<compile_context>
chip_gen: v5e
topology: v5e:2x2
jax: 0.10.0
libtpu: 0.0.40
codegen_flags: <defaults>
</compile_context>

<pallas_src>
import functools

import jax
import jax.numpy as jnp
from jax.experimental import pallas as pl
from jax.experimental.pallas import tpu as pltpu


# ----------------------------------------------------------------------------
# small helpers
# ----------------------------------------------------------------------------

def _round_up(x, m):
    return ((x + m - 1) // m) * m


def _pick_tile(n, align, cap):
    """Largest divisor of n that is a multiple of `align` and <= cap, else n
    (a full-extent block is always a legal block shape)."""
    t = (min(cap, n) // align) * align
    while t >= align:
        if n % t == 0:
            return t
        t -= align
    return n


def _vmem_limit():
    try:
        cap = pltpu.get_tpu_info().vmem_capacity_bytes
    except Exception:
        cap = 128 * 1024 * 1024
    return min(64 * 1024 * 1024, int(cap * 0.7))


# ----------------------------------------------------------------------------
# ConvTranspose3d (kernel_size == stride, bias=False) as a row-tiled matmul
# ----------------------------------------------------------------------------

def _ct_kernel(x_ref, w_ref, o_ref):
    o_ref[...] = jnp.dot(x_ref[...], w_ref[...],
                         preferred_element_type=jnp.float32).astype(o_ref.dtype)


def conv_transpose3d_stride(x, wm, stride):
    """x: (N, Dc, Hc, Wc, Cin); wm: (Cin, sd*sh*sw*Cout) bf16 -> bf16 NDHWC."""
    sd, sh, sw = stride
    N, Dc, Hc, Wc, Cin = x.shape
    G = sd * sh * sw
    Cout = wm.shape[1] // G
    M = N * Dc * Hc * Wc
    xf = x.reshape(M, Cin).astype(jnp.bfloat16)
    tm = _pick_tile(M, 8, 1024)
    # TODO(synk): add K/N tiling for very large Cin or G*Cout (not needed here).
    yf = pl.pallas_call(
        _ct_kernel,
        grid=(M // tm,),
        in_specs=[pl.BlockSpec((tm, Cin), lambda i: (i, 0)),
                  pl.BlockSpec((Cin, wm.shape[1]), lambda i: (0, 0))],
        out_specs=pl.BlockSpec((tm, wm.shape[1]), lambda i: (i, 0)),
        out_shape=jax.ShapeDtypeStruct((M, wm.shape[1]), jnp.bfloat16),
        compiler_params=pltpu.CompilerParams(dimension_semantics=("parallel",)),
    )(xf, wm)
    # pixel-shuffle in XLA on bf16 (channel dim stays minor -> cheap copy)
    y = yf.reshape(N, Dc, Hc, Wc, sd, sh, sw, Cout)
    y = jnp.transpose(y, (0, 1, 4, 2, 5, 3, 6, 7))
    return y.reshape(N, Dc * sd, Hc * sh, Wc * sw, Cout)


# ----------------------------------------------------------------------------
# fused additive attention gate -> alpha only (the multiply is fused downstream)
# ----------------------------------------------------------------------------

def _gate_kernel(g_ref, sp_ref, wg_ref, wx_ref, psi_ref, a_ref):
    theta = jnp.dot(g_ref[...].astype(jnp.bfloat16), wg_ref[...],
                    preferred_element_type=jnp.float32)
    phi = jnp.dot(sp_ref[...], wx_ref[...], preferred_element_type=jnp.float32)
    f = jnp.maximum(theta + phi, 0.0)
    s = jnp.sum(f * psi_ref[...], axis=-1, keepdims=True)   # (tmc, 1) in VMEM
    a_ref[...] = jax.nn.sigmoid(s)


def attention_alpha(g, skip, att_p, stride):
    """g: (N, Dc, Hc, Wc, Cg); skip: (N, Ds, Hs, Ws, Cs) -> alpha (N,Dc,Hc,Wc)."""
    sd, sh, sw = stride
    N, Dc, Hc, Wc, Cg = g.shape
    _, _, _, _, Cs = skip.shape
    P = sd * sh * sw * Cs
    Mc = N * Dc * Hc * Wc
    F = att_p['wg'].shape[1]

    gf = g.reshape(Mc, Cg)
    sp = skip.reshape(N, Dc, sd, Hc, sh, Wc, sw, Cs)
    sp = jnp.transpose(sp, (0, 1, 3, 5, 2, 4, 6, 7)).reshape(Mc, P)
    sp = sp.astype(jnp.bfloat16)

    tmc = _pick_tile(Mc, 8, 1024)
    alpha = pl.pallas_call(
        _gate_kernel,
        grid=(Mc // tmc,),
        in_specs=[pl.BlockSpec((tmc, Cg), lambda i: (i, 0)),
                  pl.BlockSpec((tmc, P), lambda i: (i, 0)),
                  pl.BlockSpec((Cg, F), lambda i: (0, 0)),
                  pl.BlockSpec((P, F), lambda i: (0, 0)),
                  pl.BlockSpec((1, F), lambda i: (0, 0))],
        out_specs=pl.BlockSpec((tmc, 1), lambda i: (i, 0)),
        out_shape=jax.ShapeDtypeStruct((Mc, 1), jnp.float32),
        compiler_params=pltpu.CompilerParams(dimension_semantics=("parallel",)),
    )(gf, sp, att_p['wg'], att_p['wx'], att_p['psi'])
    return alpha.reshape(N, Dc, Hc, Wc)


# ----------------------------------------------------------------------------
# padded-plane helpers (channels-last, bf16, row dim padded to a multiple of 8)
# ----------------------------------------------------------------------------

def _pad_planes(x_cl, dtype=jnp.bfloat16):
    """(N, D, H, W, C) -> (N, D+2, RPP, C) with RP=(H+2)*(W+2) rounded up to 8."""
    N, D, H, W, C = x_cl.shape
    xp = jnp.pad(x_cl.astype(dtype), ((0, 0), (1, 1), (1, 1), (1, 1), (0, 0)))
    rp = (H + 2) * (W + 2)
    rpp = _round_up(rp, 8)
    xp = xp.reshape(N, D + 2, rp, C)
    if rpp != rp:
        xp = jnp.pad(xp, ((0, 0), (0, 0), (0, rpp - rp), (0, 0)))
    return xp


def _alpha_planes(alpha, stride, fine_dims):
    """alpha (N, Dc, Hc, Wc) f32 -> upsampled, padded, row-flattened planes."""
    sd, sh, sw = stride
    D, H, W = fine_dims
    N, Dc, Hc, Wc = alpha.shape
    a = jnp.broadcast_to(alpha[:, :, None, :, None, :, None],
                         (N, Dc, sd, Hc, sh, Wc, sw)).reshape(N, D, H, W)
    a = jnp.pad(a, ((0, 0), (1, 1), (1, 1), (1, 1)))
    rp = (H + 2) * (W + 2)
    rpp = _round_up(rp, 8)
    a = a.reshape(N, D + 2, rp, 1)
    if rpp != rp:
        a = jnp.pad(a, ((0, 0), (0, 0), (0, rpp - rp), (0, 0)))
    return a


# ----------------------------------------------------------------------------
# 3x3x3 conv (pad=1) with fused concat, fused alpha multiply, kw-folded MXU
# dots, roll-based kh shifts, in-kernel W+2 -> W compaction, fused IN stats
# ----------------------------------------------------------------------------

def _conv3x3_kernel(*refs, wp, hout, wout, gated):
    if gated:
        xu_ref, xs_ref, al_ref, w_ref, o_ref, s1_ref, s2_ref, acc_ref = refs
    else:
        xu_ref, xs_ref, w_ref, o_ref, s1_ref, s2_ref, acc_ref = refs
        al_ref = None

    kd = pl.program_id(2)

    @pl.when(kd == 0)
    def _():
        acc_ref[...] = jnp.zeros_like(acc_ref)

    pu = xu_ref[...].astype(jnp.float32)                     # (RPP, Cu)
    ps = xs_ref[...].astype(jnp.float32)                     # (RPP, Cs)
    if gated:
        ps = ps * al_ref[...]                                # alpha broadcast
    p = jnp.concatenate([pu, ps], axis=-1)                   # (RPP, Cin)
    rpp = p.shape[0]
    # fold the 3 kw taps into the contraction dim (K = 3*Cin)
    xcat = jnp.concatenate(
        [p,
         pltpu.roll(p, rpp - 1, axis=0),
         pltpu.roll(p, rpp - 2, axis=0)],
        axis=-1).astype(jnp.bfloat16)                        # (RPP, 3*Cin)

    for kh in range(3):
        t = jnp.dot(xcat, w_ref[kd, kh],
                    preferred_element_type=jnp.float32)      # (RPP, Cout)
        if kh == 0:
            acc_ref[...] += t
        else:
            acc_ref[...] += pltpu.roll(t, rpp - kh * wp, axis=0)

    @pl.when(kd == pl.num_programs(2) - 1)
    def _():
        # compact the W+2 row stride down to W while writing the output block
        for h in range(hout):
            o_ref[pl.ds(h * wout, wout), :] = acc_ref[pl.ds(h * wp, wout), :]
        # fused InstanceNorm partial statistics over the compacted plane
        y = o_ref[...]                                       # (H*W, Cout)
        s1_ref[...] = jnp.sum(y, axis=0, keepdims=True)
        s2_ref[...] = jnp.sum(y * y, axis=0, keepdims=True)


# ----------------------------------------------------------------------------
# InstanceNorm apply + LeakyReLU(0.01) + fused 1x1x1 deep-supervision head
# (bf16 activation out, lane-dense (out_ch, S) deep-supervision out)
# ----------------------------------------------------------------------------

def _in_apply_ds_kernel(y_ref, mean_ref, rstd_ref, gamma_ref, beta_ref,
                        wds_ref, act_ref, ds_ref, *, slope):
    y = y_ref[...]                                           # (ts, C) f32
    yn = (y - mean_ref[...]) * (rstd_ref[...] * gamma_ref[...]) + beta_ref[...]
    yn = jnp.where(yn >= 0, yn, slope * yn)
    act_ref[...] = yn.astype(act_ref.dtype)
    # (out_ch, C) x (ts, C)^T -> (out_ch, ts): lane-dense DS store, NCDHW layout
    ds_ref[...] = jax.lax.dot_general(
        wds_ref[...], yn.astype(jnp.bfloat16),
        dimension_numbers=(((1,), (1,)), ((), ())),
        preferred_element_type=jnp.float32)


# ----------------------------------------------------------------------------
# one decoder stage: conv -> IN -> LeakyReLU (+ DS head)
# ----------------------------------------------------------------------------

def conv_block_stage(xup_planes, skp_planes, alpha_planes, dec_p, wds,
                     dims, eps=1e-5, slope=0.01):
    """Returns (activation (N,D,H,W,Cout) bf16, ds (N,out_ch,D,H,W) f32)."""
    N, D, H, W = dims
    Cu = xup_planes.shape[-1]
    Cs = skp_planes.shape[-1]
    Cin = Cu + Cs
    wk = dec_p['wk']                                         # (3, 3, 3*Cin, Cout)
    Cout = wk.shape[-1]
    Wp = W + 2
    RPP = xup_planes.shape[2]
    HW = H * W
    gated = alpha_planes is not None
    out_ch = wds.shape[0]

    plane_ix = lambda n, d, kd: (n, d + kd, 0, 0)
    in_arrays = [xup_planes, skp_planes]
    in_specs = [pl.BlockSpec((None, None, RPP, Cu), plane_ix),
                pl.BlockSpec((None, None, RPP, Cs), plane_ix)]
    if gated:
        in_arrays.append(alpha_planes)
        in_specs.append(pl.BlockSpec((None, None, RPP, 1), plane_ix))
    in_arrays.append(wk)
    in_specs.append(pl.BlockSpec((3, 3, 3 * Cin, Cout),
                                 lambda n, d, kd: (0, 0, 0, 0)))  # VMEM-resident

    y, s1, s2 = pl.pallas_call(
        functools.partial(_conv3x3_kernel, wp=Wp, hout=H, wout=W, gated=gated),
        grid=(N, D, 3),
        in_specs=in_specs,
        out_specs=[pl.BlockSpec((None, None, HW, Cout), lambda n, d, kd: (n, d, 0, 0)),
                   pl.BlockSpec((None, None, 1, Cout), lambda n, d, kd: (n, d, 0, 0)),
                   pl.BlockSpec((None, None, 1, Cout), lambda n, d, kd: (n, d, 0, 0))],
        out_shape=[jax.ShapeDtypeStruct((N, D, HW, Cout), jnp.float32),
                   jax.ShapeDtypeStruct((N, D, 1, Cout), jnp.float32),
                   jax.ShapeDtypeStruct((N, D, 1, Cout), jnp.float32)],
        scratch_shapes=[pltpu.VMEM((RPP, Cout), jnp.float32)],
        compiler_params=pltpu.CompilerParams(
            dimension_semantics=("parallel", "parallel", "arbitrary"),
            vmem_limit_bytes=_vmem_limit()),
    )(*in_arrays)
    # TODO(synk): tile H (with a 2-row halo) for very large planes on v7x.

    # finalize InstanceNorm stats in XLA (tiny: N*D*Cout elements)
    # TODO(synk): E[x^2]-E[x]^2 is cancellation-prone; use Welford if exact
    # PyTorch InstanceNorm3d numerics are required.
    count = float(D * HW)
    mean = jnp.sum(s1, axis=1) / count                       # (N, 1, Cout)
    var = jnp.maximum(jnp.sum(s2, axis=1) / count - mean * mean, 0.0)
    rstd = jax.lax.rsqrt(var + eps)

    # apply pass: normalize + LeakyReLU + fused deep-supervision head
    S = D * HW
    yr = y.reshape(N, S, Cout)
    ts = _pick_tile(S, 128, 2048)
    if ts == S and S >= 256 and (S // 2) % 128 == 0:
        ts = S // 2                                          # megacore-friendly
    act, ds = pl.pallas_call(
        functools.partial(_in_apply_ds_kernel, slope=slope),
        grid=(N, S // ts),
        in_specs=[pl.BlockSpec((None, ts, Cout), lambda n, s: (n, s, 0)),
                  pl.BlockSpec((None, 1, Cout), lambda n, s: (n, 0, 0)),
                  pl.BlockSpec((None, 1, Cout), lambda n, s: (n, 0, 0)),
                  pl.BlockSpec((1, Cout), lambda n, s: (0, 0)),
                  pl.BlockSpec((1, Cout), lambda n, s: (0, 0)),
                  pl.BlockSpec((out_ch, Cout), lambda n, s: (0, 0))],
        out_specs=[pl.BlockSpec((None, ts, Cout), lambda n, s: (n, s, 0)),
                   pl.BlockSpec((None, out_ch, ts), lambda n, s: (n, 0, s))],
        out_shape=[jax.ShapeDtypeStruct((N, S, Cout), jnp.bfloat16),
                   jax.ShapeDtypeStruct((N, out_ch, S), jnp.float32)],
        compiler_params=pltpu.CompilerParams(
            dimension_semantics=("parallel", "parallel")),
    )(yr, mean, rstd, dec_p['gamma'], dec_p['beta'], wds)

    act = act.reshape(N, D, H, W, Cout)
    ds = ds.reshape(N, out_ch, D, H, W)                      # NCDHW, no transpose
    return act, ds


# ----------------------------------------------------------------------------
# Parameter construction (mirrors SEG_Decoder_with_AG.__init__)
# ----------------------------------------------------------------------------

def make_params(key, channels, pool_op_kernel_sizes, conv_kernel_sizes,
                out_channels, apply_skips='0,1,2,3,4'):
    del conv_kernel_sizes  # 3x3x3 assumed (matches reference config)
    keys = iter(jax.random.split(key, 128))

    def nrm(shape, scale=0.1):
        return scale * jax.random.normal(next(keys), shape, jnp.float32)

    def prep_decoder(cin, cout):
        w = nrm((cout, cin, 3, 3, 3))                        # PyTorch layout
        # (kd, kh, kw, cin, cout) -> (kd, kh, kw*cin, cout): kw folded into K
        wk = jnp.transpose(w, (2, 3, 4, 1, 0)).reshape(3, 3, 3 * cin, cout)
        # NOTE: Conv3d bias is cancelled by InstanceNorm -> omitted entirely.
        return dict(wk=wk.astype(jnp.bfloat16),
                    gamma=jnp.ones((1, cout), jnp.float32),
                    beta=jnp.zeros((1, cout), jnp.float32))

    def prep_up(cin, cout, stride):
        sd, sh, sw = stride
        w = nrm((cin, cout) + stride)                        # ConvTranspose3d
        wm = jnp.transpose(w, (0, 2, 3, 4, 1)).reshape(cin, sd * sh * sw * cout)
        return wm.astype(jnp.bfloat16)

    def prep_att(cg, cs, stride):
        sd, sh, sw = stride
        f = cs
        wg = nrm((f, cg))                                    # 1x1x1 conv on g
        wx = nrm((f, cs) + stride)                           # strided conv on skip
        psi = nrm((f, 1))
        return dict(
            wg=jnp.transpose(wg, (1, 0)).astype(jnp.bfloat16),             # (Cg,F)
            wx=jnp.transpose(wx, (2, 3, 4, 1, 0))
                .reshape(sd * sh * sw * cs, f).astype(jnp.bfloat16),       # (P,F)
            psi=jnp.transpose(psi, (1, 0)).astype(jnp.float32))            # (1,F)

    params = {'decoder': [], 'up': [], 'att': [], 'ds': [], 'strides': []}
    stride = tuple(pool_op_kernel_sizes[-1])
    c_last = channels[-1]

    # stage 0
    params['decoder'].append(prep_decoder(c_last * 2, c_last))
    params['up'].append(prep_up(c_last, c_last, stride))
    params['att'].append(prep_att(c_last, c_last, stride))
    params['strides'].append(stride)

    # later decoder stages
    for c in channels[::-1][1:]:
        params['decoder'].append(prep_decoder(c * 2, c))
    for ix, pool in enumerate(pool_op_kernel_sizes[::-1][1:]):
        dec = tuple(pool)
        cin = channels[-(ix + 1)]
        cout = channels[-(ix + 2)]
        params['up'].append(prep_up(cin, cout, dec))
        params['att'].append(prep_att(cin, cout, dec))
        params['strides'].append(dec)

    # deep supervision heads (1x1x1, bias=False), stored as (out_ch, C) bf16
    for c in channels[::-1]:
        params['ds'].append(nrm((out_channels, c)).astype(jnp.bfloat16))

    params['apply_skips'] = [int(i) for i in apply_skips.split(',')]
    params['out_channels'] = out_channels
    return params


# ----------------------------------------------------------------------------
# Forward pass (mirrors SEG_Decoder_with_AG.forward; deep_supervision=True)
# ----------------------------------------------------------------------------

def seg_decoder_with_ag_forward(x, skips, params):
    """x, skips given in PyTorch NCDHW; DS outputs returned in NCDHW."""
    x = jnp.transpose(x, (0, 2, 3, 4, 1))                    # -> channels-last
    skips_cl = [jnp.transpose(s, (0, 2, 3, 4, 1)) for s in skips]

    seg_outputs = []
    for ix in range(len(params['decoder'])):
        stride = params['strides'][ix]
        x_up = conv_transpose3d_stride(x, params['up'][ix], stride)   # bf16
        N, D, H, W, _ = x_up.shape
        skip = skips_cl[-(ix + 2)]
        gated = (len(skips) - (ix + 2)) in params['apply_skips']
        if gated:
            alpha = attention_alpha(x, skip, params['att'][ix], stride)
            alpha_planes = _alpha_planes(alpha, stride, (D, H, W))
        else:
            alpha_planes = None
        xup_planes = _pad_planes(x_up)                       # bf16 padded planes
        skp_planes = _pad_planes(skip)                       # bf16 padded planes
        x, ds = conv_block_stage(xup_planes, skp_planes, alpha_planes,
                                 params['decoder'][ix], params['ds'][ix],
                                 (N, D, H, W))
        seg_outputs.append(ds)                               # already NCDHW

    # deep supervision ordering: (last, *reversed(earlier)), identity upscales
    return tuple([seg_outputs[-1]] + seg_outputs[:-1][::-1])


# ----------------------------------------------------------------------------
# Demo
# ----------------------------------------------------------------------------

if __name__ == "__main__":
    key = jax.random.PRNGKey(0)
    k_p, k_x, k_s0, k_s1, k_s2 = jax.random.split(key, 5)

    channels = [4, 8]
    pool_op_kernel_sizes = [[2, 2, 2], [2, 2, 2]]
    conv_kernel_sizes = [[3, 3, 3], [3, 3, 3]]
    out_channels = 2

    params = make_params(k_p, channels, pool_op_kernel_sizes,
                         conv_kernel_sizes, out_channels)

    # bottleneck feature map + encoder skips (NCDHW)
    x = jax.random.normal(k_x, (1, 8, 2, 4, 4), jnp.float32)
    skips = [
        jax.random.normal(k_s0, (1, 4, 8, 16, 16), jnp.float32),
        jax.random.normal(k_s1, (1, 8, 4, 8, 8), jnp.float32),
        jax.random.normal(k_s2, (1, 8, 2, 4, 4), jnp.float32),
    ]

    fwd = jax.jit(lambda xx, ss: seg_decoder_with_ag_forward(xx, ss, params))
    outs = fwd(x, skips)
    for o in outs:
        jax.block_until_ready(o)

    assert outs[0].shape == (1, 2, 8, 16, 16), outs[0].shape
    assert outs[1].shape == (1, 2, 4, 8, 8), outs[1].shape
    assert all(bool(jnp.all(jnp.isfinite(o))) for o in outs)
    print("KERNEL_OK")
</pallas_src>

<mosaic_0001>
module attributes {stable_mosaic.version = 11 : i64} {
  func.func @_gate_kernel(%arg0: i32, %arg1: memref<32x8xf32, #tpu.memory_space<vmem>>, %arg2: memref<32x64xbf16, #tpu.memory_space<vmem>>, %arg3: memref<8x8xbf16, #tpu.memory_space<vmem>>, %arg4: memref<64x8xbf16, #tpu.memory_space<vmem>>, %arg5: memref<1x8xf32, #tpu.memory_space<vmem>>, %arg6: memref<32x1xf32, #tpu.memory_space<vmem>>) attributes {dimension_semantics = [#tpu.dimension_semantics<parallel>], iteration_bounds = array<i64: 1>, scalar_prefetch = 0 : i64, scratch_operands = 0 : i64, tpu.core_type = #tpu.core_type<tc>, window_params = [{transform_indices = @transform_0, window_bounds = array<i64: 32, 8>}, {transform_indices = @transform_1, window_bounds = array<i64: 32, 64>}, {pipeline_mode = #tpu.pipeline_mode<synchronous>, transform_indices = @transform_2, window_bounds = array<i64: 8, 8>}, {pipeline_mode = #tpu.pipeline_mode<synchronous>, transform_indices = @transform_3, window_bounds = array<i64: 64, 8>}, {pipeline_mode = #tpu.pipeline_mode<synchronous>, transform_indices = @transform_4, window_bounds = array<i64: 1, 8>}, {transform_indices = @transform_5, window_bounds = array<i64: 32, 1>}]} {
    %c0 = arith.constant 0 : index
    %c0_0 = arith.constant 0 : index
    %0 = vector.load %arg1[%c0, %c0_0] : memref<32x8xf32, #tpu.memory_space<vmem>>, vector<32x8xf32>
    %1 = arith.truncf %0 : vector<32x8xf32> to vector<32x8xbf16>
    %c0_1 = arith.constant 0 : index
    %c0_2 = arith.constant 0 : index
    %2 = vector.load %arg3[%c0_1, %c0_2] : memref<8x8xbf16, #tpu.memory_space<vmem>>, vector<8x8xbf16>
    %cst = arith.constant dense<0.000000e+00> : vector<32x8xf32>
    %3 = tpu.matmul %1, %2, %cst {dimension_numbers = #tpu.dot_dimension_numbers<[1], [0], [0], [1], [0, 0, 1, 1], [], []>} : vector<32x8xbf16>, vector<8x8xbf16>, vector<32x8xf32> -> vector<32x8xf32>
    %c0_3 = arith.constant 0 : index
    %c0_4 = arith.constant 0 : index
    %4 = vector.load %arg2[%c0_3, %c0_4] : memref<32x64xbf16, #tpu.memory_space<vmem>>, vector<32x64xbf16>
    %c0_5 = arith.constant 0 : index
    %c0_6 = arith.constant 0 : index
    %5 = vector.load %arg4[%c0_5, %c0_6] : memref<64x8xbf16, #tpu.memory_space<vmem>>, vector<64x8xbf16>
    %cst_7 = arith.constant dense<0.000000e+00> : vector<32x8xf32>
    %6 = tpu.matmul %4, %5, %cst_7 {dimension_numbers = #tpu.dot_dimension_numbers<[1], [0], [0], [1], [0, 0, 1, 1], [], []>} : vector<32x64xbf16>, vector<64x8xbf16>, vector<32x8xf32> -> vector<32x8xf32>
    %7 = arith.addf %3, %6 : vector<32x8xf32>
    %cst_8 = arith.constant 0.000000e+00 : f32
    %8 = vector.broadcast %cst_8 : f32 to vector<32x8xf32>
    %9 = arith.maximumf %7, %8 : vector<32x8xf32>
    %c0_9 = arith.constant 0 : index
    %c0_10 = arith.constant 0 : index
    %10 = vector.load %arg5[%c0_9, %c0_10] : memref<1x8xf32, #tpu.memory_space<vmem>>, vector<1x8xf32>
    %11 = vector.broadcast %10 : vector<1x8xf32> to vector<32x8xf32>
    %12 = arith.mulf %9, %11 : vector<32x8xf32>
    %cst_11 = arith.constant dense<0.000000e+00> : vector<32xf32>
    %13 = vector.multi_reduction <add>, %12, %cst_11 [1] : vector<32x8xf32> to vector<32xf32>
    %14 = vector.shape_cast %13 : vector<32xf32> to vector<32x1xf32>
    %15 = arith.negf %14 : vector<32x1xf32>
    %16 = math.exp %15 : vector<32x1xf32>
    %cst_12 = arith.constant 1.000000e+00 : f32
    %17 = vector.broadcast %cst_12 : f32 to vector<32x1xf32>
    %18 = arith.addf %17, %16 : vector<32x1xf32>
    %19 = arith.divf %17, %18 : vector<32x1xf32>
    %c0_13 = arith.constant 0 : index
    %c0_14 = arith.constant 0 : index
    %20 = vector.load %arg6[%c0_13, %c0_14] : memref<32x1xf32, #tpu.memory_space<vmem>>, vector<32x1xf32>
    tpu.vector_store %arg6[%c0_13, %c0_14], %19 {strides = array<i32>} : memref<32x1xf32, #tpu.memory_space<vmem>>, vector<32x1xf32>,
    return
  }
  func.func @transform_0(%arg0: i32) -> (i32, i32) {
    %c0_i32 = arith.constant 0 : i32
    %c0_i32_0 = arith.constant 0 : i32
    return %arg0, %c0_i32 : i32, i32
  }
  func.func @transform_1(%arg0: i32) -> (i32, i32) {
    %c0_i32 = arith.constant 0 : i32
    %c0_i32_0 = arith.constant 0 : i32
    return %arg0, %c0_i32 : i32, i32
  }
  func.func @transform_2(%arg0: i32) -> (i32, i32) {
    %c0_i32 = arith.constant 0 : i32
    %c0_i32_0 = arith.constant 0 : i32
    %c0_i32_1 = arith.constant 0 : i32
    return %c0_i32, %c0_i32_0 : i32, i32
  }
  func.func @transform_3(%arg0: i32) -> (i32, i32) {
    %c0_i32 = arith.constant 0 : i32
    %c0_i32_0 = arith.constant 0 : i32
    %c0_i32_1 = arith.constant 0 : i32
    return %c0_i32, %c0_i32_0 : i32, i32
  }
  func.func @transform_4(%arg0: i32) -> (i32, i32) {
    %c0_i32 = arith.constant 0 : i32
    %c0_i32_0 = arith.constant 0 : i32
    %c0_i32_1 = arith.constant 0 : i32
    return %c0_i32, %c0_i32_0 : i32, i32
  }
  func.func @transform_5(%arg0: i32) -> (i32, i32) {
    %c0_i32 = arith.constant 0 : i32
    %c0_i32_0 = arith.constant 0 : i32
    return %arg0, %c0_i32 : i32, i32
  }
}

module attributes {stable_mosaic.version = 11 : i64} {
  func.func @_ct_kernel(%arg0: i32, %arg1: memref<32x8xbf16, #tpu.memory_space<vmem>>, %arg2: memref<8x64xbf16, #tpu.memory_space<vmem>>, %arg3: memref<32x64xbf16, #tpu.memory_space<vmem>>) attributes {dimension_semantics = [#tpu.dimension_semantics<parallel>], iteration_bounds = array<i64: 1>, scalar_prefetch = 0 : i64, scratch_operands = 0 : i64, tpu.core_type = #tpu.core_type<tc>, window_params = [{transform_indices = @transform_0, window_bounds = array<i64: 32, 8>}, {pipeline_mode = #tpu.pipeline_mode<synchronous>, transform_indices = @transform_1, window_bounds = array<i64: 8, 64>}, {transform_indices = @transform_2, window_bounds = array<i64: 32, 64>}]} {
    %c0 = arith.constant 0 : index
    %c0_0 = arith.constant 0 : index
    %0 = vector.load %arg1[%c0, %c0_0] : memref<32x8xbf16, #tpu.memory_space<vmem>>, vector<32x8xbf16>
    %c0_1 = arith.constant 0 : index
    %c0_2 = arith.constant 0 : index
    %1 = vector.load %arg2[%c0_1, %c0_2] : memref<8x64xbf16, #tpu.memory_space<vmem>>, vector<8x64xbf16>
    %cst = arith.constant dense<0.000000e+00> : vector<32x64xf32>
    %2 = tpu.matmul %0, %1, %cst {dimension_numbers = #tpu.dot_dimension_numbers<[1], [0], [0], [1], [0, 0, 1, 1], [], []>} : vector<32x8xbf16>, vector<8x64xbf16>, vector<32x64xf32> -> vector<32x64xf32>
    %3 = arith.truncf %2 : vector<32x64xf32> to vector<32x64xbf16>
    %c0_3 = arith.constant 0 : index
    %c0_4 = arith.constant 0 : index
    %4 = vector.load %arg3[%c0_3, %c0_4] : memref<32x64xbf16, #tpu.memory_space<vmem>>, vector<32x64xbf16>
    tpu.vector_store %arg3[%c0_3, %c0_4], %3 {strides = array<i32>} : memref<32x64xbf16, #tpu.memory_space<vmem>>, vector<32x64xbf16>,
    return
  }
  func.func @transform_0(%arg0: i32) -> (i32, i32) {
    %c0_i32 = arith.constant 0 : i32
    %c0_i32_0 = arith.constant 0 : i32
    return %arg0, %c0_i32 : i32, i32
  }
  func.func @transform_1(%arg0: i32) -> (i32, i32) {
    %c0_i32 = arith.constant 0 : i32
    %c0_i32_0 = arith.constant 0 : i32
    %c0_i32_1 = arith.constant 0 : i32
    return %c0_i32, %c0_i32_0 : i32, i32
  }
  func.func @transform_2(%arg0: i32) -> (i32, i32) {
    %c0_i32 = arith.constant 0 : i32
    %c0_i32_0 = arith.constant 0 : i32
    return %arg0, %c0_i32 : i32, i32
  }
}

module attributes {stable_mosaic.version = 11 : i64} {
  func.func @_conv3x3_kernel(%arg0: i32, %arg1: i32, %arg2: i32, %arg3: memref<1x1x104x8xbf16, #tpu.memory_space<vmem>>, %arg4: memref<1x1x104x8xbf16, #tpu.memory_space<vmem>>, %arg5: memref<1x1x104x1xf32, #tpu.memory_space<vmem>>, %arg6: memref<3x3x48x8xbf16, #tpu.memory_space<vmem>>, %arg7: memref<1x1x64x8xf32, #tpu.memory_space<vmem>>, %arg8: memref<1x1x1x8xf32, #tpu.memory_space<vmem>>, %arg9: memref<1x1x1x8xf32, #tpu.memory_space<vmem>>, %arg10: memref<104x8xf32, #tpu.memory_space<vmem>>) attributes {dimension_semantics = [#tpu.dimension_semantics<parallel>, #tpu.dimension_semantics<parallel>, #tpu.dimension_semantics<arbitrary>], iteration_bounds = array<i64: 1, 4, 3>, scalar_prefetch = 0 : i64, scratch_operands = 1 : i64, tpu.core_type = #tpu.core_type<tc>, window_params = [{transform_indices = @transform_0, window_bounds = array<i64: 1, 1, 104, 8>}, {transform_indices = @transform_1, window_bounds = array<i64: 1, 1, 104, 8>}, {transform_indices = @transform_2, window_bounds = array<i64: 1, 1, 104, 1>}, {pipeline_mode = #tpu.pipeline_mode<synchronous>, transform_indices = @transform_3, window_bounds = array<i64: 3, 3, 48, 8>}, {transform_indices = @transform_4, window_bounds = array<i64: 1, 1, 64, 8>}, {transform_indices = @transform_5, window_bounds = array<i64: 1, 1, 1, 8>}, {transform_indices = @transform_6, window_bounds = array<i64: 1, 1, 1, 8>}]} {
    %c0_i32 = arith.constant 0 : i32
    %0 = arith.cmpi eq, %arg2, %c0_i32 : i32
    %1 = arith.extui %0 : i1 to i32
    %c0_i32_0 = arith.constant 0 : i32
    %2 = arith.cmpi ne, %1, %c0_i32_0 : i32
    scf.if %2 {
      %cst_34 = arith.constant 0.000000e+00 : f32
      %44 = vector.broadcast %cst_34 : f32 to vector<104x8xf32>
      %c0_35 = arith.constant 0 : index
      %c0_36 = arith.constant 0 : index
      %45 = vector.load %arg10[%c0_35, %c0_36] : memref<104x8xf32, #tpu.memory_space<vmem>>, vector<104x8xf32>
      tpu.vector_store %arg10[%c0_35, %c0_36], %44 {strides = array<i32>} : memref<104x8xf32, #tpu.memory_space<vmem>>, vector<104x8xf32>,
    } else {
    }
    %c0 = arith.constant 0 : index
    %c0_1 = arith.constant 0 : index
    %c0_2 = arith.constant 0 : index
    %c0_3 = arith.constant 0 : index
    %3 = vector.load %arg3[%c0, %c0_1, %c0_2, %c0_3] : memref<1x1x104x8xbf16, #tpu.memory_space<vmem>>, vector<1x1x104x8xbf16>
    %4 = vector.shape_cast %3 : vector<1x1x104x8xbf16> to vector<104x8xbf16>
    %5 = arith.extf %4 : vector<104x8xbf16> to vector<104x8xf32>
    %c0_4 = arith.constant 0 : index
    %c0_5 = arith.constant 0 : index
    %c0_6 = arith.constant 0 : index
    %c0_7 = arith.constant 0 : index
    %6 = vector.load %arg4[%c0_4, %c0_5, %c0_6, %c0_7] : memref<1x1x104x8xbf16, #tpu.memory_space<vmem>>, vector<1x1x104x8xbf16>
    %7 = vector.shape_cast %6 : vector<1x1x104x8xbf16> to vector<104x8xbf16>
    %8 = arith.extf %7 : vector<104x8xbf16> to vector<104x8xf32>
    %c0_8 = arith.constant 0 : index
    %c0_9 = arith.constant 0 : index
    %c0_10 = arith.constant 0 : index
    %c0_11 = arith.constant 0 : index
    %9 = vector.load %arg5[%c0_8, %c0_9, %c0_10, %c0_11] : memref<1x1x104x1xf32, #tpu.memory_space<vmem>>, vector<1x1x104x1xf32>
    %10 = vector.shape_cast %9 : vector<1x1x104x1xf32> to vector<104x1xf32>
    %11 = vector.broadcast %10 : vector<104x1xf32> to vector<104x8xf32>
    %12 = arith.mulf %8, %11 : vector<104x8xf32>
    %13 = tpu.concatenate %5, %12 in 1 : vector<104x8xf32>, vector<104x8xf32> -> vector<104x16xf32>
    %c103_i32 = arith.constant 103 : i32
    %14 = tpu.dynamic_rotate %13 by %c103_i32 dim 0 : vector<104x16xf32>, i32 -> vector<104x16xf32>
    %c102_i32 = arith.constant 102 : i32
    %15 = tpu.dynamic_rotate %13 by %c102_i32 dim 0 : vector<104x16xf32>, i32 -> vector<104x16xf32>
    %16 = tpu.concatenate %13, %14, %15 in 1 : vector<104x16xf32>, vector<104x16xf32>, vector<104x16xf32> -> vector<104x48xf32>
    %17 = arith.truncf %16 : vector<104x48xf32> to vector<104x48xbf16>
    %18 = arith.index_cast %arg2 : i32 to index
    %c0_12 = arith.constant 0 : index
    %c0_13 = arith.constant 0 : index
    %c0_14 = arith.constant 0 : index
    %19 = vector.load %arg6[%18, %c0_12, %c0_13, %c0_14] : memref<3x3x48x8xbf16, #tpu.memory_space<vmem>>, vector<1x1x48x8xbf16>
    %20 = vector.shape_cast %19 : vector<1x1x48x8xbf16> to vector<48x8xbf16>
    %cst = arith.constant dense<0.000000e+00> : vector<104x8xf32>
    %21 = tpu.matmul %17, %20, %cst {dimension_numbers = #tpu.dot_dimension_numbers<[1], [0], [0], [1], [0, 0, 1, 1], [], []>} : vector<104x48xbf16>, vector<48x8xbf16>, vector<104x8xf32> -> vector<104x8xf32>
    %c0_15 = arith.constant 0 : index
    %c0_16 = arith.constant 0 : index
    %22 = vector.load %arg10[%c0_15, %c0_16] : memref<104x8xf32, #tpu.memory_space<vmem>>, vector<104x8xf32>
    %23 = arith.addf %22, %21 : vector<104x8xf32>
    %c0_17 = arith.constant 0 : index
    %c0_18 = arith.constant 0 : index
    %24 = vector.load %arg10[%c0_17, %c0_18] : memref<104x8xf32, #tpu.memory_space<vmem>>, vector<104x8xf32>
    tpu.vector_store %arg10[%c0_17, %c0_18], %23 {strides = array<i32>} : memref<104x8xf32, #tpu.memory_space<vmem>>, vector<104x8xf32>,
    %25 = arith.index_cast %arg2 : i32 to index
    %c1 = arith.constant 1 : index
    %c0_19 = arith.constant 0 : index
    %c0_20 = arith.constant 0 : index
    %26 = vector.load %arg6[%25, %c1, %c0_19, %c0_20] : memref<3x3x48x8xbf16, #tpu.memory_space<vmem>>, vector<1x1x48x8xbf16>
    %27 = vector.shape_cast %26 : vector<1x1x48x8xbf16> to vector<48x8xbf16>
    %cst_21 = arith.constant dense<0.000000e+00> : vector<104x8xf32>
    %28 = tpu.matmul %17, %27, %cst_21 {dimension_numbers = #tpu.dot_dimension_numbers<[1], [0], [0], [1], [0, 0, 1, 1], [], []>} : vector<104x48xbf16>, vector<48x8xbf16>, vector<104x8xf32> -> vector<104x8xf32>
    %c0_22 = arith.constant 0 : index
    %c0_23 = arith.constant 0 : index
    %29 = vector.load %arg10[%c0_22, %c0_23] : memref<104x8xf32, #tpu.memory_space<vmem>>, vector<104x8xf32>
    %c94_i32 = arith.constant 94 : i32
    %30 = tpu.dynamic_rotate %28 by %c94_i32 dim 0 : vector<104x8xf32>, i32 -> vector<104x8xf32>
    %31 = arith.addf %29, %30 : vector<104x8xf32>
    %c0_24 = arith.constant 0 : index
    %c0_25 = arith.constant 0 : index
    %32 = vector.load %arg10[%c0_24, %c0_25] : memref<104x8xf32, #tpu.memory_space<vmem>>, vector<104x8xf32>
    tpu.vector_store %arg10[%c0_24, %c0_25], %31 {strides = array<i32>} : memref<104x8xf32, #tpu.memory_space<vmem>>, vector<104x8xf32>,
    %33 = arith.index_cast %arg2 : i32 to index
    %c2 = arith.constant 2 : index
    %c0_26 = arith.constant 0 : index
    %c0_27 = arith.constant 0 : index
    %34 = vector.load %arg6[%33, %c2, %c0_26, %c0_27] : memref<3x3x48x8xbf16, #tpu.memory_space<vmem>>, vector<1x1x48x8xbf16>
    %35 = vector.shape_cast %34 : vector<1x1x48x8xbf16> to vector<48x8xbf16>
    %cst_28 = arith.constant dense<0.000000e+00> : vector<104x8xf32>
    %36 = tpu.matmul %17, %35, %cst_28 {dimension_numbers = #tpu.dot_dimension_numbers<[1], [0], [0], [1], [0, 0, 1, 1], [], []>} : vector<104x48xbf16>, vector<48x8xbf16>, vector<104x8xf32> -> vector<104x8xf32>
    %c0_29 = arith.constant 0 : index
    %c0_30 = arith.constant 0 : index
    %37 = vector.load %arg10[%c0_29, %c0_30] : memref<104x8xf32, #tpu.memory_space<vmem>>, vector<104x8xf32>
    %c84_i32 = arith.constant 84 : i32
    %38 = tpu.dynamic_rotate %36 by %c84_i32 dim 0 : vector<104x8xf32>, i32 -> vector<104x8xf32>
    %39 = arith.addf %37, %38 : vector<104x8xf32>
    %c0_31 = arith.constant 0 : index
    %c0_32 = arith.constant 0 : index
    %40 = vector.load %arg10[%c0_31, %c0_32] : memref<104x8xf32, #tpu.memory_space<vmem>>, vector<104x8xf32>
    tpu.vector_store %arg10[%c0_31, %c0_32], %39 {strides = array<i32>} : memref<104x8xf32, #tpu.memory_space<vmem>>, vector<104x8xf32>,
    %c2_i32 = arith.constant 2 : i32
    %41 = arith.cmpi eq, %arg2, %c2_i32 : i32
    %42 = arith.extui %41 : i1 to i32
    %c0_i32_33 = arith.constant 0 : i32
    %43 = arith.cmpi ne, %42, %c0_i32_33 : i32
    scf.if %43 {
      %c0_34 = arith.constant 0 : index
      %c0_35 = arith.constant 0 : index
      %44 = vector.load %arg10[%c0_34, %c0_35] : memref<104x8xf32, #tpu.memory_space<vmem>>, vector<8x8xf32>
      %c0_36 = arith.constant 0 : index
      %c0_37 = arith.constant 0 : index
      %c0_38 = arith.constant 0 : index
      %c0_39 = arith.constant 0 : index
      %45 = vector.load %arg7[%c0_36, %c0_37, %c0_38, %c0_39] : memref<1x1x64x8xf32, #tpu.memory_space<vmem>>, vector<1x1x8x8xf32>
      %46 = vector.shape_cast %45 : vector<1x1x8x8xf32> to vector<8x8xf32>
      %47 = vector.shape_cast %44 : vector<8x8xf32> to vector<1x1x8x8xf32>
      tpu.vector_store %arg7[%c0_36, %c0_37, %c0_38, %c0_39], %47 {strides = array<i32>} : memref<1x1x64x8xf32, #tpu.memory_space<vmem>>, vector<1x1x8x8xf32>,
      %c10 = arith.constant 10 : index
      %c0_40 = arith.constant 0 : index
      %48 = vector.load %arg10[%c10, %c0_40] : memref<104x8xf32, #tpu.memory_space<vmem>>, vector<8x8xf32>
      %c0_41 = arith.constant 0 : index
      %c0_42 = arith.constant 0 : index
      %c8 = arith.constant 8 : index
      %c0_43 = arith.constant 0 : index
      %49 = vector.load %arg7[%c0_41, %c0_42, %c8, %c0_43] : memref<1x1x64x8xf32, #tpu.memory_space<vmem>>, vector<1x1x8x8xf32>
      %50 = vector.shape_cast %49 : vector<1x1x8x8xf32> to vector<8x8xf32>
      %51 = vector.shape_cast %48 : vector<8x8xf32> to vector<1x1x8x8xf32>
      tpu.vector_store %arg7[%c0_41, %c0_42, %c8, %c0_43], %51 {strides = array<i32>} : memref<1x1x64x8xf32, #tpu.memory_space<vmem>>, vector<1x1x8x8xf32>,
      %c20 = arith.constant 20 : index
      %c0_44 = arith.constant 0 : index
      %52 = vector.load %arg10[%c20, %c0_44] : memref<104x8xf32, #tpu.memory_space<vmem>>, vector<8x8xf32>
      %c0_45 = arith.constant 0 : index
      %c0_46 = arith.constant 0 : index
      %c16 = arith.constant 16 : index
      %c0_47 = arith.constant 0 : index
      %53 = vector.load %arg7[%c0_45, %c0_46, %c16, %c0_47] : memref<1x1x64x8xf32, #tpu.memory_space<vmem>>, vector<1x1x8x8xf32>
      %54 = vector.shape_cast %53 : vector<1x1x8x8xf32> to vector<8x8xf32>
      %55 = vector.shape_cast %52 : vector<8x8xf32> to vector<1x1x8x8xf32>
      tpu.vector_store %arg7[%c0_45, %c0_46, %c16, %c0_47], %55 {strides = array<i32>} : memref<1x1x64x8xf32, #tpu.memory_space<vmem>>, vector<1x1x8x8xf32>,
      %c30 = arith.constant 30 : index
      %c0_48 = arith.constant 0 : index
      %56 = vector.load %arg10[%c30, %c0_48] : memref<104x8xf32, #tpu.memory_space<vmem>>, vector<8x8xf32>
      %c0_49 = arith.constant 0 : index
      %c0_50 = arith.constant 0 : index
      %c24 = arith.constant 24 : index
      %c0_51 = arith.constant 0 : index
      %57 = vector.load %arg7[%c0_49, %c0_50, %c24, %c0_51] : memref<1x1x64x8xf32, #tpu.memory_space<vmem>>, vector<1x1x8x8xf32>
      %58 = vector.shape_cast %57 : vector<1x1x8x8xf32> to vector<8x8xf32>
      %59 = vector.shape_cast %56 : vector<8x8xf32> to vector<1x1x8x8xf32>
      tpu.vector_store %arg7[%c0_49, %c0_50, %c24, %c0_51], %59 {strides = array<i32>} : memref<1x1x64x8xf32, #tpu.memory_space<vmem>>, vector<1x1x8x8xf32>,
      %c40 = arith.constant 40 : index
      %c0_52 = arith.constant 0 : index
      %60 = vector.load %arg10[%c40, %c0_52] : memref<104x8xf32, #tpu.memory_space<vmem>>, vector<8x8xf32>
      %c0_53 = arith.constant 0 : index
      %c0_54 = arith.constant 0 : index
      %c32 = arith.constant 32 : index
      %c0_55 = arith.constant 0 : index
      %61 = vector.load %arg7[%c0_53, %c0_54, %c32, %c0_55] : memref<1x1x64x8xf32, #tpu.memory_space<vmem>>, vector<1x1x8x8xf32>
      %62 = vector.shape_cast %61 : vector<1x1x8x8xf32> to vector<8x8xf32>
      %63 = vector.shape_cast %60 : vector<8x8xf32> to vector<1x1x8x8xf32>
      tpu.vector_store %arg7[%c0_53, %c0_54, %c32, %c0_55], %63 {strides = array<i32>} : memref<1x1x64x8xf32, #tpu.memory_space<vmem>>, vector<1x1x8x8xf32>,
      %c50 = arith.constant 50 : index
      %c0_56 = arith.constant 0 : index
      %64 = vector.load %arg10[%c50, %c0_56] : memref<104x8xf32, #tpu.memory_space<vmem>>, vector<8x8xf32>
      %c0_57 = arith.constant 0 : index
      %c0_58 = arith.constant 0 : index
      %c40_59 = arith.constant 40 : index
      %c0_60 = arith.constant 0 : index
      %65 = vector.load %arg7[%c0_57, %c0_58, %c40_59, %c0_60] : memref<1x1x64x8xf32, #tpu.memory_space<vmem>>, vector<1x1x8x8xf32>
      %66 = vector.shape_cast %65 : vector<1x1x8x8xf32> to vector<8x8xf32>
      %67 = vector.shape_cast %64 : vector<8x8xf32> to vector<1x1x8x8xf32>
      tpu.vector_store %arg7[%c0_57, %c0_58, %c40_59, %c0_60], %67 {strides = array<i32>} : memref<1x1x64x8xf32, #tpu.memory_space<vmem>>, vector<1x1x8x8xf32>,
      %c60 = arith.constant 60 : index
      %c0_61 = arith.constant 0 : index
      %68 = vector.load %arg10[%c60, %c0_61] : memref<104x8xf32, #tpu.memory_space<vmem>>, vector<8x8xf32>
      %c0_62 = arith.constant 0 : index
      %c0_63 = arith.constant 0 : index
      %c48 = arith.constant 48 : index
      %c0_64 = arith.constant 0 : index
      %69 = vector.load %arg7[%c0_62, %c0_63, %c48, %c0_64] : memref<1x1x64x8xf32, #tpu.memory_space<vmem>>, vector<1x1x8x8xf32>
      %70 = vector.shape_cast %69 : vector<1x1x8x8xf32> to vector<8x8xf32>
      %71 = vector.shape_cast %68 : vector<8x8xf32> to vector<1x1x8x8xf32>
      tpu.vector_store %arg7[%c0_62, %c0_63, %c48, %c0_64], %71 {strides = array<i32>} : memref<1x1x64x8xf32, #tpu.memory_space<vmem>>, vector<1x1x8x8xf32>,
      %c70 = arith.constant 70 : index
      %c0_65 = arith.constant 0 : index
      %72 = vector.load %arg10[%c70, %c0_65] : memref<104x8xf32, #tpu.memory_space<vmem>>, vector<8x8xf32>
      %c0_66 = arith.constant 0 : index
      %c0_67 = arith.constant 0 : index
      %c56 = arith.constant 56 : index
      %c0_68 = arith.constant 0 : index
      %73 = vector.load %arg7[%c0_66, %c0_67, %c56, %c0_68] : memref<1x1x64x8xf32, #tpu.memory_space<vmem>>, vector<1x1x8x8xf32>
      %74 = vector.shape_cast %73 : vector<1x1x8x8xf32> to vector<8x8xf32>
      %75 = vector.shape_cast %72 : vector<8x8xf32> to vector<1x1x8x8xf32>
      tpu.vector_store %arg7[%c0_66, %c0_67, %c56, %c0_68], %75 {strides = array<i32>} : memref<1x1x64x8xf32, #tpu.memory_space<vmem>>, vector<1x1x8x8xf32>,
      %c0_69 = arith.constant 0 : index
      %c0_70 = arith.constant 0 : index
      %c0_71 = arith.constant 0 : index
      %c0_72 = arith.constant 0 : index
      %76 = vector.load %arg7[%c0_69, %c0_70, %c0_71, %c0_72] : memref<1x1x64x8xf32, #tpu.memory_space<vmem>>, vector<1x1x64x8xf32>
      %77 = vector.shape_cast %76 : vector<1x1x64x8xf32> to vector<64x8xf32>
      %cst_73 = arith.constant dense<0.000000e+00> : vector<8xf32>
      %78 = vector.multi_reduction <add>, %77, %cst_73 [0] : vector<64x8xf32> to vector<8xf32>
      %79 = vector.shape_cast %78 : vector<8xf32> to vector<1x8xf32>
      %c0_74 = arith.constant 0 : index
      %c0_75 = arith.constant 0 : index
      %c0_76 = arith.constant 0 : index
      %c0_77 = arith.constant 0 : index
      %80 = vector.load %arg8[%c0_74, %c0_75, %c0_76, %c0_77] : memref<1x1x1x8xf32, #tpu.memory_space<vmem>>, vector<1x1x1x8xf32>
      %81 = vector.shape_cast %80 : vector<1x1x1x8xf32> to vector<1x8xf32>
      %82 = vector.shape_cast %79 : vector<1x8xf32> to vector<1x1x1x8xf32>
      tpu.vector_store %arg8[%c0_74, %c0_75, %c0_76, %c0_77], %82 {strides = array<i32>} : memref<1x1x1x8xf32, #tpu.memory_space<vmem>>, vector<1x1x1x8xf32>,
      %83 = arith.mulf %77, %77 : vector<64x8xf32>
      %cst_78 = arith.constant dense<0.000000e+00> : vector<8xf32>
      %84 = vector.multi_reduction <add>, %83, %cst_78 [0] : vector<64x8xf32> to vector<8xf32>
      %85 = vector.shape_cast %84 : vector<8xf32> to vector<1x8xf32>
      %c0_79 = arith.constant 0 : index
      %c0_80 = arith.constant 0 : index
      %c0_81 = arith.constant 0 : index
      %c0_82 = arith.constant 0 : index
      %86 = vector.load %arg9[%c0_79, %c0_80, %c0_81, %c0_82] : memref<1x1x1x8xf32, #tpu.memory_space<vmem>>, vector<1x1x1x8xf32>
      %87 = vector.shape_cast %86 : vector<1x1x1x8xf32> to vector<1x8xf32>
      %88 = vector.shape_cast %85 : vector<1x8xf32> to vector<1x1x1x8xf32>
      tpu.vector_store %arg9[%c0_79, %c0_80, %c0_81, %c0_82], %88 {strides = array<i32>} : memref<1x1x1x8xf32, #tpu.memory_space<vmem>>, vector<1x1x1x8xf32>,
    } else {
    }
    return
  }
  func.func @transform_0(%arg0: i32, %arg1: i32, %arg2: i32) -> (i32, i32, i32, i32) {
    %0 = arith.addi %arg1, %arg2 : i32
    %c0_i32 = arith.constant 0 : i32
    %c0_i32_0 = arith.constant 0 : i32
    %c0_i32_1 = arith.constant 0 : i32
    return %arg0, %0, %c0_i32, %c0_i32_0 : i32, i32, i32, i32
  }
  func.func @transform_1(%arg0: i32, %arg1: i32, %arg2: i32) -> (i32, i32, i32, i32) {
    %0 = arith.addi %arg1, %arg2 : i32
    %c0_i32 = arith.constant 0 : i32
    %c0_i32_0 = arith.constant 0 : i32
    %c0_i32_1 = arith.constant 0 : i32
    return %arg0, %0, %c0_i32, %c0_i32_0 : i32, i32, i32, i32
  }
  func.func @transform_2(%arg0: i32, %arg1: i32, %arg2: i32) -> (i32, i32, i32, i32) {
    %0 = arith.addi %arg1, %arg2 : i32
    %c0_i32 = arith.constant 0 : i32
    %c0_i32_0 = arith.constant 0 : i32
    %c0_i32_1 = arith.constant 0 : i32
    return %arg0, %0, %c0_i32, %c0_i32_0 : i32, i32, i32, i32
  }
  func.func @transform_3(%arg0: i32, %arg1: i32, %arg2: i32) -> (i32, i32, i32, i32) {
    %c0_i32 = arith.constant 0 : i32
    %c0_i32_0 = arith.constant 0 : i32
    %c0_i32_1 = arith.constant 0 : i32
    %c0_i32_2 = arith.constant 0 : i32
    %c0_i32_3 = arith.constant 0 : i32
    return %c0_i32, %c0_i32_0, %c0_i32_1, %c0_i32_2 : i32, i32, i32, i32
  }
  func.func @transform_4(%arg0: i32, %arg1: i32, %arg2: i32) -> (i32, i32, i32, i32) {
    %c0_i32 = arith.constant 0 : i32
    %c0_i32_0 = arith.constant 0 : i32
    %c0_i32_1 = arith.constant 0 : i32
    return %arg0, %arg1, %c0_i32, %c0_i32_0 : i32, i32, i32, i32
  }
  func.func @transform_5(%arg0: i32, %arg1: i32, %arg2: i32) -> (i32, i32, i32, i32) {
    %c0_i32 = arith.constant 0 : i32
    %c0_i32_0 = arith.constant 0 : i32
    %c0_i32_1 = arith.constant 0 : i32
    return %arg0, %arg1, %c0_i32, %c0_i32_0 : i32, i32, i32, i32
  }
  func.func @transform_6(%arg0: i32, %arg1: i32, %arg2: i32) -> (i32, i32, i32, i32) {
    %c0_i32 = arith.constant 0 : i32
    %c0_i32_0 = arith.constant 0 : i32
    %c0_i32_1 = arith.constant 0 : i32
    return %arg0, %arg1, %c0_i32, %c0_i32_0 : i32, i32, i32, i32
  }
}

module attributes {stable_mosaic.version = 11 : i64} {
  func.func @_in_apply_ds_kernel(%arg0: i32, %arg1: i32, %arg2: memref<1x128x8xf32, #tpu.memory_space<vmem>>, %arg3: memref<1x1x8xf32, #tpu.memory_space<vmem>>, %arg4: memref<1x1x8xf32, #tpu.memory_space<vmem>>, %arg5: memref<1x8xf32, #tpu.memory_space<vmem>>, %arg6: memref<1x8xf32, #tpu.memory_space<vmem>>, %arg7: memref<2x8xbf16, #tpu.memory_space<vmem>>, %arg8: memref<1x128x8xbf16, #tpu.memory_space<vmem>>, %arg9: memref<1x2x128xf32, #tpu.memory_space<vmem>>) attributes {dimension_semantics = [#tpu.dimension_semantics<parallel>, #tpu.dimension_semantics<parallel>], iteration_bounds = array<i64: 1, 2>, scalar_prefetch = 0 : i64, scratch_operands = 0 : i64, tpu.core_type = #tpu.core_type<tc>, window_params = [{transform_indices = @transform_0, window_bounds = array<i64: 1, 128, 8>}, {transform_indices = @transform_1, window_bounds = array<i64: 1, 1, 8>}, {transform_indices = @transform_2, window_bounds = array<i64: 1, 1, 8>}, {pipeline_mode = #tpu.pipeline_mode<synchronous>, transform_indices = @transform_3, window_bounds = array<i64: 1, 8>}, {pipeline_mode = #tpu.pipeline_mode<synchronous>, transform_indices = @transform_4, window_bounds = array<i64: 1, 8>}, {pipeline_mode = #tpu.pipeline_mode<synchronous>, transform_indices = @transform_5, window_bounds = array<i64: 2, 8>}, {transform_indices = @transform_6, window_bounds = array<i64: 1, 128, 8>}, {transform_indices = @transform_7, window_bounds = array<i64: 1, 2, 128>}]} {
    %c0 = arith.constant 0 : index
    %c0_0 = arith.constant 0 : index
    %c0_1 = arith.constant 0 : index
    %0 = vector.load %arg2[%c0, %c0_0, %c0_1] : memref<1x128x8xf32, #tpu.memory_space<vmem>>, vector<1x128x8xf32>
    %1 = vector.shape_cast %0 : vector<1x128x8xf32> to vector<128x8xf32>
    %c0_2 = arith.constant 0 : index
    %c0_3 = arith.constant 0 : index
    %c0_4 = arith.constant 0 : index
    %2 = vector.load %arg3[%c0_2, %c0_3, %c0_4] : memref<1x1x8xf32, #tpu.memory_space<vmem>>, vector<1x1x8xf32>
    %3 = vector.shape_cast %2 : vector<1x1x8xf32> to vector<1x8xf32>
    %4 = vector.broadcast %3 : vector<1x8xf32> to vector<128x8xf32>
    %5 = arith.subf %1, %4 : vector<128x8xf32>
    %c0_5 = arith.constant 0 : index
    %c0_6 = arith.constant 0 : index
    %c0_7 = arith.constant 0 : index
    %6 = vector.load %arg4[%c0_5, %c0_6, %c0_7] : memref<1x1x8xf32, #tpu.memory_space<vmem>>, vector<1x1x8xf32>
    %7 = vector.shape_cast %6 : vector<1x1x8xf32> to vector<1x8xf32>
    %c0_8 = arith.constant 0 : index
    %c0_9 = arith.constant 0 : index
    %8 = vector.load %arg5[%c0_8, %c0_9] : memref<1x8xf32, #tpu.memory_space<vmem>>, vector<1x8xf32>
    %9 = arith.mulf %7, %8 : vector<1x8xf32>
    %10 = vector.broadcast %9 : vector<1x8xf32> to vector<128x8xf32>
    %11 = arith.mulf %5, %10 : vector<128x8xf32>
    %c0_10 = arith.constant 0 : index
    %c0_11 = arith.constant 0 : index
    %12 = vector.load %arg6[%c0_10, %c0_11] : memref<1x8xf32, #tpu.memory_space<vmem>>, vector<1x8xf32>
    %13 = vector.broadcast %12 : vector<1x8xf32> to vector<128x8xf32>
    %14 = arith.addf %11, %13 : vector<128x8xf32>
    %cst = arith.constant 0.000000e+00 : f32
    %15 = vector.broadcast %cst : f32 to vector<128x8xf32>
    %16 = arith.cmpf oge, %14, %15 : vector<128x8xf32>
    %cst_12 = arith.constant 0.00999999977 : f32
    %17 = vector.broadcast %cst_12 : f32 to vector<128x8xf32>
    %18 = arith.mulf %17, %14 : vector<128x8xf32>
    %19 = arith.select %16, %14, %18 : vector<128x8xi1>, vector<128x8xf32>
    %20 = arith.truncf %19 : vector<128x8xf32> to vector<128x8xbf16>
    %c0_13 = arith.constant 0 : index
    %c0_14 = arith.constant 0 : index
    %c0_15 = arith.constant 0 : index
    %21 = vector.load %arg8[%c0_13, %c0_14, %c0_15] : memref<1x128x8xbf16, #tpu.memory_space<vmem>>, vector<1x128x8xbf16>
    %22 = vector.shape_cast %21 : vector<1x128x8xbf16> to vector<128x8xbf16>
    %23 = vector.shape_cast %20 : vector<128x8xbf16> to vector<1x128x8xbf16>
    tpu.vector_store %arg8[%c0_13, %c0_14, %c0_15], %23 {strides = array<i32>} : memref<1x128x8xbf16, #tpu.memory_space<vmem>>, vector<1x128x8xbf16>,
    %c0_16 = arith.constant 0 : index
    %c0_17 = arith.constant 0 : index
    %24 = vector.load %arg7[%c0_16, %c0_17] : memref<2x8xbf16, #tpu.memory_space<vmem>>, vector<2x8xbf16>
    %25 = arith.truncf %19 : vector<128x8xf32> to vector<128x8xbf16>
    %cst_18 = arith.constant dense<0.000000e+00> : vector<2x128xf32>
    %26 = tpu.matmul %24, %25, %cst_18 {dimension_numbers = #tpu.dot_dimension_numbers<[1], [1], [0], [0], [0, 0, 1, 0], [], []>} : vector<2x8xbf16>, vector<128x8xbf16>, vector<2x128xf32> -> vector<2x128xf32>
    %c0_19 = arith.constant 0 : index
    %c0_20 = arith.constant 0 : index
    %c0_21 = arith.constant 0 : index
    %27 = vector.load %arg9[%c0_19, %c0_20, %c0_21] : memref<1x2x128xf32, #tpu.memory_space<vmem>>, vector<1x2x128xf32>
    %28 = vector.shape_cast %27 : vector<1x2x128xf32> to vector<2x128xf32>
    %29 = vector.shape_cast %26 : vector<2x128xf32> to vector<1x2x128xf32>
    tpu.vector_store %arg9[%c0_19, %c0_20, %c0_21], %29 {strides = array<i32>} : memref<1x2x128xf32, #tpu.memory_space<vmem>>, vector<1x2x128xf32>,
    return
  }
  func.func @transform_0(%arg0: i32, %arg1: i32) -> (i32, i32, i32) {
    %c0_i32 = arith.constant 0 : i32
    %c0_i32_0 = arith.constant 0 : i32
    return %arg0, %arg1, %c0_i32 : i32, i32, i32
  }
  func.func @transform_1(%arg0: i32, %arg1: i32) -> (i32, i32, i32) {
    %c0_i32 = arith.constant 0 : i32
    %c0_i32_0 = arith.constant 0 : i32
    %c0_i32_1 = arith.constant 0 : i32
    return %arg0, %c0_i32, %c0_i32_0 : i32, i32, i32
  }
  func.func @transform_2(%arg0: i32, %arg1: i32) -> (i32, i32, i32) {
    %c0_i32 = arith.constant 0 : i32
    %c0_i32_0 = arith.constant 0 : i32
    %c0_i32_1 = arith.constant 0 : i32
    return %arg0, %c0_i32, %c0_i32_0 : i32, i32, i32
  }
  func.func @transform_3(%arg0: i32, %arg1: i32) -> (i32, i32) {
    %c0_i32 = arith.constant 0 : i32
    %c0_i32_0 = arith.constant 0 : i32
    %c0_i32_1 = arith.constant 0 : i32
    return %c0_i32, %c0_i32_0 : i32, i32
  }
  func.func @transform_4(%arg0: i32, %arg1: i32) -> (i32, i32) {
    %c0_i32 = arith.constant 0 : i32
    %c0_i32_0 = arith.constant 0 : i32
    %c0_i32_1 = arith.constant 0 : i32
    return %c0_i32, %c0_i32_0 : i32, i32
  }
  func.func @transform_5(%arg0: i32, %arg1: i32) -> (i32, i32) {
    %c0_i32 = arith.constant 0 : i32
    %c0_i32_0 = arith.constant 0 : i32
    %c0_i32_1 = arith.constant 0 : i32
    return %c0_i32, %c0_i32_0 : i32, i32
  }
  func.func @transform_6(%arg0: i32, %arg1: i32) -> (i32, i32, i32) {
    %c0_i32 = arith.constant 0 : i32
    %c0_i32_0 = arith.constant 0 : i32
    return %arg0, %arg1, %c0_i32 : i32, i32, i32
  }
  func.func @transform_7(%arg0: i32, %arg1: i32) -> (i32, i32, i32) {
    %c0_i32 = arith.constant 0 : i32
    %c0_i32_0 = arith.constant 0 : i32
    return %arg0, %c0_i32, %arg1 : i32, i32, i32
  }
}

module attributes {stable_mosaic.version = 11 : i64} {
  func.func @_gate_kernel(%arg0: i32, %arg1: memref<256x8xbf16, #tpu.memory_space<vmem>>, %arg2: memref<256x32xbf16, #tpu.memory_space<vmem>>, %arg3: memref<8x4xbf16, #tpu.memory_space<vmem>>, %arg4: memref<32x4xbf16, #tpu.memory_space<vmem>>, %arg5: memref<1x4xf32, #tpu.memory_space<vmem>>, %arg6: memref<256x1xf32, #tpu.memory_space<vmem>>) attributes {dimension_semantics = [#tpu.dimension_semantics<parallel>], iteration_bounds = array<i64: 1>, scalar_prefetch = 0 : i64, scratch_operands = 0 : i64, tpu.core_type = #tpu.core_type<tc>, window_params = [{transform_indices = @transform_0, window_bounds = array<i64: 256, 8>}, {transform_indices = @transform_1, window_bounds = array<i64: 256, 32>}, {pipeline_mode = #tpu.pipeline_mode<synchronous>, transform_indices = @transform_2, window_bounds = array<i64: 8, 4>}, {pipeline_mode = #tpu.pipeline_mode<synchronous>, transform_indices = @transform_3, window_bounds = array<i64: 32, 4>}, {pipeline_mode = #tpu.pipeline_mode<synchronous>, transform_indices = @transform_4, window_bounds = array<i64: 1, 4>}, {transform_indices = @transform_5, window_bounds = array<i64: 256, 1>}]} {
    %c0 = arith.constant 0 : index
    %c0_0 = arith.constant 0 : index
    %0 = vector.load %arg1[%c0, %c0_0] : memref<256x8xbf16, #tpu.memory_space<vmem>>, vector<256x8xbf16>
    %c0_1 = arith.constant 0 : index
    %c0_2 = arith.constant 0 : index
    %1 = vector.load %arg3[%c0_1, %c0_2] : memref<8x4xbf16, #tpu.memory_space<vmem>>, vector<8x4xbf16>
    %cst = arith.constant dense<0.000000e+00> : vector<256x4xf32>
    %2 = tpu.matmul %0, %1, %cst {dimension_numbers = #tpu.dot_dimension_numbers<[1], [0], [0], [1], [0, 0, 1, 1], [], []>} : vector<256x8xbf16>, vector<8x4xbf16>, vector<256x4xf32> -> vector<256x4xf32>
    %c0_3 = arith.constant 0 : index
    %c0_4 = arith.constant 0 : index
    %3 = vector.load %arg2[%c0_3, %c0_4] : memref<256x32xbf16, #tpu.memory_space<vmem>>, vector<256x32xbf16>
    %c0_5 = arith.constant 0 : index
    %c0_6 = arith.constant 0 : index
    %4 = vector.load %arg4[%c0_5, %c0_6] : memref<32x4xbf16, #tpu.memory_space<vmem>>, vector<32x4xbf16>
    %cst_7 = arith.constant dense<0.000000e+00> : vector<256x4xf32>
    %5 = tpu.matmul %3, %4, %cst_7 {dimension_numbers = #tpu.dot_dimension_numbers<[1], [0], [0], [1], [0, 0, 1, 1], [], []>} : vector<256x32xbf16>, vector<32x4xbf16>, vector<256x4xf32> -> vector<256x4xf32>
    %6 = arith.addf %2, %5 : vector<256x4xf32>
    %cst_8 = arith.constant 0.000000e+00 : f32
    %7 = vector.broadcast %cst_8 : f32 to vector<256x4xf32>
    %8 = arith.maximumf %6, %7 : vector<256x4xf32>
    %c0_9 = arith.constant 0 : index
    %c0_10 = arith.constant 0 : index
    %9 = vector.load %arg5[%c0_9, %c0_10] : memref<1x4xf32, #tpu.memory_space<vmem>>, vector<1x4xf32>
    %10 = vector.broadcast %9 : vector<1x4xf32> to vector<256x4xf32>
    %11 = arith.mulf %8, %10 : vector<256x4xf32>
    %cst_11 = arith.constant dense<0.000000e+00> : vector<256xf32>
    %12 = vector.multi_reduction <add>, %11, %cst_11 [1] : vector<256x4xf32> to vector<256xf32>
    %13 = vector.shape_cast %12 : vector<256xf32> to vector<256x1xf32>
    %14 = arith.negf %13 : vector<256x1xf32>
    %15 = math.exp %14 : vector<256x1xf32>
    %cst_12 = arith.constant 1.000000e+00 : f32
    %16 = vector.broadcast %cst_12 : f32 to vector<256x1xf32>
    %17 = arith.addf %16, %15 : vector<256x1xf32>
    %18 = arith.divf %16, %17 : vector<256x1xf32>
    %c0_13 = arith.constant 0 : index
    %c0_14 = arith.constant 0 : index
    %19 = vector.load %arg6[%c0_13, %c0_14] : memref<256x1xf32, #tpu.memory_space<vmem>>, vector<256x1xf32>
    tpu.vector_store %arg6[%c0_13, %c0_14], %18 {strides = array<i32>} : memref<256x1xf32, #tpu.memory_space<vmem>>, vector<256x1xf32>,
    return
  }
  func.func @transform_0(%arg0: i32) -> (i32, i32) {
    %c0_i32 = arith.constant 0 : i32
    %c0_i32_0 = arith.constant 0 : i32
    return %arg0, %c0_i32 : i32, i32
  }
  func.func @transform_1(%arg0: i32) -> (i32, i32) {
    %c0_i32 = arith.constant 0 : i32
    %c0_i32_0 = arith.constant 0 : i32
    return %arg0, %c0_i32 : i32, i32
  }
  func.func @transform_2(%arg0: i32) -> (i32, i32) {
    %c0_i32 = arith.constant 0 : i32
    %c0_i32_0 = arith.constant 0 : i32
    %c0_i32_1 = arith.constant 0 : i32
    return %c0_i32, %c0_i32_0 : i32, i32
  }
  func.func @transform_3(%arg0: i32) -> (i32, i32) {
    %c0_i32 = arith.constant 0 : i32
    %c0_i32_0 = arith.constant 0 : i32
    %c0_i32_1 = arith.constant 0 : i32
    return %c0_i32, %c0_i32_0 : i32, i32
  }
  func.func @transform_4(%arg0: i32) -> (i32, i32) {
    %c0_i32 = arith.constant 0 : i32
    %c0_i32_0 = arith.constant 0 : i32
    %c0_i32_1 = arith.constant 0 : i32
    return %c0_i32, %c0_i32_0 : i32, i32
  }
  func.func @transform_5(%arg0: i32) -> (i32, i32) {
    %c0_i32 = arith.constant 0 : i32
    %c0_i32_0 = arith.constant 0 : i32
    return %arg0, %c0_i32 : i32, i32
  }
}

module attributes {stable_mosaic.version = 11 : i64} {
  func.func @_ct_kernel(%arg0: i32, %arg1: memref<256x8xbf16, #tpu.memory_space<vmem>>, %arg2: memref<8x32xbf16, #tpu.memory_space<vmem>>, %arg3: memref<256x32xbf16, #tpu.memory_space<vmem>>) attributes {dimension_semantics = [#tpu.dimension_semantics<parallel>], iteration_bounds = array<i64: 1>, scalar_prefetch = 0 : i64, scratch_operands = 0 : i64, tpu.core_type = #tpu.core_type<tc>, window_params = [{transform_indices = @transform_0, window_bounds = array<i64: 256, 8>}, {pipeline_mode = #tpu.pipeline_mode<synchronous>, transform_indices = @transform_1, window_bounds = array<i64: 8, 32>}, {transform_indices = @transform_2, window_bounds = array<i64: 256, 32>}]} {
    %c0 = arith.constant 0 : index
    %c0_0 = arith.constant 0 : index
    %0 = vector.load %arg1[%c0, %c0_0] : memref<256x8xbf16, #tpu.memory_space<vmem>>, vector<256x8xbf16>
    %c0_1 = arith.constant 0 : index
    %c0_2 = arith.constant 0 : index
    %1 = vector.load %arg2[%c0_1, %c0_2] : memref<8x32xbf16, #tpu.memory_space<vmem>>, vector<8x32xbf16>
    %cst = arith.constant dense<0.000000e+00> : vector<256x32xf32>
    %2 = tpu.matmul %0, %1, %cst {dimension_numbers = #tpu.dot_dimension_numbers<[1], [0], [0], [1], [0, 0, 1, 1], [], []>} : vector<256x8xbf16>, vector<8x32xbf16>, vector<256x32xf32> -> vector<256x32xf32>
    %3 = arith.truncf %2 : vector<256x32xf32> to vector<256x32xbf16>
    %c0_3 = arith.constant 0 : index
    %c0_4 = arith.constant 0 : index
    %4 = vector.load %arg3[%c0_3, %c0_4] : memref<256x32xbf16, #tpu.memory_space<vmem>>, vector<256x32xbf16>
    tpu.vector_store %arg3[%c0_3, %c0_4], %3 {strides = array<i32>} : memref<256x32xbf16, #tpu.memory_space<vmem>>, vector<256x32xbf16>,
    return
  }
  func.func @transform_0(%arg0: i32) -> (i32, i32) {
    %c0_i32 = arith.constant 0 : i32
    %c0_i32_0 = arith.constant 0 : i32
    return %arg0, %c0_i32 : i32, i32
  }
  func.func @transform_1(%arg0: i32) -> (i32, i32) {
    %c0_i32 = arith.constant 0 : i32
    %c0_i32_0 = arith.constant 0 : i32
    %c0_i32_1 = arith.constant 0 : i32
    return %c0_i32, %c0_i32_0 : i32, i32
  }
  func.func @transform_2(%arg0: i32) -> (i32, i32) {
    %c0_i32 = arith.constant 0 : i32
    %c0_i32_0 = arith.constant 0 : i32
    return %arg0, %c0_i32 : i32, i32
  }
}

module attributes {stable_mosaic.version = 11 : i64} {
  func.func @_conv3x3_kernel(%arg0: i32, %arg1: i32, %arg2: i32, %arg3: memref<1x1x328x4xbf16, #tpu.memory_space<vmem>>, %arg4: memref<1x1x328x4xbf16, #tpu.memory_space<vmem>>, %arg5: memref<1x1x328x1xf32, #tpu.memory_space<vmem>>, %arg6: memref<3x3x24x4xbf16, #tpu.memory_space<vmem>>, %arg7: memref<1x1x256x4xf32, #tpu.memory_space<vmem>>, %arg8: memref<1x1x1x4xf32, #tpu.memory_space<vmem>>, %arg9: memref<1x1x1x4xf32, #tpu.memory_space<vmem>>, %arg10: memref<328x4xf32, #tpu.memory_space<vmem>>) attributes {dimension_semantics = [#tpu.dimension_semantics<parallel>, #tpu.dimension_semantics<parallel>, #tpu.dimension_semantics<arbitrary>], iteration_bounds = array<i64: 1, 8, 3>, scalar_prefetch = 0 : i64, scratch_operands = 1 : i64, tpu.core_type = #tpu.core_type<tc>, window_params = [{transform_indices = @transform_0, window_bounds = array<i64: 1, 1, 328, 4>}, {transform_indices = @transform_1, window_bounds = array<i64: 1, 1, 328, 4>}, {transform_indices = @transform_2, window_bounds = array<i64: 1, 1, 328, 1>}, {pipeline_mode = #tpu.pipeline_mode<synchronous>, transform_indices = @transform_3, window_bounds = array<i64: 3, 3, 24, 4>}, {transform_indices = @transform_4, window_bounds = array<i64: 1, 1, 256, 4>}, {transform_indices = @transform_5, window_bounds = array<i64: 1, 1, 1, 4>}, {transform_indices = @transform_6, window_bounds = array<i64: 1, 1, 1, 4>}]} {
    %c0_i32 = arith.constant 0 : i32
    %0 = arith.cmpi eq, %arg2, %c0_i32 : i32
    %1 = arith.extui %0 : i1 to i32
    %c0_i32_0 = arith.constant 0 : i32
    %2 = arith.cmpi ne, %1, %c0_i32_0 : i32
    scf.if %2 {
      %cst_34 = arith.constant 0.000000e+00 : f32
      %44 = vector.broadcast %cst_34 : f32 to vector<328x4xf32>
      %c0_35 = arith.constant 0 : index
      %c0_36 = arith.constant 0 : index
      %45 = vector.load %arg10[%c0_35, %c0_36] : memref<328x4xf32, #tpu.memory_space<vmem>>, vector<328x4xf32>
      tpu.vector_store %arg10[%c0_35, %c0_36], %44 {strides = array<i32>} : memref<328x4xf32, #tpu.memory_space<vmem>>, vector<328x4xf32>,
    } else {
    }
    %c0 = arith.constant 0 : index
    %c0_1 = arith.constant 0 : index
    %c0_2 = arith.constant 0 : index
    %c0_3 = arith.constant 0 : index
    %3 = vector.load %arg3[%c0, %c0_1, %c0_2, %c0_3] : memref<1x1x328x4xbf16, #tpu.memory_space<vmem>>, vector<1x1x328x4xbf16>
    %4 = vector.shape_cast %3 : vector<1x1x328x4xbf16> to vector<328x4xbf16>
    %5 = arith.extf %4 : vector<328x4xbf16> to vector<328x4xf32>
    %c0_4 = arith.constant 0 : index
    %c0_5 = arith.constant 0 : index
    %c0_6 = arith.constant 0 : index
    %c0_7 = arith.constant 0 : index
    %6 = vector.load %arg4[%c0_4, %c0_5, %c0_6, %c0_7] : memref<1x1x328x4xbf16, #tpu.memory_space<vmem>>, vector<1x1x328x4xbf16>
    %7 = vector.shape_cast %6 : vector<1x1x328x4xbf16> to vector<328x4xbf16>
    %8 = arith.extf %7 : vector<328x4xbf16> to vector<328x4xf32>
    %c0_8 = arith.constant 0 : index
    %c0_9 = arith.constant 0 : index
    %c0_10 = arith.constant 0 : index
    %c0_11 = arith.constant 0 : index
    %9 = vector.load %arg5[%c0_8, %c0_9, %c0_10, %c0_11] : memref<1x1x328x1xf32, #tpu.memory_space<vmem>>, vector<1x1x328x1xf32>
    %10 = vector.shape_cast %9 : vector<1x1x328x1xf32> to vector<328x1xf32>
    %11 = vector.broadcast %10 : vector<328x1xf32> to vector<328x4xf32>
    %12 = arith.mulf %8, %11 : vector<328x4xf32>
    %13 = tpu.concatenate %5, %12 in 1 : vector<328x4xf32>, vector<328x4xf32> -> vector<328x8xf32>
    %c327_i32 = arith.constant 327 : i32
    %14 = tpu.dynamic_rotate %13 by %c327_i32 dim 0 : vector<328x8xf32>, i32 -> vector<328x8xf32>
    %c326_i32 = arith.constant 326 : i32
    %15 = tpu.dynamic_rotate %13 by %c326_i32 dim 0 : vector<328x8xf32>, i32 -> vector<328x8xf32>
    %16 = tpu.concatenate %13, %14, %15 in 1 : vector<328x8xf32>, vector<328x8xf32>, vector<328x8xf32> -> vector<328x24xf32>
    %17 = arith.truncf %16 : vector<328x24xf32> to vector<328x24xbf16>
    %18 = arith.index_cast %arg2 : i32 to index
    %c0_12 = arith.constant 0 : index
    %c0_13 = arith.constant 0 : index
    %c0_14 = arith.constant 0 : index
    %19 = vector.load %arg6[%18, %c0_12, %c0_13, %c0_14] : memref<3x3x24x4xbf16, #tpu.memory_space<vmem>>, vector<1x1x24x4xbf16>
    %20 = vector.shape_cast %19 : vector<1x1x24x4xbf16> to vector<24x4xbf16>
    %cst = arith.constant dense<0.000000e+00> : vector<328x4xf32>
    %21 = tpu.matmul %17, %20, %cst {dimension_numbers = #tpu.dot_dimension_numbers<[1], [0], [0], [1], [0, 0, 1, 1], [], []>} : vector<328x24xbf16>, vector<24x4xbf16>, vector<328x4xf32> -> vector<328x4xf32>
    %c0_15 = arith.constant 0 : index
    %c0_16 = arith.constant 0 : index
    %22 = vector.load %arg10[%c0_15, %c0_16] : memref<328x4xf32, #tpu.memory_space<vmem>>, vector<328x4xf32>
    %23 = arith.addf %22, %21 : vector<328x4xf32>
    %c0_17 = arith.constant 0 : index
    %c0_18 = arith.constant 0 : index
    %24 = vector.load %arg10[%c0_17, %c0_18] : memref<328x4xf32, #tpu.memory_space<vmem>>, vector<328x4xf32>
    tpu.vector_store %arg10[%c0_17, %c0_18], %23 {strides = array<i32>} : memref<328x4xf32, #tpu.memory_space<vmem>>, vector<328x4xf32>,
    %25 = arith.index_cast %arg2 : i32 to index
    %c1 = arith.constant 1 : index
    %c0_19 = arith.constant 0 : index
    %c0_20 = arith.constant 0 : index
    %26 = vector.load %arg6[%25, %c1, %c0_19, %c0_20] : memref<3x3x24x4xbf16, #tpu.memory_space<vmem>>, vector<1x1x24x4xbf16>
    %27 = vector.shape_cast %26 : vector<1x1x24x4xbf16> to vector<24x4xbf16>
    %cst_21 = arith.constant dense<0.000000e+00> : vector<328x4xf32>
    %28 = tpu.matmul %17, %27, %cst_21 {dimension_numbers = #tpu.dot_dimension_numbers<[1], [0], [0], [1], [0, 0, 1, 1], [], []>} : vector<328x24xbf16>, vector<24x4xbf16>, vector<328x4xf32> -> vector<328x4xf32>
    %c0_22 = arith.constant 0 : index
    %c0_23 = arith.constant 0 : index
    %29 = vector.load %arg10[%c0_22, %c0_23] : memref<328x4xf32, #tpu.memory_space<vmem>>, vector<328x4xf32>
    %c310_i32 = arith.constant 310 : i32
    %30 = tpu.dynamic_rotate %28 by %c310_i32 dim 0 : vector<328x4xf32>, i32 -> vector<328x4xf32>
    %31 = arith.addf %29, %30 : vector<328x4xf32>
    %c0_24 = arith.constant 0 : index
    %c0_25 = arith.constant 0 : index
    %32 = vector.load %arg10[%c0_24, %c0_25] : memref<328x4xf32, #tpu.memory_space<vmem>>, vector<328x4xf32>
    tpu.vector_store %arg10[%c0_24, %c0_25], %31 {strides = array<i32>} : memref<328x4xf32, #tpu.memory_space<vmem>>, vector<328x4xf32>,
    %33 = arith.index_cast %arg2 : i32 to index
    %c2 = arith.constant 2 : index
    %c0_26 = arith.constant 0 : index
    %c0_27 = arith.constant 0 : index
    %34 = vector.load %arg6[%33, %c2, %c0_26, %c0_27] : memref<3x3x24x4xbf16, #tpu.memory_space<vmem>>, vector<1x1x24x4xbf16>
    %35 = vector.shape_cast %34 : vector<1x1x24x4xbf16> to vector<24x4xbf16>
    %cst_28 = arith.constant dense<0.000000e+00> : vector<328x4xf32>
    %36 = tpu.matmul %17, %35, %cst_28 {dimension_numbers = #tpu.dot_dimension_numbers<[1], [0], [0], [1], [0, 0, 1, 1], [], []>} : vector<328x24xbf16>, vector<24x4xbf16>, vector<328x4xf32> -> vector<328x4xf32>
    %c0_29 = arith.constant 0 : index
    %c0_30 = arith.constant 0 : index
    %37 = vector.load %arg10[%c0_29, %c0_30] : memref<328x4xf32, #tpu.memory_space<vmem>>, vector<328x4xf32>
    %c292_i32 = arith.constant 292 : i32
    %38 = tpu.dynamic_rotate %36 by %c292_i32 dim 0 : vector<328x4xf32>, i32 -> vector<328x4xf32>
    %39 = arith.addf %37, %38 : vector<328x4xf32>
    %c0_31 = arith.constant 0 : index
    %c0_32 = arith.constant 0 : index
    %40 = vector.load %arg10[%c0_31, %c0_32] : memref<328x4xf32, #tpu.memory_space<vmem>>, vector<328x4xf32>
    tpu.vector_store %arg10[%c0_31, %c0_32], %39 {strides = array<i32>} : memref<328x4xf32, #tpu.memory_space<vmem>>, vector<328x4xf32>,
    %c2_i32 = arith.constant 2 : i32
    %41 = arith.cmpi eq, %arg2, %c2_i32 : i32
    %42 = arith.extui %41 : i1 to i32
    %c0_i32_33 = arith.constant 0 : i32
    %43 = arith.cmpi ne, %42, %c0_i32_33 : i32
    scf.if %43 {
      %c0_34 = arith.constant 0 : index
      %c0_35 = arith.constant 0 : index
      %44 = vector.load %arg10[%c0_34, %c0_35] : memref<328x4xf32, #tpu.memory_space<vmem>>, vector<16x4xf32>
      %c0_36 = arith.constant 0 : index
      %c0_37 = arith.constant 0 : index
      %c0_38 = arith.constant 0 : index
      %c0_39 = arith.constant 0 : index
      %45 = vector.load %arg7[%c0_36, %c0_37, %c0_38, %c0_39] : memref<1x1x256x4xf32, #tpu.memory_space<vmem>>, vector<1x1x16x4xf32>
      %46 = vector.shape_cast %45 : vector<1x1x16x4xf32> to vector<16x4xf32>
      %47 = vector.shape_cast %44 : vector<16x4xf32> to vector<1x1x16x4xf32>
      tpu.vector_store %arg7[%c0_36, %c0_37, %c0_38, %c0_39], %47 {strides = array<i32>} : memref<1x1x256x4xf32, #tpu.memory_space<vmem>>, vector<1x1x16x4xf32>,
      %c18 = arith.constant 18 : index
      %c0_40 = arith.constant 0 : index
      %48 = vector.load %arg10[%c18, %c0_40] : memref<328x4xf32, #tpu.memory_space<vmem>>, vector<16x4xf32>
      %c0_41 = arith.constant 0 : index
      %c0_42 = arith.constant 0 : index
      %c16 = arith.constant 16 : index
      %c0_43 = arith.constant 0 : index
      %49 = vector.load %arg7[%c0_41, %c0_42, %c16, %c0_43] : memref<1x1x256x4xf32, #tpu.memory_space<vmem>>, vector<1x1x16x4xf32>
      %50 = vector.shape_cast %49 : vector<1x1x16x4xf32> to vector<16x4xf32>
      %51 = vector.shape_cast %48 : vector<16x4xf32> to vector<1x1x16x4xf32>
      tpu.vector_store %arg7[%c0_41, %c0_42, %c16, %c0_43], %51 {strides = array<i32>} : memref<1x1x256x4xf32, #tpu.memory_space<vmem>>, vector<1x1x16x4xf32>,
      %c36 = arith.constant 36 : index
      %c0_44 = arith.constant 0 : index
      %52 = vector.load %arg10[%c36, %c0_44] : memref<328x4xf32, #tpu.memory_space<vmem>>, vector<16x4xf32>
      %c0_45 = arith.constant 0 : index
      %c0_46 = arith.constant 0 : index
      %c32 = arith.constant 32 : index
      %c0_47 = arith.constant 0 : index
      %53 = vector.load %arg7[%c0_45, %c0_46, %c32, %c0_47] : memref<1x1x256x4xf32, #tpu.memory_space<vmem>>, vector<1x1x16x4xf32>
      %54 = vector.shape_cast %53 : vector<1x1x16x4xf32> to vector<16x4xf32>
      %55 = vector.shape_cast %52 : vector<16x4xf32> to vector<1x1x16x4xf32>
      tpu.vector_store %arg7[%c0_45, %c0_46, %c32, %c0_47], %55 {strides = array<i32>} : memref<1x1x256x4xf32, #tpu.memory_space<vmem>>, vector<1x1x16x4xf32>,
      %c54 = arith.constant 54 : index
      %c0_48 = arith.constant 0 : index
      %56 = vector.load %arg10[%c54, %c0_48] : memref<328x4xf32, #tpu.memory_space<vmem>>, vector<16x4xf32>
      %c0_49 = arith.constant 0 : index
      %c0_50 = arith.constant 0 : index
      %c48 = arith.constant 48 : index
      %c0_51 = arith.constant 0 : index
      %57 = vector.load %arg7[%c0_49, %c0_50, %c48, %c0_51] : memref<1x1x256x4xf32, #tpu.memory_space<vmem>>, vector<1x1x16x4xf32>
      %58 = vector.shape_cast %57 : vector<1x1x16x4xf32> to vector<16x4xf32>
      %59 = vector.shape_cast %56 : vector<16x4xf32> to vector<1x1x16x4xf32>
      tpu.vector_store %arg7[%c0_49, %c0_50, %c48, %c0_51], %59 {strides = array<i32>} : memref<1x1x256x4xf32, #tpu.memory_space<vmem>>, vector<1x1x16x4xf32>,
      %c72 = arith.constant 72 : index
      %c0_52 = arith.constant 0 : index
      %60 = vector.load %arg10[%c72, %c0_52] : memref<328x4xf32, #tpu.memory_space<vmem>>, vector<16x4xf32>
      %c0_53 = arith.constant 0 : index
      %c0_54 = arith.constant 0 : index
      %c64 = arith.constant 64 : index
      %c0_55 = arith.constant 0 : index
      %61 = vector.load %arg7[%c0_53, %c0_54, %c64, %c0_55] : memref<1x1x256x4xf32, #tpu.memory_space<vmem>>, vector<1x1x16x4xf32>
      %62 = vector.shape_cast %61 : vector<1x1x16x4xf32> to vector<16x4xf32>
      %63 = vector.shape_cast %60 : vector<16x4xf32> to vector<1x1x16x4xf32>
      tpu.vector_store %arg7[%c0_53, %c0_54, %c64, %c0_55], %63 {strides = array<i32>} : memref<1x1x256x4xf32, #tpu.memory_space<vmem>>, vector<1x1x16x4xf32>,
      %c90 = arith.constant 90 : index
      %c0_56 = arith.constant 0 : index
      %64 = vector.load %arg10[%c90, %c0_56] : memref<328x4xf32, #tpu.memory_space<vmem>>, vector<16x4xf32>
      %c0_57 = arith.constant 0 : index
      %c0_58 = arith.constant 0 : index
      %c80 = arith.constant 80 : index
      %c0_59 = arith.constant 0 : index
      %65 = vector.load %arg7[%c0_57, %c0_58, %c80, %c0_59] : memref<1x1x256x4xf32, #tpu.memory_space<vmem>>, vector<1x1x16x4xf32>
      %66 = vector.shape_cast %65 : vector<1x1x16x4xf32> to vector<16x4xf32>
      %67 = vector.shape_cast %64 : vector<16x4xf32> to vector<1x1x16x4xf32>
      tpu.vector_store %arg7[%c0_57, %c0_58, %c80, %c0_59], %67 {strides = array<i32>} : memref<1x1x256x4xf32, #tpu.memory_space<vmem>>, vector<1x1x16x4xf32>,
      %c108 = arith.constant 108 : index
      %c0_60 = arith.constant 0 : index
      %68 = vector.load %arg10[%c108, %c0_60] : memref<328x4xf32, #tpu.memory_space<vmem>>, vector<16x4xf32>
      %c0_61 = arith.constant 0 : index
      %c0_62 = arith.constant 0 : index
      %c96 = arith.constant 96 : index
      %c0_63 = arith.constant 0 : index
      %69 = vector.load %arg7[%c0_61, %c0_62, %c96, %c0_63] : memref<1x1x256x4xf32, #tpu.memory_space<vmem>>, vector<1x1x16x4xf32>
      %70 = vector.shape_cast %69 : vector<1x1x16x4xf32> to vector<16x4xf32>
      %71 = vector.shape_cast %68 : vector<16x4xf32> to vector<1x1x16x4xf32>
      tpu.vector_store %arg7[%c0_61, %c0_62, %c96, %c0_63], %71 {strides = array<i32>} : memref<1x1x256x4xf32, #tpu.memory_space<vmem>>, vector<1x1x16x4xf32>,
      %c126 = arith.constant 126 : index
      %c0_64 = arith.constant 0 : index
      %72 = vector.load %arg10[%c126, %c0_64] : memref<328x4xf32, #tpu.memory_space<vmem>>, vector<16x4xf32>
      %c0_65 = arith.constant 0 : index
      %c0_66 = arith.constant 0 : index
      %c112 = arith.constant 112 : index
      %c0_67 = arith.constant 0 : index
      %73 = vector.load %arg7[%c0_65, %c0_66, %c112, %c0_67] : memref<1x1x256x4xf32, #tpu.memory_space<vmem>>, vector<1x1x16x4xf32>
      %74 = vector.shape_cast %73 : vector<1x1x16x4xf32> to vector<16x4xf32>
      %75 = vector.shape_cast %72 : vector<16x4xf32> to vector<1x1x16x4xf32>
      tpu.vector_store %arg7[%c0_65, %c0_66, %c112, %c0_67], %75 {strides = array<i32>} : memref<1x1x256x4xf32, #tpu.memory_space<vmem>>, vector<1x1x16x4xf32>,
      %c144 = arith.constant 144 : index
      %c0_68 = arith.constant 0 : index
      %76 = vector.load %arg10[%c144, %c0_68] : memref<328x4xf32, #tpu.memory_space<vmem>>, vector<16x4xf32>
      %c0_69 = arith.constant 0 : index
      %c0_70 = arith.constant 0 : index
      %c128 = arith.constant 128 : index
      %c0_71 = arith.constant 0 : index
      %77 = vector.load %arg7[%c0_69, %c0_70, %c128, %c0_71] : memref<1x1x256x4xf32, #tpu.memory_space<vmem>>, vector<1x1x16x4xf32>
      %78 = vector.shape_cast %77 : vector<1x1x16x4xf32> to vector<16x4xf32>
      %79 = vector.shape_cast %76 : vector<16x4xf32> to vector<1x1x16x4xf32>
      tpu.vector_store %arg7[%c0_69, %c0_70, %c128, %c0_71], %79 {strides = array<i32>} : memref<1x1x256x4xf32, #tpu.memory_space<vmem>>, vector<1x1x16x4xf32>,
      %c162 = arith.constant 162 : index
      %c0_72 = arith.constant 0 : index
      %80 = vector.load %arg10[%c162, %c0_72] : memref<328x4xf32, #tpu.memory_space<vmem>>, vector<16x4xf32>
      %c0_73 = arith.constant 0 : index
      %c0_74 = arith.constant 0 : index
      %c144_75 = arith.constant 144 : index
      %c0_76 = arith.constant 0 : index
      %81 = vector.load %arg7[%c0_73, %c0_74, %c144_75, %c0_76] : memref<1x1x256x4xf32, #tpu.memory_space<vmem>>, vector<1x1x16x4xf32>
      %82 = vector.shape_cast %81 : vector<1x1x16x4xf32> to vector<16x4xf32>
      %83 = vector.shape_cast %80 : vector<16x4xf32> to vector<1x1x16x4xf32>
      tpu.vector_store %arg7[%c0_73, %c0_74, %c144_75, %c0_76], %83 {strides = array<i32>} : memref<1x1x256x4xf32, #tpu.memory_space<vmem>>, vector<1x1x16x4xf32>,
      %c180 = arith.constant 180 : index
      %c0_77 = arith.constant 0 : index
      %84 = vector.load %arg10[%c180, %c0_77] : memref<328x4xf32, #tpu.memory_space<vmem>>, vector<16x4xf32>
      %c0_78 = arith.constant 0 : index
      %c0_79 = arith.constant 0 : index
      %c160 = arith.constant 160 : index
      %c0_80 = arith.constant 0 : index
      %85 = vector.load %arg7[%c0_78, %c0_79, %c160, %c0_80] : memref<1x1x256x4xf32, #tpu.memory_space<vmem>>, vector<1x1x16x4xf32>
      %86 = vector.shape_cast %85 : vector<1x1x16x4xf32> to vector<16x4xf32>
      %87 = vector.shape_cast %84 : vector<16x4xf32> to vector<1x1x16x4xf32>
      tpu.vector_store %arg7[%c0_78, %c0_79, %c160, %c0_80], %87 {strides = array<i32>} : memref<1x1x256x4xf32, #tpu.memory_space<vmem>>, vector<1x1x16x4xf32>,
      %c198 = arith.constant 198 : index
      %c0_81 = arith.constant 0 : index
      %88 = vector.load %arg10[%c198, %c0_81] : memref<328x4xf32, #tpu.memory_space<vmem>>, vector<16x4xf32>
      %c0_82 = arith.constant 0 : index
      %c0_83 = arith.constant 0 : index
      %c176 = arith.constant 176 : index
      %c0_84 = arith.constant 0 : index
      %89 = vector.load %arg7[%c0_82, %c0_83, %c176, %c0_84] : memref<1x1x256x4xf32, #tpu.memory_space<vmem>>, vector<1x1x16x4xf32>
      %90 = vector.shape_cast %89 : vector<1x1x16x4xf32> to vector<16x4xf32>
      %91 = vector.shape_cast %88 : vector<16x4xf32> to vector<1x1x16x4xf32>
      tpu.vector_store %arg7[%c0_82, %c0_83, %c176, %c0_84], %91 {strides = array<i32>} : memref<1x1x256x4xf32, #tpu.memory_space<vmem>>, vector<1x1x16x4xf32>,
      %c216 = arith.constant 216 : index
      %c0_85 = arith.constant 0 : index
      %92 = vector.load %arg10[%c216, %c0_85] : memref<328x4xf32, #tpu.memory_space<vmem>>, vector<16x4xf32>
      %c0_86 = arith.constant 0 : index
      %c0_87 = arith.constant 0 : index
      %c192 = arith.constant 192 : index
      %c0_88 = arith.constant 0 : index
      %93 = vector.load %arg7[%c0_86, %c0_87, %c192, %c0_88] : memref<1x1x256x4xf32, #tpu.memory_space<vmem>>, vector<1x1x16x4xf32>
      %94 = vector.shape_cast %93 : vector<1x1x16x4xf32> to vector<16x4xf32>
      %95 = vector.shape_cast %92 : vector<16x4xf32> to vector<1x1x16x4xf32>
      tpu.vector_store %arg7[%c0_86, %c0_87, %c192, %c0_88], %95 {strides = array<i32>} : memref<1x1x256x4xf32, #tpu.memory_space<vmem>>, vector<1x1x16x4xf32>,
      %c234 = arith.constant 234 : index
      %c0_89 = arith.constant 0 : index
      %96 = vector.load %arg10[%c234, %c0_89] : memref<328x4xf32, #tpu.memory_space<vmem>>, vector<16x4xf32>
      %c0_90 = arith.constant 0 : index
      %c0_91 = arith.constant 0 : index
      %c208 = arith.constant 208 : index
      %c0_92 = arith.constant 0 : index
      %97 = vector.load %arg7[%c0_90, %c0_91, %c208, %c0_92] : memref<1x1x256x4xf32, #tpu.memory_space<vmem>>, vector<1x1x16x4xf32>
      %98 = vector.shape_cast %97 : vector<1x1x16x4xf32> to vector<16x4xf32>
      %99 = vector.shape_cast %96 : vector<16x4xf32> to vector<1x1x16x4xf32>
      tpu.vector_store %arg7[%c0_90, %c0_91, %c208, %c0_92], %99 {strides = array<i32>} : memref<1x1x256x4xf32, #tpu.memory_space<vmem>>, vector<1x1x16x4xf32>,
      %c252 = arith.constant 252 : index
      %c0_93 = arith.constant 0 : index
      %100 = vector.load %arg10[%c252, %c0_93] : memref<328x4xf32, #tpu.memory_space<vmem>>, vector<16x4xf32>
      %c0_94 = arith.constant 0 : index
      %c0_95 = arith.constant 0 : index
      %c224 = arith.constant 224 : index
      %c0_96 = arith.constant 0 : index
      %101 = vector.load %arg7[%c0_94, %c0_95, %c224, %c0_96] : memref<1x1x256x4xf32, #tpu.memory_space<vmem>>, vector<1x1x16x4xf32>
      %102 = vector.shape_cast %101 : vector<1x1x16x4xf32> to vector<16x4xf32>
      %103 = vector.shape_cast %100 : vector<16x4xf32> to vector<1x1x16x4xf32>
      tpu.vector_store %arg7[%c0_94, %c0_95, %c224, %c0_96], %103 {strides = array<i32>} : memref<1x1x256x4xf32, #tpu.memory_space<vmem>>, vector<1x1x16x4xf32>,
      %c270 = arith.constant 270 : index
      %c0_97 = arith.constant 0 : index
      %104 = vector.load %arg10[%c270, %c0_97] : memref<328x4xf32, #tpu.memory_space<vmem>>, vector<16x4xf32>
      %c0_98 = arith.constant 0 : index
      %c0_99 = arith.constant 0 : index
      %c240 = arith.constant 240 : index
      %c0_100 = arith.constant 0 : index
      %105 = vector.load %arg7[%c0_98, %c0_99, %c240, %c0_100] : memref<1x1x256x4xf32, #tpu.memory_space<vmem>>, vector<1x1x16x4xf32>
      %106 = vector.shape_cast %105 : vector<1x1x16x4xf32> to vector<16x4xf32>
      %107 = vector.shape_cast %104 : vector<16x4xf32> to vector<1x1x16x4xf32>
      tpu.vector_store %arg7[%c0_98, %c0_99, %c240, %c0_100], %107 {strides = array<i32>} : memref<1x1x256x4xf32, #tpu.memory_space<vmem>>, vector<1x1x16x4xf32>,
      %c0_101 = arith.constant 0 : index
      %c0_102 = arith.constant 0 : index
      %c0_103 = arith.constant 0 : index
      %c0_104 = arith.constant 0 : index
      %108 = vector.load %arg7[%c0_101, %c0_102, %c0_103, %c0_104] : memref<1x1x256x4xf32, #tpu.memory_space<vmem>>, vector<1x1x256x4xf32>
      %109 = vector.shape_cast %108 : vector<1x1x256x4xf32> to vector<256x4xf32>
      %cst_105 = arith.constant dense<0.000000e+00> : vector<4xf32>
      %110 = vector.multi_reduction <add>, %109, %cst_105 [0] : vector<256x4xf32> to vector<4xf32>
      %111 = vector.shape_cast %110 : vector<4xf32> to vector<1x4xf32>
      %c0_106 = arith.constant 0 : index
      %c0_107 = arith.constant 0 : index
      %c0_108 = arith.constant 0 : index
      %c0_109 = arith.constant 0 : index
      %112 = vector.load %arg8[%c0_106, %c0_107, %c0_108, %c0_109] : memref<1x1x1x4xf32, #tpu.memory_space<vmem>>, vector<1x1x1x4xf32>
      %113 = vector.shape_cast %112 : vector<1x1x1x4xf32> to vector<1x4xf32>
      %114 = vector.shape_cast %111 : vector<1x4xf32> to vector<1x1x1x4xf32>
      tpu.vector_store %arg8[%c0_106, %c0_107, %c0_108, %c0_109], %114 {strides = array<i32>} : memref<1x1x1x4xf32, #tpu.memory_space<vmem>>, vector<1x1x1x4xf32>,
      %115 = arith.mulf %109, %109 : vector<256x4xf32>
      %cst_110 = arith.constant dense<0.000000e+00> : vector<4xf32>
      %116 = vector.multi_reduction <add>, %115, %cst_110 [0] : vector<256x4xf32> to vector<4xf32>
      %117 = vector.shape_cast %116 : vector<4xf32> to vector<1x4xf32>
      %c0_111 = arith.constant 0 : index
      %c0_112 = arith.constant 0 : index
      %c0_113 = arith.constant 0 : index
      %c0_114 = arith.constant 0 : index
      %118 = vector.load %arg9[%c0_111, %c0_112, %c0_113, %c0_114] : memref<1x1x1x4xf32, #tpu.memory_space<vmem>>, vector<1x1x1x4xf32>
      %119 = vector.shape_cast %118 : vector<1x1x1x4xf32> to vector<1x4xf32>
      %120 = vector.shape_cast %117 : vector<1x4xf32> to vector<1x1x1x4xf32>
      tpu.vector_store %arg9[%c0_111, %c0_112, %c0_113, %c0_114], %120 {strides = array<i32>} : memref<1x1x1x4xf32, #tpu.memory_space<vmem>>, vector<1x1x1x4xf32>,
    } else {
    }
    return
  }
  func.func @transform_0(%arg0: i32, %arg1: i32, %arg2: i32) -> (i32, i32, i32, i32) {
    %0 = arith.addi %arg1, %arg2 : i32
    %c0_i32 = arith.constant 0 : i32
    %c0_i32_0 = arith.constant 0 : i32
    %c0_i32_1 = arith.constant 0 : i32
    return %arg0, %0, %c0_i32, %c0_i32_0 : i32, i32, i32, i32
  }
  func.func @transform_1(%arg0: i32, %arg1: i32, %arg2: i32) -> (i32, i32, i32, i32) {
    %0 = arith.addi %arg1, %arg2 : i32
    %c0_i32 = arith.constant 0 : i32
    %c0_i32_0 = arith.constant 0 : i32
    %c0_i32_1 = arith.constant 0 : i32
    return %arg0, %0, %c0_i32, %c0_i32_0 : i32, i32, i32, i32
  }
  func.func @transform_2(%arg0: i32, %arg1: i32, %arg2: i32) -> (i32, i32, i32, i32) {
    %0 = arith.addi %arg1, %arg2 : i32
    %c0_i32 = arith.constant 0 : i32
    %c0_i32_0 = arith.constant 0 : i32
    %c0_i32_1 = arith.constant 0 : i32
    return %arg0, %0, %c0_i32, %c0_i32_0 : i32, i32, i32, i32
  }
  func.func @transform_3(%arg0: i32, %arg1: i32, %arg2: i32) -> (i32, i32, i32, i32) {
    %c0_i32 = arith.constant 0 : i32
    %c0_i32_0 = arith.constant 0 : i32
    %c0_i32_1 = arith.constant 0 : i32
    %c0_i32_2 = arith.constant 0 : i32
    %c0_i32_3 = arith.constant 0 : i32
    return %c0_i32, %c0_i32_0, %c0_i32_1, %c0_i32_2 : i32, i32, i32, i32
  }
  func.func @transform_4(%arg0: i32, %arg1: i32, %arg2: i32) -> (i32, i32, i32, i32) {
    %c0_i32 = arith.constant 0 : i32
    %c0_i32_0 = arith.constant 0 : i32
    %c0_i32_1 = arith.constant 0 : i32
    return %arg0, %arg1, %c0_i32, %c0_i32_0 : i32, i32, i32, i32
  }
  func.func @transform_5(%arg0: i32, %arg1: i32, %arg2: i32) -> (i32, i32, i32, i32) {
    %c0_i32 = arith.constant 0 : i32
    %c0_i32_0 = arith.constant 0 : i32
    %c0_i32_1 = arith.constant 0 : i32
    return %arg0, %arg1, %c0_i32, %c0_i32_0 : i32, i32, i32, i32
  }
  func.func @transform_6(%arg0: i32, %arg1: i32, %arg2: i32) -> (i32, i32, i32, i32) {
    %c0_i32 = arith.constant 0 : i32
    %c0_i32_0 = arith.constant 0 : i32
    %c0_i32_1 = arith.constant 0 : i32
    return %arg0, %arg1, %c0_i32, %c0_i32_0 : i32, i32, i32, i32
  }
}

module attributes {stable_mosaic.version = 11 : i64} {
  func.func @_in_apply_ds_kernel(%arg0: i32, %arg1: i32, %arg2: memref<1x1024x4xf32, #tpu.memory_space<vmem>>, %arg3: memref<1x1x4xf32, #tpu.memory_space<vmem>>, %arg4: memref<1x1x4xf32, #tpu.memory_space<vmem>>, %arg5: memref<1x4xf32, #tpu.memory_space<vmem>>, %arg6: memref<1x4xf32, #tpu.memory_space<vmem>>, %arg7: memref<2x4xbf16, #tpu.memory_space<vmem>>, %arg8: memref<1x1024x4xbf16, #tpu.memory_space<vmem>>, %arg9: memref<1x2x1024xf32, #tpu.memory_space<vmem>>) attributes {dimension_semantics = [#tpu.dimension_semantics<parallel>, #tpu.dimension_semantics<parallel>], iteration_bounds = array<i64: 1, 2>, scalar_prefetch = 0 : i64, scratch_operands = 0 : i64, tpu.core_type = #tpu.core_type<tc>, window_params = [{transform_indices = @transform_0, window_bounds = array<i64: 1, 1024, 4>}, {transform_indices = @transform_1, window_bounds = array<i64: 1, 1, 4>}, {transform_indices = @transform_2, window_bounds = array<i64: 1, 1, 4>}, {pipeline_mode = #tpu.pipeline_mode<synchronous>, transform_indices = @transform_3, window_bounds = array<i64: 1, 4>}, {pipeline_mode = #tpu.pipeline_mode<synchronous>, transform_indices = @transform_4, window_bounds = array<i64: 1, 4>}, {pipeline_mode = #tpu.pipeline_mode<synchronous>, transform_indices = @transform_5, window_bounds = array<i64: 2, 4>}, {transform_indices = @transform_6, window_bounds = array<i64: 1, 1024, 4>}, {transform_indices = @transform_7, window_bounds = array<i64: 1, 2, 1024>}]} {
    %c0 = arith.constant 0 : index
    %c0_0 = arith.constant 0 : index
    %c0_1 = arith.constant 0 : index
    %0 = vector.load %arg2[%c0, %c0_0, %c0_1] : memref<1x1024x4xf32, #tpu.memory_space<vmem>>, vector<1x1024x4xf32>
    %1 = vector.shape_cast %0 : vector<1x1024x4xf32> to vector<1024x4xf32>
    %c0_2 = arith.constant 0 : index
    %c0_3 = arith.constant 0 : index
    %c0_4 = arith.constant 0 : index
    %2 = vector.load %arg3[%c0_2, %c0_3, %c0_4] : memref<1x1x4xf32, #tpu.memory_space<vmem>>, vector<1x1x4xf32>
    %3 = vector.shape_cast %2 : vector<1x1x4xf32> to vector<1x4xf32>
    %4 = vector.broadcast %3 : vector<1x4xf32> to vector<1024x4xf32>
    %5 = arith.subf %1, %4 : vector<1024x4xf32>
    %c0_5 = arith.constant 0 : index
    %c0_6 = arith.constant 0 : index
    %c0_7 = arith.constant 0 : index
    %6 = vector.load %arg4[%c0_5, %c0_6, %c0_7] : memref<1x1x4xf32, #tpu.memory_space<vmem>>, vector<1x1x4xf32>
    %7 = vector.shape_cast %6 : vector<1x1x4xf32> to vector<1x4xf32>
    %c0_8 = arith.constant 0 : index
    %c0_9 = arith.constant 0 : index
    %8 = vector.load %arg5[%c0_8, %c0_9] : memref<1x4xf32, #tpu.memory_space<vmem>>, vector<1x4xf32>
    %9 = arith.mulf %7, %8 : vector<1x4xf32>
    %10 = vector.broadcast %9 : vector<1x4xf32> to vector<1024x4xf32>
    %11 = arith.mulf %5, %10 : vector<1024x4xf32>
    %c0_10 = arith.constant 0 : index
    %c0_11 = arith.constant 0 : index
    %12 = vector.load %arg6[%c0_10, %c0_11] : memref<1x4xf32, #tpu.memory_space<vmem>>, vector<1x4xf32>
    %13 = vector.broadcast %12 : vector<1x4xf32> to vector<1024x4xf32>
    %14 = arith.addf %11, %13 : vector<1024x4xf32>
    %cst = arith.constant 0.000000e+00 : f32
    %15 = vector.broadcast %cst : f32 to vector<1024x4xf32>
    %16 = arith.cmpf oge, %14, %15 : vector<1024x4xf32>
    %cst_12 = arith.constant 0.00999999977 : f32
    %17 = vector.broadcast %cst_12 : f32 to vector<1024x4xf32>
    %18 = arith.mulf %17, %14 : vector<1024x4xf32>
    %19 = arith.select %16, %14, %18 : vector<1024x4xi1>, vector<1024x4xf32>
    %20 = arith.truncf %19 : vector<1024x4xf32> to vector<1024x4xbf16>
    %c0_13 = arith.constant 0 : index
    %c0_14 = arith.constant 0 : index
    %c0_15 = arith.constant 0 : index
    %21 = vector.load %arg8[%c0_13, %c0_14, %c0_15] : memref<1x1024x4xbf16, #tpu.memory_space<vmem>>, vector<1x1024x4xbf16>
    %22 = vector.shape_cast %21 : vector<1x1024x4xbf16> to vector<1024x4xbf16>
    %23 = vector.shape_cast %20 : vector<1024x4xbf16> to vector<1x1024x4xbf16>
    tpu.vector_store %arg8[%c0_13, %c0_14, %c0_15], %23 {strides = array<i32>} : memref<1x1024x4xbf16, #tpu.memory_space<vmem>>, vector<1x1024x4xbf16>,
    %c0_16 = arith.constant 0 : index
    %c0_17 = arith.constant 0 : index
    %24 = vector.load %arg7[%c0_16, %c0_17] : memref<2x4xbf16, #tpu.memory_space<vmem>>, vector<2x4xbf16>
    %25 = arith.truncf %19 : vector<1024x4xf32> to vector<1024x4xbf16>
    %cst_18 = arith.constant dense<0.000000e+00> : vector<2x1024xf32>
    %26 = tpu.matmul %24, %25, %cst_18 {dimension_numbers = #tpu.dot_dimension_numbers<[1], [1], [0], [0], [0, 0, 1, 0], [], []>} : vector<2x4xbf16>, vector<1024x4xbf16>, vector<2x1024xf32> -> vector<2x1024xf32>
    %c0_19 = arith.constant 0 : index
    %c0_20 = arith.constant 0 : index
    %c0_21 = arith.constant 0 : index
    %27 = vector.load %arg9[%c0_19, %c0_20, %c0_21] : memref<1x2x1024xf32, #tpu.memory_space<vmem>>, vector<1x2x1024xf32>
    %28 = vector.shape_cast %27 : vector<1x2x1024xf32> to vector<2x1024xf32>
    %29 = vector.shape_cast %26 : vector<2x1024xf32> to vector<1x2x1024xf32>
    tpu.vector_store %arg9[%c0_19, %c0_20, %c0_21], %29 {strides = array<i32>} : memref<1x2x1024xf32, #tpu.memory_space<vmem>>, vector<1x2x1024xf32>,
    return
  }
  func.func @transform_0(%arg0: i32, %arg1: i32) -> (i32, i32, i32) {
    %c0_i32 = arith.constant 0 : i32
    %c0_i32_0 = arith.constant 0 : i32
    return %arg0, %arg1, %c0_i32 : i32, i32, i32
  }
  func.func @transform_1(%arg0: i32, %arg1: i32) -> (i32, i32, i32) {
    %c0_i32 = arith.constant 0 : i32
    %c0_i32_0 = arith.constant 0 : i32
    %c0_i32_1 = arith.constant 0 : i32
    return %arg0, %c0_i32, %c0_i32_0 : i32, i32, i32
  }
  func.func @transform_2(%arg0: i32, %arg1: i32) -> (i32, i32, i32) {
    %c0_i32 = arith.constant 0 : i32
    %c0_i32_0 = arith.constant 0 : i32
    %c0_i32_1 = arith.constant 0 : i32
    return %arg0, %c0_i32, %c0_i32_0 : i32, i32, i32
  }
  func.func @transform_3(%arg0: i32, %arg1: i32) -> (i32, i32) {
    %c0_i32 = arith.constant 0 : i32
    %c0_i32_0 = arith.constant 0 : i32
    %c0_i32_1 = arith.constant 0 : i32
    return %c0_i32, %c0_i32_0 : i32, i32
  }
  func.func @transform_4(%arg0: i32, %arg1: i32) -> (i32, i32) {
    %c0_i32 = arith.constant 0 : i32
    %c0_i32_0 = arith.constant 0 : i32
    %c0_i32_1 = arith.constant 0 : i32
    return %c0_i32, %c0_i32_0 : i32, i32
  }
  func.func @transform_5(%arg0: i32, %arg1: i32) -> (i32, i32) {
    %c0_i32 = arith.constant 0 : i32
    %c0_i32_0 = arith.constant 0 : i32
    %c0_i32_1 = arith.constant 0 : i32
    return %c0_i32, %c0_i32_0 : i32, i32
  }
  func.func @transform_6(%arg0: i32, %arg1: i32) -> (i32, i32, i32) {
    %c0_i32 = arith.constant 0 : i32
    %c0_i32_0 = arith.constant 0 : i32
    return %arg0, %arg1, %c0_i32 : i32, i32, i32
  }
  func.func @transform_7(%arg0: i32, %arg1: i32) -> (i32, i32, i32) {
    %c0_i32 = arith.constant 0 : i32
    %c0_i32_0 = arith.constant 0 : i32
    return %arg0, %c0_i32, %arg1 : i32, i32, i32
  }
}

</mosaic_0001>

<llo_original>
// kernel: _lambda_.9
$region0: #{_lambda_.9}
  #allocation0 [shape = 'u32[]', space=smem, size = 0x4, offset = 0x4, fixed_abs, tag = 'smem constant byte address 0x4 - core index']
  #allocation1 [shape = 'u32[72,128]{1,0:T(1,128)}', space=vmem, size = 0x9000, scoped, tag = 'internal scratch']
  %s0 = inlined_call_operand.hbm [shape: f32[32,8], index: 0, kind: input, shape index: {}]
  %s1 = inlined_call_operand.vmem [shape: bf16[32,64], index: 1, kind: input, shape index: {}]
  %s2 = inlined_call_operand.hbm [shape: bf16[8,8], index: 2, kind: input, shape index: {}]
  %s3 = inlined_call_operand.hbm [shape: bf16[64,8], index: 3, kind: input, shape index: {}]
  %s4 = inlined_call_operand.hbm [shape: f32[1,8], index: 4, kind: input, shape index: {}]
  %s5 = inlined_call_operand.vmem [shape: f32[32,1], index: 5, kind: output, shape index: {}]
  %s6 = sld [smem:[#allocation0]]
  $region46: #{_lambda_.9} parent=0
    _
  %s8 = ssub.s32 1, %s6
  %s9 = scalar_select 0, %s8, %s6
  $region1: #{_lambda_.9} parent=0
    #allocation2 [shape = 'u8[16384]{0}', space=vmem, size = 0x4000, scoped, tag = 'input window, operand 0, single buffered']
    #allocation3 [shape = 's32[1]{0}', space=sflag, size = 0x4, scoped, tag = 'scoped memory for _lambda_.9']
    #allocation4 [shape = 'u8[2048]{0}', space=vmem, size = 0x800, scoped, tag = 'input window, operand 2, single buffered']
    #allocation5 [shape = 's32[1]{0}', space=sflag, size = 0x4, scoped, tag = 'scoped memory for _lambda_.9']
    #allocation6 [shape = 'u8[16384]{0}', space=vmem, size = 0x4000, scoped, tag = 'input window, operand 3, single buffered']
    #allocation7 [shape = 'u8[512]{0}', space=vmem, size = 0x400, scoped, tag = 'input window, operand 4, single buffered']
    #allocation8 [shape = 's32[1]{0}', space=sflag, size = 0x4, scoped, tag = 'scoped memory for _lambda_.9']
    %10 = vsyncpa [#allocation3], 0
    %11 = vsyncpa [#allocation5], 0
    %12 = vsyncpa [#allocation8], 0
    // Predicated region
    $region2: #{_lambda_.9} parent=1 // pred_check
      _
    $region3: #{_lambda_.9} parent=1 // pred_check_branch
      %14 = sbr.rel (0) target = $region5
    $region4: #{_lambda_.9} parent=1 // pred_region
      %16 = vsyncadd [#allocation3], 0
      %s17 = sshll.u32 %s0, 4
      %s18 = int_to_ptr.hbm [resolvable:$true] %s17
      %s19 = sshll.u32 [#allocation2], 4
      %s20 = int_to_ptr.vmem [resolvable:$true] %s19
      %25 = dma.hbm_to_vmem [thread:$0]  %s18, 512, %s20, [#allocation3], 128, 128, 8
    $region5: #{_lambda_.9} parent=1 // pred_fallthru
      _
    // Predicated region
    $region6: #{_lambda_.9} parent=1 // pred_check
      _
    $region7: #{_lambda_.9} parent=1 // pred_check_branch
      %27 = sbr.rel (0) target = $region9
    $region8: #{_lambda_.9} parent=1 // pred_region
      _
    $region9: #{_lambda_.9} parent=1 // pred_fallthru
      _
    // Predicated region
    $region10: #{_lambda_.9} parent=1 // pred_check
      _
    $region11: #{_lambda_.9} parent=1 // pred_check_branch
      %29 = sbr.rel (0) target = $region13
    $region12: #{_lambda_.9} parent=1 // pred_region
      %31 = vsyncadd [#allocation5], 0
      %s33 = sshll.u32 %s2, 4
      %s34 = int_to_ptr.hbm [resolvable:$true] %s33
      %s35 = sshll.u32 [#allocation4], 4
      %s36 = int_to_ptr.vmem [resolvable:$true] %s35
      %38 = dma.hbm_to_vmem [thread:$0]  %s34, 64, %s36, [#allocation5]
    $region13: #{_lambda_.9} parent=1 // pred_fallthru
      _
    // Predicated region
    $region14: #{_lambda_.9} parent=1 // pred_check
      _
    $region15: #{_lambda_.9} parent=1 // pred_check_branch
      %40 = sbr.rel (0) target = $region17
    $region16: #{_lambda_.9} parent=1 // pred_region
      %42 = vsyncadd [#allocation5], 0
      %s43 = sshll.u32 %s3, 4
      %s44 = int_to_ptr.hbm [resolvable:$true] %s43
      %s45 = sshll.u32 [#allocation6], 4
      %s46 = int_to_ptr.vmem [resolvable:$true] %s45
      %51 = dma.hbm_to_vmem [thread:$0]  %s44, 512, %s46, [#allocation5], 64, 64, 4
    $region17: #{_lambda_.9} parent=1 // pred_fallthru
      _
    // Predicated region
    $region18: #{_lambda_.9} parent=1 // pred_check
      _
    $region19: #{_lambda_.9} parent=1 // pred_check_branch
      %53 = sbr.rel (0) target = $region21
    $region20: #{_lambda_.9} parent=1 // pred_region
      %55 = vsyncadd [#allocation8], 0
      %s57 = sshll.u32 %s4, 4
      %s58 = int_to_ptr.hbm [resolvable:$true] %s57
      %s59 = sshll.u32 [#allocation7], 4
      %s60 = int_to_ptr.vmem [resolvable:$true] %s59
      %62 = dma.hbm_to_vmem [thread:$0]  %s58, 16, %s60, [#allocation8]
    $region21: #{_lambda_.9} parent=1 // pred_fallthru
      _
    // Predicated region
    $region22: #{_lambda_.9} parent=1 // pred_check
      _
    $region23: #{_lambda_.9} parent=1 // pred_check_branch
      %64 = sbr.rel (0) target = $region25
    $region24: #{_lambda_.9} parent=1 // pred_region
      %66 = dma.done [#allocation3], 512
    $region25: #{_lambda_.9} parent=1 // pred_fallthru
      _
    // Predicated region
    $region26: #{_lambda_.9} parent=1 // pred_check
      _
    $region27: #{_lambda_.9} parent=1 // pred_check_branch
      %68 = sbr.rel (0) target = $region29
    $region28: #{_lambda_.9} parent=1 // pred_region
      %70 = dma.done [#allocation5], 64
    $region29: #{_lambda_.9} parent=1 // pred_fallthru
      _
    // Predicated region
    $region30: #{_lambda_.9} parent=1 // pred_check
      _
    $region31: #{_lambda_.9} parent=1 // pred_check_branch
      %72 = sbr.rel (0) target = $region33
    $region32: #{_lambda_.9} parent=1 // pred_region
      %74 = dma.done [#allocation5], 512
    $region33: #{_lambda_.9} parent=1 // pred_fallthru
      _
    // Predicated region
    $region34: #{_lambda_.9} parent=1 // pred_check
      _
    $region35: #{_lambda_.9} parent=1 // pred_check_branch
      %76 = sbr.rel (0) target = $region37
    $region36: #{_lambda_.9} parent=1 // pred_region
      %78 = dma.done [#allocation8], 16
    $region37: #{_lambda_.9} parent=1 // pred_fallthru
      _
    %v80 = vld [vmem:[#allocation2] sm:$0xff]
    %v81 = vld [vmem:[#allocation2 + $0x8] sm:$0xff]
    %v82 = vld [vmem:[#allocation2 + $0x10] sm:$0xff]
    %v83 = vld [vmem:[#allocation2 + $0x18] sm:$0xff]
    %v84 = vpack.c.bf16 %v81, %v80
    %v85 = vpack.c.bf16 %v83, %v82
    %v86 = vld [vmem:[#allocation4] sm:$0xf]
    %v87 = vld [vmem:[%s1] sm:$0xf]
    %v88 = vld [vmem:[%s1 + $0x4] sm:$0xf]
    %v89 = vld [vmem:[%s1 + $0x8] sm:$0xf]
    %v90 = vld [vmem:[%s1 + $0xc] sm:$0xf]
    %v91 = vld [vmem:[#allocation6] sm:$0xf]
    %v92 = vld [vmem:[#allocation6 + $0x4] sm:$0xf]
    %v93 = vld [vmem:[#allocation6 + $0x8] sm:$0xf]
    %v94 = vld [vmem:[#allocation6 + $0xc] sm:$0xf]
    %v95 = vld [vmem:[#allocation6 + $0x10] sm:$0xf]
    %v96 = vld [vmem:[#allocation6 + $0x14] sm:$0xf]
    %v97 = vld [vmem:[#allocation6 + $0x18] sm:$0xf]
    %v98 = vld [vmem:[#allocation6 + $0x1c] sm:$0xf]
    %v103 = vunpack.c.l.b16 %v87
    %v104 = vunpack.c.l.b16 %v88
    %v105 = vunpack.c.l.b16 %v89
    %v106 = vunpack.c.l.b16 %v90
    %v107 = vpack.c.b16 %v104, %v103
    %v108 = vpack.c.b16 %v106, %v105
    %v117 = vunpack.c.l.b16 %v91
    %v118 = vunpack.c.l.b16 %v92
    %v119 = vunpack.c.l.b16 %v93
    %v120 = vunpack.c.l.b16 %v94
    %v121 = vunpack.c.l.b16 %v95
    %v122 = vunpack.c.l.b16 %v96
    %v123 = vunpack.c.l.b16 %v97
    %v124 = vunpack.c.l.b16 %v98
    %v125 = vpack.c.b16 %v118, %v117
    %v126 = vpack.c.b16 %v120, %v119
    %v127 = vpack.c.b16 %v122, %v121
    %v128 = vpack.c.b16 %v124, %v123
    %vm133 = vcmask 523264
    %v135 = vsel %vm133, %v107, 0
    %v138 = vsel %vm133, %v108, 0
    %140 = vmatpush.bf16.msra.mxu0 0
    %141 = vmatpush.bf16.msra.mxu0 0
    %142 = vmatpush.bf16.msra.mxu0 0
    %143 = vmatpush.bf16.msra.mxu0 0
    %144 = vmatpush.bf16.msra.mxu0 %v128
    %145 = vmatpush.bf16.msra.mxu0 %v127
    %146 = vmatpush.bf16.msra.mxu0 %v126
    %147 = vmatpush.bf16.msra.mxu0 %v125
    %148 = vmatmul.bf16.gmra.mxu0 %v135
    %v149 = vpop.f32.mrf.mxu0
    %v150 = vadd.f32 0.0, %v149
    %v151 = vpop.f32.mrf.mxu0
    %v152 = vadd.f32 0.0, %v151
    %153 = vmatmul.bf16.gmra.mxu0 %v138
    %v154 = vpop.f32.mrf.mxu0
    %v155 = vadd.f32 0.0, %v154
    %v156 = vpop.f32.mrf.mxu0
    %v157 = vadd.f32 0.0, %v156
    %158 = vdwg.mxu0
    %vm159 = vcmask 64512
    %v161 = vsel %vm159, %v84, 0
    %v164 = vsel %vm159, %v85, 0
    %vm166 = vcmask 1043456
    %v168 = vsel %vm166, %v86, 0
    %170 = vmatpush.bf16.msra.mxu0 0
    %171 = vmatpush.bf16.msra.mxu0 0
    %172 = vmatpush.bf16.msra.mxu0 0
    %173 = vmatpush.bf16.msra.mxu0 0
    %174 = vmatpush.bf16.msra.mxu0 0
    %175 = vmatpush.bf16.msra.mxu0 0
    %176 = vmatpush.bf16.msra.mxu0 0
    %177 = vmatpush.bf16.msra.mxu0 %v168
    %178 = vmatmul.bf16.gmra.mxu0 %v161
    %v179 = vpop.f32.mrf.mxu0
    %v180 = vadd.f32 %v150, %v179
    %v181 = vpop.f32.mrf.mxu0
    %v182 = vadd.f32 %v152, %v181
    %183 = vmatmul.bf16.gmra.mxu0 %v164
    %v184 = vpop.f32.mrf.mxu0
    %v185 = vadd.f32 %v155, %v184
    %v186 = vpop.f32.mrf.mxu0
    %v187 = vadd.f32 %v157, %v186
    %188 = vdwg.mxu0
    %v189 = vmax.f32 %v180, 0.0
    %v190 = vmax.f32 %v182, 0.0
    %v191 = vmax.f32 %v185, 0.0
    %v192 = vmax.f32 %v187, 0.0
    %v193 = vld [vmem:[#allocation7] sm:$0x1]
    %v195 = vperm.slane %v193, 0
    %v197 = vmul.f32 %v189, %v195
    %v198 = vmul.f32 %v190, %v195
    %v199 = vmul.f32 %v191, %v195
    %v200 = vmul.f32 %v192, %v195
    %v201 = vsel %vm159, %v197, 0.0
    %202 = vadd.xlane.f32.xlu0 %v201
    %v203 = vpop.xlane.xlu0 %202
    %v204 = vsel %vm159, %v198, 0.0
    %205 = vadd.xlane.f32.xlu0 %v204
    %v206 = vpop.xlane.xlu0 %205
    %v207 = vsel %vm159, %v199, 0.0
    %208 = vadd.xlane.f32.xlu0 %v207
    %v209 = vpop.xlane.xlu0 %208
    %v210 = vsel %vm159, %v200, 0.0
    %211 = vadd.xlane.f32.xlu0 %v210
    %v212 = vpop.xlane.xlu0 %211
    %v213 = vxor.u32 %v203, 2147483648
    %v214 = vxor.u32 %v206, 2147483648
    %v215 = vxor.u32 %v209, 2147483648
    %v216 = vxor.u32 %v212, 2147483648
    %v217 = vmul.f32 %v213, 1.442695
    %v218 = vpow.pop %v217
    %v219 = vmul.f32 %v214, 1.442695
    %v220 = vpow.pop %v219
    %v221 = vmul.f32 %v215, 1.442695
    %v222 = vpow.pop %v221
    %v223 = vmul.f32 %v216, 1.442695
    %v224 = vpow.pop %v223
    %v225 = vadd.f32 %v218, 1.0
    %v226 = vadd.f32 %v220, 1.0
    %v227 = vadd.f32 %v222, 1.0
    %v228 = vadd.f32 %v224, 1.0
    %v229 = vrcp.pop %v225
    %v230 = vmul.f32 %v225, %v229
    %v231 = vsub.f32 1.0, %v230
    %v232 = vmul.f32 %v229, %v231
    %v233 = vadd.f32 %v229, %v232
    %vm234 = vweird.f32 %v225
    %vm235 = vweird.f32 %v229
    %vm236 = vmor %vm234, %vm235
    %v237 = vsel %vm236, %v229, %v233
    %v238 = vand.u32 2147483647, %v225
    %vm239 = vcmp.eq.f32.partialorder %v238, 8.507059e+37
    %v240 = vand.u32 %v225, 2147483648
    %v241 = vor.u32 1.1754944e-38, %v240
    %v242 = vsel %vm239, %v241, %v237
    %v243 = vmul.f32 1.0, %v242
    %v244 = vrcp.pop %v226
    %v245 = vmul.f32 %v226, %v244
    %v246 = vsub.f32 1.0, %v245
    %v247 = vmul.f32 %v244, %v246
    %v248 = vadd.f32 %v244, %v247
    %vm249 = vweird.f32 %v226
    %vm250 = vweird.f32 %v244
    %vm251 = vmor %vm249, %vm250
    %v252 = vsel %vm251, %v244, %v248
    %v253 = vand.u32 2147483647, %v226
    %vm254 = vcmp.eq.f32.partialorder %v253, 8.507059e+37
    %v255 = vand.u32 %v226, 2147483648
    %v256 = vor.u32 1.1754944e-38, %v255
    %v257 = vsel %vm254, %v256, %v252
    %v258 = vmul.f32 1.0, %v257
    %v259 = vrcp.pop %v227
    %v260 = vmul.f32 %v227, %v259
    %v261 = vsub.f32 1.0, %v260
    %v262 = vmul.f32 %v259, %v261
    %v263 = vadd.f32 %v259, %v262
    %vm264 = vweird.f32 %v227
    %vm265 = vweird.f32 %v259
    %vm266 = vmor %vm264, %vm265
    %v267 = vsel %vm266, %v259, %v263
    %v268 = vand.u32 2147483647, %v227
    %vm269 = vcmp.eq.f32.partialorder %v268, 8.507059e+37
    %v270 = vand.u32 %v227, 2147483648
    %v271 = vor.u32 1.1754944e-38, %v270
    %v272 = vsel %vm269, %v271, %v267
    %v273 = vmul.f32 1.0, %v272
    %v274 = vrcp.pop %v228
    %v275 = vmul.f32 %v228, %v274
    %v276 = vsub.f32 1.0, %v275
    %v277 = vmul.f32 %v274, %v276
    %v278 = vadd.f32 %v274, %v277
    %vm279 = vweird.f32 %v228
    %vm280 = vweird.f32 %v274
    %vm281 = vmor %vm279, %vm280
    %v282 = vsel %vm281, %v274, %v278
    %v283 = vand.u32 2147483647, %v228
    %vm284 = vcmp.eq.f32.partialorder %v283, 8.507059e+37
    %v285 = vand.u32 %v228, 2147483648
    %v286 = vor.u32 1.1754944e-38, %v285
    %v287 = vsel %vm284, %v286, %v282
    %v288 = vmul.f32 1.0, %v287
    %vm289 = vcmask 7168
    %290 = vst.msk [vmem:[%s5] sm:$0xff] %vm289, %v243
    %291 = vst.msk [vmem:[%s5 + $0x8] sm:$0xff] %vm289, %v258
    %292 = vst.msk [vmem:[%s5 + $0x10] sm:$0xff] %vm289, %v273
    %293 = vst.msk [vmem:[%s5 + $0x18] sm:$0xff] %vm289, %v288
    // Predicated region
    $region38: #{_lambda_.9} parent=1 // pred_check
      _
    $region39: #{_lambda_.9} parent=1 // pred_check_branch
      %295 = sbr.rel (0) target = $region41
    $region40: #{_lambda_.9} parent=1 // pred_region
      _
    $region41: #{_lambda_.9} parent=1 // pred_fallthru
      _
    // Predicated region
    $region42: #{_lambda_.9} parent=1 // pred_check
      _
    $region43: #{_lambda_.9} parent=1 // pred_check_branch
      %297 = sbr.rel (0) target = $region45
    $region44: #{_lambda_.9} parent=1 // pred_region
      _
    $region45: #{_lambda_.9} parent=1 // pred_fallthru
      _
    %298 = vsyncpa [#allocation3], 1
    %299 = vsyncpa [#allocation5], 1
    %300 = vsyncpa [#allocation8], 1

// kernel: _lambda_.8
$region0: #{_lambda_.8}
  #allocation0 [shape = 'u32[]', space=smem, size = 0x4, offset = 0x4, fixed_abs, tag = 'smem constant byte address 0x4 - core index']
  #allocation1 [shape = 'u32[72,128]{1,0:T(1,128)}', space=vmem, size = 0x9000, scoped, tag = 'internal scratch']
  %s0 = inlined_call_operand.vmem [shape: bf16[32,8], index: 0, kind: input, shape index: {}]
  %s1 = inlined_call_operand.vmem [shape: bf16[8,64], index: 1, kind: input, shape index: {}]
  %s2 = inlined_call_operand.vmem [shape: bf16[32,64], index: 2, kind: output, shape index: {}]
  %s3 = sld [smem:[#allocation0]]
  $region18: #{_lambda_.8} parent=0
    _
  %s5 = ssub.s32 1, %s3
  %s6 = scalar_select 0, %s5, %s3
  // Predicated region
  $region2: #{_lambda_.8} parent=0 // pred_check
    _
  $region3: #{_lambda_.8} parent=0 // pred_check_branch
    %8 = sbr.rel (0) target = $region5
  $region4: #{_lambda_.8} parent=0 // pred_region
    _
  $region5: #{_lambda_.8} parent=0 // pred_fallthru
    _
  // Predicated region
  $region6: #{_lambda_.8} parent=0 // pred_check
    _
  $region7: #{_lambda_.8} parent=0 // pred_check_branch
    %10 = sbr.rel (0) target = $region9
  $region8: #{_lambda_.8} parent=0 // pred_region
    _
  $region9: #{_lambda_.8} parent=0 // pred_fallthru
    _
  %v12 = vld [vmem:[%s0] sm:$0xf]
  %v13 = vld [vmem:[%s0 + $0x4] sm:$0xf]
  %v14 = vld [vmem:[%s0 + $0x8] sm:$0xf]
  %v15 = vld [vmem:[%s0 + $0xc] sm:$0xf]
  %v16 = vld [vmem:[%s1] sm:$0xf]
  %v21 = vunpack.c.l.b16 %v12
  %v22 = vunpack.c.l.b16 %v13
  %v23 = vunpack.c.l.b16 %v14
  %v24 = vunpack.c.l.b16 %v15
  %v25 = vpack.c.b16 %v22, %v21
  %v26 = vpack.c.b16 %v24, %v23
  %vm27 = vcmask 64512
  %v29 = vsel %vm27, %v25, 0
  %v32 = vsel %vm27, %v26, 0
  %vm34 = vcmask 1043456
  %v36 = vsel %vm34, %v16, 0
  %38 = vmatpush.bf16.msra.mxu0 0
  %39 = vmatpush.bf16.msra.mxu0 0
  %40 = vmatpush.bf16.msra.mxu0 0
  %41 = vmatpush.bf16.msra.mxu0 0
  %42 = vmatpush.bf16.msra.mxu0 0
  %43 = vmatpush.bf16.msra.mxu0 0
  %44 = vmatpush.bf16.msra.mxu0 0
  %45 = vmatpush.bf16.msra.mxu0 %v36
  %46 = vmatmul.bf16.gmra.mxu0 %v29
  %v47 = vpop.f32.mrf.mxu0
  %v48 = vadd.f32 0.0, %v47
  %v49 = vpop.f32.mrf.mxu0
  %v50 = vadd.f32 0.0, %v49
  %51 = vmatmul.bf16.gmra.mxu0 %v32
  %v52 = vpop.f32.mrf.mxu0
  %v53 = vadd.f32 0.0, %v52
  %v54 = vpop.f32.mrf.mxu0
  %v55 = vadd.f32 0.0, %v54
  %56 = vdwg.mxu0
  %v57 = vpack.c.bf16 %v48, %v48
  %v58 = vpack.c.bf16 %v50, %v50
  %v59 = vpack.c.bf16 %v53, %v53
  %v60 = vpack.c.bf16 %v55, %v55
  %vm61 = vcmask 519168
  %62 = vst.msk [vmem:[%s2] sm:$0xf] %vm61, %v57
  %63 = vst.msk [vmem:[%s2 + $0x4] sm:$0xf] %vm61, %v58
  %64 = vst.msk [vmem:[%s2 + $0x8] sm:$0xf] %vm61, %v59
  %65 = vst.msk [vmem:[%s2 + $0xc] sm:$0xf] %vm61, %v60
  // Predicated region
  $region10: #{_lambda_.8} parent=0 // pred_check
    _
  $region11: #{_lambda_.8} parent=0 // pred_check_branch
    %67 = sbr.rel (0) target = $region13
  $region12: #{_lambda_.8} parent=0 // pred_region
    _
  $region13: #{_lambda_.8} parent=0 // pred_fallthru
    _
  // Predicated region
  $region14: #{_lambda_.8} parent=0 // pred_check
    _
  $region15: #{_lambda_.8} parent=0 // pred_check_branch
    %69 = sbr.rel (0) target = $region17
  $region16: #{_lambda_.8} parent=0 // pred_region
    _
  $region17: #{_lambda_.8} parent=0 // pred_fallthru
    _

// kernel: _lambda_.11
$region0: #{_lambda_.11}
  #allocation0 [shape = 'u32[]', space=smem, size = 0x4, offset = 0x4, fixed_abs, tag = 'smem constant byte address 0x4 - core index']
  #allocation1 [shape = 'u32[72,128]{1,0:T(1,128)}', space=vmem, size = 0x9000, scoped, tag = 'internal scratch']
  %s0 = inlined_call_operand.vmem [shape: f32[1,256,8], index: 0, kind: input, shape index: {}]
  %s1 = inlined_call_operand.vmem [shape: f32[1,1,8], index: 1, kind: input, shape index: {}]
  %s2 = inlined_call_operand.vmem [shape: f32[1,1,8], index: 2, kind: input, shape index: {}]
  %s3 = inlined_call_operand.vmem [shape: f32[1,8], index: 3, kind: input, shape index: {}]
  %s4 = inlined_call_operand.vmem [shape: f32[1,8], index: 4, kind: input, shape index: {}]
  %s5 = inlined_call_operand.vmem [shape: bf16[2,8], index: 5, kind: input, shape index: {}]
  %s6 = inlined_call_operand.vmem [shape: bf16[1,256,8], index: 6, kind: output, shape index: {0}]
  %s7 = inlined_call_operand.vmem [shape: f32[1,2,256], index: 7, kind: output, shape index: {1}]
  %8 = xla_tuple %s6, %s7
  %s9 = sld [smem:[#allocation0]]
  $region65: #{_lambda_.11} parent=0
    _
  %s11 = ssub.s32 1, %s9
  %s12 = scalar_select 0, %s11, %s9
  loop: start=0, step=1, limit=4
  $region2: #{_lambda_.11} parent=0 // loop_pre_header
    _
  $region3: #{_lambda_.11} parent=0 // loop_header
    %s14 = sphi 0, %s18
    %p15 = scmp.ge.s32.totalorder %s14, 4
    %s21 = sphi 0, %s33
    %s22 = sphi 0, %s29
    %s23 = sphi 0, %s21
    %s24 = sphi 0, %s22
    %s25 = sphi 0, %s23
    %s26 = sphi 0, %s24
    %s38 = sphi 0, %s40
    %s41 = sphi 0, %s38
    %s42 = sphi 0, %s41
    %s58 = sphi 0, %s42
    %s64 = sphi 0, %s66
    %s67 = sphi 0, %s64
    %s68 = sphi 0, %s67
    %s84 = sphi 0, %s68
    %s90 = sphi 0, %s92
    %s93 = sphi 0, %s90
    %s94 = sphi 0, %s93
    %s110 = sphi 0, %s94
    %s114 = sphi 0, %s114
    %s116 = sphi 0, %s114
    %s117 = sphi 0, %s116
    %s131 = sphi 0, %s117
    %s135 = sphi 0, %s135
    %s137 = sphi 0, %s135
    %s138 = sphi 0, %s137
    %s152 = sphi 0, %s138
    %s156 = sphi 0, %s156
    %s158 = sphi 0, %s156
    %s159 = sphi 0, %s158
    %s173 = sphi 0, %s159
    %s181 = sphi 0, %s183
    %s184 = sphi 0, %s181
    %s185 = sphi 0, %s184
    %s201 = sphi 0, %s185
    %s209 = sphi 0, %s211
    %s212 = sphi 0, %s209
    %s213 = sphi 0, %s212
    %s229 = sphi 0, %s213
  $region4: #{_lambda_.11} parent=0 // loop_header_branch
    %17 = sbr.rel (%p15) target = $region8
  $region5: #{_lambda_.11} parent=0 // loop_body
    %s19 = ssub.s32 %s14, 1
    %s20 = ssub.s32 %s14, 2
    %s27 = sadd.s32 1, %s22
    %p28 = scmp.ge.s32.totalorder %s27, 2
    %s29 = scalar_select %p28, 0, %s27
    %s30 = sadd.s32 1, %s21
    %s31 = scalar_select %p28, %s30, %s21
    %p32 = scmp.ge.s32.totalorder %s31, 1
    %s33 = scalar_select %p32, 0, %s31
    %s34 = ssub.s32 %s21, %s33
    %s35 = ssub.s32 %s22, %s29
    %s36 = sor.u32 %s34, %s35
    %p37 = scmp.eq.s32.totalorder %s36, 0
    %s39 = sadd.s32 %s38, 1
    %s40 = scalar_select %p37, %s38, %s39
    %p43 = pneg %p37
    %p44 = scmp.eq.s32.totalorder %s14, 1
    %p45 = por %p43, %p44
    %p46 = scmp.ne.s32.totalorder %s38, %s41
    %p47 = scmp.eq.s32.totalorder %s14, 0
    %p48 = por %p46, %p47
    %p49 = scmp.ne.s32.totalorder %s38, %s41
    %p50 = scmp.eq.s32.totalorder %s19, 1
    %p51 = por %p49, %p50
    %p52 = scmp.ne.s32.totalorder %s41, %s42
    %p53 = scmp.eq.s32.totalorder %s19, 0
    %p54 = por %p52, %p53
    %p55 = scmp.ne.s32.totalorder %s41, %s42
    %p56 = scmp.eq.s32.totalorder %s20, 1
    %p57 = por %p55, %p56
    %p59 = scmp.ne.s32.totalorder %s42, %s58
    %p60 = scmp.eq.s32.totalorder %s20, 0
    %p61 = por %p59, %p60
    %s62 = ssub.s32 %s21, %s33
    %p63 = scmp.eq.s32.totalorder %s62, 0
    %s65 = sadd.s32 %s64, 1
    %s66 = scalar_select %p63, %s64, %s65
    %p69 = pneg %p63
    %p70 = scmp.eq.s32.totalorder %s14, 1
    %p71 = por %p69, %p70
    %p72 = scmp.ne.s32.totalorder %s64, %s67
    %p73 = scmp.eq.s32.totalorder %s14, 0
    %p74 = por %p72, %p73
    %p75 = scmp.ne.s32.totalorder %s64, %s67
    %p76 = scmp.eq.s32.totalorder %s19, 1
    %p77 = por %p75, %p76
    %p78 = scmp.ne.s32.totalorder %s67, %s68
    %p79 = scmp.eq.s32.totalorder %s19, 0
    %p80 = por %p78, %p79
    %p81 = scmp.ne.s32.totalorder %s67, %s68
    %p82 = scmp.eq.s32.totalorder %s20, 1
    %p83 = por %p81, %p82
    %p85 = scmp.ne.s32.totalorder %s68, %s84
    %p86 = scmp.eq.s32.totalorder %s20, 0
    %p87 = por %p85, %p86
    %s88 = ssub.s32 %s21, %s33
    %p89 = scmp.eq.s32.totalorder %s88, 0
    %s91 = sadd.s32 %s90, 1
    %s92 = scalar_select %p89, %s90, %s91
    %p95 = pneg %p89
    %p96 = scmp.eq.s32.totalorder %s14, 1
    %p97 = por %p95, %p96
    %p98 = scmp.ne.s32.totalorder %s90, %s93
    %p99 = scmp.eq.s32.totalorder %s14, 0
    %p100 = por %p98, %p99
    %p101 = scmp.ne.s32.totalorder %s90, %s93
    %p102 = scmp.eq.s32.totalorder %s19, 1
    %p103 = por %p101, %p102
    %p104 = scmp.ne.s32.totalorder %s93, %s94
    %p105 = scmp.eq.s32.totalorder %s19, 0
    %p106 = por %p104, %p105
    %p107 = scmp.ne.s32.totalorder %s93, %s94
    %p108 = scmp.eq.s32.totalorder %s20, 1
    %p109 = por %p107, %p108
    %p111 = scmp.ne.s32.totalorder %s94, %s110
    %p112 = scmp.eq.s32.totalorder %s20, 0
    %p113 = por %p111, %p112
    %s115 = sadd.s32 %s114, 1
    %p118 = scmp.eq.s32.totalorder %s14, 1
    %p119 = scmp.ne.s32.totalorder %s114, %s116
    %p120 = scmp.eq.s32.totalorder %s14, 0
    %p121 = por %p119, %p120
    %p122 = scmp.ne.s32.totalorder %s114, %s116
    %p123 = scmp.eq.s32.totalorder %s19, 1
    %p124 = por %p122, %p123
    %p125 = scmp.ne.s32.totalorder %s116, %s117
    %p126 = scmp.eq.s32.totalorder %s19, 0
    %p127 = por %p125, %p126
    %p128 = scmp.ne.s32.totalorder %s116, %s117
    %p129 = scmp.eq.s32.totalorder %s20, 1
    %p130 = por %p128, %p129
    %p132 = scmp.ne.s32.totalorder %s117, %s131
    %p133 = scmp.eq.s32.totalorder %s20, 0
    %p134 = por %p132, %p133
    %s136 = sadd.s32 %s135, 1
    %p139 = scmp.eq.s32.totalorder %s14, 1
    %p140 = scmp.ne.s32.totalorder %s135, %s137
    %p141 = scmp.eq.s32.totalorder %s14, 0
    %p142 = por %p140, %p141
    %p143 = scmp.ne.s32.totalorder %s135, %s137
    %p144 = scmp.eq.s32.totalorder %s19, 1
    %p145 = por %p143, %p144
    %p146 = scmp.ne.s32.totalorder %s137, %s138
    %p147 = scmp.eq.s32.totalorder %s19, 0
    %p148 = por %p146, %p147
    %p149 = scmp.ne.s32.totalorder %s137, %s138
    %p150 = scmp.eq.s32.totalorder %s20, 1
    %p151 = por %p149, %p150
    %p153 = scmp.ne.s32.totalorder %s138, %s152
    %p154 = scmp.eq.s32.totalorder %s20, 0
    %p155 = por %p153, %p154
    %s157 = sadd.s32 %s156, 1
    %p160 = scmp.eq.s32.totalorder %s14, 1
    %p161 = scmp.ne.s32.totalorder %s156, %s158
    %p162 = scmp.eq.s32.totalorder %s14, 0
    %p163 = por %p161, %p162
    %p164 = scmp.ne.s32.totalorder %s156, %s158
    %p165 = scmp.eq.s32.totalorder %s19, 1
    %p166 = por %p164, %p165
    %p167 = scmp.ne.s32.totalorder %s158, %s159
    %p168 = scmp.eq.s32.totalorder %s19, 0
    %p169 = por %p167, %p168
    %p170 = scmp.ne.s32.totalorder %s158, %s159
    %p171 = scmp.eq.s32.totalorder %s20, 1
    %p172 = por %p170, %p171
    %p174 = scmp.ne.s32.totalorder %s159, %s173
    %p175 = scmp.eq.s32.totalorder %s20, 0
    %p176 = por %p174, %p175
    %s177 = ssub.s32 %s21, %s33
    %s178 = ssub.s32 %s22, %s29
    %s179 = sor.u32 %s177, %s178
    %p180 = scmp.eq.s32.totalorder %s179, 0
    %s182 = sadd.s32 %s181, 1
    %s183 = scalar_select %p180, %s181, %s182
    %p186 = pneg %p180
    %p187 = scmp.eq.s32.totalorder %s14, 1
    %p188 = por %p186, %p187
    %p189 = scmp.ne.s32.totalorder %s181, %s184
    %p190 = scmp.eq.s32.totalorder %s14, 0
    %p191 = por %p189, %p190
    %p192 = scmp.ne.s32.totalorder %s181, %s184
    %p193 = scmp.eq.s32.totalorder %s19, 1
    %p194 = por %p192, %p193
    %p195 = scmp.ne.s32.totalorder %s184, %s185
    %p196 = scmp.eq.s32.totalorder %s19, 0
    %p197 = por %p195, %p196
    %p198 = scmp.ne.s32.totalorder %s184, %s185
    %p199 = scmp.eq.s32.totalorder %s20, 1
    %p200 = por %p198, %p199
    %p202 = scmp.ne.s32.totalorder %s185, %s201
    %p203 = scmp.eq.s32.totalorder %s20, 0
    %p204 = por %p202, %p203
    %s205 = ssub.s32 %s21, %s33
    %s206 = ssub.s32 %s22, %s29
    %s207 = sor.u32 %s205, %s206
    %p208 = scmp.eq.s32.totalorder %s207, 0
    %s210 = sadd.s32 %s209, 1
    %s211 = scalar_select %p208, %s209, %s210
    %p214 = pneg %p208
    %p215 = scmp.eq.s32.totalorder %s14, 1
    %p216 = por %p214, %p215
    %p217 = scmp.ne.s32.totalorder %s209, %s212
    %p218 = scmp.eq.s32.totalorder %s14, 0
    %p219 = por %p217, %p218
    %p220 = scmp.ne.s32.totalorder %s209, %s212
    %p221 = scmp.eq.s32.totalorder %s19, 1
    %p222 = por %p220, %p221
    %p223 = scmp.ne.s32.totalorder %s212, %s213
    %p224 = scmp.eq.s32.totalorder %s19, 0
    %p225 = por %p223, %p224
    %p226 = scmp.ne.s32.totalorder %s212, %s213
    %p227 = scmp.eq.s32.totalorder %s20, 1
    %p228 = por %p226, %p227
    %p230 = scmp.ne.s32.totalorder %s213, %s229
    %p231 = scmp.eq.s32.totalorder %s20, 0
    %p232 = por %p230, %p231
    %p233 = scmp.le.s32.totalorder 1, %s14
    %p234 = scmp.lt.s32.totalorder %s14, 3
    %p235 = pnand %p233, %p234
    %p236 = pneg %p235
    // Predicated region
    $region9: #{_lambda_.11} parent=5 // pred_check
      _
    $region10: #{_lambda_.11} parent=5 // pred_check_branch
      %238 = sbr.rel (%p235) target = $region12
    $region11: #{_lambda_.11} parent=5 // pred_region
      %s239 = ssub.s32 %s14, 1
      // Predicated region
      $region13: #{_lambda_.11} parent=11 // pred_check
        %p240 = pneg %p80
      $region14: #{_lambda_.11} parent=11 // pred_check_branch
        %242 = sbr.rel (%p240) target = $region16
      $region15: #{_lambda_.11} parent=11 // pred_region
        %p243 = scmp.lt.s32.totalorder %s23, 0
        %s244 = scalar_select %p243, %s23, 0
        %s245 = scalar_lea.vmem %s1, %s244
      $region16: #{_lambda_.11} parent=11 // pred_fallthru
        _
      // Predicated region
      $region17: #{_lambda_.11} parent=11 // pred_check
        %p246 = pneg %p106
      $region18: #{_lambda_.11} parent=11 // pred_check_branch
        %248 = sbr.rel (%p246) target = $region20
      $region19: #{_lambda_.11} parent=11 // pred_region
        %p249 = scmp.lt.s32.totalorder %s23, 0
        %s250 = scalar_select %p249, %s23, 0
        %s251 = scalar_lea.vmem %s2, %s250
      $region20: #{_lambda_.11} parent=11 // pred_fallthru
        _
      // Predicated region
      $region21: #{_lambda_.11} parent=11 // pred_check
        %p252 = pneg %p127
      $region22: #{_lambda_.11} parent=11 // pred_check_branch
        %254 = sbr.rel (%p252) target = $region24
      $region23: #{_lambda_.11} parent=11 // pred_region
        _
      $region24: #{_lambda_.11} parent=11 // pred_fallthru
        _
      // Predicated region
      $region25: #{_lambda_.11} parent=11 // pred_check
        %p255 = pneg %p148
      $region26: #{_lambda_.11} parent=11 // pred_check_branch
        %257 = sbr.rel (%p255) target = $region28
      $region27: #{_lambda_.11} parent=11 // pred_region
        _
      $region28: #{_lambda_.11} parent=11 // pred_fallthru
        _
      // Predicated region
      $region29: #{_lambda_.11} parent=11 // pred_check
        %p258 = pneg %p169
      $region30: #{_lambda_.11} parent=11 // pred_check_branch
        %260 = sbr.rel (%p258) target = $region32
      $region31: #{_lambda_.11} parent=11 // pred_region
        _
      $region32: #{_lambda_.11} parent=11 // pred_fallthru
        _
    $region12: #{_lambda_.11} parent=5 // pred_fallthru
      _
    %p261 = scmp.lt.s32.totalorder %s14, 2
    // Predicated region
    $region33: #{_lambda_.11} parent=5 // pred_check
      %p262 = pneg %p261
    $region34: #{_lambda_.11} parent=5 // pred_check_branch
      %264 = sbr.rel (%p262) target = $region36
    $region35: #{_lambda_.11} parent=5 // pred_region
      // Predicated region
      $region37: #{_lambda_.11} parent=35 // pred_check
        %p265 = pneg %p48
      $region38: #{_lambda_.11} parent=35 // pred_check_branch
        %267 = sbr.rel (%p265) target = $region40
      $region39: #{_lambda_.11} parent=35 // pred_region
        %s268 = smul.u32 16, %s22
        %p269 = scmp.lt.s32.totalorder %s21, 0
        %s270 = scalar_select %p269, %s21, 0
        %p271 = scmp.lt.s32.totalorder %s268, 31
        %s272 = scalar_select %p271, %s268, 31
        %s273 = smul.addr %s270, 32
        %s274 = sadd.s32 %s272, %s273
        %s275 = smul.addr %s274, 8
        %s276 = scalar_lea.vmem %s0, %s275
        %s277 = smul.u32 16, %s22
      $region40: #{_lambda_.11} parent=35 // pred_fallthru
        _
    $region36: #{_lambda_.11} parent=5 // pred_fallthru
      _
    %p278 = scmp.le.s32.totalorder 1, %s14
    %p279 = scmp.lt.s32.totalorder %s14, 3
    %p280 = pnand %p278, %p279
    %p281 = pneg %p280
    // Predicated region
    $region41: #{_lambda_.11} parent=5 // pred_check
      _
    $region42: #{_lambda_.11} parent=5 // pred_check_branch
      %283 = sbr.rel (%p280) target = $region44
    $region43: #{_lambda_.11} parent=5 // pred_region
      %s284 = ssub.s32 %s14, 1
      %s285 = smul.u32 16, %s24
      %p286 = scmp.lt.s32.totalorder %s23, 0
      %s287 = scalar_select %p286, %s23, 0
      %p288 = scmp.lt.s32.totalorder %s285, 31
      %s289 = scalar_select %p288, %s285, 31
      %s290 = smul.addr %s287, 32
      %s291 = sadd.s32 %s289, %s290
      %s292 = smul.addr %s291, 8
      %s293 = scalar_lea.vmem %s0, %s292
      %p294 = pneg %p54
      %p295 = pneg %p51
      %p296 = scmp.lt.s32.totalorder %s23, 0
      %s297 = scalar_select %p296, %s23, 0
      %s298 = scalar_lea.vmem %s1, %s297
      %p299 = pneg %p80
      %p300 = pneg %p77
      %p301 = scmp.lt.s32.totalorder %s23, 0
      %s302 = scalar_select %p301, %s23, 0
      %s303 = scalar_lea.vmem %s2, %s302
      %p304 = pneg %p106
      %p305 = pneg %p103
      %p306 = pneg %p127
      %p307 = pneg %p124
      %p308 = pneg %p148
      %p309 = pneg %p145
      %p310 = pneg %p169
      %p311 = pneg %p166
      %p312 = pneg %p197
      %p313 = pneg %p194
      %s314 = smul.u32 16, %s24
      %p315 = scmp.lt.s32.totalorder %s23, 0
      %s316 = scalar_select %p315, %s23, 0
      %p317 = scmp.lt.s32.totalorder %s314, 31
      %s318 = scalar_select %p317, %s314, 31
      %s319 = smul.addr %s316, 32
      %s320 = sadd.s32 %s318, %s319
      %s321 = smul.addr %s320, 4
      %s322 = scalar_lea.vmem %s6, %s321
      %p323 = pneg %p225
      %p324 = pneg %p222
      %p325 = scmp.lt.s32.totalorder %s23, 0
      %s326 = scalar_select %p325, %s23, 0
      %p327 = scmp.lt.s32.totalorder %s24, 1
      %s328 = scalar_select %p327, %s24, 1
      %s329 = smul.addr %s326, 2
      %s330 = sadd.s32 %s328, %s329
      %s331 = smul.addr %s330, 2
      %s332 = scalar_lea.vmem %s7, %s331
      %s333 = smul.u32 16, %s24
      %p334 = scmp.lt.s32.totalorder %s23, 0
      %s335 = scalar_select %p334, %s23, 0
      %p336 = scmp.lt.s32.totalorder %s333, 31
      %s337 = scalar_select %p336, %s333, 31
      %s338 = smul.addr %s335, 32
      %s339 = sadd.s32 %s337, %s338
      %s340 = smul.addr %s339, 8
      %s341 = scalar_lea.vmem %s0, %s340
      %s342 = smul.u32 16, %s24
      %p343 = scmp.lt.s32.totalorder %s23, 0
      %s344 = scalar_select %p343, %s23, 0
      %s345 = scalar_lea.vmem %s1, %s344
      %p346 = scmp.lt.s32.totalorder %s23, 0
      %s347 = scalar_select %p346, %s23, 0
      %s348 = scalar_lea.vmem %s2, %s347
      %s349 = smul.u32 16, %s24
      %p350 = scmp.lt.s32.totalorder %s23, 0
      %s351 = scalar_select %p350, %s23, 0
      %p352 = scmp.lt.s32.totalorder %s349, 31
      %s353 = scalar_select %p352, %s349, 31
      %s354 = smul.addr %s351, 32
      %s355 = sadd.s32 %s353, %s354
      %s356 = smul.addr %s355, 4
      %s357 = scalar_lea.vmem %s6, %s356
      %s358 = smul.u32 16, %s24
      %p359 = scmp.lt.s32.totalorder %s23, 0
      %s360 = scalar_select %p359, %s23, 0
      %p361 = scmp.lt.s32.totalorder %s24, 1
      %s362 = scalar_select %p361, %s24, 1
      %s363 = smul.addr %s360, 2
      %s364 = sadd.s32 %s362, %s363
      %s365 = smul.addr %s364, 2
      %s366 = scalar_lea.vmem %s7, %s365
      %v367 = vld [vmem:[%s341] sm:$0xff]
      %v368 = vld [vmem:[%s341 + $0x8] sm:$0xff]
      %v369 = vld [vmem:[%s341 + $0x10] sm:$0xff]
      %v370 = vld [vmem:[%s341 + $0x18] sm:$0xff]
      %v371 = vld [vmem:[%s341 + $0x20] sm:$0xff]
      %v372 = vld [vmem:[%s341 + $0x28] sm:$0xff]
      %v373 = vld [vmem:[%s341 + $0x30] sm:$0xff]
      %v374 = vld [vmem:[%s341 + $0x38] sm:$0xff]
      %v375 = vld [vmem:[%s341 + $0x40] sm:$0xff]
      %v376 = vld [vmem:[%s341 + $0x48] sm:$0xff]
      %v377 = vld [vmem:[%s341 + $0x50] sm:$0xff]
      %v378 = vld [vmem:[%s341 + $0x58] sm:$0xff]
      %v379 = vld [vmem:[%s341 + $0x60] sm:$0xff]
      %v380 = vld [vmem:[%s341 + $0x68] sm:$0xff]
      %v381 = vld [vmem:[%s341 + $0x70] sm:$0xff]
      %v382 = vld [vmem:[%s341 + $0x78] sm:$0xff]
      %v383 = vld [vmem:[%s345] sm:$0x1]
      %v385 = vperm.slane %v383, 0
      %v387 = vsub.f32 %v367, %v385
      %v388 = vsub.f32 %v368, %v385
      %v389 = vsub.f32 %v369, %v385
      %v390 = vsub.f32 %v370, %v385
      %v391 = vsub.f32 %v371, %v385
      %v392 = vsub.f32 %v372, %v385
      %v393 = vsub.f32 %v373, %v385
      %v394 = vsub.f32 %v374, %v385
      %v395 = vsub.f32 %v375, %v385
      %v396 = vsub.f32 %v376, %v385
      %v397 = vsub.f32 %v377, %v385
      %v398 = vsub.f32 %v378, %v385
      %v399 = vsub.f32 %v379, %v385
      %v400 = vsub.f32 %v380, %v385
      %v401 = vsub.f32 %v381, %v385
      %v402 = vsub.f32 %v382, %v385
      %v403 = vld [vmem:[%s348] sm:$0x1]
      %v404 = vld [vmem:[%s3] sm:$0x1]
      %v405 = vmul.f32 %v403, %v404
      %v407 = vperm.slane %v405, 0
      %v409 = vmul.f32 %v387, %v407
      %v410 = vmul.f32 %v388, %v407
      %v411 = vmul.f32 %v389, %v407
      %v412 = vmul.f32 %v390, %v407
      %v413 = vmul.f32 %v391, %v407
      %v414 = vmul.f32 %v392, %v407
      %v415 = vmul.f32 %v393, %v407
      %v416 = vmul.f32 %v394, %v407
      %v417 = vmul.f32 %v395, %v407
      %v418 = vmul.f32 %v396, %v407
      %v419 = vmul.f32 %v397, %v407
      %v420 = vmul.f32 %v398, %v407
      %v421 = vmul.f32 %v399, %v407
      %v422 = vmul.f32 %v400, %v407
      %v423 = vmul.f32 %v401, %v407
      %v424 = vmul.f32 %v402, %v407
      %v425 = vld [vmem:[%s4] sm:$0x1]
      %v427 = vperm.slane %v425, 0
      %v429 = vadd.f32 %v409, %v427
      %v430 = vadd.f32 %v410, %v427
      %v431 = vadd.f32 %v411, %v427
      %v432 = vadd.f32 %v412, %v427
      %v433 = vadd.f32 %v413, %v427
      %v434 = vadd.f32 %v414, %v427
      %v435 = vadd.f32 %v415, %v427
      %v436 = vadd.f32 %v416, %v427
      %v437 = vadd.f32 %v417, %v427
      %v438 = vadd.f32 %v418, %v427
      %v439 = vadd.f32 %v419, %v427
      %v440 = vadd.f32 %v420, %v427
      %v441 = vadd.f32 %v421, %v427
      %v442 = vadd.f32 %v422, %v427
      %v443 = vadd.f32 %v423, %v427
      %v444 = vadd.f32 %v424, %v427
      %vm445 = vcmp.ge.f32.partialorder %v429, 0.0
      %vm446 = vcmp.ge.f32.partialorder %v430, 0.0
      %vm447 = vcmp.ge.f32.partialorder %v431, 0.0
      %vm448 = vcmp.ge.f32.partialorder %v432, 0.0
      %vm449 = vcmp.ge.f32.partialorder %v433, 0.0
      %vm450 = vcmp.ge.f32.partialorder %v434, 0.0
      %vm451 = vcmp.ge.f32.partialorder %v435, 0.0
      %vm452 = vcmp.ge.f32.partialorder %v436, 0.0
      %vm453 = vcmp.ge.f32.partialorder %v437, 0.0
      %vm454 = vcmp.ge.f32.partialorder %v438, 0.0
      %vm455 = vcmp.ge.f32.partialorder %v439, 0.0
      %vm456 = vcmp.ge.f32.partialorder %v440, 0.0
      %vm457 = vcmp.ge.f32.partialorder %v441, 0.0
      %vm458 = vcmp.ge.f32.partialorder %v442, 0.0
      %vm459 = vcmp.ge.f32.partialorder %v443, 0.0
      %vm460 = vcmp.ge.f32.partialorder %v444, 0.0
      %v461 = vmul.f32 %v429, 0.01
      %v462 = vmul.f32 %v430, 0.01
      %v463 = vmul.f32 %v431, 0.01
      %v464 = vmul.f32 %v432, 0.01
      %v465 = vmul.f32 %v433, 0.01
      %v466 = vmul.f32 %v434, 0.01
      %v467 = vmul.f32 %v435, 0.01
      %v468 = vmul.f32 %v436, 0.01
      %v469 = vmul.f32 %v437, 0.01
      %v470 = vmul.f32 %v438, 0.01
      %v471 = vmul.f32 %v439, 0.01
      %v472 = vmul.f32 %v440, 0.01
      %v473 = vmul.f32 %v441, 0.01
      %v474 = vmul.f32 %v442, 0.01
      %v475 = vmul.f32 %v443, 0.01
      %v476 = vmul.f32 %v444, 0.01
      %v477 = vsel %vm445, %v429, %v461
      %v478 = vsel %vm446, %v430, %v462
      %v479 = vsel %vm447, %v431, %v463
      %v480 = vsel %vm448, %v432, %v464
      %v481 = vsel %vm449, %v433, %v465
      %v482 = vsel %vm450, %v434, %v466
      %v483 = vsel %vm451, %v435, %v467
      %v484 = vsel %vm452, %v436, %v468
      %v485 = vsel %vm453, %v437, %v469
      %v486 = vsel %vm454, %v438, %v470
      %v487 = vsel %vm455, %v439, %v471
      %v488 = vsel %vm456, %v440, %v472
      %v489 = vsel %vm457, %v441, %v473
      %v490 = vsel %vm458, %v442, %v474
      %v491 = vsel %vm459, %v443, %v475
      %v492 = vsel %vm460, %v444, %v476
      %v493 = vpack.c.bf16 %v477, %v477
      %v494 = vpack.c.bf16 %v478, %v478
      %v495 = vpack.c.bf16 %v479, %v479
      %v496 = vpack.c.bf16 %v480, %v480
      %v497 = vpack.c.bf16 %v481, %v481
      %v498 = vpack.c.bf16 %v482, %v482
      %v499 = vpack.c.bf16 %v483, %v483
      %v500 = vpack.c.bf16 %v484, %v484
      %v501 = vpack.c.bf16 %v485, %v485
      %v502 = vpack.c.bf16 %v486, %v486
      %v503 = vpack.c.bf16 %v487, %v487
      %v504 = vpack.c.bf16 %v488, %v488
      %v505 = vpack.c.bf16 %v489, %v489
      %v506 = vpack.c.bf16 %v490, %v490
      %v507 = vpack.c.bf16 %v491, %v491
      %v508 = vpack.c.bf16 %v492, %v492
      %vm509 = vcmask 60416
      %510 = vst.msk [vmem:[%s357] sm:$0xf] %vm509, %v493
      %511 = vst.msk [vmem:[%s357 + $0x4] sm:$0xf] %vm509, %v494
      %512 = vst.msk [vmem:[%s357 + $0x8] sm:$0xf] %vm509, %v495
      %513 = vst.msk [vmem:[%s357 + $0xc] sm:$0xf] %vm509, %v496
      %514 = vst.msk [vmem:[%s357 + $0x10] sm:$0xf] %vm509, %v497
      %515 = vst.msk [vmem:[%s357 + $0x14] sm:$0xf] %vm509, %v498
      %516 = vst.msk [vmem:[%s357 + $0x18] sm:$0xf] %vm509, %v499
      %517 = vst.msk [vmem:[%s357 + $0x1c] sm:$0xf] %vm509, %v500
      %518 = vst.msk [vmem:[%s357 + $0x20] sm:$0xf] %vm509, %v501
      %519 = vst.msk [vmem:[%s357 + $0x24] sm:$0xf] %vm509, %v502
      %520 = vst.msk [vmem:[%s357 + $0x28] sm:$0xf] %vm509, %v503
      %521 = vst.msk [vmem:[%s357 + $0x2c] sm:$0xf] %vm509, %v504
      %522 = vst.msk [vmem:[%s357 + $0x30] sm:$0xf] %vm509, %v505
      %523 = vst.msk [vmem:[%s357 + $0x34] sm:$0xf] %vm509, %v506
      %524 = vst.msk [vmem:[%s357 + $0x38] sm:$0xf] %vm509, %v507
      %525 = vst.msk [vmem:[%s357 + $0x3c] sm:$0xf] %vm509, %v508
      %v526 = vld [vmem:[%s5] sm:$0x1]
      %v543 = vunpack.c.l.b16 %v493
      %v544 = vunpack.c.l.b16 %v494
      %v545 = vunpack.c.l.b16 %v495
      %v546 = vunpack.c.l.b16 %v496
      %v547 = vunpack.c.l.b16 %v497
      %v548 = vunpack.c.l.b16 %v498
      %v549 = vunpack.c.l.b16 %v499
      %v550 = vunpack.c.l.b16 %v500
      %v551 = vunpack.c.l.b16 %v501
      %v552 = vunpack.c.l.b16 %v502
      %v553 = vunpack.c.l.b16 %v503
      %v554 = vunpack.c.l.b16 %v504
      %v555 = vunpack.c.l.b16 %v505
      %v556 = vunpack.c.l.b16 %v506
      %v557 = vunpack.c.l.b16 %v507
      %v558 = vunpack.c.l.b16 %v508
      %v559 = vpack.c.b16 %v544, %v543
      %v560 = vpack.c.b16 %v546, %v545
      %v561 = vpack.c.b16 %v548, %v547
      %v562 = vpack.c.b16 %v550, %v549
      %v563 = vpack.c.b16 %v552, %v551
      %v564 = vpack.c.b16 %v554, %v553
      %v565 = vpack.c.b16 %v556, %v555
      %v566 = vpack.c.b16 %v558, %v557
      %vm567 = vcmask 64512
      %v569 = vsel %vm567, %v526, 0
      %v572 = vsel %vm567, %v559, 0
      %v575 = vsel %vm567, %v560, 0
      %v578 = vsel %vm567, %v561, 0
      %v581 = vsel %vm567, %v562, 0
      %v584 = vsel %vm567, %v563, 0
      %v587 = vsel %vm567, %v564, 0
      %v590 = vsel %vm567, %v565, 0
      %v593 = vsel %vm567, %v566, 0
      %595 = vmatpush.bf16.xpose.msra.mxu0 %v593
      %596 = vmatpush.bf16.xpose.msra.mxu0 %v590
      %597 = vmatpush.bf16.xpose.msra.mxu0 %v587
      %598 = vmatpush.bf16.xpose.msra.mxu0 %v584
      %599 = vmatpush.bf16.xpose.msra.mxu0 %v581
      %600 = vmatpush.bf16.xpose.msra.mxu0 %v578
      %601 = vmatpush.bf16.xpose.msra.mxu0 %v575
      %602 = vmatpush.bf16.xpose.msra.mxu0 %v572
      %603 = vmatmul.bf16.gmra.mxu0 %v569
      %v604 = vpop.f32.mrf.mxu0
      %v605 = vadd.f32 0.0, %v604
      %v606 = vpop.f32.mrf.mxu0
      %607 = vdwg.mxu0
      %608 = vst [vmem:[%s366] sm:$0x3] %v605
      %s609 = smul.u32 16, %s24
      %p610 = scmp.lt.s32.totalorder %s23, 0
      %s611 = scalar_select %p610, %s23, 0
      %p612 = scmp.lt.s32.totalorder %s609, 31
      %s613 = scalar_select %p612, %s609, 31
      %s614 = smul.addr %s611, 32
      %s615 = sadd.s32 %s613, %s614
      %s616 = smul.addr %s615, 4
      %s617 = scalar_lea.vmem %s6, %s616
      %p618 = scmp.lt.s32.totalorder %s23, 0
      %s619 = scalar_select %p618, %s23, 0
      %p620 = scmp.lt.s32.totalorder %s24, 1
      %s621 = scalar_select %p620, %s24, 1
      %s622 = smul.addr %s619, 2
      %s623 = sadd.s32 %s621, %s622
      %s624 = smul.addr %s623, 2
      %s625 = scalar_lea.vmem %s7, %s624
      // Predicated region
      $region45: #{_lambda_.11} parent=43 // pred_check
        %p626 = pneg %p194
      $region46: #{_lambda_.11} parent=43 // pred_check_branch
        %628 = sbr.rel (%p626) target = $region48
      $region47: #{_lambda_.11} parent=43 // pred_region
        %s629 = smul.u32 16, %s24
      $region48: #{_lambda_.11} parent=43 // pred_fallthru
        _
      // Predicated region
      $region49: #{_lambda_.11} parent=43 // pred_check
        %p630 = pneg %p222
      $region50: #{_lambda_.11} parent=43 // pred_check_branch
        %632 = sbr.rel (%p630) target = $region52
      $region51: #{_lambda_.11} parent=43 // pred_region
        _
      $region52: #{_lambda_.11} parent=43 // pred_fallthru
        _
    $region44: #{_lambda_.11} parent=5 // pred_fallthru
      _
    %p633 = scmp.le.s32.totalorder 2, %s14
    // Predicated region
    $region53: #{_lambda_.11} parent=5 // pred_check
      %p634 = pneg %p633
    $region54: #{_lambda_.11} parent=5 // pred_check_branch
      %636 = sbr.rel (%p634) target = $region56
    $region55: #{_lambda_.11} parent=5 // pred_region
      %s637 = ssub.s32 %s14, 2
      // Predicated region
      $region57: #{_lambda_.11} parent=55 // pred_check
        %p638 = pneg %p200
      $region58: #{_lambda_.11} parent=55 // pred_check_branch
        %640 = sbr.rel (%p638) target = $region60
      $region59: #{_lambda_.11} parent=55 // pred_region
        %s641 = smul.u32 16, %s26
        %p642 = scmp.lt.s32.totalorder %s25, 0
        %s643 = scalar_select %p642, %s25, 0
        %p644 = scmp.lt.s32.totalorder %s641, 31
        %s645 = scalar_select %p644, %s641, 31
        %s646 = smul.addr %s643, 32
        %s647 = sadd.s32 %s645, %s646
        %s648 = smul.addr %s647, 4
        %s649 = scalar_lea.vmem %s6, %s648
      $region60: #{_lambda_.11} parent=55 // pred_fallthru
        _
      // Predicated region
      $region61: #{_lambda_.11} parent=55 // pred_check
        %p650 = pneg %p228
      $region62: #{_lambda_.11} parent=55 // pred_check_branch
        %652 = sbr.rel (%p650) target = $region64
      $region63: #{_lambda_.11} parent=55 // pred_region
        %p653 = scmp.lt.s32.totalorder %s25, 0
        %s654 = scalar_select %p653, %s25, 0
        %p655 = scmp.lt.s32.totalorder %s26, 1
        %s656 = scalar_select %p655, %s26, 1
        %s657 = smul.addr %s654, 2
        %s658 = sadd.s32 %s656, %s657
        %s659 = smul.addr %s658, 2
        %s660 = scalar_lea.vmem %s7, %s659
      $region64: #{_lambda_.11} parent=55 // pred_fallthru
        _
    $region56: #{_lambda_.11} parent=5 // pred_fallthru
      _
  $region6: #{_lambda_.11} parent=0 // loop_footer
    %s18 = sadd.s32 1, %s14
  $region7: #{_lambda_.11} parent=0 // loop_footer_branch
    %13 = sbr.rel target = $region3
  $region8: #{_lambda_.11} parent=0 // loop_exit
    _

// kernel: _lambda_.10
$region0: #{_lambda_.10}
  #allocation0 [shape = 'u32[]', space=smem, size = 0x4, offset = 0x4, fixed_abs, tag = 'smem constant byte address 0x4 - core index']
  #allocation1 [shape = 'u32[72,128]{1,0:T(1,128)}', space=vmem, size = 0x9000, scoped, tag = 'internal scratch']
  #allocation2 [shape = 'f32[104,8]{1,0:T(8,128)}', space=vmem, size = 0xd000, scoped, tag = 'scratch operand']
  %s0 = inlined_call_operand.vmem [shape: bf16[1,6,104,8], index: 0, kind: input, shape index: {}]
  %s1 = inlined_call_operand.vmem [shape: bf16[1,6,104,8], index: 1, kind: input, shape index: {}]
  %s2 = inlined_call_operand.vmem [shape: f32[1,6,104,1], index: 2, kind: input, shape index: {}]
  %s3 = inlined_call_operand.vmem [shape: bf16[3,3,48,8], index: 3, kind: input, shape index: {}]
  %s4 = inlined_call_operand.vmem [shape: f32[1,4,64,8], index: 4, kind: output, shape index: {0}]
  %s5 = inlined_call_operand.vmem [shape: f32[1,4,1,8], index: 5, kind: output, shape index: {1}]
  %s6 = inlined_call_operand.vmem [shape: f32[1,4,1,8], index: 6, kind: output, shape index: {2}]
  %7 = xla_tuple %s4, %s5, %s6
  %s8 = sld [smem:[#allocation0]]
  $region73: #{_lambda_.10} parent=0
    _
  %s10 = ssub.s32 1, %s8
  %s11 = scalar_select 0, %s10, %s8
  loop: start=0, step=1, limit=14
  $region2: #{_lambda_.10} parent=0 // loop_pre_header
    _
  $region3: #{_lambda_.10} parent=0 // loop_header
    %s13 = sphi 0, %s17
    %p14 = scmp.ge.s32.totalorder %s13, 14
    %s20 = sphi 0, %s39
    %s21 = sphi 0, %s35
    %s22 = sphi 0, %s31
    %s23 = sphi 0, %s20
    %s24 = sphi 0, %s21
    %s25 = sphi 0, %s22
    %s26 = sphi 0, %s23
    %s27 = sphi 0, %s24
    %s28 = sphi 0, %s25
    %s46 = sphi 0, %s48
    %s49 = sphi 0, %s46
    %s50 = sphi 0, %s49
    %s66 = sphi 0, %s50
    %s76 = sphi 0, %s78
    %s79 = sphi 0, %s76
    %s80 = sphi 0, %s79
    %s96 = sphi 0, %s80
    %s106 = sphi 0, %s108
    %s109 = sphi 0, %s106
    %s110 = sphi 0, %s109
    %s126 = sphi 0, %s110
    %s130 = sphi 0, %s130
    %s132 = sphi 0, %s130
    %s133 = sphi 0, %s132
    %s147 = sphi 0, %s133
    %s155 = sphi 0, %s157
    %s158 = sphi 0, %s155
    %s159 = sphi 0, %s158
    %s175 = sphi 0, %s159
    %s183 = sphi 0, %s185
    %s186 = sphi 0, %s183
    %s187 = sphi 0, %s186
    %s203 = sphi 0, %s187
    %s211 = sphi 0, %s213
    %s214 = sphi 0, %s211
    %s215 = sphi 0, %s214
    %s231 = sphi 0, %s215
  $region4: #{_lambda_.10} parent=0 // loop_header_branch
    %16 = sbr.rel (%p14) target = $region8
  $region5: #{_lambda_.10} parent=0 // loop_body
    %s18 = ssub.s32 %s13, 1
    %s19 = ssub.s32 %s13, 2
    %s29 = sadd.s32 1, %s22
    %p30 = scmp.ge.s32.totalorder %s29, 3
    %s31 = scalar_select %p30, 0, %s29
    %s32 = sadd.s32 1, %s21
    %s33 = scalar_select %p30, %s32, %s21
    %p34 = scmp.ge.s32.totalorder %s33, 4
    %s35 = scalar_select %p34, 0, %s33
    %s36 = sadd.s32 1, %s20
    %s37 = scalar_select %p34, %s36, %s20
    %p38 = scmp.ge.s32.totalorder %s37, 1
    %s39 = scalar_select %p38, 0, %s37
    %s40 = sadd.s32 %s21, %s22
    %s41 = sadd.s32 %s35, %s31
    %s42 = ssub.s32 %s20, %s39
    %s43 = ssub.s32 %s40, %s41
    %s44 = sor.u32 %s42, %s43
    %p45 = scmp.eq.s32.totalorder %s44, 0
    %s47 = sadd.s32 %s46, 1
    %s48 = scalar_select %p45, %s46, %s47
    %p51 = pneg %p45
    %p52 = scmp.eq.s32.totalorder %s13, 11
    %p53 = por %p51, %p52
    %p54 = scmp.ne.s32.totalorder %s46, %s49
    %p55 = scmp.eq.s32.totalorder %s13, 0
    %p56 = por %p54, %p55
    %p57 = scmp.ne.s32.totalorder %s46, %s49
    %p58 = scmp.eq.s32.totalorder %s18, 11
    %p59 = por %p57, %p58
    %p60 = scmp.ne.s32.totalorder %s49, %s50
    %p61 = scmp.eq.s32.totalorder %s18, 0
    %p62 = por %p60, %p61
    %p63 = scmp.ne.s32.totalorder %s49, %s50
    %p64 = scmp.eq.s32.totalorder %s19, 11
    %p65 = por %p63, %p64
    %p67 = scmp.ne.s32.totalorder %s50, %s66
    %p68 = scmp.eq.s32.totalorder %s19, 0
    %p69 = por %p67, %p68
    %s70 = sadd.s32 %s21, %s22
    %s71 = sadd.s32 %s35, %s31
    %s72 = ssub.s32 %s20, %s39
    %s73 = ssub.s32 %s70, %s71
    %s74 = sor.u32 %s72, %s73
    %p75 = scmp.eq.s32.totalorder %s74, 0
    %s77 = sadd.s32 %s76, 1
    %s78 = scalar_select %p75, %s76, %s77
    %p81 = pneg %p75
    %p82 = scmp.eq.s32.totalorder %s13, 11
    %p83 = por %p81, %p82
    %p84 = scmp.ne.s32.totalorder %s76, %s79
    %p85 = scmp.eq.s32.totalorder %s13, 0
    %p86 = por %p84, %p85
    %p87 = scmp.ne.s32.totalorder %s76, %s79
    %p88 = scmp.eq.s32.totalorder %s18, 11
    %p89 = por %p87, %p88
    %p90 = scmp.ne.s32.totalorder %s79, %s80
    %p91 = scmp.eq.s32.totalorder %s18, 0
    %p92 = por %p90, %p91
    %p93 = scmp.ne.s32.totalorder %s79, %s80
    %p94 = scmp.eq.s32.totalorder %s19, 11
    %p95 = por %p93, %p94
    %p97 = scmp.ne.s32.totalorder %s80, %s96
    %p98 = scmp.eq.s32.totalorder %s19, 0
    %p99 = por %p97, %p98
    %s100 = sadd.s32 %s21, %s22
    %s101 = sadd.s32 %s35, %s31
    %s102 = ssub.s32 %s20, %s39
    %s103 = ssub.s32 %s100, %s101
    %s104 = sor.u32 %s102, %s103
    %p105 = scmp.eq.s32.totalorder %s104, 0
    %s107 = sadd.s32 %s106, 1
    %s108 = scalar_select %p105, %s106, %s107
    %p111 = pneg %p105
    %p112 = scmp.eq.s32.totalorder %s13, 11
    %p113 = por %p111, %p112
    %p114 = scmp.ne.s32.totalorder %s106, %s109
    %p115 = scmp.eq.s32.totalorder %s13, 0
    %p116 = por %p114, %p115
    %p117 = scmp.ne.s32.totalorder %s106, %s109
    %p118 = scmp.eq.s32.totalorder %s18, 11
    %p119 = por %p117, %p118
    %p120 = scmp.ne.s32.totalorder %s109, %s110
    %p121 = scmp.eq.s32.totalorder %s18, 0
    %p122 = por %p120, %p121
    %p123 = scmp.ne.s32.totalorder %s109, %s110
    %p124 = scmp.eq.s32.totalorder %s19, 11
    %p125 = por %p123, %p124
    %p127 = scmp.ne.s32.totalorder %s110, %s126
    %p128 = scmp.eq.s32.totalorder %s19, 0
    %p129 = por %p127, %p128
    %s131 = sadd.s32 %s130, 1
    %p134 = scmp.eq.s32.totalorder %s13, 11
    %p135 = scmp.ne.s32.totalorder %s130, %s132
    %p136 = scmp.eq.s32.totalorder %s13, 0
    %p137 = por %p135, %p136
    %p138 = scmp.ne.s32.totalorder %s130, %s132
    %p139 = scmp.eq.s32.totalorder %s18, 11
    %p140 = por %p138, %p139
    %p141 = scmp.ne.s32.totalorder %s132, %s133
    %p142 = scmp.eq.s32.totalorder %s18, 0
    %p143 = por %p141, %p142
    %p144 = scmp.ne.s32.totalorder %s132, %s133
    %p145 = scmp.eq.s32.totalorder %s19, 11
    %p146 = por %p144, %p145
    %p148 = scmp.ne.s32.totalorder %s133, %s147
    %p149 = scmp.eq.s32.totalorder %s19, 0
    %p150 = por %p148, %p149
    %s151 = ssub.s32 %s20, %s39
    %s152 = ssub.s32 %s21, %s35
    %s153 = sor.u32 %s151, %s152
    %p154 = scmp.eq.s32.totalorder %s153, 0
    %s156 = sadd.s32 %s155, 1
    %s157 = scalar_select %p154, %s155, %s156
    %p160 = pneg %p154
    %p161 = scmp.eq.s32.totalorder %s13, 11
    %p162 = por %p160, %p161
    %p163 = scmp.ne.s32.totalorder %s155, %s158
    %p164 = scmp.eq.s32.totalorder %s13, 0
    %p165 = por %p163, %p164
    %p166 = scmp.ne.s32.totalorder %s155, %s158
    %p167 = scmp.eq.s32.totalorder %s18, 11
    %p168 = por %p166, %p167
    %p169 = scmp.ne.s32.totalorder %s158, %s159
    %p170 = scmp.eq.s32.totalorder %s18, 0
    %p171 = por %p169, %p170
    %p172 = scmp.ne.s32.totalorder %s158, %s159
    %p173 = scmp.eq.s32.totalorder %s19, 11
    %p174 = por %p172, %p173
    %p176 = scmp.ne.s32.totalorder %s159, %s175
    %p177 = scmp.eq.s32.totalorder %s19, 0
    %p178 = por %p176, %p177
    %s179 = ssub.s32 %s20, %s39
    %s180 = ssub.s32 %s21, %s35
    %s181 = sor.u32 %s179, %s180
    %p182 = scmp.eq.s32.totalorder %s181, 0
    %s184 = sadd.s32 %s183, 1
    %s185 = scalar_select %p182, %s183, %s184
    %p188 = pneg %p182
    %p189 = scmp.eq.s32.totalorder %s13, 11
    %p190 = por %p188, %p189
    %p191 = scmp.ne.s32.totalorder %s183, %s186
    %p192 = scmp.eq.s32.totalorder %s13, 0
    %p193 = por %p191, %p192
    %p194 = scmp.ne.s32.totalorder %s183, %s186
    %p195 = scmp.eq.s32.totalorder %s18, 11
    %p196 = por %p194, %p195
    %p197 = scmp.ne.s32.totalorder %s186, %s187
    %p198 = scmp.eq.s32.totalorder %s18, 0
    %p199 = por %p197, %p198
    %p200 = scmp.ne.s32.totalorder %s186, %s187
    %p201 = scmp.eq.s32.totalorder %s19, 11
    %p202 = por %p200, %p201
    %p204 = scmp.ne.s32.totalorder %s187, %s203
    %p205 = scmp.eq.s32.totalorder %s19, 0
    %p206 = por %p204, %p205
    %s207 = ssub.s32 %s20, %s39
    %s208 = ssub.s32 %s21, %s35
    %s209 = sor.u32 %s207, %s208
    %p210 = scmp.eq.s32.totalorder %s209, 0
    %s212 = sadd.s32 %s211, 1
    %s213 = scalar_select %p210, %s211, %s212
    %p216 = pneg %p210
    %p217 = scmp.eq.s32.totalorder %s13, 11
    %p218 = por %p216, %p217
    %p219 = scmp.ne.s32.totalorder %s211, %s214
    %p220 = scmp.eq.s32.totalorder %s13, 0
    %p221 = por %p219, %p220
    %p222 = scmp.ne.s32.totalorder %s211, %s214
    %p223 = scmp.eq.s32.totalorder %s18, 11
    %p224 = por %p222, %p223
    %p225 = scmp.ne.s32.totalorder %s214, %s215
    %p226 = scmp.eq.s32.totalorder %s18, 0
    %p227 = por %p225, %p226
    %p228 = scmp.ne.s32.totalorder %s214, %s215
    %p229 = scmp.eq.s32.totalorder %s19, 11
    %p230 = por %p228, %p229
    %p232 = scmp.ne.s32.totalorder %s215, %s231
    %p233 = scmp.eq.s32.totalorder %s19, 0
    %p234 = por %p232, %p233
    %p235 = scmp.le.s32.totalorder 1, %s13
    %p236 = scmp.lt.s32.totalorder %s13, 13
    %p237 = pnand %p235, %p236
    %p238 = pneg %p237
    // Predicated region
    $region9: #{_lambda_.10} parent=5 // pred_check
      _
    $region10: #{_lambda_.10} parent=5 // pred_check_branch
      %240 = sbr.rel (%p237) target = $region12
    $region11: #{_lambda_.10} parent=5 // pred_region
      %s241 = ssub.s32 %s13, 1
      // Predicated region
      $region13: #{_lambda_.10} parent=11 // pred_check
        %p242 = pneg %p143
      $region14: #{_lambda_.10} parent=11 // pred_check_branch
        %244 = sbr.rel (%p242) target = $region16
      $region15: #{_lambda_.10} parent=11 // pred_region
        _
      $region16: #{_lambda_.10} parent=11 // pred_fallthru
        _
    $region12: #{_lambda_.10} parent=5 // pred_fallthru
      _
    %p245 = scmp.lt.s32.totalorder %s13, 12
    // Predicated region
    $region17: #{_lambda_.10} parent=5 // pred_check
      %p246 = pneg %p245
    $region18: #{_lambda_.10} parent=5 // pred_check_branch
      %248 = sbr.rel (%p246) target = $region20
    $region19: #{_lambda_.10} parent=5 // pred_region
      // Predicated region
      $region21: #{_lambda_.10} parent=19 // pred_check
        %p249 = pneg %p56
      $region22: #{_lambda_.10} parent=19 // pred_check_branch
        %251 = sbr.rel (%p249) target = $region24
      $region23: #{_lambda_.10} parent=19 // pred_region
        %s252 = sadd.s32 %s21, %s22
        %p253 = scmp.lt.s32.totalorder %s20, 0
        %s254 = scalar_select %p253, %s20, 0
        %p255 = scmp.lt.s32.totalorder %s252, 5
        %s256 = scalar_select %p255, %s252, 5
        %s257 = smul.addr %s256, 13
        %s258 = smul.addr %s254, 78
        %s259 = sadd.s32 %s257, %s258
        %s260 = smul.addr %s259, 4
        %s261 = scalar_lea.vmem %s0, %s260
        %s262 = sadd.s32 %s21, %s22
      $region24: #{_lambda_.10} parent=19 // pred_fallthru
        _
      // Predicated region
      $region25: #{_lambda_.10} parent=19 // pred_check
        %p263 = pneg %p86
      $region26: #{_lambda_.10} parent=19 // pred_check_branch
        %265 = sbr.rel (%p263) target = $region28
      $region27: #{_lambda_.10} parent=19 // pred_region
        %s266 = sadd.s32 %s21, %s22
        %p267 = scmp.lt.s32.totalorder %s20, 0
        %s268 = scalar_select %p267, %s20, 0
        %p269 = scmp.lt.s32.totalorder %s266, 5
        %s270 = scalar_select %p269, %s266, 5
        %s271 = smul.addr %s270, 13
        %s272 = smul.addr %s268, 78
        %s273 = sadd.s32 %s271, %s272
        %s274 = smul.addr %s273, 4
        %s275 = scalar_lea.vmem %s1, %s274
        %s276 = sadd.s32 %s21, %s22
      $region28: #{_lambda_.10} parent=19 // pred_fallthru
        _
      // Predicated region
      $region29: #{_lambda_.10} parent=19 // pred_check
        %p277 = pneg %p116
      $region30: #{_lambda_.10} parent=19 // pred_check_branch
        %279 = sbr.rel (%p277) target = $region32
      $region31: #{_lambda_.10} parent=19 // pred_region
        %s280 = sadd.s32 %s21, %s22
        %p281 = scmp.lt.s32.totalorder %s20, 0
        %s282 = scalar_select %p281, %s20, 0
        %p283 = scmp.lt.s32.totalorder %s280, 5
        %s284 = scalar_select %p283, %s280, 5
        %s285 = smul.addr %s284, 13
        %s286 = smul.addr %s282, 78
        %s287 = sadd.s32 %s285, %s286
        %s288 = smul.addr %s287, 8
        %s289 = scalar_lea.vmem %s2, %s288
        %s290 = sadd.s32 %s21, %s22
      $region32: #{_lambda_.10} parent=19 // pred_fallthru
        _
    $region20: #{_lambda_.10} parent=5 // pred_fallthru
      _
    %p291 = scmp.le.s32.totalorder 1, %s13
    %p292 = scmp.lt.s32.totalorder %s13, 13
    %p293 = pnand %p291, %p292
    %p294 = pneg %p293
    // Predicated region
    $region33: #{_lambda_.10} parent=5 // pred_check
      _
    $region34: #{_lambda_.10} parent=5 // pred_check_branch
      %296 = sbr.rel (%p293) target = $region36
    $region35: #{_lambda_.10} parent=5 // pred_region
      %s297 = ssub.s32 %s13, 1
      %s298 = sadd.s32 %s24, %s25
      %p299 = scmp.lt.s32.totalorder %s23, 0
      %s300 = scalar_select %p299, %s23, 0
      %p301 = scmp.lt.s32.totalorder %s298, 5
      %s302 = scalar_select %p301, %s298, 5
      %s303 = smul.addr %s302, 13
      %s304 = smul.addr %s300, 78
      %s305 = sadd.s32 %s303, %s304
      %s306 = smul.addr %s305, 4
      %s307 = scalar_lea.vmem %s0, %s306
      %p308 = pneg %p62
      %p309 = pneg %p59
      %s310 = sadd.s32 %s24, %s25
      %p311 = scmp.lt.s32.totalorder %s23, 0
      %s312 = scalar_select %p311, %s23, 0
      %p313 = scmp.lt.s32.totalorder %s310, 5
      %s314 = scalar_select %p313, %s310, 5
      %s315 = smul.addr %s314, 13
      %s316 = smul.addr %s312, 78
      %s317 = sadd.s32 %s315, %s316
      %s318 = smul.addr %s317, 4
      %s319 = scalar_lea.vmem %s1, %s318
      %p320 = pneg %p92
      %p321 = pneg %p89
      %s322 = sadd.s32 %s24, %s25
      %p323 = scmp.lt.s32.totalorder %s23, 0
      %s324 = scalar_select %p323, %s23, 0
      %p325 = scmp.lt.s32.totalorder %s322, 5
      %s326 = scalar_select %p325, %s322, 5
      %s327 = smul.addr %s326, 13
      %s328 = smul.addr %s324, 78
      %s329 = sadd.s32 %s327, %s328
      %s330 = smul.addr %s329, 8
      %s331 = scalar_lea.vmem %s2, %s330
      %p332 = pneg %p122
      %p333 = pneg %p119
      %p334 = pneg %p143
      %p335 = pneg %p140
      %p336 = pneg %p171
      %p337 = pneg %p168
      %p338 = scmp.lt.s32.totalorder %s23, 0
      %s339 = scalar_select %p338, %s23, 0
      %p340 = scmp.lt.s32.totalorder %s24, 3
      %s341 = scalar_select %p340, %s24, 3
      %s342 = smul.addr %s341, 8
      %s343 = smul.addr %s339, 32
      %s344 = sadd.s32 %s342, %s343
      %s345 = smul.addr %s344, 8
      %s346 = scalar_lea.vmem %s4, %s345
      %p347 = pneg %p199
      %p348 = pneg %p196
      %p349 = scmp.lt.s32.totalorder %s23, 0
      %s350 = scalar_select %p349, %s23, 0
      %p351 = scmp.lt.s32.totalorder %s24, 3
      %s352 = scalar_select %p351, %s24, 3
      %s353 = smul.addr %s350, 4
      %s354 = sadd.s32 %s352, %s353
      %s355 = scalar_lea.vmem %s5, %s354
      %p356 = pneg %p227
      %p357 = pneg %p224
      %p358 = scmp.lt.s32.totalorder %s23, 0
      %s359 = scalar_select %p358, %s23, 0
      %p360 = scmp.lt.s32.totalorder %s24, 3
      %s361 = scalar_select %p360, %s24, 3
      %s362 = smul.addr %s359, 4
      %s363 = sadd.s32 %s361, %s362
      %s364 = scalar_lea.vmem %s6, %s363
      %s365 = sadd.s32 %s24, %s25
      %p366 = scmp.lt.s32.totalorder %s23, 0
      %s367 = scalar_select %p366, %s23, 0
      %p368 = scmp.lt.s32.totalorder %s365, 5
      %s369 = scalar_select %p368, %s365, 5
      %s370 = smul.addr %s369, 13
      %s371 = smul.addr %s367, 78
      %s372 = sadd.s32 %s370, %s371
      %s373 = smul.addr %s372, 4
      %s374 = scalar_lea.vmem %s0, %s373
      %s375 = sadd.s32 %s24, %s25
      %s376 = sadd.s32 %s24, %s25
      %p377 = scmp.lt.s32.totalorder %s23, 0
      %s378 = scalar_select %p377, %s23, 0
      %p379 = scmp.lt.s32.totalorder %s376, 5
      %s380 = scalar_select %p379, %s376, 5
      %s381 = smul.addr %s380, 13
      %s382 = smul.addr %s378, 78
      %s383 = sadd.s32 %s381, %s382
      %s384 = smul.addr %s383, 4
      %s385 = scalar_lea.vmem %s1, %s384
      %s386 = sadd.s32 %s24, %s25
      %s387 = sadd.s32 %s24, %s25
      %p388 = scmp.lt.s32.totalorder %s23, 0
      %s389 = scalar_select %p388, %s23, 0
      %p390 = scmp.lt.s32.totalorder %s387, 5
      %s391 = scalar_select %p390, %s387, 5
      %s392 = smul.addr %s391, 13
      %s393 = smul.addr %s389, 78
      %s394 = sadd.s32 %s392, %s393
      %s395 = smul.addr %s394, 8
      %s396 = scalar_lea.vmem %s2, %s395
      %s397 = sadd.s32 %s24, %s25
      %p398 = scmp.lt.s32.totalorder %s23, 0
      %s399 = scalar_select %p398, %s23, 0
      %p400 = scmp.lt.s32.totalorder %s24, 3
      %s401 = scalar_select %p400, %s24, 3
      %s402 = smul.addr %s401, 8
      %s403 = smul.addr %s399, 32
      %s404 = sadd.s32 %s402, %s403
      %s405 = smul.addr %s404, 8
      %s406 = scalar_lea.vmem %s4, %s405
      %p407 = scmp.lt.s32.totalorder %s23, 0
      %s408 = scalar_select %p407, %s23, 0
      %p409 = scmp.lt.s32.totalorder %s24, 3
      %s410 = scalar_select %p409, %s24, 3
      %s411 = smul.addr %s408, 4
      %s412 = sadd.s32 %s410, %s411
      %s413 = scalar_lea.vmem %s5, %s412
      %p414 = scmp.lt.s32.totalorder %s23, 0
      %s415 = scalar_select %p414, %s23, 0
      %p416 = scmp.lt.s32.totalorder %s24, 3
      %s417 = scalar_select %p416, %s24, 3
      %s418 = smul.addr %s415, 4
      %s419 = sadd.s32 %s417, %s418
      %s420 = scalar_lea.vmem %s6, %s419
      %p422 = scmp.eq.s32.totalorder %s25, 0
      // Predicated region
      $region37: #{_lambda_.10} parent=35 // pred_check
        %p423 = pneg %p422
      $region38: #{_lambda_.10} parent=35 // pred_check_branch
        %425 = sbr.rel (%p423) target = $region40
      $region39: #{_lambda_.10} parent=35 // pred_region
        %vm426 = vcmask 64512
        %427 = vst.msk [vmem:[#allocation2] sm:$0xff] %vm426, 0.0
        %428 = vst.msk [vmem:[#allocation2 + $0x8] sm:$0xff] %vm426, 0.0
        %429 = vst.msk [vmem:[#allocation2 + $0x10] sm:$0xff] %vm426, 0.0
        %430 = vst.msk [vmem:[#allocation2 + $0x18] sm:$0xff] %vm426, 0.0
        %431 = vst.msk [vmem:[#allocation2 + $0x20] sm:$0xff] %vm426, 0.0
        %432 = vst.msk [vmem:[#allocation2 + $0x28] sm:$0xff] %vm426, 0.0
        %433 = vst.msk [vmem:[#allocation2 + $0x30] sm:$0xff] %vm426, 0.0
        %434 = vst.msk [vmem:[#allocation2 + $0x38] sm:$0xff] %vm426, 0.0
        %435 = vst.msk [vmem:[#allocation2 + $0x40] sm:$0xff] %vm426, 0.0
        %436 = vst.msk [vmem:[#allocation2 + $0x48] sm:$0xff] %vm426, 0.0
        %437 = vst.msk [vmem:[#allocation2 + $0x50] sm:$0xff] %vm426, 0.0
        %438 = vst.msk [vmem:[#allocation2 + $0x58] sm:$0xff] %vm426, 0.0
        %439 = vst.msk [vmem:[#allocation2 + $0x60] sm:$0xff] %vm426, 0.0
      $region40: #{_lambda_.10} parent=35 // pred_fallthru
        _
      %v440 = vld [vmem:[%s374] sm:$0xf]
      %v441 = vld [vmem:[%s374 + $0x4] sm:$0xf]
      %v442 = vld [vmem:[%s374 + $0x8] sm:$0xf]
      %v443 = vld [vmem:[%s374 + $0xc] sm:$0xf]
      %v444 = vld [vmem:[%s374 + $0x10] sm:$0xf]
      %v445 = vld [vmem:[%s374 + $0x14] sm:$0xf]
      %v446 = vld [vmem:[%s374 + $0x18] sm:$0xf]
      %v447 = vld [vmem:[%s374 + $0x1c] sm:$0xf]
      %v448 = vld [vmem:[%s374 + $0x20] sm:$0xf]
      %v449 = vld [vmem:[%s374 + $0x24] sm:$0xf]
      %v450 = vld [vmem:[%s374 + $0x28] sm:$0xf]
      %v451 = vld [vmem:[%s374 + $0x2c] sm:$0xf]
      %v452 = vld [vmem:[%s374 + $0x30] sm:$0xf]
      %v453 = vunpack.c.l.bf16 %v440
      %v454 = vunpack.c.l.bf16 %v441
      %v455 = vunpack.c.l.bf16 %v442
      %v456 = vunpack.c.l.bf16 %v443
      %v457 = vunpack.c.l.bf16 %v444
      %v458 = vunpack.c.l.bf16 %v445
      %v459 = vunpack.c.l.bf16 %v446
      %v460 = vunpack.c.l.bf16 %v447
      %v461 = vunpack.c.l.bf16 %v448
      %v462 = vunpack.c.l.bf16 %v449
      %v463 = vunpack.c.l.bf16 %v450
      %v464 = vunpack.c.l.bf16 %v451
      %v465 = vunpack.c.l.bf16 %v452
      %v466 = vld [vmem:[%s385] sm:$0xf]
      %v467 = vld [vmem:[%s385 + $0x4] sm:$0xf]
      %v468 = vld [vmem:[%s385 + $0x8] sm:$0xf]
      %v469 = vld [vmem:[%s385 + $0xc] sm:$0xf]
      %v470 = vld [vmem:[%s385 + $0x10] sm:$0xf]
      %v471 = vld [vmem:[%s385 + $0x14] sm:$0xf]
      %v472 = vld [vmem:[%s385 + $0x18] sm:$0xf]
      %v473 = vld [vmem:[%s385 + $0x1c] sm:$0xf]
      %v474 = vld [vmem:[%s385 + $0x20] sm:$0xf]
      %v475 = vld [vmem:[%s385 + $0x24] sm:$0xf]
      %v476 = vld [vmem:[%s385 + $0x28] sm:$0xf]
      %v477 = vld [vmem:[%s385 + $0x2c] sm:$0xf]
      %v478 = vld [vmem:[%s385 + $0x30] sm:$0xf]
      %v479 = vunpack.c.l.bf16 %v466
      %v480 = vunpack.c.l.bf16 %v467
      %v481 = vunpack.c.l.bf16 %v468
      %v482 = vunpack.c.l.bf16 %v469
      %v483 = vunpack.c.l.bf16 %v470
      %v484 = vunpack.c.l.bf16 %v471
      %v485 = vunpack.c.l.bf16 %v472
      %v486 = vunpack.c.l.bf16 %v473
      %v487 = vunpack.c.l.bf16 %v474
      %v488 = vunpack.c.l.bf16 %v475
      %v489 = vunpack.c.l.bf16 %v476
      %v490 = vunpack.c.l.bf16 %v477
      %v491 = vunpack.c.l.bf16 %v478
      %v492 = vld [vmem:[%s396] sm:$0xff]
      %v493 = vld [vmem:[%s396 + $0x8] sm:$0xff]
      %v494 = vld [vmem:[%s396 + $0x10] sm:$0xff]
      %v495 = vld [vmem:[%s396 + $0x18] sm:$0xff]
      %v496 = vld [vmem:[%s396 + $0x20] sm:$0xff]
      %v497 = vld [vmem:[%s396 + $0x28] sm:$0xff]
      %v498 = vld [vmem:[%s396 + $0x30] sm:$0xff]
      %v499 = vld [vmem:[%s396 + $0x38] sm:$0xff]
      %v500 = vld [vmem:[%s396 + $0x40] sm:$0xff]
      %v501 = vld [vmem:[%s396 + $0x48] sm:$0xff]
      %v502 = vld [vmem:[%s396 + $0x50] sm:$0xff]
      %v503 = vld [vmem:[%s396 + $0x58] sm:$0xff]
      %v504 = vld [vmem:[%s396 + $0x60] sm:$0xff]
      %506 = vset.pattern.permute.xlu0 0
      %507 = vperm.xlu0 %506, %v492
      %v508 = vpop.permute.xlu0 %507
      %511 = vset.pattern.permute.xlu0 0
      %512 = vperm.xlu0 %511, %v493
      %v513 = vpop.permute.xlu0 %512
      %516 = vset.pattern.permute.xlu0 0
      %517 = vperm.xlu0 %516, %v494
      %v518 = vpop.permute.xlu0 %517
      %521 = vset.pattern.permute.xlu0 0
      %522 = vperm.xlu0 %521, %v495
      %v523 = vpop.permute.xlu0 %522
      %526 = vset.pattern.permute.xlu0 0
      %527 = vperm.xlu0 %526, %v496
      %v528 = vpop.permute.xlu0 %527
      %531 = vset.pattern.permute.xlu0 0
      %532 = vperm.xlu0 %531, %v497
      %v533 = vpop.permute.xlu0 %532
      %536 = vset.pattern.permute.xlu0 0
      %537 = vperm.xlu0 %536, %v498
      %v538 = vpop.permute.xlu0 %537
      %541 = vset.pattern.permute.xlu0 0
      %542 = vperm.xlu0 %541, %v499
      %v543 = vpop.permute.xlu0 %542
      %546 = vset.pattern.permute.xlu0 0
      %547 = vperm.xlu0 %546, %v500
      %v548 = vpop.permute.xlu0 %547
      %551 = vset.pattern.permute.xlu0 0
      %552 = vperm.xlu0 %551, %v501
      %v553 = vpop.permute.xlu0 %552
      %556 = vset.pattern.permute.xlu0 0
      %557 = vperm.xlu0 %556, %v502
      %v558 = vpop.permute.xlu0 %557
      %561 = vset.pattern.permute.xlu0 0
      %562 = vperm.xlu0 %561, %v503
      %v563 = vpop.permute.xlu0 %562
      %566 = vset.pattern.permute.xlu0 0
      %567 = vperm.xlu0 %566, %v504
      %v568 = vpop.permute.xlu0 %567
      %v570 = vmul.f32 %v479, %v508
      %v571 = vmul.f32 %v480, %v513
      %v572 = vmul.f32 %v481, %v518
      %v573 = vmul.f32 %v482, %v523
      %v574 = vmul.f32 %v483, %v528
      %v575 = vmul.f32 %v484, %v533
      %v576 = vmul.f32 %v485, %v538
      %v577 = vmul.f32 %v486, %v543
      %v578 = vmul.f32 %v487, %v548
      %v579 = vmul.f32 %v488, %v553
      %v580 = vmul.f32 %v489, %v558
      %v581 = vmul.f32 %v490, %v563
      %v582 = vmul.f32 %v491, %v568
      %596 = vrot.lane.b32.xlu0 %v570, 8
      %v597 = vpop.permute.xlu0 %596
      %598 = vrot.lane.b32.xlu0 %v571, 8
      %v599 = vpop.permute.xlu0 %598
      %600 = vrot.lane.b32.xlu0 %v572, 8
      %v601 = vpop.permute.xlu0 %600
      %602 = vrot.lane.b32.xlu0 %v573, 8
      %v603 = vpop.permute.xlu0 %602
      %604 = vrot.lane.b32.xlu0 %v574, 8
      %v605 = vpop.permute.xlu0 %604
      %606 = vrot.lane.b32.xlu0 %v575, 8
      %v607 = vpop.permute.xlu0 %606
      %608 = vrot.lane.b32.xlu0 %v576, 8
      %v609 = vpop.permute.xlu0 %608
      %610 = vrot.lane.b32.xlu0 %v577, 8
      %v611 = vpop.permute.xlu0 %610
      %612 = vrot.lane.b32.xlu0 %v578, 8
      %v613 = vpop.permute.xlu0 %612
      %614 = vrot.lane.b32.xlu0 %v579, 8
      %v615 = vpop.permute.xlu0 %614
      %616 = vrot.lane.b32.xlu0 %v580, 8
      %v617 = vpop.permute.xlu0 %616
      %618 = vrot.lane.b32.xlu0 %v581, 8
      %v619 = vpop.permute.xlu0 %618
      %620 = vrot.lane.b32.xlu0 %v582, 8
      %v621 = vpop.permute.xlu0 %620
      %vm635 = vcmask 64512
      %v636 = vsel %vm635, %v453, %v597
      %v637 = vsel %vm635, %v454, %v599
      %v638 = vsel %vm635, %v455, %v601
      %v639 = vsel %vm635, %v456, %v603
      %v640 = vsel %vm635, %v457, %v605
      %v641 = vsel %vm635, %v458, %v607
      %v642 = vsel %vm635, %v459, %v609
      %v643 = vsel %vm635, %v460, %v611
      %v644 = vsel %vm635, %v461, %v613
      %v645 = vsel %vm635, %v462, %v615
      %v646 = vsel %vm635, %v463, %v617
      %v647 = vsel %vm635, %v464, %v619
      %v648 = vsel %vm635, %v465, %v621
      %v649 = vrot.slane %v636, 1
      %v650 = vrot.slane %v637, 1
      %v651 = vrot.slane %v638, 1
      %v652 = vrot.slane %v639, 1
      %v653 = vrot.slane %v640, 1
      %v654 = vrot.slane %v641, 1
      %v655 = vrot.slane %v642, 1
      %v656 = vrot.slane %v643, 1
      %v657 = vrot.slane %v644, 1
      %v658 = vrot.slane %v645, 1
      %v659 = vrot.slane %v646, 1
      %v660 = vrot.slane %v647, 1
      %v661 = vrot.slane %v648, 1
      %v662 = vlaneseq
      %v663 = vshrl.u32 %v662, 7
      %vm664 = vcmp.lt.s32.totalorder %v663, 7
      %v665 = vsel %vm664, %v660, %v661
      %v666 = vsel %vm664, %v659, %v660
      %v667 = vsel %vm664, %v658, %v659
      %v668 = vsel %vm664, %v657, %v658
      %v669 = vsel %vm664, %v656, %v657
      %v670 = vsel %vm664, %v655, %v656
      %v671 = vsel %vm664, %v654, %v655
      %v672 = vsel %vm664, %v653, %v654
      %v673 = vsel %vm664, %v652, %v653
      %v674 = vsel %vm664, %v651, %v652
      %v675 = vsel %vm664, %v650, %v651
      %v676 = vsel %vm664, %v649, %v650
      %v677 = vsel %vm664, %v661, %v649
      %v678 = vrot.slane %v636, 2
      %v679 = vrot.slane %v637, 2
      %v680 = vrot.slane %v638, 2
      %v681 = vrot.slane %v639, 2
      %v682 = vrot.slane %v640, 2
      %v683 = vrot.slane %v641, 2
      %v684 = vrot.slane %v642, 2
      %v685 = vrot.slane %v643, 2
      %v686 = vrot.slane %v644, 2
      %v687 = vrot.slane %v645, 2
      %v688 = vrot.slane %v646, 2
      %v689 = vrot.slane %v647, 2
      %v690 = vrot.slane %v648, 2
      %vm691 = vcmp.lt.s32.totalorder %v663, 6
      %v692 = vsel %vm691, %v689, %v690
      %v693 = vsel %vm691, %v688, %v689
      %v694 = vsel %vm691, %v687, %v688
      %v695 = vsel %vm691, %v686, %v687
      %v696 = vsel %vm691, %v685, %v686
      %v697 = vsel %vm691, %v684, %v685
      %v698 = vsel %vm691, %v683, %v684
      %v699 = vsel %vm691, %v682, %v683
      %v700 = vsel %vm691, %v681, %v682
      %v701 = vsel %vm691, %v680, %v681
      %v702 = vsel %vm691, %v679, %v680
      %v703 = vsel %vm691, %v678, %v679
      %v704 = vsel %vm691, %v690, %v678
      %718 = vrot.lane.b32.xlu0 %v676, 16
      %v719 = vpop.permute.xlu0 %718
      %720 = vrot.lane.b32.xlu0 %v675, 16
      %v721 = vpop.permute.xlu0 %720
      %722 = vrot.lane.b32.xlu0 %v674, 16
      %v723 = vpop.permute.xlu0 %722
      %724 = vrot.lane.b32.xlu0 %v673, 16
      %v725 = vpop.permute.xlu0 %724
      %726 = vrot.lane.b32.xlu0 %v672, 16
      %v727 = vpop.permute.xlu0 %726
      %728 = vrot.lane.b32.xlu0 %v671, 16
      %v729 = vpop.permute.xlu0 %728
      %730 = vrot.lane.b32.xlu0 %v670, 16
      %v731 = vpop.permute.xlu0 %730
      %732 = vrot.lane.b32.xlu0 %v669, 16
      %v733 = vpop.permute.xlu0 %732
      %734 = vrot.lane.b32.xlu0 %v668, 16
      %v735 = vpop.permute.xlu0 %734
      %736 = vrot.lane.b32.xlu0 %v667, 16
      %v737 = vpop.permute.xlu0 %736
      %738 = vrot.lane.b32.xlu0 %v666, 16
      %v739 = vpop.permute.xlu0 %738
      %740 = vrot.lane.b32.xlu0 %v665, 16
      %v741 = vpop.permute.xlu0 %740
      %742 = vrot.lane.b32.xlu0 %v677, 16
      %v743 = vpop.permute.xlu0 %742
      %770 = vrot.lane.b32.xlu0 %v703, 32
      %v771 = vpop.permute.xlu0 %770
      %772 = vrot.lane.b32.xlu0 %v702, 32
      %v773 = vpop.permute.xlu0 %772
      %774 = vrot.lane.b32.xlu0 %v701, 32
      %v775 = vpop.permute.xlu0 %774
      %776 = vrot.lane.b32.xlu0 %v700, 32
      %v777 = vpop.permute.xlu0 %776
      %778 = vrot.lane.b32.xlu0 %v699, 32
      %v779 = vpop.permute.xlu0 %778
      %780 = vrot.lane.b32.xlu0 %v698, 32
      %v781 = vpop.permute.xlu0 %780
      %782 = vrot.lane.b32.xlu0 %v697, 32
      %v783 = vpop.permute.xlu0 %782
      %784 = vrot.lane.b32.xlu0 %v696, 32
      %v785 = vpop.permute.xlu0 %784
      %786 = vrot.lane.b32.xlu0 %v695, 32
      %v787 = vpop.permute.xlu0 %786
      %788 = vrot.lane.b32.xlu0 %v694, 32
      %v789 = vpop.permute.xlu0 %788
      %790 = vrot.lane.b32.xlu0 %v693, 32
      %v791 = vpop.permute.xlu0 %790
      %792 = vrot.lane.b32.xlu0 %v692, 32
      %v793 = vpop.permute.xlu0 %792
      %794 = vrot.lane.b32.xlu0 %v704, 32
      %v795 = vpop.permute.xlu0 %794
      %vm809 = vcmask 130048
      %v810 = vsel %vm809, %v636, %v719
      %v811 = vsel %vm809, %v637, %v721
      %v812 = vsel %vm809, %v638, %v723
      %v813 = vsel %vm809, %v639, %v725
      %v814 = vsel %vm809, %v640, %v727
      %v815 = vsel %vm809, %v641, %v729
      %v816 = vsel %vm809, %v642, %v731
      %v817 = vsel %vm809, %v643, %v733
      %v818 = vsel %vm809, %v644, %v735
      %v819 = vsel %vm809, %v645, %v737
      %v820 = vsel %vm809, %v646, %v739
      %v821 = vsel %vm809, %v647, %v741
      %v822 = vsel %vm809, %v648, %v743
      %vm823 = vcmask 261120
      %v824 = vsel %vm823, %v810, %v771
      %v825 = vsel %vm823, %v811, %v773
      %v826 = vsel %vm823, %v812, %v775
      %v827 = vsel %vm823, %v813, %v777
      %v828 = vsel %vm823, %v814, %v779
      %v829 = vsel %vm823, %v815, %v781
      %v830 = vsel %vm823, %v816, %v783
      %v831 = vsel %vm823, %v817, %v785
      %v832 = vsel %vm823, %v818, %v787
      %v833 = vsel %vm823, %v819, %v789
      %v834 = vsel %vm823, %v820, %v791
      %v835 = vsel %vm823, %v821, %v793
      %v836 = vsel %vm823, %v822, %v795
      %v837 = vpack.c.bf16 %v825, %v824
      %v838 = vpack.c.bf16 %v827, %v826
      %v839 = vpack.c.bf16 %v829, %v828
      %v840 = vpack.c.bf16 %v831, %v830
      %v841 = vpack.c.bf16 %v833, %v832
      %v842 = vpack.c.bf16 %v835, %v834
      %v843 = vpack.c.bf16 %v836, %v836
      %s844 = smul.u32 %s25, 18
      %s845 = smul.addr %s844, 4
      %s846 = scalar_lea.vmem %s3, %s845
      %v847 = vld [vmem:[%s846] sm:$0xf]
      %v848 = vld [vmem:[%s846 + $0x4] sm:$0xf]
      %v849 = vld [vmem:[%s846 + $0x8] sm:$0xf]
      %v850 = vld [vmem:[%s846 + $0xc] sm:$0xf]
      %v851 = vld [vmem:[%s846 + $0x10] sm:$0xf]
      %v852 = vld [vmem:[%s846 + $0x14] sm:$0xf]
      %v859 = vunpack.c.l.b16 %v847
      %v860 = vunpack.c.l.b16 %v848
      %v861 = vunpack.c.l.b16 %v849
      %v862 = vunpack.c.l.b16 %v850
      %v863 = vunpack.c.l.b16 %v851
      %v864 = vunpack.c.l.b16 %v852
      %v865 = vpack.c.b16 %v860, %v859
      %v866 = vpack.c.b16 %v862, %v861
      %v867 = vpack.c.b16 %v864, %v863
      %vm871 = vcmask 392192
      %v873 = vsel %vm871, %v837, 0
      %v876 = vsel %vm871, %v838, 0
      %v879 = vsel %vm871, %v839, 0
      %v882 = vsel %vm871, %v840, 0
      %v885 = vsel %vm871, %v841, 0
      %v888 = vsel %vm871, %v842, 0
      %v891 = vsel %vm871, %v843, 0
      %893 = vmatpush.bf16.msra.mxu0 0
      %894 = vmatpush.bf16.msra.mxu0 0
      %895 = vmatpush.bf16.msra.mxu0 0
      %896 = vmatpush.bf16.msra.mxu0 0
      %897 = vmatpush.bf16.msra.mxu0 0
      %898 = vmatpush.bf16.msra.mxu0 %v867
      %899 = vmatpush.bf16.msra.mxu0 %v866
      %900 = vmatpush.bf16.msra.mxu0 %v865
      %901 = vmatmul.bf16.gmra.mxu0 %v873
      %v902 = vpop.f32.mrf.mxu0
      %v903 = vadd.f32 0.0, %v902
      %v904 = vpop.f32.mrf.mxu0
      %v905 = vadd.f32 0.0, %v904
      %906 = vmatmul.bf16.gmra.mxu0 %v876
      %v907 = vpop.f32.mrf.mxu0
      %v908 = vadd.f32 0.0, %v907
      %v909 = vpop.f32.mrf.mxu0
      %v910 = vadd.f32 0.0, %v909
      %911 = vmatmul.bf16.gmra.mxu0 %v879
      %v912 = vpop.f32.mrf.mxu0
      %v913 = vadd.f32 0.0, %v912
      %v914 = vpop.f32.mrf.mxu0
      %v915 = vadd.f32 0.0, %v914
      %916 = vmatmul.bf16.gmra.mxu0 %v882
      %v917 = vpop.f32.mrf.mxu0
      %v918 = vadd.f32 0.0, %v917
      %v919 = vpop.f32.mrf.mxu0
      %v920 = vadd.f32 0.0, %v919
      %921 = vmatmul.bf16.gmra.mxu0 %v885
      %v922 = vpop.f32.mrf.mxu0
      %v923 = vadd.f32 0.0, %v922
      %v924 = vpop.f32.mrf.mxu0
      %v925 = vadd.f32 0.0, %v924
      %926 = vmatmul.bf16.gmra.mxu0 %v888
      %v927 = vpop.f32.mrf.mxu0
      %v928 = vadd.f32 0.0, %v927
      %v929 = vpop.f32.mrf.mxu0
      %v930 = vadd.f32 0.0, %v929
      %931 = vmatmul.bf16.gmra.mxu0 %v891
      %v932 = vpop.f32.mrf.mxu0
      %v933 = vadd.f32 0.0, %v932
      %v934 = vpop.f32.mrf.mxu0
      %935 = vdwg.mxu0
      %v936 = vld [vmem:[#allocation2] sm:$0xff]
      %v937 = vld [vmem:[#allocation2 + $0x8] sm:$0xff]
      %v938 = vld [vmem:[#allocation2 + $0x10] sm:$0xff]
      %v939 = vld [vmem:[#allocation2 + $0x18] sm:$0xff]
      %v940 = vld [vmem:[#allocation2 + $0x20] sm:$0xff]
      %v941 = vld [vmem:[#allocation2 + $0x28] sm:$0xff]
      %v942 = vld [vmem:[#allocation2 + $0x30] sm:$0xff]
      %v943 = vld [vmem:[#allocation2 + $0x38] sm:$0xff]
      %v944 = vld [vmem:[#allocation2 + $0x40] sm:$0xff]
      %v945 = vld [vmem:[#allocation2 + $0x48] sm:$0xff]
      %v946 = vld [vmem:[#allocation2 + $0x50] sm:$0xff]
      %v947 = vld [vmem:[#allocation2 + $0x58] sm:$0xff]
      %v948 = vld [vmem:[#allocation2 + $0x60] sm:$0xff]
      %v949 = vadd.f32 %v936, %v903
      %v950 = vadd.f32 %v937, %v905
      %v951 = vadd.f32 %v938, %v908
      %v952 = vadd.f32 %v939, %v910
      %v953 = vadd.f32 %v940, %v913
      %v954 = vadd.f32 %v941, %v915
      %v955 = vadd.f32 %v942, %v918
      %v956 = vadd.f32 %v943, %v920
      %v957 = vadd.f32 %v944, %v923
      %v958 = vadd.f32 %v945, %v925
      %v959 = vadd.f32 %v946, %v928
      %v960 = vadd.f32 %v947, %v930
      %v961 = vadd.f32 %v948, %v933
      %962 = vst.msk [vmem:[#allocation2] sm:$0xff] %vm635, %v949
      %963 = vst.msk [vmem:[#allocation2 + $0x8] sm:$0xff] %vm635, %v950
      %964 = vst.msk [vmem:[#allocation2 + $0x10] sm:$0xff] %vm635, %v951
      %965 = vst.msk [vmem:[#allocation2 + $0x18] sm:$0xff] %vm635, %v952
      %966 = vst.msk [vmem:[#allocation2 + $0x20] sm:$0xff] %vm635, %v953
      %967 = vst.msk [vmem:[#allocation2 + $0x28] sm:$0xff] %vm635, %v954
      %968 = vst.msk [vmem:[#allocation2 + $0x30] sm:$0xff] %vm635, %v955
      %969 = vst.msk [vmem:[#allocation2 + $0x38] sm:$0xff] %vm635, %v956
      %970 = vst.msk [vmem:[#allocation2 + $0x40] sm:$0xff] %vm635, %v957
      %971 = vst.msk [vmem:[#allocation2 + $0x48] sm:$0xff] %vm635, %v958
      %972 = vst.msk [vmem:[#allocation2 + $0x50] sm:$0xff] %vm635, %v959
      %973 = vst.msk [vmem:[#allocation2 + $0x58] sm:$0xff] %vm635, %v960
      %974 = vst.msk [vmem:[#allocation2 + $0x60] sm:$0xff] %vm635, %v961
      %s975 = sadd.s32 6, %s844
      %s976 = smul.addr %s975, 4
      %s977 = scalar_lea.vmem %s3, %s976
      %v978 = vld [vmem:[%s977] sm:$0xf]
      %v979 = vld [vmem:[%s977 + $0x4] sm:$0xf]
      %v980 = vld [vmem:[%s977 + $0x8] sm:$0xf]
      %v981 = vld [vmem:[%s977 + $0xc] sm:$0xf]
      %v982 = vld [vmem:[%s977 + $0x10] sm:$0xf]
      %v983 = vld [vmem:[%s977 + $0x14] sm:$0xf]
      %v990 = vunpack.c.l.b16 %v978
      %v991 = vunpack.c.l.b16 %v979
      %v992 = vunpack.c.l.b16 %v980
      %v993 = vunpack.c.l.b16 %v981
      %v994 = vunpack.c.l.b16 %v982
      %v995 = vunpack.c.l.b16 %v983
      %v996 = vpack.c.b16 %v991, %v990
      %v997 = vpack.c.b16 %v993, %v992
      %v998 = vpack.c.b16 %v995, %v994
      %1002 = vmatpush.bf16.msra.mxu0 0
      %1003 = vmatpush.bf16.msra.mxu0 0
      %1004 = vmatpush.bf16.msra.mxu0 0
      %1005 = vmatpush.bf16.msra.mxu0 0
      %1006 = vmatpush.bf16.msra.mxu0 0
      %1007 = vmatpush.bf16.msra.mxu0 %v998
      %1008 = vmatpush.bf16.msra.mxu0 %v997
      %1009 = vmatpush.bf16.msra.mxu0 %v996
      %1010 = vmatmul.bf16.gmra.mxu0 %v873
      %v1011 = vpop.f32.mrf.mxu0
      %v1012 = vadd.f32 0.0, %v1011
      %v1013 = vpop.f32.mrf.mxu0
      %v1014 = vadd.f32 0.0, %v1013
      %1015 = vmatmul.bf16.gmra.mxu0 %v876
      %v1016 = vpop.f32.mrf.mxu0
      %v1017 = vadd.f32 0.0, %v1016
      %v1018 = vpop.f32.mrf.mxu0
      %v1019 = vadd.f32 0.0, %v1018
      %1020 = vmatmul.bf16.gmra.mxu0 %v879
      %v1021 = vpop.f32.mrf.mxu0
      %v1022 = vadd.f32 0.0, %v1021
      %v1023 = vpop.f32.mrf.mxu0
      %v1024 = vadd.f32 0.0, %v1023
      %1025 = vmatmul.bf16.gmra.mxu0 %v882
      %v1026 = vpop.f32.mrf.mxu0
      %v1027 = vadd.f32 0.0, %v1026
      %v1028 = vpop.f32.mrf.mxu0
      %v1029 = vadd.f32 0.0, %v1028
      %1030 = vmatmul.bf16.gmra.mxu0 %v885
      %v1031 = vpop.f32.mrf.mxu0
      %v1032 = vadd.f32 0.0, %v1031
      %v1033 = vpop.f32.mrf.mxu0
      %v1034 = vadd.f32 0.0, %v1033
      %1035 = vmatmul.bf16.gmra.mxu0 %v888
      %v1036 = vpop.f32.mrf.mxu0
      %v1037 = vadd.f32 0.0, %v1036
      %v1038 = vpop.f32.mrf.mxu0
      %v1039 = vadd.f32 0.0, %v1038
      %1040 = vmatmul.bf16.gmra.mxu0 %v891
      %v1041 = vpop.f32.mrf.mxu0
      %v1042 = vadd.f32 0.0, %v1041
      %v1043 = vpop.f32.mrf.mxu0
      %1044 = vdwg.mxu0
      %v1045 = vld [vmem:[#allocation2] sm:$0xff]
      %v1046 = vld [vmem:[#allocation2 + $0x8] sm:$0xff]
      %v1047 = vld [vmem:[#allocation2 + $0x10] sm:$0xff]
      %v1048 = vld [vmem:[#allocation2 + $0x18] sm:$0xff]
      %v1049 = vld [vmem:[#allocation2 + $0x20] sm:$0xff]
      %v1050 = vld [vmem:[#allocation2 + $0x28] sm:$0xff]
      %v1051 = vld [vmem:[#allocation2 + $0x30] sm:$0xff]
      %v1052 = vld [vmem:[#allocation2 + $0x38] sm:$0xff]
      %v1053 = vld [vmem:[#allocation2 + $0x40] sm:$0xff]
      %v1054 = vld [vmem:[#allocation2 + $0x48] sm:$0xff]
      %v1055 = vld [vmem:[#allocation2 + $0x50] sm:$0xff]
      %v1056 = vld [vmem:[#allocation2 + $0x58] sm:$0xff]
      %v1057 = vld [vmem:[#allocation2 + $0x60] sm:$0xff]
      %v1058 = vrot.slane %v1012, 2
      %v1059 = vrot.slane %v1014, 2
      %v1060 = vrot.slane %v1017, 2
      %v1061 = vrot.slane %v1019, 2
      %v1062 = vrot.slane %v1022, 2
      %v1063 = vrot.slane %v1024, 2
      %v1064 = vrot.slane %v1027, 2
      %v1065 = vrot.slane %v1029, 2
      %v1066 = vrot.slane %v1032, 2
      %v1067 = vrot.slane %v1034, 2
      %v1068 = vrot.slane %v1037, 2
      %v1069 = vrot.slane %v1039, 2
      %v1070 = vrot.slane %v1042, 2
      %v1071 = vsel %vm691, %v1069, %v1070
      %v1072 = vsel %vm691, %v1068, %v1069
      %v1073 = vsel %vm691, %v1067, %v1068
      %v1074 = vsel %vm691, %v1066, %v1067
      %v1075 = vsel %vm691, %v1065, %v1066
      %v1076 = vsel %vm691, %v1064, %v1065
      %v1077 = vsel %vm691, %v1063, %v1064
      %v1078 = vsel %vm691, %v1062, %v1063
      %v1079 = vsel %vm691, %v1061, %v1062
      %v1080 = vsel %vm691, %v1060, %v1061
      %v1081 = vsel %vm691, %v1059, %v1060
      %v1082 = vsel %vm691, %v1058, %v1059
      %v1083 = vsel %vm691, %v1070, %v1058
      %v1084 = vadd.f32 %v1045, %v1081
      %v1085 = vadd.f32 %v1046, %v1080
      %v1086 = vadd.f32 %v1047, %v1079
      %v1087 = vadd.f32 %v1048, %v1078
      %v1088 = vadd.f32 %v1049, %v1077
      %v1089 = vadd.f32 %v1050, %v1076
      %v1090 = vadd.f32 %v1051, %v1075
      %v1091 = vadd.f32 %v1052, %v1074
      %v1092 = vadd.f32 %v1053, %v1073
      %v1093 = vadd.f32 %v1054, %v1072
      %v1094 = vadd.f32 %v1055, %v1071
      %v1095 = vadd.f32 %v1056, %v1083
      %v1096 = vadd.f32 %v1057, %v1082
      %1097 = vst.msk [vmem:[#allocation2] sm:$0xff] %vm635, %v1084
      %1098 = vst.msk [vmem:[#allocation2 + $0x8] sm:$0xff] %vm635, %v1085
      %1099 = vst.msk [vmem:[#allocation2 + $0x10] sm:$0xff] %vm635, %v1086
      %1100 = vst.msk [vmem:[#allocation2 + $0x18] sm:$0xff] %vm635, %v1087
      %1101 = vst.msk [vmem:[#allocation2 + $0x20] sm:$0xff] %vm635, %v1088
      %1102 = vst.msk [vmem:[#allocation2 + $0x28] sm:$0xff] %vm635, %v1089
      %1103 = vst.msk [vmem:[#allocation2 + $0x30] sm:$0xff] %vm635, %v1090
      %1104 = vst.msk [vmem:[#allocation2 + $0x38] sm:$0xff] %vm635, %v1091
      %1105 = vst.msk [vmem:[#allocation2 + $0x40] sm:$0xff] %vm635, %v1092
      %1106 = vst.msk [vmem:[#allocation2 + $0x48] sm:$0xff] %vm635, %v1093
      %1107 = vst.msk [vmem:[#allocation2 + $0x50] sm:$0xff] %vm635, %v1094
      %1108 = vst.msk [vmem:[#allocation2 + $0x58] sm:$0xff] %vm635, %v1095
      %1109 = vst.msk [vmem:[#allocation2 + $0x60] sm:$0xff] %vm635, %v1096
      %s1110 = sadd.s32 12, %s844
      %s1111 = smul.addr %s1110, 4
      %s1112 = scalar_lea.vmem %s3, %s1111
      %v1113 = vld [vmem:[%s1112] sm:$0xf]
      %v1114 = vld [vmem:[%s1112 + $0x4] sm:$0xf]
      %v1115 = vld [vmem:[%s1112 + $0x8] sm:$0xf]
      %v1116 = vld [vmem:[%s1112 + $0xc] sm:$0xf]
      %v1117 = vld [vmem:[%s1112 + $0x10] sm:$0xf]
      %v1118 = vld [vmem:[%s1112 + $0x14] sm:$0xf]
      %v1125 = vunpack.c.l.b16 %v1113
      %v1126 = vunpack.c.l.b16 %v1114
      %v1127 = vunpack.c.l.b16 %v1115
      %v1128 = vunpack.c.l.b16 %v1116
      %v1129 = vunpack.c.l.b16 %v1117
      %v1130 = vunpack.c.l.b16 %v1118
      %v1131 = vpack.c.b16 %v1126, %v1125
      %v1132 = vpack.c.b16 %v1128, %v1127
      %v1133 = vpack.c.b16 %v1130, %v1129
      %1137 = vmatpush.bf16.msra.mxu0 0
      %1138 = vmatpush.bf16.msra.mxu0 0
      %1139 = vmatpush.bf16.msra.mxu0 0
      %1140 = vmatpush.bf16.msra.mxu0 0
      %1141 = vmatpush.bf16.msra.mxu0 0
      %1142 = vmatpush.bf16.msra.mxu0 %v1133
      %1143 = vmatpush.bf16.msra.mxu0 %v1132
      %1144 = vmatpush.bf16.msra.mxu0 %v1131
      %1145 = vmatmul.bf16.gmra.mxu0 %v873
      %v1146 = vpop.f32.mrf.mxu0
      %v1147 = vadd.f32 0.0, %v1146
      %v1148 = vpop.f32.mrf.mxu0
      %v1149 = vadd.f32 0.0, %v1148
      %1150 = vmatmul.bf16.gmra.mxu0 %v876
      %v1151 = vpop.f32.mrf.mxu0
      %v1152 = vadd.f32 0.0, %v1151
      %v1153 = vpop.f32.mrf.mxu0
      %v1154 = vadd.f32 0.0, %v1153
      %1155 = vmatmul.bf16.gmra.mxu0 %v879
      %v1156 = vpop.f32.mrf.mxu0
      %v1157 = vadd.f32 0.0, %v1156
      %v1158 = vpop.f32.mrf.mxu0
      %v1159 = vadd.f32 0.0, %v1158
      %1160 = vmatmul.bf16.gmra.mxu0 %v882
      %v1161 = vpop.f32.mrf.mxu0
      %v1162 = vadd.f32 0.0, %v1161
      %v1163 = vpop.f32.mrf.mxu0
      %v1164 = vadd.f32 0.0, %v1163
      %1165 = vmatmul.bf16.gmra.mxu0 %v885
      %v1166 = vpop.f32.mrf.mxu0
      %v1167 = vadd.f32 0.0, %v1166
      %v1168 = vpop.f32.mrf.mxu0
      %v1169 = vadd.f32 0.0, %v1168
      %1170 = vmatmul.bf16.gmra.mxu0 %v888
      %v1171 = vpop.f32.mrf.mxu0
      %v1172 = vadd.f32 0.0, %v1171
      %v1173 = vpop.f32.mrf.mxu0
      %v1174 = vadd.f32 0.0, %v1173
      %1175 = vmatmul.bf16.gmra.mxu0 %v891
      %v1176 = vpop.f32.mrf.mxu0
      %v1177 = vadd.f32 0.0, %v1176
      %v1178 = vpop.f32.mrf.mxu0
      %1179 = vdwg.mxu0
      %v1180 = vld [vmem:[#allocation2] sm:$0xff]
      %v1181 = vld [vmem:[#allocation2 + $0x8] sm:$0xff]
      %v1182 = vld [vmem:[#allocation2 + $0x10] sm:$0xff]
      %v1183 = vld [vmem:[#allocation2 + $0x18] sm:$0xff]
      %v1184 = vld [vmem:[#allocation2 + $0x20] sm:$0xff]
      %v1185 = vld [vmem:[#allocation2 + $0x28] sm:$0xff]
      %v1186 = vld [vmem:[#allocation2 + $0x30] sm:$0xff]
      %v1187 = vld [vmem:[#allocation2 + $0x38] sm:$0xff]
      %v1188 = vld [vmem:[#allocation2 + $0x40] sm:$0xff]
      %v1189 = vld [vmem:[#allocation2 + $0x48] sm:$0xff]
      %v1190 = vld [vmem:[#allocation2 + $0x50] sm:$0xff]
      %v1191 = vld [vmem:[#allocation2 + $0x58] sm:$0xff]
      %v1192 = vld [vmem:[#allocation2 + $0x60] sm:$0xff]
      %v1193 = vrot.slane %v1147, 4
      %v1194 = vrot.slane %v1149, 4
      %v1195 = vrot.slane %v1152, 4
      %v1196 = vrot.slane %v1154, 4
      %v1197 = vrot.slane %v1157, 4
      %v1198 = vrot.slane %v1159, 4
      %v1199 = vrot.slane %v1162, 4
      %v1200 = vrot.slane %v1164, 4
      %v1201 = vrot.slane %v1167, 4
      %v1202 = vrot.slane %v1169, 4
      %v1203 = vrot.slane %v1172, 4
      %v1204 = vrot.slane %v1174, 4
      %v1205 = vrot.slane %v1177, 4
      %vm1206 = vcmp.lt.s32.totalorder %v663, 4
      %v1207 = vsel %vm1206, %v1204, %v1205
      %v1208 = vsel %vm1206, %v1203, %v1204
      %v1209 = vsel %vm1206, %v1202, %v1203
      %v1210 = vsel %vm1206, %v1201, %v1202
      %v1211 = vsel %vm1206, %v1200, %v1201
      %v1212 = vsel %vm1206, %v1199, %v1200
      %v1213 = vsel %vm1206, %v1198, %v1199
      %v1214 = vsel %vm1206, %v1197, %v1198
      %v1215 = vsel %vm1206, %v1196, %v1197
      %v1216 = vsel %vm1206, %v1195, %v1196
      %v1217 = vsel %vm1206, %v1194, %v1195
      %v1218 = vsel %vm1206, %v1193, %v1194
      %v1219 = vsel %vm1206, %v1205, %v1193
      %v1220 = vadd.f32 %v1180, %v1216
      %v1221 = vadd.f32 %v1181, %v1215
      %v1222 = vadd.f32 %v1182, %v1214
      %v1223 = vadd.f32 %v1183, %v1213
      %v1224 = vadd.f32 %v1184, %v1212
      %v1225 = vadd.f32 %v1185, %v1211
      %v1226 = vadd.f32 %v1186, %v1210
      %v1227 = vadd.f32 %v1187, %v1209
      %v1228 = vadd.f32 %v1188, %v1208
      %v1229 = vadd.f32 %v1189, %v1207
      %v1230 = vadd.f32 %v1190, %v1219
      %v1231 = vadd.f32 %v1191, %v1218
      %v1232 = vadd.f32 %v1192, %v1217
      %1233 = vst.msk [vmem:[#allocation2] sm:$0xff] %vm635, %v1220
      %1234 = vst.msk [vmem:[#allocation2 + $0x8] sm:$0xff] %vm635, %v1221
      %1235 = vst.msk [vmem:[#allocation2 + $0x10] sm:$0xff] %vm635, %v1222
      %1236 = vst.msk [vmem:[#allocation2 + $0x18] sm:$0xff] %vm635, %v1223
      %1237 = vst.msk [vmem:[#allocation2 + $0x20] sm:$0xff] %vm635, %v1224
      %1238 = vst.msk [vmem:[#allocation2 + $0x28] sm:$0xff] %vm635, %v1225
      %1239 = vst.msk [vmem:[#allocation2 + $0x30] sm:$0xff] %vm635, %v1226
      %1240 = vst.msk [vmem:[#allocation2 + $0x38] sm:$0xff] %vm635, %v1227
      %1241 = vst.msk [vmem:[#allocation2 + $0x40] sm:$0xff] %vm635, %v1228
      %1242 = vst.msk [vmem:[#allocation2 + $0x48] sm:$0xff] %vm635, %v1229
      %1243 = vst.msk [vmem:[#allocation2 + $0x50] sm:$0xff] %vm635, %v1230
      %1244 = vst.msk [vmem:[#allocation2 + $0x58] sm:$0xff] %vm635, %v1231
      %1245 = vst.msk [vmem:[#allocation2 + $0x60] sm:$0xff] %vm635, %v1232
      %p1246 = scmp.eq.s32.totalorder %s25, 2
      // Predicated region
      $region41: #{_lambda_.10} parent=35 // pred_check
        %p1247 = pneg %p1246
      $region42: #{_lambda_.10} parent=35 // pred_check_branch
        %1249 = sbr.rel (%p1247) target = $region44
      $region43: #{_lambda_.10} parent=35 // pred_region
        %v1250 = vld [vmem:[#allocation2] sm:$0xff]
        %1251 = vst.msk [vmem:[%s406] sm:$0xff] %vm635, %v1250
        %v1252 = vld [vmem:[#allocation2 + $0xa] sm:$0xff]
        %1253 = vst.msk [vmem:[%s406 + $0x8] sm:$0xff] %vm635, %v1252
        %v1254 = vld [vmem:[#allocation2 + $0x14] sm:$0xff]
        %1255 = vst.msk [vmem:[%s406 + $0x10] sm:$0xff] %vm635, %v1254
        %v1256 = vld [vmem:[#allocation2 + $0x1e] sm:$0xff]
        %1257 = vst.msk [vmem:[%s406 + $0x18] sm:$0xff] %vm635, %v1256
        %v1258 = vld [vmem:[#allocation2 + $0x28] sm:$0xff]
        %1259 = vst.msk [vmem:[%s406 + $0x20] sm:$0xff] %vm635, %v1258
        %v1260 = vld [vmem:[#allocation2 + $0x32] sm:$0xff]
        %1261 = vst.msk [vmem:[%s406 + $0x28] sm:$0xff] %vm635, %v1260
        %v1262 = vld [vmem:[#allocation2 + $0x3c] sm:$0xff]
        %1263 = vst.msk [vmem:[%s406 + $0x30] sm:$0xff] %vm635, %v1262
        %v1264 = vld [vmem:[#allocation2 + $0x46] sm:$0xff]
        %1265 = vst.msk [vmem:[%s406 + $0x38] sm:$0xff] %vm635, %v1264
        %v1266 = vld [vmem:[%s406] sm:$0xff]
        %v1267 = vld [vmem:[%s406 + $0x8] sm:$0xff]
        %v1268 = vld [vmem:[%s406 + $0x10] sm:$0xff]
        %v1269 = vld [vmem:[%s406 + $0x18] sm:$0xff]
        %v1270 = vld [vmem:[%s406 + $0x20] sm:$0xff]
        %v1271 = vld [vmem:[%s406 + $0x28] sm:$0xff]
        %v1272 = vld [vmem:[%s406 + $0x30] sm:$0xff]
        %v1273 = vld [vmem:[%s406 + $0x38] sm:$0xff]
        %v1274 = vsel %vm635, %v1266, 0.0
        %v1275 = vsel %vm635, %v1267, 0.0
        %v1276 = vadd.f32 %v1274, %v1275
        %v1277 = vsel %vm635, %v1268, 0.0
        %v1278 = vadd.f32 %v1276, %v1277
        %v1279 = vsel %vm635, %v1269, 0.0
        %v1280 = vadd.f32 %v1278, %v1279
        %v1281 = vsel %vm635, %v1270, 0.0
        %v1282 = vadd.f32 %v1280, %v1281
        %v1283 = vsel %vm635, %v1271, 0.0
        %v1284 = vadd.f32 %v1282, %v1283
        %v1285 = vsel %vm635, %v1272, 0.0
        %v1286 = vadd.f32 %v1284, %v1285
        %v1287 = vsel %vm635, %v1273, 0.0
        %v1288 = vadd.f32 %v1286, %v1287
        %v1289 = vrot.slane %v1288, 4
        %v1290 = vadd.f32 %v1288, %v1289
        %v1291 = vrot.slane %v1290, 2
        %v1292 = vadd.f32 %v1290, %v1291
        %v1293 = vrot.slane %v1292, 1
        %v1294 = vadd.f32 %v1292, %v1293
        %vm1295 = vcmask 57344
        %1296 = vst.msk [vmem:[%s413] sm:$0x1] %vm1295, %v1294
        %v1297 = vmul.f32 %v1266, %v1266
        %v1298 = vmul.f32 %v1267, %v1267
        %v1299 = vmul.f32 %v1268, %v1268
        %v1300 = vmul.f32 %v1269, %v1269
        %v1301 = vmul.f32 %v1270, %v1270
        %v1302 = vmul.f32 %v1271, %v1271
        %v1303 = vmul.f32 %v1272, %v1272
        %v1304 = vmul.f32 %v1273, %v1273
        %v1305 = vsel %vm635, %v1297, 0.0
        %v1306 = vsel %vm635, %v1298, 0.0
        %v1307 = vadd.f32 %v1305, %v1306
        %v1308 = vsel %vm635, %v1299, 0.0
        %v1309 = vadd.f32 %v1307, %v1308
        %v1310 = vsel %vm635, %v1300, 0.0
        %v1311 = vadd.f32 %v1309, %v1310
        %v1312 = vsel %vm635, %v1301, 0.0
        %v1313 = vadd.f32 %v1311, %v1312
        %v1314 = vsel %vm635, %v1302, 0.0
        %v1315 = vadd.f32 %v1313, %v1314
        %v1316 = vsel %vm635, %v1303, 0.0
        %v1317 = vadd.f32 %v1315, %v1316
        %v1318 = vsel %vm635, %v1304, 0.0
        %v1319 = vadd.f32 %v1317, %v1318
        %v1320 = vrot.slane %v1319, 4
        %v1321 = vadd.f32 %v1319, %v1320
        %v1322 = vrot.slane %v1321, 2
        %v1323 = vadd.f32 %v1321, %v1322
        %v1324 = vrot.slane %v1323, 1
        %v1325 = vadd.f32 %v1323, %v1324
        %1326 = vst.msk [vmem:[%s420] sm:$0x1] %vm1295, %v1325
      $region44: #{_lambda_.10} parent=35 // pred_fallthru
        _
      %p1327 = scmp.lt.s32.totalorder %s23, 0
      %s1328 = scalar_select %p1327, %s23, 0
      %p1329 = scmp.lt.s32.totalorder %s24, 3
      %s1330 = scalar_select %p1329, %s24, 3
      %s1331 = smul.addr %s1330, 8
      %s1332 = smul.addr %s1328, 32
      %s1333 = sadd.s32 %s1331, %s1332
      %s1334 = smul.addr %s1333, 8
      %s1335 = scalar_lea.vmem %s4, %s1334
      %p1336 = scmp.lt.s32.totalorder %s23, 0
      %s1337 = scalar_select %p1336, %s23, 0
      %p1338 = scmp.lt.s32.totalorder %s24, 3
      %s1339 = scalar_select %p1338, %s24, 3
      %s1340 = smul.addr %s1337, 4
      %s1341 = sadd.s32 %s1339, %s1340
      %s1342 = scalar_lea.vmem %s5, %s1341
      %p1343 = scmp.lt.s32.totalorder %s23, 0
      %s1344 = scalar_select %p1343, %s23, 0
      %p1345 = scmp.lt.s32.totalorder %s24, 3
      %s1346 = scalar_select %p1345, %s24, 3
      %s1347 = smul.addr %s1344, 4
      %s1348 = sadd.s32 %s1346, %s1347
      %s1349 = scalar_lea.vmem %s6, %s1348
      // Predicated region
      $region45: #{_lambda_.10} parent=35 // pred_check
        %p1350 = pneg %p168
      $region46: #{_lambda_.10} parent=35 // pred_check_branch
        %1352 = sbr.rel (%p1350) target = $region48
      $region47: #{_lambda_.10} parent=35 // pred_region
        _
      $region48: #{_lambda_.10} parent=35 // pred_fallthru
        _
      // Predicated region
      $region49: #{_lambda_.10} parent=35 // pred_check
        %p1353 = pneg %p196
      $region50: #{_lambda_.10} parent=35 // pred_check_branch
        %1355 = sbr.rel (%p1353) target = $region52
      $region51: #{_lambda_.10} parent=35 // pred_region
        _
      $region52: #{_lambda_.10} parent=35 // pred_fallthru
        _
      // Predicated region
      $region53: #{_lambda_.10} parent=35 // pred_check
        %p1356 = pneg %p224
      $region54: #{_lambda_.10} parent=35 // pred_check_branch
        %1358 = sbr.rel (%p1356) target = $region56
      $region55: #{_lambda_.10} parent=35 // pred_region
        _
      $region56: #{_lambda_.10} parent=35 // pred_fallthru
        _
    $region36: #{_lambda_.10} parent=5 // pred_fallthru
      _
    %p1359 = scmp.le.s32.totalorder 2, %s13
    // Predicated region
    $region57: #{_lambda_.10} parent=5 // pred_check
      %p1360 = pneg %p1359
    $region58: #{_lambda_.10} parent=5 // pred_check_branch
      %1362 = sbr.rel (%p1360) target = $region60
    $region59: #{_lambda_.10} parent=5 // pred_region
      %s1363 = ssub.s32 %s13, 2
      // Predicated region
      $region61: #{_lambda_.10} parent=59 // pred_check
        %p1364 = pneg %p174
      $region62: #{_lambda_.10} parent=59 // pred_check_branch
        %1366 = sbr.rel (%p1364) target = $region64
      $region63: #{_lambda_.10} parent=59 // pred_region
        %p1367 = scmp.lt.s32.totalorder %s26, 0
        %s1368 = scalar_select %p1367, %s26, 0
        %p1369 = scmp.lt.s32.totalorder %s27, 3
        %s1370 = scalar_select %p1369, %s27, 3
        %s1371 = smul.addr %s1370, 8
        %s1372 = smul.addr %s1368, 32
        %s1373 = sadd.s32 %s1371, %s1372
        %s1374 = smul.addr %s1373, 8
        %s1375 = scalar_lea.vmem %s4, %s1374
      $region64: #{_lambda_.10} parent=59 // pred_fallthru
        _
      // Predicated region
      $region65: #{_lambda_.10} parent=59 // pred_check
        %p1376 = pneg %p202
      $region66: #{_lambda_.10} parent=59 // pred_check_branch
        %1378 = sbr.rel (%p1376) target = $region68
      $region67: #{_lambda_.10} parent=59 // pred_region
        %p1379 = scmp.lt.s32.totalorder %s26, 0
        %s1380 = scalar_select %p1379, %s26, 0
        %p1381 = scmp.lt.s32.totalorder %s27, 3
        %s1382 = scalar_select %p1381, %s27, 3
        %s1383 = smul.addr %s1380, 4
        %s1384 = sadd.s32 %s1382, %s1383
        %s1385 = scalar_lea.vmem %s5, %s1384
      $region68: #{_lambda_.10} parent=59 // pred_fallthru
        _
      // Predicated region
      $region69: #{_lambda_.10} parent=59 // pred_check
        %p1386 = pneg %p230
      $region70: #{_lambda_.10} parent=59 // pred_check_branch
        %1388 = sbr.rel (%p1386) target = $region72
      $region71: #{_lambda_.10} parent=59 // pred_region
        %p1389 = scmp.lt.s32.totalorder %s26, 0
        %s1390 = scalar_select %p1389, %s26, 0
        %p1391 = scmp.lt.s32.totalorder %s27, 3
        %s1392 = scalar_select %p1391, %s27, 3
        %s1393 = smul.addr %s1390, 4
        %s1394 = sadd.s32 %s1392, %s1393
        %s1395 = scalar_lea.vmem %s6, %s1394
      $region72: #{_lambda_.10} parent=59 // pred_fallthru
        _
    $region60: #{_lambda_.10} parent=5 // pred_fallthru
      _
  $region6: #{_lambda_.10} parent=0 // loop_footer
    %s17 = sadd.s32 1, %s13
  $region7: #{_lambda_.10} parent=0 // loop_footer_branch
    %12 = sbr.rel target = $region3
  $region8: #{_lambda_.10} parent=0 // loop_exit
    _

// kernel: _lambda_.13
$region0: #{_lambda_.13}
  #allocation0 [shape = 'u32[]', space=smem, size = 0x4, offset = 0x4, fixed_abs, tag = 'smem constant byte address 0x4 - core index']
  #allocation1 [shape = 'u32[72,128]{1,0:T(1,128)}', space=vmem, size = 0x9000, scoped, tag = 'internal scratch']
  %s0 = inlined_call_operand.vmem [shape: bf16[256,8], index: 0, kind: input, shape index: {}]
  %s1 = inlined_call_operand.vmem [shape: bf16[256,32], index: 1, kind: input, shape index: {}]
  %s2 = inlined_call_operand.vmem [shape: bf16[8,4], index: 2, kind: input, shape index: {}]
  %s3 = inlined_call_operand.vmem [shape: bf16[32,4], index: 3, kind: input, shape index: {}]
  %s4 = inlined_call_operand.vmem [shape: f32[1,4], index: 4, kind: input, shape index: {}]
  %s5 = inlined_call_operand.vmem [shape: f32[256,1], index: 5, kind: output, shape index: {}]
  %s6 = sld [smem:[#allocation0]]
  $region30: #{_lambda_.13} parent=0
    _
  %s8 = ssub.s32 1, %s6
  %s9 = scalar_select 0, %s8, %s6
  // Predicated region
  $region2: #{_lambda_.13} parent=0 // pred_check
    _
  $region3: #{_lambda_.13} parent=0 // pred_check_branch
    %11 = sbr.rel (0) target = $region5
  $region4: #{_lambda_.13} parent=0 // pred_region
    _
  $region5: #{_lambda_.13} parent=0 // pred_fallthru
    _
  // Predicated region
  $region6: #{_lambda_.13} parent=0 // pred_check
    _
  $region7: #{_lambda_.13} parent=0 // pred_check_branch
    %13 = sbr.rel (0) target = $region9
  $region8: #{_lambda_.13} parent=0 // pred_region
    _
  $region9: #{_lambda_.13} parent=0 // pred_fallthru
    _
  // Predicated region
  $region10: #{_lambda_.13} parent=0 // pred_check
    _
  $region11: #{_lambda_.13} parent=0 // pred_check_branch
    %15 = sbr.rel (0) target = $region13
  $region12: #{_lambda_.13} parent=0 // pred_region
    _
  $region13: #{_lambda_.13} parent=0 // pred_fallthru
    _
  // Predicated region
  $region14: #{_lambda_.13} parent=0 // pred_check
    _
  $region15: #{_lambda_.13} parent=0 // pred_check_branch
    %17 = sbr.rel (0) target = $region17
  $region16: #{_lambda_.13} parent=0 // pred_region
    _
  $region17: #{_lambda_.13} parent=0 // pred_fallthru
    _
  // Predicated region
  $region18: #{_lambda_.13} parent=0 // pred_check
    _
  $region19: #{_lambda_.13} parent=0 // pred_check_branch
    %19 = sbr.rel (0) target = $region21
  $region20: #{_lambda_.13} parent=0 // pred_region
    _
  $region21: #{_lambda_.13} parent=0 // pred_fallthru
    _
  %v21 = vld [vmem:[%s0] sm:$0xf]
  %v22 = vld [vmem:[%s0 + $0x4] sm:$0xf]
  %v23 = vld [vmem:[%s0 + $0x8] sm:$0xf]
  %v24 = vld [vmem:[%s0 + $0xc] sm:$0xf]
  %v25 = vld [vmem:[%s0 + $0x10] sm:$0xf]
  %v26 = vld [vmem:[%s0 + $0x14] sm:$0xf]
  %v27 = vld [vmem:[%s0 + $0x18] sm:$0xf]
  %v28 = vld [vmem:[%s0 + $0x1c] sm:$0xf]
  %v29 = vld [vmem:[%s0 + $0x20] sm:$0xf]
  %v30 = vld [vmem:[%s0 + $0x24] sm:$0xf]
  %v31 = vld [vmem:[%s0 + $0x28] sm:$0xf]
  %v32 = vld [vmem:[%s0 + $0x2c] sm:$0xf]
  %v33 = vld [vmem:[%s0 + $0x30] sm:$0xf]
  %v34 = vld [vmem:[%s0 + $0x34] sm:$0xf]
  %v35 = vld [vmem:[%s0 + $0x38] sm:$0xf]
  %v36 = vld [vmem:[%s0 + $0x3c] sm:$0xf]
  %v37 = vld [vmem:[%s0 + $0x40] sm:$0xf]
  %v38 = vld [vmem:[%s0 + $0x44] sm:$0xf]
  %v39 = vld [vmem:[%s0 + $0x48] sm:$0xf]
  %v40 = vld [vmem:[%s0 + $0x4c] sm:$0xf]
  %v41 = vld [vmem:[%s0 + $0x50] sm:$0xf]
  %v42 = vld [vmem:[%s0 + $0x54] sm:$0xf]
  %v43 = vld [vmem:[%s0 + $0x58] sm:$0xf]
  %v44 = vld [vmem:[%s0 + $0x5c] sm:$0xf]
  %v45 = vld [vmem:[%s0 + $0x60] sm:$0xf]
  %v46 = vld [vmem:[%s0 + $0x64] sm:$0xf]
  %v47 = vld [vmem:[%s0 + $0x68] sm:$0xf]
  %v48 = vld [vmem:[%s0 + $0x6c] sm:$0xf]
  %v49 = vld [vmem:[%s0 + $0x70] sm:$0xf]
  %v50 = vld [vmem:[%s0 + $0x74] sm:$0xf]
  %v51 = vld [vmem:[%s0 + $0x78] sm:$0xf]
  %v52 = vld [vmem:[%s0 + $0x7c] sm:$0xf]
  %v53 = vld [vmem:[%s2] sm:$0xf]
  %v54 = vld [vmem:[%s1] sm:$0xf]
  %v55 = vld [vmem:[%s1 + $0x4] sm:$0xf]
  %v56 = vld [vmem:[%s1 + $0x8] sm:$0xf]
  %v57 = vld [vmem:[%s1 + $0xc] sm:$0xf]
  %v58 = vld [vmem:[%s1 + $0x10] sm:$0xf]
  %v59 = vld [vmem:[%s1 + $0x14] sm:$0xf]
  %v60 = vld [vmem:[%s1 + $0x18] sm:$0xf]
  %v61 = vld [vmem:[%s1 + $0x1c] sm:$0xf]
  %v62 = vld [vmem:[%s1 + $0x20] sm:$0xf]
  %v63 = vld [vmem:[%s1 + $0x24] sm:$0xf]
  %v64 = vld [vmem:[%s1 + $0x28] sm:$0xf]
  %v65 = vld [vmem:[%s1 + $0x2c] sm:$0xf]
  %v66 = vld [vmem:[%s1 + $0x30] sm:$0xf]
  %v67 = vld [vmem:[%s1 + $0x34] sm:$0xf]
  %v68 = vld [vmem:[%s1 + $0x38] sm:$0xf]
  %v69 = vld [vmem:[%s1 + $0x3c] sm:$0xf]
  %v70 = vld [vmem:[%s1 + $0x40] sm:$0xf]
  %v71 = vld [vmem:[%s1 + $0x44] sm:$0xf]
  %v72 = vld [vmem:[%s1 + $0x48] sm:$0xf]
  %v73 = vld [vmem:[%s1 + $0x4c] sm:$0xf]
  %v74 = vld [vmem:[%s1 + $0x50] sm:$0xf]
  %v75 = vld [vmem:[%s1 + $0x54] sm:$0xf]
  %v76 = vld [vmem:[%s1 + $0x58] sm:$0xf]
  %v77 = vld [vmem:[%s1 + $0x5c] sm:$0xf]
  %v78 = vld [vmem:[%s1 + $0x60] sm:$0xf]
  %v79 = vld [vmem:[%s1 + $0x64] sm:$0xf]
  %v80 = vld [vmem:[%s1 + $0x68] sm:$0xf]
  %v81 = vld [vmem:[%s1 + $0x6c] sm:$0xf]
  %v82 = vld [vmem:[%s1 + $0x70] sm:$0xf]
  %v83 = vld [vmem:[%s1 + $0x74] sm:$0xf]
  %v84 = vld [vmem:[%s1 + $0x78] sm:$0xf]
  %v85 = vld [vmem:[%s1 + $0x7c] sm:$0xf]
  %v86 = vld [vmem:[%s3] sm:$0xf]
  %v87 = vld [vmem:[%s3 + $0x4] sm:$0xf]
  %v88 = vld [vmem:[%s3 + $0x8] sm:$0xf]
  %v89 = vld [vmem:[%s3 + $0xc] sm:$0xf]
  %v122 = vunpack.c.l.b16 %v54
  %v123 = vunpack.c.l.b16 %v55
  %v124 = vunpack.c.l.b16 %v56
  %v125 = vunpack.c.l.b16 %v57
  %v126 = vunpack.c.l.b16 %v58
  %v127 = vunpack.c.l.b16 %v59
  %v128 = vunpack.c.l.b16 %v60
  %v129 = vunpack.c.l.b16 %v61
  %v130 = vunpack.c.l.b16 %v62
  %v131 = vunpack.c.l.b16 %v63
  %v132 = vunpack.c.l.b16 %v64
  %v133 = vunpack.c.l.b16 %v65
  %v134 = vunpack.c.l.b16 %v66
  %v135 = vunpack.c.l.b16 %v67
  %v136 = vunpack.c.l.b16 %v68
  %v137 = vunpack.c.l.b16 %v69
  %v138 = vunpack.c.l.b16 %v70
  %v139 = vunpack.c.l.b16 %v71
  %v140 = vunpack.c.l.b16 %v72
  %v141 = vunpack.c.l.b16 %v73
  %v142 = vunpack.c.l.b16 %v74
  %v143 = vunpack.c.l.b16 %v75
  %v144 = vunpack.c.l.b16 %v76
  %v145 = vunpack.c.l.b16 %v77
  %v146 = vunpack.c.l.b16 %v78
  %v147 = vunpack.c.l.b16 %v79
  %v148 = vunpack.c.l.b16 %v80
  %v149 = vunpack.c.l.b16 %v81
  %v150 = vunpack.c.l.b16 %v82
  %v151 = vunpack.c.l.b16 %v83
  %v152 = vunpack.c.l.b16 %v84
  %v153 = vunpack.c.l.b16 %v85
  %v154 = vpack.c.b16 %v123, %v122
  %v155 = vpack.c.b16 %v125, %v124
  %v156 = vpack.c.b16 %v127, %v126
  %v157 = vpack.c.b16 %v129, %v128
  %v158 = vpack.c.b16 %v131, %v130
  %v159 = vpack.c.b16 %v133, %v132
  %v160 = vpack.c.b16 %v135, %v134
  %v161 = vpack.c.b16 %v137, %v136
  %v162 = vpack.c.b16 %v139, %v138
  %v163 = vpack.c.b16 %v141, %v140
  %v164 = vpack.c.b16 %v143, %v142
  %v165 = vpack.c.b16 %v145, %v144
  %v166 = vpack.c.b16 %v147, %v146
  %v167 = vpack.c.b16 %v149, %v148
  %v168 = vpack.c.b16 %v151, %v150
  %v169 = vpack.c.b16 %v153, %v152
  %v174 = vunpack.c.l.b16 %v86
  %v175 = vunpack.c.l.b16 %v87
  %v176 = vunpack.c.l.b16 %v88
  %v177 = vunpack.c.l.b16 %v89
  %v178 = vpack.c.b16 %v175, %v174
  %v179 = vpack.c.b16 %v177, %v176
  %vm182 = vcmask 261120
  %v184 = vsel %vm182, %v154, 0
  %v187 = vsel %vm182, %v155, 0
  %v190 = vsel %vm182, %v156, 0
  %v193 = vsel %vm182, %v157, 0
  %v196 = vsel %vm182, %v158, 0
  %v199 = vsel %vm182, %v159, 0
  %v202 = vsel %vm182, %v160, 0
  %v205 = vsel %vm182, %v161, 0
  %v208 = vsel %vm182, %v162, 0
  %v211 = vsel %vm182, %v163, 0
  %v214 = vsel %vm182, %v164, 0
  %v217 = vsel %vm182, %v165, 0
  %v220 = vsel %vm182, %v166, 0
  %v223 = vsel %vm182, %v167, 0
  %v226 = vsel %vm182, %v168, 0
  %v229 = vsel %vm182, %v169, 0
  %231 = vmatpush.bf16.msra.mxu0 0
  %232 = vmatpush.bf16.msra.mxu0 0
  %233 = vmatpush.bf16.msra.mxu0 0
  %234 = vmatpush.bf16.msra.mxu0 0
  %235 = vmatpush.bf16.msra.mxu0 0
  %236 = vmatpush.bf16.msra.mxu0 0
  %237 = vmatpush.bf16.msra.mxu0 %v179
  %238 = vmatpush.bf16.msra.mxu0 %v178
  %239 = vmatmul.bf16.gmra.mxu0 %v184
  %v240 = vpop.f32.mrf.mxu0
  %v241 = vadd.f32 0.0, %v240
  %v242 = vpop.f32.mrf.mxu0
  %v243 = vadd.f32 0.0, %v242
  %244 = vmatmul.bf16.gmra.mxu0 %v187
  %v245 = vpop.f32.mrf.mxu0
  %v246 = vadd.f32 0.0, %v245
  %v247 = vpop.f32.mrf.mxu0
  %v248 = vadd.f32 0.0, %v247
  %249 = vmatmul.bf16.gmra.mxu0 %v190
  %v250 = vpop.f32.mrf.mxu0
  %v251 = vadd.f32 0.0, %v250
  %v252 = vpop.f32.mrf.mxu0
  %v253 = vadd.f32 0.0, %v252
  %254 = vmatmul.bf16.gmra.mxu0 %v193
  %v255 = vpop.f32.mrf.mxu0
  %v256 = vadd.f32 0.0, %v255
  %v257 = vpop.f32.mrf.mxu0
  %v258 = vadd.f32 0.0, %v257
  %259 = vmatmul.bf16.gmra.mxu0 %v196
  %v260 = vpop.f32.mrf.mxu0
  %v261 = vadd.f32 0.0, %v260
  %v262 = vpop.f32.mrf.mxu0
  %v263 = vadd.f32 0.0, %v262
  %264 = vmatmul.bf16.gmra.mxu0 %v199
  %v265 = vpop.f32.mrf.mxu0
  %v266 = vadd.f32 0.0, %v265
  %v267 = vpop.f32.mrf.mxu0
  %v268 = vadd.f32 0.0, %v267
  %269 = vmatmul.bf16.gmra.mxu0 %v202
  %v270 = vpop.f32.mrf.mxu0
  %v271 = vadd.f32 0.0, %v270
  %v272 = vpop.f32.mrf.mxu0
  %v273 = vadd.f32 0.0, %v272
  %274 = vmatmul.bf16.gmra.mxu0 %v205
  %v275 = vpop.f32.mrf.mxu0
  %v276 = vadd.f32 0.0, %v275
  %v277 = vpop.f32.mrf.mxu0
  %v278 = vadd.f32 0.0, %v277
  %279 = vmatmul.bf16.gmra.mxu0 %v208
  %v280 = vpop.f32.mrf.mxu0
  %v281 = vadd.f32 0.0, %v280
  %v282 = vpop.f32.mrf.mxu0
  %v283 = vadd.f32 0.0, %v282
  %284 = vmatmul.bf16.gmra.mxu0 %v211
  %v285 = vpop.f32.mrf.mxu0
  %v286 = vadd.f32 0.0, %v285
  %v287 = vpop.f32.mrf.mxu0
  %v288 = vadd.f32 0.0, %v287
  %289 = vmatmul.bf16.gmra.mxu0 %v214
  %v290 = vpop.f32.mrf.mxu0
  %v291 = vadd.f32 0.0, %v290
  %v292 = vpop.f32.mrf.mxu0
  %v293 = vadd.f32 0.0, %v292
  %294 = vmatmul.bf16.gmra.mxu0 %v217
  %v295 = vpop.f32.mrf.mxu0
  %v296 = vadd.f32 0.0, %v295
  %v297 = vpop.f32.mrf.mxu0
  %v298 = vadd.f32 0.0, %v297
  %299 = vmatmul.bf16.gmra.mxu0 %v220
  %v300 = vpop.f32.mrf.mxu0
  %v301 = vadd.f32 0.0, %v300
  %v302 = vpop.f32.mrf.mxu0
  %v303 = vadd.f32 0.0, %v302
  %304 = vmatmul.bf16.gmra.mxu0 %v223
  %v305 = vpop.f32.mrf.mxu0
  %v306 = vadd.f32 0.0, %v305
  %v307 = vpop.f32.mrf.mxu0
  %v308 = vadd.f32 0.0, %v307
  %309 = vmatmul.bf16.gmra.mxu0 %v226
  %v310 = vpop.f32.mrf.mxu0
  %v311 = vadd.f32 0.0, %v310
  %v312 = vpop.f32.mrf.mxu0
  %v313 = vadd.f32 0.0, %v312
  %314 = vmatmul.bf16.gmra.mxu0 %v229
  %v315 = vpop.f32.mrf.mxu0
  %v316 = vadd.f32 0.0, %v315
  %v317 = vpop.f32.mrf.mxu0
  %v318 = vadd.f32 0.0, %v317
  %319 = vdwg.mxu0
  %v352 = vunpack.c.l.b16 %v21
  %v353 = vunpack.c.l.b16 %v22
  %v354 = vunpack.c.l.b16 %v23
  %v355 = vunpack.c.l.b16 %v24
  %v356 = vunpack.c.l.b16 %v25
  %v357 = vunpack.c.l.b16 %v26
  %v358 = vunpack.c.l.b16 %v27
  %v359 = vunpack.c.l.b16 %v28
  %v360 = vunpack.c.l.b16 %v29
  %v361 = vunpack.c.l.b16 %v30
  %v362 = vunpack.c.l.b16 %v31
  %v363 = vunpack.c.l.b16 %v32
  %v364 = vunpack.c.l.b16 %v33
  %v365 = vunpack.c.l.b16 %v34
  %v366 = vunpack.c.l.b16 %v35
  %v367 = vunpack.c.l.b16 %v36
  %v368 = vunpack.c.l.b16 %v37
  %v369 = vunpack.c.l.b16 %v38
  %v370 = vunpack.c.l.b16 %v39
  %v371 = vunpack.c.l.b16 %v40
  %v372 = vunpack.c.l.b16 %v41
  %v373 = vunpack.c.l.b16 %v42
  %v374 = vunpack.c.l.b16 %v43
  %v375 = vunpack.c.l.b16 %v44
  %v376 = vunpack.c.l.b16 %v45
  %v377 = vunpack.c.l.b16 %v46
  %v378 = vunpack.c.l.b16 %v47
  %v379 = vunpack.c.l.b16 %v48
  %v380 = vunpack.c.l.b16 %v49
  %v381 = vunpack.c.l.b16 %v50
  %v382 = vunpack.c.l.b16 %v51
  %v383 = vunpack.c.l.b16 %v52
  %v384 = vpack.c.b16 %v353, %v352
  %v385 = vpack.c.b16 %v355, %v354
  %v386 = vpack.c.b16 %v357, %v356
  %v387 = vpack.c.b16 %v359, %v358
  %v388 = vpack.c.b16 %v361, %v360
  %v389 = vpack.c.b16 %v363, %v362
  %v390 = vpack.c.b16 %v365, %v364
  %v391 = vpack.c.b16 %v367, %v366
  %v392 = vpack.c.b16 %v369, %v368
  %v393 = vpack.c.b16 %v371, %v370
  %v394 = vpack.c.b16 %v373, %v372
  %v395 = vpack.c.b16 %v375, %v374
  %v396 = vpack.c.b16 %v377, %v376
  %v397 = vpack.c.b16 %v379, %v378
  %v398 = vpack.c.b16 %v381, %v380
  %v399 = vpack.c.b16 %v383, %v382
  %vm400 = vcmask 64512
  %v402 = vsel %vm400, %v384, 0
  %v405 = vsel %vm400, %v385, 0
  %v408 = vsel %vm400, %v386, 0
  %v411 = vsel %vm400, %v387, 0
  %v414 = vsel %vm400, %v388, 0
  %v417 = vsel %vm400, %v389, 0
  %v420 = vsel %vm400, %v390, 0
  %v423 = vsel %vm400, %v391, 0
  %v426 = vsel %vm400, %v392, 0
  %v429 = vsel %vm400, %v393, 0
  %v432 = vsel %vm400, %v394, 0
  %v435 = vsel %vm400, %v395, 0
  %v438 = vsel %vm400, %v396, 0
  %v441 = vsel %vm400, %v397, 0
  %v444 = vsel %vm400, %v398, 0
  %v447 = vsel %vm400, %v399, 0
  %vm449 = vcmask 1043456
  %v451 = vsel %vm449, %v53, 0
  %453 = vmatpush.bf16.msra.mxu0 0
  %454 = vmatpush.bf16.msra.mxu0 0
  %455 = vmatpush.bf16.msra.mxu0 0
  %456 = vmatpush.bf16.msra.mxu0 0
  %457 = vmatpush.bf16.msra.mxu0 0
  %458 = vmatpush.bf16.msra.mxu0 0
  %459 = vmatpush.bf16.msra.mxu0 0
  %460 = vmatpush.bf16.msra.mxu0 %v451
  %461 = vmatmul.bf16.gmra.mxu0 %v402
  %v462 = vpop.f32.mrf.mxu0
  %v463 = vadd.f32 %v241, %v462
  %v464 = vpop.f32.mrf.mxu0
  %v465 = vadd.f32 %v243, %v464
  %466 = vmatmul.bf16.gmra.mxu0 %v405
  %v467 = vpop.f32.mrf.mxu0
  %v468 = vadd.f32 %v246, %v467
  %v469 = vpop.f32.mrf.mxu0
  %v470 = vadd.f32 %v248, %v469
  %471 = vmatmul.bf16.gmra.mxu0 %v408
  %v472 = vpop.f32.mrf.mxu0
  %v473 = vadd.f32 %v251, %v472
  %v474 = vpop.f32.mrf.mxu0
  %v475 = vadd.f32 %v253, %v474
  %476 = vmatmul.bf16.gmra.mxu0 %v411
  %v477 = vpop.f32.mrf.mxu0
  %v478 = vadd.f32 %v256, %v477
  %v479 = vpop.f32.mrf.mxu0
  %v480 = vadd.f32 %v258, %v479
  %481 = vmatmul.bf16.gmra.mxu0 %v414
  %v482 = vpop.f32.mrf.mxu0
  %v483 = vadd.f32 %v261, %v482
  %v484 = vpop.f32.mrf.mxu0
  %v485 = vadd.f32 %v263, %v484
  %486 = vmatmul.bf16.gmra.mxu0 %v417
  %v487 = vpop.f32.mrf.mxu0
  %v488 = vadd.f32 %v266, %v487
  %v489 = vpop.f32.mrf.mxu0
  %v490 = vadd.f32 %v268, %v489
  %491 = vmatmul.bf16.gmra.mxu0 %v420
  %v492 = vpop.f32.mrf.mxu0
  %v493 = vadd.f32 %v271, %v492
  %v494 = vpop.f32.mrf.mxu0
  %v495 = vadd.f32 %v273, %v494
  %496 = vmatmul.bf16.gmra.mxu0 %v423
  %v497 = vpop.f32.mrf.mxu0
  %v498 = vadd.f32 %v276, %v497
  %v499 = vpop.f32.mrf.mxu0
  %v500 = vadd.f32 %v278, %v499
  %501 = vmatmul.bf16.gmra.mxu0 %v426
  %v502 = vpop.f32.mrf.mxu0
  %v503 = vadd.f32 %v281, %v502
  %v504 = vpop.f32.mrf.mxu0
  %v505 = vadd.f32 %v283, %v504
  %506 = vmatmul.bf16.gmra.mxu0 %v429
  %v507 = vpop.f32.mrf.mxu0
  %v508 = vadd.f32 %v286, %v507
  %v509 = vpop.f32.mrf.mxu0
  %v510 = vadd.f32 %v288, %v509
  %511 = vmatmul.bf16.gmra.mxu0 %v432
  %v512 = vpop.f32.mrf.mxu0
  %v513 = vadd.f32 %v291, %v512
  %v514 = vpop.f32.mrf.mxu0
  %v515 = vadd.f32 %v293, %v514
  %516 = vmatmul.bf16.gmra.mxu0 %v435
  %v517 = vpop.f32.mrf.mxu0
  %v518 = vadd.f32 %v296, %v517
  %v519 = vpop.f32.mrf.mxu0
  %v520 = vadd.f32 %v298, %v519
  %521 = vmatmul.bf16.gmra.mxu0 %v438
  %v522 = vpop.f32.mrf.mxu0
  %v523 = vadd.f32 %v301, %v522
  %v524 = vpop.f32.mrf.mxu0
  %v525 = vadd.f32 %v303, %v524
  %526 = vmatmul.bf16.gmra.mxu0 %v441
  %v527 = vpop.f32.mrf.mxu0
  %v528 = vadd.f32 %v306, %v527
  %v529 = vpop.f32.mrf.mxu0
  %v530 = vadd.f32 %v308, %v529
  %531 = vmatmul.bf16.gmra.mxu0 %v444
  %v532 = vpop.f32.mrf.mxu0
  %v533 = vadd.f32 %v311, %v532
  %v534 = vpop.f32.mrf.mxu0
  %v535 = vadd.f32 %v313, %v534
  %536 = vmatmul.bf16.gmra.mxu0 %v447
  %v537 = vpop.f32.mrf.mxu0
  %v538 = vadd.f32 %v316, %v537
  %v539 = vpop.f32.mrf.mxu0
  %v540 = vadd.f32 %v318, %v539
  %541 = vdwg.mxu0
  %v542 = vmax.f32 %v463, 0.0
  %v543 = vmax.f32 %v465, 0.0
  %v544 = vmax.f32 %v468, 0.0
  %v545 = vmax.f32 %v470, 0.0
  %v546 = vmax.f32 %v473, 0.0
  %v547 = vmax.f32 %v475, 0.0
  %v548 = vmax.f32 %v478, 0.0
  %v549 = vmax.f32 %v480, 0.0
  %v550 = vmax.f32 %v483, 0.0
  %v551 = vmax.f32 %v485, 0.0
  %v552 = vmax.f32 %v488, 0.0
  %v553 = vmax.f32 %v490, 0.0
  %v554 = vmax.f32 %v493, 0.0
  %v555 = vmax.f32 %v495, 0.0
  %v556 = vmax.f32 %v498, 0.0
  %v557 = vmax.f32 %v500, 0.0
  %v558 = vmax.f32 %v503, 0.0
  %v559 = vmax.f32 %v505, 0.0
  %v560 = vmax.f32 %v508, 0.0
  %v561 = vmax.f32 %v510, 0.0
  %v562 = vmax.f32 %v513, 0.0
  %v563 = vmax.f32 %v515, 0.0
  %v564 = vmax.f32 %v518, 0.0
  %v565 = vmax.f32 %v520, 0.0
  %v566 = vmax.f32 %v523, 0.0
  %v567 = vmax.f32 %v525, 0.0
  %v568 = vmax.f32 %v528, 0.0
  %v569 = vmax.f32 %v530, 0.0
  %v570 = vmax.f32 %v533, 0.0
  %v571 = vmax.f32 %v535, 0.0
  %v572 = vmax.f32 %v538, 0.0
  %v573 = vmax.f32 %v540, 0.0
  %v574 = vld [vmem:[%s4] sm:$0x1]
  %v576 = vperm.slane %v574, 0
  %v578 = vmul.f32 %v542, %v576
  %v579 = vmul.f32 %v543, %v576
  %v580 = vmul.f32 %v544, %v576
  %v581 = vmul.f32 %v545, %v576
  %v582 = vmul.f32 %v546, %v576
  %v583 = vmul.f32 %v547, %v576
  %v584 = vmul.f32 %v548, %v576
  %v585 = vmul.f32 %v549, %v576
  %v586 = vmul.f32 %v550, %v576
  %v587 = vmul.f32 %v551, %v576
  %v588 = vmul.f32 %v552, %v576
  %v589 = vmul.f32 %v553, %v576
  %v590 = vmul.f32 %v554, %v576
  %v591 = vmul.f32 %v555, %v576
  %v592 = vmul.f32 %v556, %v576
  %v593 = vmul.f32 %v557, %v576
  %v594 = vmul.f32 %v558, %v576
  %v595 = vmul.f32 %v559, %v576
  %v596 = vmul.f32 %v560, %v576
  %v597 = vmul.f32 %v561, %v576
  %v598 = vmul.f32 %v562, %v576
  %v599 = vmul.f32 %v563, %v576
  %v600 = vmul.f32 %v564, %v576
  %v601 = vmul.f32 %v565, %v576
  %v602 = vmul.f32 %v566, %v576
  %v603 = vmul.f32 %v567, %v576
  %v604 = vmul.f32 %v568, %v576
  %v605 = vmul.f32 %v569, %v576
  %v606 = vmul.f32 %v570, %v576
  %v607 = vmul.f32 %v571, %v576
  %v608 = vmul.f32 %v572, %v576
  %v609 = vmul.f32 %v573, %v576
  %vm610 = vcmask 31744
  %v611 = vsel %vm610, %v578, 0.0
  %612 = vadd.xlane.f32.xlu0 %v611
  %v613 = vpop.xlane.xlu0 %612
  %v614 = vsel %vm610, %v579, 0.0
  %615 = vadd.xlane.f32.xlu0 %v614
  %v616 = vpop.xlane.xlu0 %615
  %v617 = vsel %vm610, %v580, 0.0
  %618 = vadd.xlane.f32.xlu0 %v617
  %v619 = vpop.xlane.xlu0 %618
  %v620 = vsel %vm610, %v581, 0.0
  %621 = vadd.xlane.f32.xlu0 %v620
  %v622 = vpop.xlane.xlu0 %621
  %v623 = vsel %vm610, %v582, 0.0
  %624 = vadd.xlane.f32.xlu0 %v623
  %v625 = vpop.xlane.xlu0 %624
  %v626 = vsel %vm610, %v583, 0.0
  %627 = vadd.xlane.f32.xlu0 %v626
  %v628 = vpop.xlane.xlu0 %627
  %v629 = vsel %vm610, %v584, 0.0
  %630 = vadd.xlane.f32.xlu0 %v629
  %v631 = vpop.xlane.xlu0 %630
  %v632 = vsel %vm610, %v585, 0.0
  %633 = vadd.xlane.f32.xlu0 %v632
  %v634 = vpop.xlane.xlu0 %633
  %v635 = vsel %vm610, %v586, 0.0
  %636 = vadd.xlane.f32.xlu0 %v635
  %v637 = vpop.xlane.xlu0 %636
  %v638 = vsel %vm610, %v587, 0.0
  %639 = vadd.xlane.f32.xlu0 %v638
  %v640 = vpop.xlane.xlu0 %639
  %v641 = vsel %vm610, %v588, 0.0
  %642 = vadd.xlane.f32.xlu0 %v641
  %v643 = vpop.xlane.xlu0 %642
  %v644 = vsel %vm610, %v589, 0.0
  %645 = vadd.xlane.f32.xlu0 %v644
  %v646 = vpop.xlane.xlu0 %645
  %v647 = vsel %vm610, %v590, 0.0
  %648 = vadd.xlane.f32.xlu0 %v647
  %v649 = vpop.xlane.xlu0 %648
  %v650 = vsel %vm610, %v591, 0.0
  %651 = vadd.xlane.f32.xlu0 %v650
  %v652 = vpop.xlane.xlu0 %651
  %v653 = vsel %vm610, %v592, 0.0
  %654 = vadd.xlane.f32.xlu0 %v653
  %v655 = vpop.xlane.xlu0 %654
  %v656 = vsel %vm610, %v593, 0.0
  %657 = vadd.xlane.f32.xlu0 %v656
  %v658 = vpop.xlane.xlu0 %657
  %v659 = vsel %vm610, %v594, 0.0
  %660 = vadd.xlane.f32.xlu0 %v659
  %v661 = vpop.xlane.xlu0 %660
  %v662 = vsel %vm610, %v595, 0.0
  %663 = vadd.xlane.f32.xlu0 %v662
  %v664 = vpop.xlane.xlu0 %663
  %v665 = vsel %vm610, %v596, 0.0
  %666 = vadd.xlane.f32.xlu0 %v665
  %v667 = vpop.xlane.xlu0 %666
  %v668 = vsel %vm610, %v597, 0.0
  %669 = vadd.xlane.f32.xlu0 %v668
  %v670 = vpop.xlane.xlu0 %669
  %v671 = vsel %vm610, %v598, 0.0
  %672 = vadd.xlane.f32.xlu0 %v671
  %v673 = vpop.xlane.xlu0 %672
  %v674 = vsel %vm610, %v599, 0.0
  %675 = vadd.xlane.f32.xlu0 %v674
  %v676 = vpop.xlane.xlu0 %675
  %v677 = vsel %vm610, %v600, 0.0
  %678 = vadd.xlane.f32.xlu0 %v677
  %v679 = vpop.xlane.xlu0 %678
  %v680 = vsel %vm610, %v601, 0.0
  %681 = vadd.xlane.f32.xlu0 %v680
  %v682 = vpop.xlane.xlu0 %681
  %v683 = vsel %vm610, %v602, 0.0
  %684 = vadd.xlane.f32.xlu0 %v683
  %v685 = vpop.xlane.xlu0 %684
  %v686 = vsel %vm610, %v603, 0.0
  %687 = vadd.xlane.f32.xlu0 %v686
  %v688 = vpop.xlane.xlu0 %687
  %v689 = vsel %vm610, %v604, 0.0
  %690 = vadd.xlane.f32.xlu0 %v689
  %v691 = vpop.xlane.xlu0 %690
  %v692 = vsel %vm610, %v605, 0.0
  %693 = vadd.xlane.f32.xlu0 %v692
  %v694 = vpop.xlane.xlu0 %693
  %v695 = vsel %vm610, %v606, 0.0
  %696 = vadd.xlane.f32.xlu0 %v695
  %v697 = vpop.xlane.xlu0 %696
  %v698 = vsel %vm610, %v607, 0.0
  %699 = vadd.xlane.f32.xlu0 %v698
  %v700 = vpop.xlane.xlu0 %699
  %v701 = vsel %vm610, %v608, 0.0
  %702 = vadd.xlane.f32.xlu0 %v701
  %v703 = vpop.xlane.xlu0 %702
  %v704 = vsel %vm610, %v609, 0.0
  %705 = vadd.xlane.f32.xlu0 %v704
  %v706 = vpop.xlane.xlu0 %705
  %v707 = vxor.u32 %v613, 2147483648
  %v708 = vxor.u32 %v616, 2147483648
  %v709 = vxor.u32 %v619, 2147483648
  %v710 = vxor.u32 %v622, 2147483648
  %v711 = vxor.u32 %v625, 2147483648
  %v712 = vxor.u32 %v628, 2147483648
  %v713 = vxor.u32 %v631, 2147483648
  %v714 = vxor.u32 %v634, 2147483648
  %v715 = vxor.u32 %v637, 2147483648
  %v716 = vxor.u32 %v640, 2147483648
  %v717 = vxor.u32 %v643, 2147483648
  %v718 = vxor.u32 %v646, 2147483648
  %v719 = vxor.u32 %v649, 2147483648
  %v720 = vxor.u32 %v652, 2147483648
  %v721 = vxor.u32 %v655, 2147483648
  %v722 = vxor.u32 %v658, 2147483648
  %v723 = vxor.u32 %v661, 2147483648
  %v724 = vxor.u32 %v664, 2147483648
  %v725 = vxor.u32 %v667, 2147483648
  %v726 = vxor.u32 %v670, 2147483648
  %v727 = vxor.u32 %v673, 2147483648
  %v728 = vxor.u32 %v676, 2147483648
  %v729 = vxor.u32 %v679, 2147483648
  %v730 = vxor.u32 %v682, 2147483648
  %v731 = vxor.u32 %v685, 2147483648
  %v732 = vxor.u32 %v688, 2147483648
  %v733 = vxor.u32 %v691, 2147483648
  %v734 = vxor.u32 %v694, 2147483648
  %v735 = vxor.u32 %v697, 2147483648
  %v736 = vxor.u32 %v700, 2147483648
  %v737 = vxor.u32 %v703, 2147483648
  %v738 = vxor.u32 %v706, 2147483648
  %v739 = vmul.f32 %v707, 1.442695
  %v740 = vpow.pop %v739
  %v741 = vmul.f32 %v708, 1.442695
  %v742 = vpow.pop %v741
  %v743 = vmul.f32 %v709, 1.442695
  %v744 = vpow.pop %v743
  %v745 = vmul.f32 %v710, 1.442695
  %v746 = vpow.pop %v745
  %v747 = vmul.f32 %v711, 1.442695
  %v748 = vpow.pop %v747
  %v749 = vmul.f32 %v712, 1.442695
  %v750 = vpow.pop %v749
  %v751 = vmul.f32 %v713, 1.442695
  %v752 = vpow.pop %v751
  %v753 = vmul.f32 %v714, 1.442695
  %v754 = vpow.pop %v753
  %v755 = vmul.f32 %v715, 1.442695
  %v756 = vpow.pop %v755
  %v757 = vmul.f32 %v716, 1.442695
  %v758 = vpow.pop %v757
  %v759 = vmul.f32 %v717, 1.442695
  %v760 = vpow.pop %v759
  %v761 = vmul.f32 %v718, 1.442695
  %v762 = vpow.pop %v761
  %v763 = vmul.f32 %v719, 1.442695
  %v764 = vpow.pop %v763
  %v765 = vmul.f32 %v720, 1.442695
  %v766 = vpow.pop %v765
  %v767 = vmul.f32 %v721, 1.442695
  %v768 = vpow.pop %v767
  %v769 = vmul.f32 %v722, 1.442695
  %v770 = vpow.pop %v769
  %v771 = vmul.f32 %v723, 1.442695
  %v772 = vpow.pop %v771
  %v773 = vmul.f32 %v724, 1.442695
  %v774 = vpow.pop %v773
  %v775 = vmul.f32 %v725, 1.442695
  %v776 = vpow.pop %v775
  %v777 = vmul.f32 %v726, 1.442695
  %v778 = vpow.pop %v777
  %v779 = vmul.f32 %v727, 1.442695
  %v780 = vpow.pop %v779
  %v781 = vmul.f32 %v728, 1.442695
  %v782 = vpow.pop %v781
  %v783 = vmul.f32 %v729, 1.442695
  %v784 = vpow.pop %v783
  %v785 = vmul.f32 %v730, 1.442695
  %v786 = vpow.pop %v785
  %v787 = vmul.f32 %v731, 1.442695
  %v788 = vpow.pop %v787
  %v789 = vmul.f32 %v732, 1.442695
  %v790 = vpow.pop %v789
  %v791 = vmul.f32 %v733, 1.442695
  %v792 = vpow.pop %v791
  %v793 = vmul.f32 %v734, 1.442695
  %v794 = vpow.pop %v793
  %v795 = vmul.f32 %v735, 1.442695
  %v796 = vpow.pop %v795
  %v797 = vmul.f32 %v736, 1.442695
  %v798 = vpow.pop %v797
  %v799 = vmul.f32 %v737, 1.442695
  %v800 = vpow.pop %v799
  %v801 = vmul.f32 %v738, 1.442695
  %v802 = vpow.pop %v801
  %v803 = vadd.f32 %v740, 1.0
  %v804 = vadd.f32 %v742, 1.0
  %v805 = vadd.f32 %v744, 1.0
  %v806 = vadd.f32 %v746, 1.0
  %v807 = vadd.f32 %v748, 1.0
  %v808 = vadd.f32 %v750, 1.0
  %v809 = vadd.f32 %v752, 1.0
  %v810 = vadd.f32 %v754, 1.0
  %v811 = vadd.f32 %v756, 1.0
  %v812 = vadd.f32 %v758, 1.0
  %v813 = vadd.f32 %v760, 1.0
  %v814 = vadd.f32 %v762, 1.0
  %v815 = vadd.f32 %v764, 1.0
  %v816 = vadd.f32 %v766, 1.0
  %v817 = vadd.f32 %v768, 1.0
  %v818 = vadd.f32 %v770, 1.0
  %v819 = vadd.f32 %v772, 1.0
  %v820 = vadd.f32 %v774, 1.0
  %v821 = vadd.f32 %v776, 1.0
  %v822 = vadd.f32 %v778, 1.0
  %v823 = vadd.f32 %v780, 1.0
  %v824 = vadd.f32 %v782, 1.0
  %v825 = vadd.f32 %v784, 1.0
  %v826 = vadd.f32 %v786, 1.0
  %v827 = vadd.f32 %v788, 1.0
  %v828 = vadd.f32 %v790, 1.0
  %v829 = vadd.f32 %v792, 1.0
  %v830 = vadd.f32 %v794, 1.0
  %v831 = vadd.f32 %v796, 1.0
  %v832 = vadd.f32 %v798, 1.0
  %v833 = vadd.f32 %v800, 1.0
  %v834 = vadd.f32 %v802, 1.0
  %v835 = vrcp.pop %v803
  %v836 = vmul.f32 %v803, %v835
  %v837 = vsub.f32 1.0, %v836
  %v838 = vmul.f32 %v835, %v837
  %v839 = vadd.f32 %v835, %v838
  %vm840 = vweird.f32 %v803
  %vm841 = vweird.f32 %v835
  %vm842 = vmor %vm840, %vm841
  %v843 = vsel %vm842, %v835, %v839
  %v844 = vand.u32 2147483647, %v803
  %vm845 = vcmp.eq.f32.partialorder %v844, 8.507059e+37
  %v846 = vand.u32 %v803, 2147483648
  %v847 = vor.u32 1.1754944e-38, %v846
  %v848 = vsel %vm845, %v847, %v843
  %v849 = vmul.f32 1.0, %v848
  %v850 = vrcp.pop %v804
  %v851 = vmul.f32 %v804, %v850
  %v852 = vsub.f32 1.0, %v851
  %v853 = vmul.f32 %v850, %v852
  %v854 = vadd.f32 %v850, %v853
  %vm855 = vweird.f32 %v804
  %vm856 = vweird.f32 %v850
  %vm857 = vmor %vm855, %vm856
  %v858 = vsel %vm857, %v850, %v854
  %v859 = vand.u32 2147483647, %v804
  %vm860 = vcmp.eq.f32.partialorder %v859, 8.507059e+37
  %v861 = vand.u32 %v804, 2147483648
  %v862 = vor.u32 1.1754944e-38, %v861
  %v863 = vsel %vm860, %v862, %v858
  %v864 = vmul.f32 1.0, %v863
  %v865 = vrcp.pop %v805
  %v866 = vmul.f32 %v805, %v865
  %v867 = vsub.f32 1.0, %v866
  %v868 = vmul.f32 %v865, %v867
  %v869 = vadd.f32 %v865, %v868
  %vm870 = vweird.f32 %v805
  %vm871 = vweird.f32 %v865
  %vm872 = vmor %vm870, %vm871
  %v873 = vsel %vm872, %v865, %v869
  %v874 = vand.u32 2147483647, %v805
  %vm875 = vcmp.eq.f32.partialorder %v874, 8.507059e+37
  %v876 = vand.u32 %v805, 2147483648
  %v877 = vor.u32 1.1754944e-38, %v876
  %v878 = vsel %vm875, %v877, %v873
  %v879 = vmul.f32 1.0, %v878
  %v880 = vrcp.pop %v806
  %v881 = vmul.f32 %v806, %v880
  %v882 = vsub.f32 1.0, %v881
  %v883 = vmul.f32 %v880, %v882
  %v884 = vadd.f32 %v880, %v883
  %vm885 = vweird.f32 %v806
  %vm886 = vweird.f32 %v880
  %vm887 = vmor %vm885, %vm886
  %v888 = vsel %vm887, %v880, %v884
  %v889 = vand.u32 2147483647, %v806
  %vm890 = vcmp.eq.f32.partialorder %v889, 8.507059e+37
  %v891 = vand.u32 %v806, 2147483648
  %v892 = vor.u32 1.1754944e-38, %v891
  %v893 = vsel %vm890, %v892, %v888
  %v894 = vmul.f32 1.0, %v893
  %v895 = vrcp.pop %v807
  %v896 = vmul.f32 %v807, %v895
  %v897 = vsub.f32 1.0, %v896
  %v898 = vmul.f32 %v895, %v897
  %v899 = vadd.f32 %v895, %v898
  %vm900 = vweird.f32 %v807
  %vm901 = vweird.f32 %v895
  %vm902 = vmor %vm900, %vm901
  %v903 = vsel %vm902, %v895, %v899
  %v904 = vand.u32 2147483647, %v807
  %vm905 = vcmp.eq.f32.partialorder %v904, 8.507059e+37
  %v906 = vand.u32 %v807, 2147483648
  %v907 = vor.u32 1.1754944e-38, %v906
  %v908 = vsel %vm905, %v907, %v903
  %v909 = vmul.f32 1.0, %v908
  %v910 = vrcp.pop %v808
  %v911 = vmul.f32 %v808, %v910
  %v912 = vsub.f32 1.0, %v911
  %v913 = vmul.f32 %v910, %v912
  %v914 = vadd.f32 %v910, %v913
  %vm915 = vweird.f32 %v808
  %vm916 = vweird.f32 %v910
  %vm917 = vmor %vm915, %vm916
  %v918 = vsel %vm917, %v910, %v914
  %v919 = vand.u32 2147483647, %v808
  %vm920 = vcmp.eq.f32.partialorder %v919, 8.507059e+37
  %v921 = vand.u32 %v808, 2147483648
  %v922 = vor.u32 1.1754944e-38, %v921
  %v923 = vsel %vm920, %v922, %v918
  %v924 = vmul.f32 1.0, %v923
  %v925 = vrcp.pop %v809
  %v926 = vmul.f32 %v809, %v925
  %v927 = vsub.f32 1.0, %v926
  %v928 = vmul.f32 %v925, %v927
  %v929 = vadd.f32 %v925, %v928
  %vm930 = vweird.f32 %v809
  %vm931 = vweird.f32 %v925
  %vm932 = vmor %vm930, %vm931
  %v933 = vsel %vm932, %v925, %v929
  %v934 = vand.u32 2147483647, %v809
  %vm935 = vcmp.eq.f32.partialorder %v934, 8.507059e+37
  %v936 = vand.u32 %v809, 2147483648
  %v937 = vor.u32 1.1754944e-38, %v936
  %v938 = vsel %vm935, %v937, %v933
  %v939 = vmul.f32 1.0, %v938
  %v940 = vrcp.pop %v810
  %v941 = vmul.f32 %v810, %v940
  %v942 = vsub.f32 1.0, %v941
  %v943 = vmul.f32 %v940, %v942
  %v944 = vadd.f32 %v940, %v943
  %vm945 = vweird.f32 %v810
  %vm946 = vweird.f32 %v940
  %vm947 = vmor %vm945, %vm946
  %v948 = vsel %vm947, %v940, %v944
  %v949 = vand.u32 2147483647, %v810
  %vm950 = vcmp.eq.f32.partialorder %v949, 8.507059e+37
  %v951 = vand.u32 %v810, 2147483648
  %v952 = vor.u32 1.1754944e-38, %v951
  %v953 = vsel %vm950, %v952, %v948
  %v954 = vmul.f32 1.0, %v953
  %v955 = vrcp.pop %v811
  %v956 = vmul.f32 %v811, %v955
  %v957 = vsub.f32 1.0, %v956
  %v958 = vmul.f32 %v955, %v957
  %v959 = vadd.f32 %v955, %v958
  %vm960 = vweird.f32 %v811
  %vm961 = vweird.f32 %v955
  %vm962 = vmor %vm960, %vm961
  %v963 = vsel %vm962, %v955, %v959
  %v964 = vand.u32 2147483647, %v811
  %vm965 = vcmp.eq.f32.partialorder %v964, 8.507059e+37
  %v966 = vand.u32 %v811, 2147483648
  %v967 = vor.u32 1.1754944e-38, %v966
  %v968 = vsel %vm965, %v967, %v963
  %v969 = vmul.f32 1.0, %v968
  %v970 = vrcp.pop %v812
  %v971 = vmul.f32 %v812, %v970
  %v972 = vsub.f32 1.0, %v971
  %v973 = vmul.f32 %v970, %v972
  %v974 = vadd.f32 %v970, %v973
  %vm975 = vweird.f32 %v812
  %vm976 = vweird.f32 %v970
  %vm977 = vmor %vm975, %vm976
  %v978 = vsel %vm977, %v970, %v974
  %v979 = vand.u32 2147483647, %v812
  %vm980 = vcmp.eq.f32.partialorder %v979, 8.507059e+37
  %v981 = vand.u32 %v812, 2147483648
  %v982 = vor.u32 1.1754944e-38, %v981
  %v983 = vsel %vm980, %v982, %v978
  %v984 = vmul.f32 1.0, %v983
  %v985 = vrcp.pop %v813
  %v986 = vmul.f32 %v813, %v985
  %v987 = vsub.f32 1.0, %v986
  %v988 = vmul.f32 %v985, %v987
  %v989 = vadd.f32 %v985, %v988
  %vm990 = vweird.f32 %v813
  %vm991 = vweird.f32 %v985
  %vm992 = vmor %vm990, %vm991
  %v993 = vsel %vm992, %v985, %v989
  %v994 = vand.u32 2147483647, %v813
  %vm995 = vcmp.eq.f32.partialorder %v994, 8.507059e+37
  %v996 = vand.u32 %v813, 2147483648
  %v997 = vor.u32 1.1754944e-38, %v996
  %v998 = vsel %vm995, %v997, %v993
  %v999 = vmul.f32 1.0, %v998
  %v1000 = vrcp.pop %v814
  %v1001 = vmul.f32 %v814, %v1000
  %v1002 = vsub.f32 1.0, %v1001
  %v1003 = vmul.f32 %v1000, %v1002
  %v1004 = vadd.f32 %v1000, %v1003
  %vm1005 = vweird.f32 %v814
  %vm1006 = vweird.f32 %v1000
  %vm1007 = vmor %vm1005, %vm1006
  %v1008 = vsel %vm1007, %v1000, %v1004
  %v1009 = vand.u32 2147483647, %v814
  %vm1010 = vcmp.eq.f32.partialorder %v1009, 8.507059e+37
  %v1011 = vand.u32 %v814, 2147483648
  %v1012 = vor.u32 1.1754944e-38, %v1011
  %v1013 = vsel %vm1010, %v1012, %v1008
  %v1014 = vmul.f32 1.0, %v1013
  %v1015 = vrcp.pop %v815
  %v1016 = vmul.f32 %v815, %v1015
  %v1017 = vsub.f32 1.0, %v1016
  %v1018 = vmul.f32 %v1015, %v1017
  %v1019 = vadd.f32 %v1015, %v1018
  %vm1020 = vweird.f32 %v815
  %vm1021 = vweird.f32 %v1015
  %vm1022 = vmor %vm1020, %vm1021
  %v1023 = vsel %vm1022, %v1015, %v1019
  %v1024 = vand.u32 2147483647, %v815
  %vm1025 = vcmp.eq.f32.partialorder %v1024, 8.507059e+37
  %v1026 = vand.u32 %v815, 2147483648
  %v1027 = vor.u32 1.1754944e-38, %v1026
  %v1028 = vsel %vm1025, %v1027, %v1023
  %v1029 = vmul.f32 1.0, %v1028
  %v1030 = vrcp.pop %v816
  %v1031 = vmul.f32 %v816, %v1030
  %v1032 = vsub.f32 1.0, %v1031
  %v1033 = vmul.f32 %v1030, %v1032
  %v1034 = vadd.f32 %v1030, %v1033
  %vm1035 = vweird.f32 %v816
  %vm1036 = vweird.f32 %v1030
  %vm1037 = vmor %vm1035, %vm1036
  %v1038 = vsel %vm1037, %v1030, %v1034
  %v1039 = vand.u32 2147483647, %v816
  %vm1040 = vcmp.eq.f32.partialorder %v1039, 8.507059e+37
  %v1041 = vand.u32 %v816, 2147483648
  %v1042 = vor.u32 1.1754944e-38, %v1041
  %v1043 = vsel %vm1040, %v1042, %v1038
  %v1044 = vmul.f32 1.0, %v1043
  %v1045 = vrcp.pop %v817
  %v1046 = vmul.f32 %v817, %v1045
  %v1047 = vsub.f32 1.0, %v1046
  %v1048 = vmul.f32 %v1045, %v1047
  %v1049 = vadd.f32 %v1045, %v1048
  %vm1050 = vweird.f32 %v817
  %vm1051 = vweird.f32 %v1045
  %vm1052 = vmor %vm1050, %vm1051
  %v1053 = vsel %vm1052, %v1045, %v1049
  %v1054 = vand.u32 2147483647, %v817
  %vm1055 = vcmp.eq.f32.partialorder %v1054, 8.507059e+37
  %v1056 = vand.u32 %v817, 2147483648
  %v1057 = vor.u32 1.1754944e-38, %v1056
  %v1058 = vsel %vm1055, %v1057, %v1053
  %v1059 = vmul.f32 1.0, %v1058
  %v1060 = vrcp.pop %v818
  %v1061 = vmul.f32 %v818, %v1060
  %v1062 = vsub.f32 1.0, %v1061
  %v1063 = vmul.f32 %v1060, %v1062
  %v1064 = vadd.f32 %v1060, %v1063
  %vm1065 = vweird.f32 %v818
  %vm1066 = vweird.f32 %v1060
  %vm1067 = vmor %vm1065, %vm1066
  %v1068 = vsel %vm1067, %v1060, %v1064
  %v1069 = vand.u32 2147483647, %v818
  %vm1070 = vcmp.eq.f32.partialorder %v1069, 8.507059e+37
  %v1071 = vand.u32 %v818, 2147483648
  %v1072 = vor.u32 1.1754944e-38, %v1071
  %v1073 = vsel %vm1070, %v1072, %v1068
  %v1074 = vmul.f32 1.0, %v1073
  %v1075 = vrcp.pop %v819
  %v1076 = vmul.f32 %v819, %v1075
  %v1077 = vsub.f32 1.0, %v1076
  %v1078 = vmul.f32 %v1075, %v1077
  %v1079 = vadd.f32 %v1075, %v1078
  %vm1080 = vweird.f32 %v819
  %vm1081 = vweird.f32 %v1075
  %vm1082 = vmor %vm1080, %vm1081
  %v1083 = vsel %vm1082, %v1075, %v1079
  %v1084 = vand.u32 2147483647, %v819
  %vm1085 = vcmp.eq.f32.partialorder %v1084, 8.507059e+37
  %v1086 = vand.u32 %v819, 2147483648
  %v1087 = vor.u32 1.1754944e-38, %v1086
  %v1088 = vsel %vm1085, %v1087, %v1083
  %v1089 = vmul.f32 1.0, %v1088
  %v1090 = vrcp.pop %v820
  %v1091 = vmul.f32 %v820, %v1090
  %v1092 = vsub.f32 1.0, %v1091
  %v1093 = vmul.f32 %v1090, %v1092
  %v1094 = vadd.f32 %v1090, %v1093
  %vm1095 = vweird.f32 %v820
  %vm1096 = vweird.f32 %v1090
  %vm1097 = vmor %vm1095, %vm1096
  %v1098 = vsel %vm1097, %v1090, %v1094
  %v1099 = vand.u32 2147483647, %v820
  %vm1100 = vcmp.eq.f32.partialorder %v1099, 8.507059e+37
  %v1101 = vand.u32 %v820, 2147483648
  %v1102 = vor.u32 1.1754944e-38, %v1101
  %v1103 = vsel %vm1100, %v1102, %v1098
  %v1104 = vmul.f32 1.0, %v1103
  %v1105 = vrcp.pop %v821
  %v1106 = vmul.f32 %v821, %v1105
  %v1107 = vsub.f32 1.0, %v1106
  %v1108 = vmul.f32 %v1105, %v1107
  %v1109 = vadd.f32 %v1105, %v1108
  %vm1110 = vweird.f32 %v821
  %vm1111 = vweird.f32 %v1105
  %vm1112 = vmor %vm1110, %vm1111
  %v1113 = vsel %vm1112, %v1105, %v1109
  %v1114 = vand.u32 2147483647, %v821
  %vm1115 = vcmp.eq.f32.partialorder %v1114, 8.507059e+37
  %v1116 = vand.u32 %v821, 2147483648
  %v1117 = vor.u32 1.1754944e-38, %v1116
  %v1118 = vsel %vm1115, %v1117, %v1113
  %v1119 = vmul.f32 1.0, %v1118
  %v1120 = vrcp.pop %v822
  %v1121 = vmul.f32 %v822, %v1120
  %v1122 = vsub.f32 1.0, %v1121
  %v1123 = vmul.f32 %v1120, %v1122
  %v1124 = vadd.f32 %v1120, %v1123
  %vm1125 = vweird.f32 %v822
  %vm1126 = vweird.f32 %v1120
  %vm1127 = vmor %vm1125, %vm1126
  %v1128 = vsel %vm1127, %v1120, %v1124
  %v1129 = vand.u32 2147483647, %v822
  %vm1130 = vcmp.eq.f32.partialorder %v1129, 8.507059e+37
  %v1131 = vand.u32 %v822, 2147483648
  %v1132 = vor.u32 1.1754944e-38, %v1131
  %v1133 = vsel %vm1130, %v1132, %v1128
  %v1134 = vmul.f32 1.0, %v1133
  %v1135 = vrcp.pop %v823
  %v1136 = vmul.f32 %v823, %v1135
  %v1137 = vsub.f32 1.0, %v1136
  %v1138 = vmul.f32 %v1135, %v1137
  %v1139 = vadd.f32 %v1135, %v1138
  %vm1140 = vweird.f32 %v823
  %vm1141 = vweird.f32 %v1135
  %vm1142 = vmor %vm1140, %vm1141
  %v1143 = vsel %vm1142, %v1135, %v1139
  %v1144 = vand.u32 2147483647, %v823
  %vm1145 = vcmp.eq.f32.partialorder %v1144, 8.507059e+37
  %v1146 = vand.u32 %v823, 2147483648
  %v1147 = vor.u32 1.1754944e-38, %v1146
  %v1148 = vsel %vm1145, %v1147, %v1143
  %v1149 = vmul.f32 1.0, %v1148
  %v1150 = vrcp.pop %v824
  %v1151 = vmul.f32 %v824, %v1150
  %v1152 = vsub.f32 1.0, %v1151
  %v1153 = vmul.f32 %v1150, %v1152
  %v1154 = vadd.f32 %v1150, %v1153
  %vm1155 = vweird.f32 %v824
  %vm1156 = vweird.f32 %v1150
  %vm1157 = vmor %vm1155, %vm1156
  %v1158 = vsel %vm1157, %v1150, %v1154
  %v1159 = vand.u32 2147483647, %v824
  %vm1160 = vcmp.eq.f32.partialorder %v1159, 8.507059e+37
  %v1161 = vand.u32 %v824, 2147483648
  %v1162 = vor.u32 1.1754944e-38, %v1161
  %v1163 = vsel %vm1160, %v1162, %v1158
  %v1164 = vmul.f32 1.0, %v1163
  %v1165 = vrcp.pop %v825
  %v1166 = vmul.f32 %v825, %v1165
  %v1167 = vsub.f32 1.0, %v1166
  %v1168 = vmul.f32 %v1165, %v1167
  %v1169 = vadd.f32 %v1165, %v1168
  %vm1170 = vweird.f32 %v825
  %vm1171 = vweird.f32 %v1165
  %vm1172 = vmor %vm1170, %vm1171
  %v1173 = vsel %vm1172, %v1165, %v1169
  %v1174 = vand.u32 2147483647, %v825
  %vm1175 = vcmp.eq.f32.partialorder %v1174, 8.507059e+37
  %v1176 = vand.u32 %v825, 2147483648
  %v1177 = vor.u32 1.1754944e-38, %v1176
  %v1178 = vsel %vm1175, %v1177, %v1173
  %v1179 = vmul.f32 1.0, %v1178
  %v1180 = vrcp.pop %v826
  %v1181 = vmul.f32 %v826, %v1180
  %v1182 = vsub.f32 1.0, %v1181
  %v1183 = vmul.f32 %v1180, %v1182
  %v1184 = vadd.f32 %v1180, %v1183
  %vm1185 = vweird.f32 %v826
  %vm1186 = vweird.f32 %v1180
  %vm1187 = vmor %vm1185, %vm1186
  %v1188 = vsel %vm1187, %v1180, %v1184
  %v1189 = vand.u32 2147483647, %v826
  %vm1190 = vcmp.eq.f32.partialorder %v1189, 8.507059e+37
  %v1191 = vand.u32 %v826, 2147483648
  %v1192 = vor.u32 1.1754944e-38, %v1191
  %v1193 = vsel %vm1190, %v1192, %v1188
  %v1194 = vmul.f32 1.0, %v1193
  %v1195 = vrcp.pop %v827
  %v1196 = vmul.f32 %v827, %v1195
  %v1197 = vsub.f32 1.0, %v1196
  %v1198 = vmul.f32 %v1195, %v1197
  %v1199 = vadd.f32 %v1195, %v1198
  %vm1200 = vweird.f32 %v827
  %vm1201 = vweird.f32 %v1195
  %vm1202 = vmor %vm1200, %vm1201
  %v1203 = vsel %vm1202, %v1195, %v1199
  %v1204 = vand.u32 2147483647, %v827
  %vm1205 = vcmp.eq.f32.partialorder %v1204, 8.507059e+37
  %v1206 = vand.u32 %v827, 2147483648
  %v1207 = vor.u32 1.1754944e-38, %v1206
  %v1208 = vsel %vm1205, %v1207, %v1203
  %v1209 = vmul.f32 1.0, %v1208
  %v1210 = vrcp.pop %v828
  %v1211 = vmul.f32 %v828, %v1210
  %v1212 = vsub.f32 1.0, %v1211
  %v1213 = vmul.f32 %v1210, %v1212
  %v1214 = vadd.f32 %v1210, %v1213
  %vm1215 = vweird.f32 %v828
  %vm1216 = vweird.f32 %v1210
  %vm1217 = vmor %vm1215, %vm1216
  %v1218 = vsel %vm1217, %v1210, %v1214
  %v1219 = vand.u32 2147483647, %v828
  %vm1220 = vcmp.eq.f32.partialorder %v1219, 8.507059e+37
  %v1221 = vand.u32 %v828, 2147483648
  %v1222 = vor.u32 1.1754944e-38, %v1221
  %v1223 = vsel %vm1220, %v1222, %v1218
  %v1224 = vmul.f32 1.0, %v1223
  %v1225 = vrcp.pop %v829
  %v1226 = vmul.f32 %v829, %v1225
  %v1227 = vsub.f32 1.0, %v1226
  %v1228 = vmul.f32 %v1225, %v1227
  %v1229 = vadd.f32 %v1225, %v1228
  %vm1230 = vweird.f32 %v829
  %vm1231 = vweird.f32 %v1225
  %vm1232 = vmor %vm1230, %vm1231
  %v1233 = vsel %vm1232, %v1225, %v1229
  %v1234 = vand.u32 2147483647, %v829
  %vm1235 = vcmp.eq.f32.partialorder %v1234, 8.507059e+37
  %v1236 = vand.u32 %v829, 2147483648
  %v1237 = vor.u32 1.1754944e-38, %v1236
  %v1238 = vsel %vm1235, %v1237, %v1233
  %v1239 = vmul.f32 1.0, %v1238
  %v1240 = vrcp.pop %v830
  %v1241 = vmul.f32 %v830, %v1240
  %v1242 = vsub.f32 1.0, %v1241
  %v1243 = vmul.f32 %v1240, %v1242
  %v1244 = vadd.f32 %v1240, %v1243
  %vm1245 = vweird.f32 %v830
  %vm1246 = vweird.f32 %v1240
  %vm1247 = vmor %vm1245, %vm1246
  %v1248 = vsel %vm1247, %v1240, %v1244
  %v1249 = vand.u32 2147483647, %v830
  %vm1250 = vcmp.eq.f32.partialorder %v1249, 8.507059e+37
  %v1251 = vand.u32 %v830, 2147483648
  %v1252 = vor.u32 1.1754944e-38, %v1251
  %v1253 = vsel %vm1250, %v1252, %v1248
  %v1254 = vmul.f32 1.0, %v1253
  %v1255 = vrcp.pop %v831
  %v1256 = vmul.f32 %v831, %v1255
  %v1257 = vsub.f32 1.0, %v1256
  %v1258 = vmul.f32 %v1255, %v1257
  %v1259 = vadd.f32 %v1255, %v1258
  %vm1260 = vweird.f32 %v831
  %vm1261 = vweird.f32 %v1255
  %vm1262 = vmor %vm1260, %vm1261
  %v1263 = vsel %vm1262, %v1255, %v1259
  %v1264 = vand.u32 2147483647, %v831
  %vm1265 = vcmp.eq.f32.partialorder %v1264, 8.507059e+37
  %v1266 = vand.u32 %v831, 2147483648
  %v1267 = vor.u32 1.1754944e-38, %v1266
  %v1268 = vsel %vm1265, %v1267, %v1263
  %v1269 = vmul.f32 1.0, %v1268
  %v1270 = vrcp.pop %v832
  %v1271 = vmul.f32 %v832, %v1270
  %v1272 = vsub.f32 1.0, %v1271
  %v1273 = vmul.f32 %v1270, %v1272
  %v1274 = vadd.f32 %v1270, %v1273
  %vm1275 = vweird.f32 %v832
  %vm1276 = vweird.f32 %v1270
  %vm1277 = vmor %vm1275, %vm1276
  %v1278 = vsel %vm1277, %v1270, %v1274
  %v1279 = vand.u32 2147483647, %v832
  %vm1280 = vcmp.eq.f32.partialorder %v1279, 8.507059e+37
  %v1281 = vand.u32 %v832, 2147483648
  %v1282 = vor.u32 1.1754944e-38, %v1281
  %v1283 = vsel %vm1280, %v1282, %v1278
  %v1284 = vmul.f32 1.0, %v1283
  %v1285 = vrcp.pop %v833
  %v1286 = vmul.f32 %v833, %v1285
  %v1287 = vsub.f32 1.0, %v1286
  %v1288 = vmul.f32 %v1285, %v1287
  %v1289 = vadd.f32 %v1285, %v1288
  %vm1290 = vweird.f32 %v833
  %vm1291 = vweird.f32 %v1285
  %vm1292 = vmor %vm1290, %vm1291
  %v1293 = vsel %vm1292, %v1285, %v1289
  %v1294 = vand.u32 2147483647, %v833
  %vm1295 = vcmp.eq.f32.partialorder %v1294, 8.507059e+37
  %v1296 = vand.u32 %v833, 2147483648
  %v1297 = vor.u32 1.1754944e-38, %v1296
  %v1298 = vsel %vm1295, %v1297, %v1293
  %v1299 = vmul.f32 1.0, %v1298
  %v1300 = vrcp.pop %v834
  %v1301 = vmul.f32 %v834, %v1300
  %v1302 = vsub.f32 1.0, %v1301
  %v1303 = vmul.f32 %v1300, %v1302
  %v1304 = vadd.f32 %v1300, %v1303
  %vm1305 = vweird.f32 %v834
  %vm1306 = vweird.f32 %v1300
  %vm1307 = vmor %vm1305, %vm1306
  %v1308 = vsel %vm1307, %v1300, %v1304
  %v1309 = vand.u32 2147483647, %v834
  %vm1310 = vcmp.eq.f32.partialorder %v1309, 8.507059e+37
  %v1311 = vand.u32 %v834, 2147483648
  %v1312 = vor.u32 1.1754944e-38, %v1311
  %v1313 = vsel %vm1310, %v1312, %v1308
  %v1314 = vmul.f32 1.0, %v1313
  %vm1315 = vcmask 7168
  %1316 = vst.msk [vmem:[%s5] sm:$0xff] %vm1315, %v849
  %1317 = vst.msk [vmem:[%s5 + $0x8] sm:$0xff] %vm1315, %v864
  %1318 = vst.msk [vmem:[%s5 + $0x10] sm:$0xff] %vm1315, %v879
  %1319 = vst.msk [vmem:[%s5 + $0x18] sm:$0xff] %vm1315, %v894
  %1320 = vst.msk [vmem:[%s5 + $0x20] sm:$0xff] %vm1315, %v909
  %1321 = vst.msk [vmem:[%s5 + $0x28] sm:$0xff] %vm1315, %v924
  %1322 = vst.msk [vmem:[%s5 + $0x30] sm:$0xff] %vm1315, %v939
  %1323 = vst.msk [vmem:[%s5 + $0x38] sm:$0xff] %vm1315, %v954
  %1324 = vst.msk [vmem:[%s5 + $0x40] sm:$0xff] %vm1315, %v969
  %1325 = vst.msk [vmem:[%s5 + $0x48] sm:$0xff] %vm1315, %v984
  %1326 = vst.msk [vmem:[%s5 + $0x50] sm:$0xff] %vm1315, %v999
  %1327 = vst.msk [vmem:[%s5 + $0x58] sm:$0xff] %vm1315, %v1014
  %1328 = vst.msk [vmem:[%s5 + $0x60] sm:$0xff] %vm1315, %v1029
  %1329 = vst.msk [vmem:[%s5 + $0x68] sm:$0xff] %vm1315, %v1044
  %1330 = vst.msk [vmem:[%s5 + $0x70] sm:$0xff] %vm1315, %v1059
  %1331 = vst.msk [vmem:[%s5 + $0x78] sm:$0xff] %vm1315, %v1074
  %1332 = vst.msk [vmem:[%s5 + $0x80] sm:$0xff] %vm1315, %v1089
  %1333 = vst.msk [vmem:[%s5 + $0x88] sm:$0xff] %vm1315, %v1104
  %1334 = vst.msk [vmem:[%s5 + $0x90] sm:$0xff] %vm1315, %v1119
  %1335 = vst.msk [vmem:[%s5 + $0x98] sm:$0xff] %vm1315, %v1134
  %1336 = vst.msk [vmem:[%s5 + $0xa0] sm:$0xff] %vm1315, %v1149
  %1337 = vst.msk [vmem:[%s5 + $0xa8] sm:$0xff] %vm1315, %v1164
  %1338 = vst.msk [vmem:[%s5 + $0xb0] sm:$0xff] %vm1315, %v1179
  %1339 = vst.msk [vmem:[%s5 + $0xb8] sm:$0xff] %vm1315, %v1194
  %1340 = vst.msk [vmem:[%s5 + $0xc0] sm:$0xff] %vm1315, %v1209
  %1341 = vst.msk [vmem:[%s5 + $0xc8] sm:$0xff] %vm1315, %v1224
  %1342 = vst.msk [vmem:[%s5 + $0xd0] sm:$0xff] %vm1315, %v1239
  %1343 = vst.msk [vmem:[%s5 + $0xd8] sm:$0xff] %vm1315, %v1254
  %1344 = vst.msk [vmem:[%s5 + $0xe0] sm:$0xff] %vm1315, %v1269
  %1345 = vst.msk [vmem:[%s5 + $0xe8] sm:$0xff] %vm1315, %v1284
  %1346 = vst.msk [vmem:[%s5 + $0xf0] sm:$0xff] %vm1315, %v1299
  %1347 = vst.msk [vmem:[%s5 + $0xf8] sm:$0xff] %vm1315, %v1314
  // Predicated region
  $region22: #{_lambda_.13} parent=0 // pred_check
    _
  $region23: #{_lambda_.13} parent=0 // pred_check_branch
    %1349 = sbr.rel (0) target = $region25
  $region24: #{_lambda_.13} parent=0 // pred_region
    _
  $region25: #{_lambda_.13} parent=0 // pred_fallthru
    _
  // Predicated region
  $region26: #{_lambda_.13} parent=0 // pred_check
    _
  $region27: #{_lambda_.13} parent=0 // pred_check_branch
    %1351 = sbr.rel (0) target = $region29
  $region28: #{_lambda_.13} parent=0 // pred_region
    _
  $region29: #{_lambda_.13} parent=0 // pred_fallthru
    _

// kernel: _lambda_.12
$region0: #{_lambda_.12}
  #allocation0 [shape = 'u32[]', space=smem, size = 0x4, offset = 0x4, fixed_abs, tag = 'smem constant byte address 0x4 - core index']
  #allocation1 [shape = 'u32[72,128]{1,0:T(1,128)}', space=vmem, size = 0x9000, scoped, tag = 'internal scratch']
  %s0 = inlined_call_operand.vmem [shape: bf16[256,8], index: 0, kind: input, shape index: {}]
  %s1 = inlined_call_operand.vmem [shape: bf16[8,32], index: 1, kind: input, shape index: {}]
  %s2 = inlined_call_operand.vmem [shape: bf16[256,32], index: 2, kind: output, shape index: {}]
  %s3 = sld [smem:[#allocation0]]
  $region18: #{_lambda_.12} parent=0
    _
  %s5 = ssub.s32 1, %s3
  %s6 = scalar_select 0, %s5, %s3
  // Predicated region
  $region2: #{_lambda_.12} parent=0 // pred_check
    _
  $region3: #{_lambda_.12} parent=0 // pred_check_branch
    %8 = sbr.rel (0) target = $region5
  $region4: #{_lambda_.12} parent=0 // pred_region
    _
  $region5: #{_lambda_.12} parent=0 // pred_fallthru
    _
  // Predicated region
  $region6: #{_lambda_.12} parent=0 // pred_check
    _
  $region7: #{_lambda_.12} parent=0 // pred_check_branch
    %10 = sbr.rel (0) target = $region9
  $region8: #{_lambda_.12} parent=0 // pred_region
    _
  $region9: #{_lambda_.12} parent=0 // pred_fallthru
    _
  %v12 = vld [vmem:[%s0] sm:$0xf]
  %v13 = vld [vmem:[%s0 + $0x4] sm:$0xf]
  %v14 = vld [vmem:[%s0 + $0x8] sm:$0xf]
  %v15 = vld [vmem:[%s0 + $0xc] sm:$0xf]
  %v16 = vld [vmem:[%s0 + $0x10] sm:$0xf]
  %v17 = vld [vmem:[%s0 + $0x14] sm:$0xf]
  %v18 = vld [vmem:[%s0 + $0x18] sm:$0xf]
  %v19 = vld [vmem:[%s0 + $0x1c] sm:$0xf]
  %v20 = vld [vmem:[%s0 + $0x20] sm:$0xf]
  %v21 = vld [vmem:[%s0 + $0x24] sm:$0xf]
  %v22 = vld [vmem:[%s0 + $0x28] sm:$0xf]
  %v23 = vld [vmem:[%s0 + $0x2c] sm:$0xf]
  %v24 = vld [vmem:[%s0 + $0x30] sm:$0xf]
  %v25 = vld [vmem:[%s0 + $0x34] sm:$0xf]
  %v26 = vld [vmem:[%s0 + $0x38] sm:$0xf]
  %v27 = vld [vmem:[%s0 + $0x3c] sm:$0xf]
  %v28 = vld [vmem:[%s0 + $0x40] sm:$0xf]
  %v29 = vld [vmem:[%s0 + $0x44] sm:$0xf]
  %v30 = vld [vmem:[%s0 + $0x48] sm:$0xf]
  %v31 = vld [vmem:[%s0 + $0x4c] sm:$0xf]
  %v32 = vld [vmem:[%s0 + $0x50] sm:$0xf]
  %v33 = vld [vmem:[%s0 + $0x54] sm:$0xf]
  %v34 = vld [vmem:[%s0 + $0x58] sm:$0xf]
  %v35 = vld [vmem:[%s0 + $0x5c] sm:$0xf]
  %v36 = vld [vmem:[%s0 + $0x60] sm:$0xf]
  %v37 = vld [vmem:[%s0 + $0x64] sm:$0xf]
  %v38 = vld [vmem:[%s0 + $0x68] sm:$0xf]
  %v39 = vld [vmem:[%s0 + $0x6c] sm:$0xf]
  %v40 = vld [vmem:[%s0 + $0x70] sm:$0xf]
  %v41 = vld [vmem:[%s0 + $0x74] sm:$0xf]
  %v42 = vld [vmem:[%s0 + $0x78] sm:$0xf]
  %v43 = vld [vmem:[%s0 + $0x7c] sm:$0xf]
  %v44 = vld [vmem:[%s1] sm:$0xf]
  %v77 = vunpack.c.l.b16 %v12
  %v78 = vunpack.c.l.b16 %v13
  %v79 = vunpack.c.l.b16 %v14
  %v80 = vunpack.c.l.b16 %v15
  %v81 = vunpack.c.l.b16 %v16
  %v82 = vunpack.c.l.b16 %v17
  %v83 = vunpack.c.l.b16 %v18
  %v84 = vunpack.c.l.b16 %v19
  %v85 = vunpack.c.l.b16 %v20
  %v86 = vunpack.c.l.b16 %v21
  %v87 = vunpack.c.l.b16 %v22
  %v88 = vunpack.c.l.b16 %v23
  %v89 = vunpack.c.l.b16 %v24
  %v90 = vunpack.c.l.b16 %v25
  %v91 = vunpack.c.l.b16 %v26
  %v92 = vunpack.c.l.b16 %v27
  %v93 = vunpack.c.l.b16 %v28
  %v94 = vunpack.c.l.b16 %v29
  %v95 = vunpack.c.l.b16 %v30
  %v96 = vunpack.c.l.b16 %v31
  %v97 = vunpack.c.l.b16 %v32
  %v98 = vunpack.c.l.b16 %v33
  %v99 = vunpack.c.l.b16 %v34
  %v100 = vunpack.c.l.b16 %v35
  %v101 = vunpack.c.l.b16 %v36
  %v102 = vunpack.c.l.b16 %v37
  %v103 = vunpack.c.l.b16 %v38
  %v104 = vunpack.c.l.b16 %v39
  %v105 = vunpack.c.l.b16 %v40
  %v106 = vunpack.c.l.b16 %v41
  %v107 = vunpack.c.l.b16 %v42
  %v108 = vunpack.c.l.b16 %v43
  %v109 = vpack.c.b16 %v78, %v77
  %v110 = vpack.c.b16 %v80, %v79
  %v111 = vpack.c.b16 %v82, %v81
  %v112 = vpack.c.b16 %v84, %v83
  %v113 = vpack.c.b16 %v86, %v85
  %v114 = vpack.c.b16 %v88, %v87
  %v115 = vpack.c.b16 %v90, %v89
  %v116 = vpack.c.b16 %v92, %v91
  %v117 = vpack.c.b16 %v94, %v93
  %v118 = vpack.c.b16 %v96, %v95
  %v119 = vpack.c.b16 %v98, %v97
  %v120 = vpack.c.b16 %v100, %v99
  %v121 = vpack.c.b16 %v102, %v101
  %v122 = vpack.c.b16 %v104, %v103
  %v123 = vpack.c.b16 %v106, %v105
  %v124 = vpack.c.b16 %v108, %v107
  %vm125 = vcmask 64512
  %v127 = vsel %vm125, %v109, 0
  %v130 = vsel %vm125, %v110, 0
  %v133 = vsel %vm125, %v111, 0
  %v136 = vsel %vm125, %v112, 0
  %v139 = vsel %vm125, %v113, 0
  %v142 = vsel %vm125, %v114, 0
  %v145 = vsel %vm125, %v115, 0
  %v148 = vsel %vm125, %v116, 0
  %v151 = vsel %vm125, %v117, 0
  %v154 = vsel %vm125, %v118, 0
  %v157 = vsel %vm125, %v119, 0
  %v160 = vsel %vm125, %v120, 0
  %v163 = vsel %vm125, %v121, 0
  %v166 = vsel %vm125, %v122, 0
  %v169 = vsel %vm125, %v123, 0
  %v172 = vsel %vm125, %v124, 0
  %vm174 = vcmask 1043456
  %v176 = vsel %vm174, %v44, 0
  %178 = vmatpush.bf16.msra.mxu0 0
  %179 = vmatpush.bf16.msra.mxu0 0
  %180 = vmatpush.bf16.msra.mxu0 0
  %181 = vmatpush.bf16.msra.mxu0 0
  %182 = vmatpush.bf16.msra.mxu0 0
  %183 = vmatpush.bf16.msra.mxu0 0
  %184 = vmatpush.bf16.msra.mxu0 0
  %185 = vmatpush.bf16.msra.mxu0 %v176
  %186 = vmatmul.bf16.gmra.mxu0 %v127
  %v187 = vpop.f32.mrf.mxu0
  %v188 = vadd.f32 0.0, %v187
  %v189 = vpop.f32.mrf.mxu0
  %v190 = vadd.f32 0.0, %v189
  %191 = vmatmul.bf16.gmra.mxu0 %v130
  %v192 = vpop.f32.mrf.mxu0
  %v193 = vadd.f32 0.0, %v192
  %v194 = vpop.f32.mrf.mxu0
  %v195 = vadd.f32 0.0, %v194
  %196 = vmatmul.bf16.gmra.mxu0 %v133
  %v197 = vpop.f32.mrf.mxu0
  %v198 = vadd.f32 0.0, %v197
  %v199 = vpop.f32.mrf.mxu0
  %v200 = vadd.f32 0.0, %v199
  %201 = vmatmul.bf16.gmra.mxu0 %v136
  %v202 = vpop.f32.mrf.mxu0
  %v203 = vadd.f32 0.0, %v202
  %v204 = vpop.f32.mrf.mxu0
  %v205 = vadd.f32 0.0, %v204
  %206 = vmatmul.bf16.gmra.mxu0 %v139
  %v207 = vpop.f32.mrf.mxu0
  %v208 = vadd.f32 0.0, %v207
  %v209 = vpop.f32.mrf.mxu0
  %v210 = vadd.f32 0.0, %v209
  %211 = vmatmul.bf16.gmra.mxu0 %v142
  %v212 = vpop.f32.mrf.mxu0
  %v213 = vadd.f32 0.0, %v212
  %v214 = vpop.f32.mrf.mxu0
  %v215 = vadd.f32 0.0, %v214
  %216 = vmatmul.bf16.gmra.mxu0 %v145
  %v217 = vpop.f32.mrf.mxu0
  %v218 = vadd.f32 0.0, %v217
  %v219 = vpop.f32.mrf.mxu0
  %v220 = vadd.f32 0.0, %v219
  %221 = vmatmul.bf16.gmra.mxu0 %v148
  %v222 = vpop.f32.mrf.mxu0
  %v223 = vadd.f32 0.0, %v222
  %v224 = vpop.f32.mrf.mxu0
  %v225 = vadd.f32 0.0, %v224
  %226 = vmatmul.bf16.gmra.mxu0 %v151
  %v227 = vpop.f32.mrf.mxu0
  %v228 = vadd.f32 0.0, %v227
  %v229 = vpop.f32.mrf.mxu0
  %v230 = vadd.f32 0.0, %v229
  %231 = vmatmul.bf16.gmra.mxu0 %v154
  %v232 = vpop.f32.mrf.mxu0
  %v233 = vadd.f32 0.0, %v232
  %v234 = vpop.f32.mrf.mxu0
  %v235 = vadd.f32 0.0, %v234
  %236 = vmatmul.bf16.gmra.mxu0 %v157
  %v237 = vpop.f32.mrf.mxu0
  %v238 = vadd.f32 0.0, %v237
  %v239 = vpop.f32.mrf.mxu0
  %v240 = vadd.f32 0.0, %v239
  %241 = vmatmul.bf16.gmra.mxu0 %v160
  %v242 = vpop.f32.mrf.mxu0
  %v243 = vadd.f32 0.0, %v242
  %v244 = vpop.f32.mrf.mxu0
  %v245 = vadd.f32 0.0, %v244
  %246 = vmatmul.bf16.gmra.mxu0 %v163
  %v247 = vpop.f32.mrf.mxu0
  %v248 = vadd.f32 0.0, %v247
  %v249 = vpop.f32.mrf.mxu0
  %v250 = vadd.f32 0.0, %v249
  %251 = vmatmul.bf16.gmra.mxu0 %v166
  %v252 = vpop.f32.mrf.mxu0
  %v253 = vadd.f32 0.0, %v252
  %v254 = vpop.f32.mrf.mxu0
  %v255 = vadd.f32 0.0, %v254
  %256 = vmatmul.bf16.gmra.mxu0 %v169
  %v257 = vpop.f32.mrf.mxu0
  %v258 = vadd.f32 0.0, %v257
  %v259 = vpop.f32.mrf.mxu0
  %v260 = vadd.f32 0.0, %v259
  %261 = vmatmul.bf16.gmra.mxu0 %v172
  %v262 = vpop.f32.mrf.mxu0
  %v263 = vadd.f32 0.0, %v262
  %v264 = vpop.f32.mrf.mxu0
  %v265 = vadd.f32 0.0, %v264
  %266 = vdwg.mxu0
  %v267 = vpack.c.bf16 %v188, %v188
  %v268 = vpack.c.bf16 %v190, %v190
  %v269 = vpack.c.bf16 %v193, %v193
  %v270 = vpack.c.bf16 %v195, %v195
  %v271 = vpack.c.bf16 %v198, %v198
  %v272 = vpack.c.bf16 %v200, %v200
  %v273 = vpack.c.bf16 %v203, %v203
  %v274 = vpack.c.bf16 %v205, %v205
  %v275 = vpack.c.bf16 %v208, %v208
  %v276 = vpack.c.bf16 %v210, %v210
  %v277 = vpack.c.bf16 %v213, %v213
  %v278 = vpack.c.bf16 %v215, %v215
  %v279 = vpack.c.bf16 %v218, %v218
  %v280 = vpack.c.bf16 %v220, %v220
  %v281 = vpack.c.bf16 %v223, %v223
  %v282 = vpack.c.bf16 %v225, %v225
  %v283 = vpack.c.bf16 %v228, %v228
  %v284 = vpack.c.bf16 %v230, %v230
  %v285 = vpack.c.bf16 %v233, %v233
  %v286 = vpack.c.bf16 %v235, %v235
  %v287 = vpack.c.bf16 %v238, %v238
  %v288 = vpack.c.bf16 %v240, %v240
  %v289 = vpack.c.bf16 %v243, %v243
  %v290 = vpack.c.bf16 %v245, %v245
  %v291 = vpack.c.bf16 %v248, %v248
  %v292 = vpack.c.bf16 %v250, %v250
  %v293 = vpack.c.bf16 %v253, %v253
  %v294 = vpack.c.bf16 %v255, %v255
  %v295 = vpack.c.bf16 %v258, %v258
  %v296 = vpack.c.bf16 %v260, %v260
  %v297 = vpack.c.bf16 %v263, %v263
  %v298 = vpack.c.bf16 %v265, %v265
  %vm299 = vcmask 257024
  %300 = vst.msk [vmem:[%s2] sm:$0xf] %vm299, %v267
  %301 = vst.msk [vmem:[%s2 + $0x4] sm:$0xf] %vm299, %v268
  %302 = vst.msk [vmem:[%s2 + $0x8] sm:$0xf] %vm299, %v269
  %303 = vst.msk [vmem:[%s2 + $0xc] sm:$0xf] %vm299, %v270
  %304 = vst.msk [vmem:[%s2 + $0x10] sm:$0xf] %vm299, %v271
  %305 = vst.msk [vmem:[%s2 + $0x14] sm:$0xf] %vm299, %v272
  %306 = vst.msk [vmem:[%s2 + $0x18] sm:$0xf] %vm299, %v273
  %307 = vst.msk [vmem:[%s2 + $0x1c] sm:$0xf] %vm299, %v274
  %308 = vst.msk [vmem:[%s2 + $0x20] sm:$0xf] %vm299, %v275
  %309 = vst.msk [vmem:[%s2 + $0x24] sm:$0xf] %vm299, %v276
  %310 = vst.msk [vmem:[%s2 + $0x28] sm:$0xf] %vm299, %v277
  %311 = vst.msk [vmem:[%s2 + $0x2c] sm:$0xf] %vm299, %v278
  %312 = vst.msk [vmem:[%s2 + $0x30] sm:$0xf] %vm299, %v279
  %313 = vst.msk [vmem:[%s2 + $0x34] sm:$0xf] %vm299, %v280
  %314 = vst.msk [vmem:[%s2 + $0x38] sm:$0xf] %vm299, %v281
  %315 = vst.msk [vmem:[%s2 + $0x3c] sm:$0xf] %vm299, %v282
  %316 = vst.msk [vmem:[%s2 + $0x40] sm:$0xf] %vm299, %v283
  %317 = vst.msk [vmem:[%s2 + $0x44] sm:$0xf] %vm299, %v284
  %318 = vst.msk [vmem:[%s2 + $0x48] sm:$0xf] %vm299, %v285
  %319 = vst.msk [vmem:[%s2 + $0x4c] sm:$0xf] %vm299, %v286
  %320 = vst.msk [vmem:[%s2 + $0x50] sm:$0xf] %vm299, %v287
  %321 = vst.msk [vmem:[%s2 + $0x54] sm:$0xf] %vm299, %v288
  %322 = vst.msk [vmem:[%s2 + $0x58] sm:$0xf] %vm299, %v289
  %323 = vst.msk [vmem:[%s2 + $0x5c] sm:$0xf] %vm299, %v290
  %324 = vst.msk [vmem:[%s2 + $0x60] sm:$0xf] %vm299, %v291
  %325 = vst.msk [vmem:[%s2 + $0x64] sm:$0xf] %vm299, %v292
  %326 = vst.msk [vmem:[%s2 + $0x68] sm:$0xf] %vm299, %v293
  %327 = vst.msk [vmem:[%s2 + $0x6c] sm:$0xf] %vm299, %v294
  %328 = vst.msk [vmem:[%s2 + $0x70] sm:$0xf] %vm299, %v295
  %329 = vst.msk [vmem:[%s2 + $0x74] sm:$0xf] %vm299, %v296
  %330 = vst.msk [vmem:[%s2 + $0x78] sm:$0xf] %vm299, %v297
  %331 = vst.msk [vmem:[%s2 + $0x7c] sm:$0xf] %vm299, %v298
  // Predicated region
  $region10: #{_lambda_.12} parent=0 // pred_check
    _
  $region11: #{_lambda_.12} parent=0 // pred_check_branch
    %333 = sbr.rel (0) target = $region13
  $region12: #{_lambda_.12} parent=0 // pred_region
    _
  $region13: #{_lambda_.12} parent=0 // pred_fallthru
    _
  // Predicated region
  $region14: #{_lambda_.12} parent=0 // pred_check
    _
  $region15: #{_lambda_.12} parent=0 // pred_check_branch
    %335 = sbr.rel (0) target = $region17
  $region16: #{_lambda_.12} parent=0 // pred_region
    _
  $region17: #{_lambda_.12} parent=0 // pred_fallthru
    _

// kernel: _lambda_.14
$region0: #{_lambda_.14}
  #allocation0 [shape = 'u32[]', space=smem, size = 0x4, offset = 0x4, fixed_abs, tag = 'smem constant byte address 0x4 - core index']
  #allocation1 [shape = 'u32[72,128]{1,0:T(1,128)}', space=vmem, size = 0x9000, scoped, tag = 'internal scratch']
  #allocation2 [shape = 'f32[328,4]{1,0:T(8,128)}', space=vmem, size = 0x29000, scoped, tag = 'scratch operand']
  %s0 = inlined_call_operand.vmem [shape: bf16[1,10,328,4], index: 0, kind: input, shape index: {}]
  %s1 = inlined_call_operand.vmem [shape: bf16[1,10,328,4], index: 1, kind: input, shape index: {}]
  %s2 = inlined_call_operand.vmem [shape: f32[1,10,328,1], index: 2, kind: input, shape index: {}]
  %s3 = inlined_call_operand.vmem [shape: bf16[3,3,24,4], index: 3, kind: input, shape index: {}]
  %s4 = inlined_call_operand.vmem [shape: f32[1,8,256,4], index: 4, kind: output, shape index: {0}]
  %s5 = inlined_call_operand.vmem [shape: f32[1,8,1,4], index: 5, kind: output, shape index: {1}]
  %s6 = inlined_call_operand.vmem [shape: f32[1,8,1,4], index: 6, kind: output, shape index: {2}]
  %7 = xla_tuple %s4, %s5, %s6
  %s8 = sld [smem:[#allocation0]]
  $region73: #{_lambda_.14} parent=0
    _
  %s10 = ssub.s32 1, %s8
  %s11 = scalar_select 0, %s10, %s8
  loop: start=0, step=1, limit=26
  $region2: #{_lambda_.14} parent=0 // loop_pre_header
    _
  $region3: #{_lambda_.14} parent=0 // loop_header
    %s13 = sphi 0, %s17
    %p14 = scmp.ge.s32.totalorder %s13, 26
    %s20 = sphi 0, %s39
    %s21 = sphi 0, %s35
    %s22 = sphi 0, %s31
    %s23 = sphi 0, %s20
    %s24 = sphi 0, %s21
    %s25 = sphi 0, %s22
    %s26 = sphi 0, %s23
    %s27 = sphi 0, %s24
    %s28 = sphi 0, %s25
    %s46 = sphi 0, %s48
    %s49 = sphi 0, %s46
    %s50 = sphi 0, %s49
    %s66 = sphi 0, %s50
    %s76 = sphi 0, %s78
    %s79 = sphi 0, %s76
    %s80 = sphi 0, %s79
    %s96 = sphi 0, %s80
    %s106 = sphi 0, %s108
    %s109 = sphi 0, %s106
    %s110 = sphi 0, %s109
    %s126 = sphi 0, %s110
    %s130 = sphi 0, %s130
    %s132 = sphi 0, %s130
    %s133 = sphi 0, %s132
    %s147 = sphi 0, %s133
    %s155 = sphi 0, %s157
    %s158 = sphi 0, %s155
    %s159 = sphi 0, %s158
    %s175 = sphi 0, %s159
    %s183 = sphi 0, %s185
    %s186 = sphi 0, %s183
    %s187 = sphi 0, %s186
    %s203 = sphi 0, %s187
    %s211 = sphi 0, %s213
    %s214 = sphi 0, %s211
    %s215 = sphi 0, %s214
    %s231 = sphi 0, %s215
  $region4: #{_lambda_.14} parent=0 // loop_header_branch
    %16 = sbr.rel (%p14) target = $region8
  $region5: #{_lambda_.14} parent=0 // loop_body
    %s18 = ssub.s32 %s13, 1
    %s19 = ssub.s32 %s13, 2
    %s29 = sadd.s32 1, %s22
    %p30 = scmp.ge.s32.totalorder %s29, 3
    %s31 = scalar_select %p30, 0, %s29
    %s32 = sadd.s32 1, %s21
    %s33 = scalar_select %p30, %s32, %s21
    %p34 = scmp.ge.s32.totalorder %s33, 8
    %s35 = scalar_select %p34, 0, %s33
    %s36 = sadd.s32 1, %s20
    %s37 = scalar_select %p34, %s36, %s20
    %p38 = scmp.ge.s32.totalorder %s37, 1
    %s39 = scalar_select %p38, 0, %s37
    %s40 = sadd.s32 %s21, %s22
    %s41 = sadd.s32 %s35, %s31
    %s42 = ssub.s32 %s20, %s39
    %s43 = ssub.s32 %s40, %s41
    %s44 = sor.u32 %s42, %s43
    %p45 = scmp.eq.s32.totalorder %s44, 0
    %s47 = sadd.s32 %s46, 1
    %s48 = scalar_select %p45, %s46, %s47
    %p51 = pneg %p45
    %p52 = scmp.eq.s32.totalorder %s13, 23
    %p53 = por %p51, %p52
    %p54 = scmp.ne.s32.totalorder %s46, %s49
    %p55 = scmp.eq.s32.totalorder %s13, 0
    %p56 = por %p54, %p55
    %p57 = scmp.ne.s32.totalorder %s46, %s49
    %p58 = scmp.eq.s32.totalorder %s18, 23
    %p59 = por %p57, %p58
    %p60 = scmp.ne.s32.totalorder %s49, %s50
    %p61 = scmp.eq.s32.totalorder %s18, 0
    %p62 = por %p60, %p61
    %p63 = scmp.ne.s32.totalorder %s49, %s50
    %p64 = scmp.eq.s32.totalorder %s19, 23
    %p65 = por %p63, %p64
    %p67 = scmp.ne.s32.totalorder %s50, %s66
    %p68 = scmp.eq.s32.totalorder %s19, 0
    %p69 = por %p67, %p68
    %s70 = sadd.s32 %s21, %s22
    %s71 = sadd.s32 %s35, %s31
    %s72 = ssub.s32 %s20, %s39
    %s73 = ssub.s32 %s70, %s71
    %s74 = sor.u32 %s72, %s73
    %p75 = scmp.eq.s32.totalorder %s74, 0
    %s77 = sadd.s32 %s76, 1
    %s78 = scalar_select %p75, %s76, %s77
    %p81 = pneg %p75
    %p82 = scmp.eq.s32.totalorder %s13, 23
    %p83 = por %p81, %p82
    %p84 = scmp.ne.s32.totalorder %s76, %s79
    %p85 = scmp.eq.s32.totalorder %s13, 0
    %p86 = por %p84, %p85
    %p87 = scmp.ne.s32.totalorder %s76, %s79
    %p88 = scmp.eq.s32.totalorder %s18, 23
    %p89 = por %p87, %p88
    %p90 = scmp.ne.s32.totalorder %s79, %s80
    %p91 = scmp.eq.s32.totalorder %s18, 0
    %p92 = por %p90, %p91
    %p93 = scmp.ne.s32.totalorder %s79, %s80
    %p94 = scmp.eq.s32.totalorder %s19, 23
    %p95 = por %p93, %p94
    %p97 = scmp.ne.s32.totalorder %s80, %s96
    %p98 = scmp.eq.s32.totalorder %s19, 0
    %p99 = por %p97, %p98
    %s100 = sadd.s32 %s21, %s22
    %s101 = sadd.s32 %s35, %s31
    %s102 = ssub.s32 %s20, %s39
    %s103 = ssub.s32 %s100, %s101
    %s104 = sor.u32 %s102, %s103
    %p105 = scmp.eq.s32.totalorder %s104, 0
    %s107 = sadd.s32 %s106, 1
    %s108 = scalar_select %p105, %s106, %s107
    %p111 = pneg %p105
    %p112 = scmp.eq.s32.totalorder %s13, 23
    %p113 = por %p111, %p112
    %p114 = scmp.ne.s32.totalorder %s106, %s109
    %p115 = scmp.eq.s32.totalorder %s13, 0
    %p116 = por %p114, %p115
    %p117 = scmp.ne.s32.totalorder %s106, %s109
    %p118 = scmp.eq.s32.totalorder %s18, 23
    %p119 = por %p117, %p118
    %p120 = scmp.ne.s32.totalorder %s109, %s110
    %p121 = scmp.eq.s32.totalorder %s18, 0
    %p122 = por %p120, %p121
    %p123 = scmp.ne.s32.totalorder %s109, %s110
    %p124 = scmp.eq.s32.totalorder %s19, 23
    %p125 = por %p123, %p124
    %p127 = scmp.ne.s32.totalorder %s110, %s126
    %p128 = scmp.eq.s32.totalorder %s19, 0
    %p129 = por %p127, %p128
    %s131 = sadd.s32 %s130, 1
    %p134 = scmp.eq.s32.totalorder %s13, 23
    %p135 = scmp.ne.s32.totalorder %s130, %s132
    %p136 = scmp.eq.s32.totalorder %s13, 0
    %p137 = por %p135, %p136
    %p138 = scmp.ne.s32.totalorder %s130, %s132
    %p139 = scmp.eq.s32.totalorder %s18, 23
    %p140 = por %p138, %p139
    %p141 = scmp.ne.s32.totalorder %s132, %s133
    %p142 = scmp.eq.s32.totalorder %s18, 0
    %p143 = por %p141, %p142
    %p144 = scmp.ne.s32.totalorder %s132, %s133
    %p145 = scmp.eq.s32.totalorder %s19, 23
    %p146 = por %p144, %p145
    %p148 = scmp.ne.s32.totalorder %s133, %s147
    %p149 = scmp.eq.s32.totalorder %s19, 0
    %p150 = por %p148, %p149
    %s151 = ssub.s32 %s20, %s39
    %s152 = ssub.s32 %s21, %s35
    %s153 = sor.u32 %s151, %s152
    %p154 = scmp.eq.s32.totalorder %s153, 0
    %s156 = sadd.s32 %s155, 1
    %s157 = scalar_select %p154, %s155, %s156
    %p160 = pneg %p154
    %p161 = scmp.eq.s32.totalorder %s13, 23
    %p162 = por %p160, %p161
    %p163 = scmp.ne.s32.totalorder %s155, %s158
    %p164 = scmp.eq.s32.totalorder %s13, 0
    %p165 = por %p163, %p164
    %p166 = scmp.ne.s32.totalorder %s155, %s158
    %p167 = scmp.eq.s32.totalorder %s18, 23
    %p168 = por %p166, %p167
    %p169 = scmp.ne.s32.totalorder %s158, %s159
    %p170 = scmp.eq.s32.totalorder %s18, 0
    %p171 = por %p169, %p170
    %p172 = scmp.ne.s32.totalorder %s158, %s159
    %p173 = scmp.eq.s32.totalorder %s19, 23
    %p174 = por %p172, %p173
    %p176 = scmp.ne.s32.totalorder %s159, %s175
    %p177 = scmp.eq.s32.totalorder %s19, 0
    %p178 = por %p176, %p177
    %s179 = ssub.s32 %s20, %s39
    %s180 = ssub.s32 %s21, %s35
    %s181 = sor.u32 %s179, %s180
    %p182 = scmp.eq.s32.totalorder %s181, 0
    %s184 = sadd.s32 %s183, 1
    %s185 = scalar_select %p182, %s183, %s184
    %p188 = pneg %p182
    %p189 = scmp.eq.s32.totalorder %s13, 23
    %p190 = por %p188, %p189
    %p191 = scmp.ne.s32.totalorder %s183, %s186
    %p192 = scmp.eq.s32.totalorder %s13, 0
    %p193 = por %p191, %p192
    %p194 = scmp.ne.s32.totalorder %s183, %s186
    %p195 = scmp.eq.s32.totalorder %s18, 23
    %p196 = por %p194, %p195
    %p197 = scmp.ne.s32.totalorder %s186, %s187
    %p198 = scmp.eq.s32.totalorder %s18, 0
    %p199 = por %p197, %p198
    %p200 = scmp.ne.s32.totalorder %s186, %s187
    %p201 = scmp.eq.s32.totalorder %s19, 23
    %p202 = por %p200, %p201
    %p204 = scmp.ne.s32.totalorder %s187, %s203
    %p205 = scmp.eq.s32.totalorder %s19, 0
    %p206 = por %p204, %p205
    %s207 = ssub.s32 %s20, %s39
    %s208 = ssub.s32 %s21, %s35
    %s209 = sor.u32 %s207, %s208
    %p210 = scmp.eq.s32.totalorder %s209, 0
    %s212 = sadd.s32 %s211, 1
    %s213 = scalar_select %p210, %s211, %s212
    %p216 = pneg %p210
    %p217 = scmp.eq.s32.totalorder %s13, 23
    %p218 = por %p216, %p217
    %p219 = scmp.ne.s32.totalorder %s211, %s214
    %p220 = scmp.eq.s32.totalorder %s13, 0
    %p221 = por %p219, %p220
    %p222 = scmp.ne.s32.totalorder %s211, %s214
    %p223 = scmp.eq.s32.totalorder %s18, 23
    %p224 = por %p222, %p223
    %p225 = scmp.ne.s32.totalorder %s214, %s215
    %p226 = scmp.eq.s32.totalorder %s18, 0
    %p227 = por %p225, %p226
    %p228 = scmp.ne.s32.totalorder %s214, %s215
    %p229 = scmp.eq.s32.totalorder %s19, 23
    %p230 = por %p228, %p229
    %p232 = scmp.ne.s32.totalorder %s215, %s231
    %p233 = scmp.eq.s32.totalorder %s19, 0
    %p234 = por %p232, %p233
    %p235 = scmp.le.s32.totalorder 1, %s13
    %p236 = scmp.lt.s32.totalorder %s13, 25
    %p237 = pnand %p235, %p236
    %p238 = pneg %p237
    // Predicated region
    $region9: #{_lambda_.14} parent=5 // pred_check
      _
    $region10: #{_lambda_.14} parent=5 // pred_check_branch
      %240 = sbr.rel (%p237) target = $region12
    $region11: #{_lambda_.14} parent=5 // pred_region
      %s241 = ssub.s32 %s13, 1
      // Predicated region
      $region13: #{_lambda_.14} parent=11 // pred_check
        %p242 = pneg %p143
      $region14: #{_lambda_.14} parent=11 // pred_check_branch
        %244 = sbr.rel (%p242) target = $region16
      $region15: #{_lambda_.14} parent=11 // pred_region
        _
      $region16: #{_lambda_.14} parent=11 // pred_fallthru
        _
    $region12: #{_lambda_.14} parent=5 // pred_fallthru
      _
    %p245 = scmp.lt.s32.totalorder %s13, 24
    // Predicated region
    $region17: #{_lambda_.14} parent=5 // pred_check
      %p246 = pneg %p245
    $region18: #{_lambda_.14} parent=5 // pred_check_branch
      %248 = sbr.rel (%p246) target = $region20
    $region19: #{_lambda_.14} parent=5 // pred_region
      // Predicated region
      $region21: #{_lambda_.14} parent=19 // pred_check
        %p249 = pneg %p56
      $region22: #{_lambda_.14} parent=19 // pred_check_branch
        %251 = sbr.rel (%p249) target = $region24
      $region23: #{_lambda_.14} parent=19 // pred_region
        %s252 = sadd.s32 %s21, %s22
        %p253 = scmp.lt.s32.totalorder %s20, 0
        %s254 = scalar_select %p253, %s20, 0
        %p255 = scmp.lt.s32.totalorder %s252, 9
        %s256 = scalar_select %p255, %s252, 9
        %s257 = smul.addr %s256, 41
        %s258 = smul.addr %s254, 410
        %s259 = sadd.s32 %s257, %s258
        %s260 = smul.addr %s259, 4
        %s261 = scalar_lea.vmem %s0, %s260
        %s262 = sadd.s32 %s21, %s22
      $region24: #{_lambda_.14} parent=19 // pred_fallthru
        _
      // Predicated region
      $region25: #{_lambda_.14} parent=19 // pred_check
        %p263 = pneg %p86
      $region26: #{_lambda_.14} parent=19 // pred_check_branch
        %265 = sbr.rel (%p263) target = $region28
      $region27: #{_lambda_.14} parent=19 // pred_region
        %s266 = sadd.s32 %s21, %s22
        %p267 = scmp.lt.s32.totalorder %s20, 0
        %s268 = scalar_select %p267, %s20, 0
        %p269 = scmp.lt.s32.totalorder %s266, 9
        %s270 = scalar_select %p269, %s266, 9
        %s271 = smul.addr %s270, 41
        %s272 = smul.addr %s268, 410
        %s273 = sadd.s32 %s271, %s272
        %s274 = smul.addr %s273, 4
        %s275 = scalar_lea.vmem %s1, %s274
        %s276 = sadd.s32 %s21, %s22
      $region28: #{_lambda_.14} parent=19 // pred_fallthru
        _
      // Predicated region
      $region29: #{_lambda_.14} parent=19 // pred_check
        %p277 = pneg %p116
      $region30: #{_lambda_.14} parent=19 // pred_check_branch
        %279 = sbr.rel (%p277) target = $region32
      $region31: #{_lambda_.14} parent=19 // pred_region
        %s280 = sadd.s32 %s21, %s22
        %p281 = scmp.lt.s32.totalorder %s20, 0
        %s282 = scalar_select %p281, %s20, 0
        %p283 = scmp.lt.s32.totalorder %s280, 9
        %s284 = scalar_select %p283, %s280, 9
        %s285 = smul.addr %s284, 41
        %s286 = smul.addr %s282, 410
        %s287 = sadd.s32 %s285, %s286
        %s288 = smul.addr %s287, 8
        %s289 = scalar_lea.vmem %s2, %s288
        %s290 = sadd.s32 %s21, %s22
      $region32: #{_lambda_.14} parent=19 // pred_fallthru
        _
    $region20: #{_lambda_.14} parent=5 // pred_fallthru
      _
    %p291 = scmp.le.s32.totalorder 1, %s13
    %p292 = scmp.lt.s32.totalorder %s13, 25
    %p293 = pnand %p291, %p292
    %p294 = pneg %p293
    // Predicated region
    $region33: #{_lambda_.14} parent=5 // pred_check
      _
    $region34: #{_lambda_.14} parent=5 // pred_check_branch
      %296 = sbr.rel (%p293) target = $region36
    $region35: #{_lambda_.14} parent=5 // pred_region
      %s297 = ssub.s32 %s13, 1
      %s298 = sadd.s32 %s24, %s25
      %p299 = scmp.lt.s32.totalorder %s23, 0
      %s300 = scalar_select %p299, %s23, 0
      %p301 = scmp.lt.s32.totalorder %s298, 9
      %s302 = scalar_select %p301, %s298, 9
      %s303 = smul.addr %s302, 41
      %s304 = smul.addr %s300, 410
      %s305 = sadd.s32 %s303, %s304
      %s306 = smul.addr %s305, 4
      %s307 = scalar_lea.vmem %s0, %s306
      %p308 = pneg %p62
      %p309 = pneg %p59
      %s310 = sadd.s32 %s24, %s25
      %p311 = scmp.lt.s32.totalorder %s23, 0
      %s312 = scalar_select %p311, %s23, 0
      %p313 = scmp.lt.s32.totalorder %s310, 9
      %s314 = scalar_select %p313, %s310, 9
      %s315 = smul.addr %s314, 41
      %s316 = smul.addr %s312, 410
      %s317 = sadd.s32 %s315, %s316
      %s318 = smul.addr %s317, 4
      %s319 = scalar_lea.vmem %s1, %s318
      %p320 = pneg %p92
      %p321 = pneg %p89
      %s322 = sadd.s32 %s24, %s25
      %p323 = scmp.lt.s32.totalorder %s23, 0
      %s324 = scalar_select %p323, %s23, 0
      %p325 = scmp.lt.s32.totalorder %s322, 9
      %s326 = scalar_select %p325, %s322, 9
      %s327 = smul.addr %s326, 41
      %s328 = smul.addr %s324, 410
      %s329 = sadd.s32 %s327, %s328
      %s330 = smul.addr %s329, 8
      %s331 = scalar_lea.vmem %s2, %s330
      %p332 = pneg %p122
      %p333 = pneg %p119
      %p334 = pneg %p143
      %p335 = pneg %p140
      %p336 = pneg %p171
      %p337 = pneg %p168
      %p338 = scmp.lt.s32.totalorder %s23, 0
      %s339 = scalar_select %p338, %s23, 0
      %p340 = scmp.lt.s32.totalorder %s24, 7
      %s341 = scalar_select %p340, %s24, 7
      %s342 = smul.addr %s341, 32
      %s343 = smul.addr %s339, 256
      %s344 = sadd.s32 %s342, %s343
      %s345 = smul.addr %s344, 8
      %s346 = scalar_lea.vmem %s4, %s345
      %p347 = pneg %p199
      %p348 = pneg %p196
      %p349 = scmp.lt.s32.totalorder %s23, 0
      %s350 = scalar_select %p349, %s23, 0
      %p351 = scmp.lt.s32.totalorder %s24, 7
      %s352 = scalar_select %p351, %s24, 7
      %s353 = smul.addr %s350, 8
      %s354 = sadd.s32 %s352, %s353
      %s355 = scalar_lea.vmem %s5, %s354
      %p356 = pneg %p227
      %p357 = pneg %p224
      %p358 = scmp.lt.s32.totalorder %s23, 0
      %s359 = scalar_select %p358, %s23, 0
      %p360 = scmp.lt.s32.totalorder %s24, 7
      %s361 = scalar_select %p360, %s24, 7
      %s362 = smul.addr %s359, 8
      %s363 = sadd.s32 %s361, %s362
      %s364 = scalar_lea.vmem %s6, %s363
      %s365 = sadd.s32 %s24, %s25
      %p366 = scmp.lt.s32.totalorder %s23, 0
      %s367 = scalar_select %p366, %s23, 0
      %p368 = scmp.lt.s32.totalorder %s365, 9
      %s369 = scalar_select %p368, %s365, 9
      %s370 = smul.addr %s369, 41
      %s371 = smul.addr %s367, 410
      %s372 = sadd.s32 %s370, %s371
      %s373 = smul.addr %s372, 4
      %s374 = scalar_lea.vmem %s0, %s373
      %s375 = sadd.s32 %s24, %s25
      %s376 = sadd.s32 %s24, %s25
      %p377 = scmp.lt.s32.totalorder %s23, 0
      %s378 = scalar_select %p377, %s23, 0
      %p379 = scmp.lt.s32.totalorder %s376, 9
      %s380 = scalar_select %p379, %s376, 9
      %s381 = smul.addr %s380, 41
      %s382 = smul.addr %s378, 410
      %s383 = sadd.s32 %s381, %s382
      %s384 = smul.addr %s383, 4
      %s385 = scalar_lea.vmem %s1, %s384
      %s386 = sadd.s32 %s24, %s25
      %s387 = sadd.s32 %s24, %s25
      %p388 = scmp.lt.s32.totalorder %s23, 0
      %s389 = scalar_select %p388, %s23, 0
      %p390 = scmp.lt.s32.totalorder %s387, 9
      %s391 = scalar_select %p390, %s387, 9
      %s392 = smul.addr %s391, 41
      %s393 = smul.addr %s389, 410
      %s394 = sadd.s32 %s392, %s393
      %s395 = smul.addr %s394, 8
      %s396 = scalar_lea.vmem %s2, %s395
      %s397 = sadd.s32 %s24, %s25
      %p398 = scmp.lt.s32.totalorder %s23, 0
      %s399 = scalar_select %p398, %s23, 0
      %p400 = scmp.lt.s32.totalorder %s24, 7
      %s401 = scalar_select %p400, %s24, 7
      %s402 = smul.addr %s401, 32
      %s403 = smul.addr %s399, 256
      %s404 = sadd.s32 %s402, %s403
      %s405 = smul.addr %s404, 8
      %s406 = scalar_lea.vmem %s4, %s405
      %p407 = scmp.lt.s32.totalorder %s23, 0
      %s408 = scalar_select %p407, %s23, 0
      %p409 = scmp.lt.s32.totalorder %s24, 7
      %s410 = scalar_select %p409, %s24, 7
      %s411 = smul.addr %s408, 8
      %s412 = sadd.s32 %s410, %s411
      %s413 = scalar_lea.vmem %s5, %s412
      %p414 = scmp.lt.s32.totalorder %s23, 0
      %s415 = scalar_select %p414, %s23, 0
      %p416 = scmp.lt.s32.totalorder %s24, 7
      %s417 = scalar_select %p416, %s24, 7
      %s418 = smul.addr %s415, 8
      %s419 = sadd.s32 %s417, %s418
      %s420 = scalar_lea.vmem %s6, %s419
      %p422 = scmp.eq.s32.totalorder %s25, 0
      // Predicated region
      $region37: #{_lambda_.14} parent=35 // pred_check
        %p423 = pneg %p422
      $region38: #{_lambda_.14} parent=35 // pred_check_branch
        %425 = sbr.rel (%p423) target = $region40
      $region39: #{_lambda_.14} parent=35 // pred_region
        %vm426 = vcmask 31744
        %427 = vst.msk [vmem:[#allocation2] sm:$0xff] %vm426, 0.0
        %428 = vst.msk [vmem:[#allocation2 + $0x8] sm:$0xff] %vm426, 0.0
        %429 = vst.msk [vmem:[#allocation2 + $0x10] sm:$0xff] %vm426, 0.0
        %430 = vst.msk [vmem:[#allocation2 + $0x18] sm:$0xff] %vm426, 0.0
        %431 = vst.msk [vmem:[#allocation2 + $0x20] sm:$0xff] %vm426, 0.0
        %432 = vst.msk [vmem:[#allocation2 + $0x28] sm:$0xff] %vm426, 0.0
        %433 = vst.msk [vmem:[#allocation2 + $0x30] sm:$0xff] %vm426, 0.0
        %434 = vst.msk [vmem:[#allocation2 + $0x38] sm:$0xff] %vm426, 0.0
        %435 = vst.msk [vmem:[#allocation2 + $0x40] sm:$0xff] %vm426, 0.0
        %436 = vst.msk [vmem:[#allocation2 + $0x48] sm:$0xff] %vm426, 0.0
        %437 = vst.msk [vmem:[#allocation2 + $0x50] sm:$0xff] %vm426, 0.0
        %438 = vst.msk [vmem:[#allocation2 + $0x58] sm:$0xff] %vm426, 0.0
        %439 = vst.msk [vmem:[#allocation2 + $0x60] sm:$0xff] %vm426, 0.0
        %440 = vst.msk [vmem:[#allocation2 + $0x68] sm:$0xff] %vm426, 0.0
        %441 = vst.msk [vmem:[#allocation2 + $0x70] sm:$0xff] %vm426, 0.0
        %442 = vst.msk [vmem:[#allocation2 + $0x78] sm:$0xff] %vm426, 0.0
        %443 = vst.msk [vmem:[#allocation2 + $0x80] sm:$0xff] %vm426, 0.0
        %444 = vst.msk [vmem:[#allocation2 + $0x88] sm:$0xff] %vm426, 0.0
        %445 = vst.msk [vmem:[#allocation2 + $0x90] sm:$0xff] %vm426, 0.0
        %446 = vst.msk [vmem:[#allocation2 + $0x98] sm:$0xff] %vm426, 0.0
        %447 = vst.msk [vmem:[#allocation2 + $0xa0] sm:$0xff] %vm426, 0.0
        %448 = vst.msk [vmem:[#allocation2 + $0xa8] sm:$0xff] %vm426, 0.0
        %449 = vst.msk [vmem:[#allocation2 + $0xb0] sm:$0xff] %vm426, 0.0
        %450 = vst.msk [vmem:[#allocation2 + $0xb8] sm:$0xff] %vm426, 0.0
        %451 = vst.msk [vmem:[#allocation2 + $0xc0] sm:$0xff] %vm426, 0.0
        %452 = vst.msk [vmem:[#allocation2 + $0xc8] sm:$0xff] %vm426, 0.0
        %453 = vst.msk [vmem:[#allocation2 + $0xd0] sm:$0xff] %vm426, 0.0
        %454 = vst.msk [vmem:[#allocation2 + $0xd8] sm:$0xff] %vm426, 0.0
        %455 = vst.msk [vmem:[#allocation2 + $0xe0] sm:$0xff] %vm426, 0.0
        %456 = vst.msk [vmem:[#allocation2 + $0xe8] sm:$0xff] %vm426, 0.0
        %457 = vst.msk [vmem:[#allocation2 + $0xf0] sm:$0xff] %vm426, 0.0
        %458 = vst.msk [vmem:[#allocation2 + $0xf8] sm:$0xff] %vm426, 0.0
        %459 = vst.msk [vmem:[#allocation2 + $0x100] sm:$0xff] %vm426, 0.0
        %460 = vst.msk [vmem:[#allocation2 + $0x108] sm:$0xff] %vm426, 0.0
        %461 = vst.msk [vmem:[#allocation2 + $0x110] sm:$0xff] %vm426, 0.0
        %462 = vst.msk [vmem:[#allocation2 + $0x118] sm:$0xff] %vm426, 0.0
        %463 = vst.msk [vmem:[#allocation2 + $0x120] sm:$0xff] %vm426, 0.0
        %464 = vst.msk [vmem:[#allocation2 + $0x128] sm:$0xff] %vm426, 0.0
        %465 = vst.msk [vmem:[#allocation2 + $0x130] sm:$0xff] %vm426, 0.0
        %466 = vst.msk [vmem:[#allocation2 + $0x138] sm:$0xff] %vm426, 0.0
        %467 = vst.msk [vmem:[#allocation2 + $0x140] sm:$0xff] %vm426, 0.0
      $region40: #{_lambda_.14} parent=35 // pred_fallthru
        _
      %v468 = vld [vmem:[%s374] sm:$0xf]
      %v469 = vld [vmem:[%s374 + $0x4] sm:$0xf]
      %v470 = vld [vmem:[%s374 + $0x8] sm:$0xf]
      %v471 = vld [vmem:[%s374 + $0xc] sm:$0xf]
      %v472 = vld [vmem:[%s374 + $0x10] sm:$0xf]
      %v473 = vld [vmem:[%s374 + $0x14] sm:$0xf]
      %v474 = vld [vmem:[%s374 + $0x18] sm:$0xf]
      %v475 = vld [vmem:[%s374 + $0x1c] sm:$0xf]
      %v476 = vld [vmem:[%s374 + $0x20] sm:$0xf]
      %v477 = vld [vmem:[%s374 + $0x24] sm:$0xf]
      %v478 = vld [vmem:[%s374 + $0x28] sm:$0xf]
      %v479 = vld [vmem:[%s374 + $0x2c] sm:$0xf]
      %v480 = vld [vmem:[%s374 + $0x30] sm:$0xf]
      %v481 = vld [vmem:[%s374 + $0x34] sm:$0xf]
      %v482 = vld [vmem:[%s374 + $0x38] sm:$0xf]
      %v483 = vld [vmem:[%s374 + $0x3c] sm:$0xf]
      %v484 = vld [vmem:[%s374 + $0x40] sm:$0xf]
      %v485 = vld [vmem:[%s374 + $0x44] sm:$0xf]
      %v486 = vld [vmem:[%s374 + $0x48] sm:$0xf]
      %v487 = vld [vmem:[%s374 + $0x4c] sm:$0xf]
      %v488 = vld [vmem:[%s374 + $0x50] sm:$0xf]
      %v489 = vld [vmem:[%s374 + $0x54] sm:$0xf]
      %v490 = vld [vmem:[%s374 + $0x58] sm:$0xf]
      %v491 = vld [vmem:[%s374 + $0x5c] sm:$0xf]
      %v492 = vld [vmem:[%s374 + $0x60] sm:$0xf]
      %v493 = vld [vmem:[%s374 + $0x64] sm:$0xf]
      %v494 = vld [vmem:[%s374 + $0x68] sm:$0xf]
      %v495 = vld [vmem:[%s374 + $0x6c] sm:$0xf]
      %v496 = vld [vmem:[%s374 + $0x70] sm:$0xf]
      %v497 = vld [vmem:[%s374 + $0x74] sm:$0xf]
      %v498 = vld [vmem:[%s374 + $0x78] sm:$0xf]
      %v499 = vld [vmem:[%s374 + $0x7c] sm:$0xf]
      %v500 = vld [vmem:[%s374 + $0x80] sm:$0xf]
      %v501 = vld [vmem:[%s374 + $0x84] sm:$0xf]
      %v502 = vld [vmem:[%s374 + $0x88] sm:$0xf]
      %v503 = vld [vmem:[%s374 + $0x8c] sm:$0xf]
      %v504 = vld [vmem:[%s374 + $0x90] sm:$0xf]
      %v505 = vld [vmem:[%s374 + $0x94] sm:$0xf]
      %v506 = vld [vmem:[%s374 + $0x98] sm:$0xf]
      %v507 = vld [vmem:[%s374 + $0x9c] sm:$0xf]
      %v508 = vld [vmem:[%s374 + $0xa0] sm:$0xf]
      %v509 = vunpack.c.l.bf16 %v468
      %v510 = vunpack.c.l.bf16 %v469
      %v511 = vunpack.c.l.bf16 %v470
      %v512 = vunpack.c.l.bf16 %v471
      %v513 = vunpack.c.l.bf16 %v472
      %v514 = vunpack.c.l.bf16 %v473
      %v515 = vunpack.c.l.bf16 %v474
      %v516 = vunpack.c.l.bf16 %v475
      %v517 = vunpack.c.l.bf16 %v476
      %v518 = vunpack.c.l.bf16 %v477
      %v519 = vunpack.c.l.bf16 %v478
      %v520 = vunpack.c.l.bf16 %v479
      %v521 = vunpack.c.l.bf16 %v480
      %v522 = vunpack.c.l.bf16 %v481
      %v523 = vunpack.c.l.bf16 %v482
      %v524 = vunpack.c.l.bf16 %v483
      %v525 = vunpack.c.l.bf16 %v484
      %v526 = vunpack.c.l.bf16 %v485
      %v527 = vunpack.c.l.bf16 %v486
      %v528 = vunpack.c.l.bf16 %v487
      %v529 = vunpack.c.l.bf16 %v488
      %v530 = vunpack.c.l.bf16 %v489
      %v531 = vunpack.c.l.bf16 %v490
      %v532 = vunpack.c.l.bf16 %v491
      %v533 = vunpack.c.l.bf16 %v492
      %v534 = vunpack.c.l.bf16 %v493
      %v535 = vunpack.c.l.bf16 %v494
      %v536 = vunpack.c.l.bf16 %v495
      %v537 = vunpack.c.l.bf16 %v496
      %v538 = vunpack.c.l.bf16 %v497
      %v539 = vunpack.c.l.bf16 %v498
      %v540 = vunpack.c.l.bf16 %v499
      %v541 = vunpack.c.l.bf16 %v500
      %v542 = vunpack.c.l.bf16 %v501
      %v543 = vunpack.c.l.bf16 %v502
      %v544 = vunpack.c.l.bf16 %v503
      %v545 = vunpack.c.l.bf16 %v504
      %v546 = vunpack.c.l.bf16 %v505
      %v547 = vunpack.c.l.bf16 %v506
      %v548 = vunpack.c.l.bf16 %v507
      %v549 = vunpack.c.l.bf16 %v508
      %v550 = vld [vmem:[%s385] sm:$0xf]
      %v551 = vld [vmem:[%s385 + $0x4] sm:$0xf]
      %v552 = vld [vmem:[%s385 + $0x8] sm:$0xf]
      %v553 = vld [vmem:[%s385 + $0xc] sm:$0xf]
      %v554 = vld [vmem:[%s385 + $0x10] sm:$0xf]
      %v555 = vld [vmem:[%s385 + $0x14] sm:$0xf]
      %v556 = vld [vmem:[%s385 + $0x18] sm:$0xf]
      %v557 = vld [vmem:[%s385 + $0x1c] sm:$0xf]
      %v558 = vld [vmem:[%s385 + $0x20] sm:$0xf]
      %v559 = vld [vmem:[%s385 + $0x24] sm:$0xf]
      %v560 = vld [vmem:[%s385 + $0x28] sm:$0xf]
      %v561 = vld [vmem:[%s385 + $0x2c] sm:$0xf]
      %v562 = vld [vmem:[%s385 + $0x30] sm:$0xf]
      %v563 = vld [vmem:[%s385 + $0x34] sm:$0xf]
      %v564 = vld [vmem:[%s385 + $0x38] sm:$0xf]
      %v565 = vld [vmem:[%s385 + $0x3c] sm:$0xf]
      %v566 = vld [vmem:[%s385 + $0x40] sm:$0xf]
      %v567 = vld [vmem:[%s385 + $0x44] sm:$0xf]
      %v568 = vld [vmem:[%s385 + $0x48] sm:$0xf]
      %v569 = vld [vmem:[%s385 + $0x4c] sm:$0xf]
      %v570 = vld [vmem:[%s385 + $0x50] sm:$0xf]
      %v571 = vld [vmem:[%s385 + $0x54] sm:$0xf]
      %v572 = vld [vmem:[%s385 + $0x58] sm:$0xf]
      %v573 = vld [vmem:[%s385 + $0x5c] sm:$0xf]
      %v574 = vld [vmem:[%s385 + $0x60] sm:$0xf]
      %v575 = vld [vmem:[%s385 + $0x64] sm:$0xf]
      %v576 = vld [vmem:[%s385 + $0x68] sm:$0xf]
      %v577 = vld [vmem:[%s385 + $0x6c] sm:$0xf]
      %v578 = vld [vmem:[%s385 + $0x70] sm:$0xf]
      %v579 = vld [vmem:[%s385 + $0x74] sm:$0xf]
      %v580 = vld [vmem:[%s385 + $0x78] sm:$0xf]
      %v581 = vld [vmem:[%s385 + $0x7c] sm:$0xf]
      %v582 = vld [vmem:[%s385 + $0x80] sm:$0xf]
      %v583 = vld [vmem:[%s385 + $0x84] sm:$0xf]
      %v584 = vld [vmem:[%s385 + $0x88] sm:$0xf]
      %v585 = vld [vmem:[%s385 + $0x8c] sm:$0xf]
      %v586 = vld [vmem:[%s385 + $0x90] sm:$0xf]
      %v587 = vld [vmem:[%s385 + $0x94] sm:$0xf]
      %v588 = vld [vmem:[%s385 + $0x98] sm:$0xf]
      %v589 = vld [vmem:[%s385 + $0x9c] sm:$0xf]
      %v590 = vld [vmem:[%s385 + $0xa0] sm:$0xf]
      %v591 = vunpack.c.l.bf16 %v550
      %v592 = vunpack.c.l.bf16 %v551
      %v593 = vunpack.c.l.bf16 %v552
      %v594 = vunpack.c.l.bf16 %v553
      %v595 = vunpack.c.l.bf16 %v554
      %v596 = vunpack.c.l.bf16 %v555
      %v597 = vunpack.c.l.bf16 %v556
      %v598 = vunpack.c.l.bf16 %v557
      %v599 = vunpack.c.l.bf16 %v558
      %v600 = vunpack.c.l.bf16 %v559
      %v601 = vunpack.c.l.bf16 %v560
      %v602 = vunpack.c.l.bf16 %v561
      %v603 = vunpack.c.l.bf16 %v562
      %v604 = vunpack.c.l.bf16 %v563
      %v605 = vunpack.c.l.bf16 %v564
      %v606 = vunpack.c.l.bf16 %v565
      %v607 = vunpack.c.l.bf16 %v566
      %v608 = vunpack.c.l.bf16 %v567
      %v609 = vunpack.c.l.bf16 %v568
      %v610 = vunpack.c.l.bf16 %v569
      %v611 = vunpack.c.l.bf16 %v570
      %v612 = vunpack.c.l.bf16 %v571
      %v613 = vunpack.c.l.bf16 %v572
      %v614 = vunpack.c.l.bf16 %v573
      %v615 = vunpack.c.l.bf16 %v574
      %v616 = vunpack.c.l.bf16 %v575
      %v617 = vunpack.c.l.bf16 %v576
      %v618 = vunpack.c.l.bf16 %v577
      %v619 = vunpack.c.l.bf16 %v578
      %v620 = vunpack.c.l.bf16 %v579
      %v621 = vunpack.c.l.bf16 %v580
      %v622 = vunpack.c.l.bf16 %v581
      %v623 = vunpack.c.l.bf16 %v582
      %v624 = vunpack.c.l.bf16 %v583
      %v625 = vunpack.c.l.bf16 %v584
      %v626 = vunpack.c.l.bf16 %v585
      %v627 = vunpack.c.l.bf16 %v586
      %v628 = vunpack.c.l.bf16 %v587
      %v629 = vunpack.c.l.bf16 %v588
      %v630 = vunpack.c.l.bf16 %v589
      %v631 = vunpack.c.l.bf16 %v590
      %v632 = vld [vmem:[%s396] sm:$0xff]
      %v633 = vld [vmem:[%s396 + $0x8] sm:$0xff]
      %v634 = vld [vmem:[%s396 + $0x10] sm:$0xff]
      %v635 = vld [vmem:[%s396 + $0x18] sm:$0xff]
      %v636 = vld [vmem:[%s396 + $0x20] sm:$0xff]
      %v637 = vld [vmem:[%s396 + $0x28] sm:$0xff]
      %v638 = vld [vmem:[%s396 + $0x30] sm:$0xff]
      %v639 = vld [vmem:[%s396 + $0x38] sm:$0xff]
      %v640 = vld [vmem:[%s396 + $0x40] sm:$0xff]
      %v641 = vld [vmem:[%s396 + $0x48] sm:$0xff]
      %v642 = vld [vmem:[%s396 + $0x50] sm:$0xff]
      %v643 = vld [vmem:[%s396 + $0x58] sm:$0xff]
      %v644 = vld [vmem:[%s396 + $0x60] sm:$0xff]
      %v645 = vld [vmem:[%s396 + $0x68] sm:$0xff]
      %v646 = vld [vmem:[%s396 + $0x70] sm:$0xff]
      %v647 = vld [vmem:[%s396 + $0x78] sm:$0xff]
      %v648 = vld [vmem:[%s396 + $0x80] sm:$0xff]
      %v649 = vld [vmem:[%s396 + $0x88] sm:$0xff]
      %v650 = vld [vmem:[%s396 + $0x90] sm:$0xff]
      %v651 = vld [vmem:[%s396 + $0x98] sm:$0xff]
      %v652 = vld [vmem:[%s396 + $0xa0] sm:$0xff]
      %v653 = vld [vmem:[%s396 + $0xa8] sm:$0xff]
      %v654 = vld [vmem:[%s396 + $0xb0] sm:$0xff]
      %v655 = vld [vmem:[%s396 + $0xb8] sm:$0xff]
      %v656 = vld [vmem:[%s396 + $0xc0] sm:$0xff]
      %v657 = vld [vmem:[%s396 + $0xc8] sm:$0xff]
      %v658 = vld [vmem:[%s396 + $0xd0] sm:$0xff]
      %v659 = vld [vmem:[%s396 + $0xd8] sm:$0xff]
      %v660 = vld [vmem:[%s396 + $0xe0] sm:$0xff]
      %v661 = vld [vmem:[%s396 + $0xe8] sm:$0xff]
      %v662 = vld [vmem:[%s396 + $0xf0] sm:$0xff]
      %v663 = vld [vmem:[%s396 + $0xf8] sm:$0xff]
      %v664 = vld [vmem:[%s396 + $0x100] sm:$0xff]
      %v665 = vld [vmem:[%s396 + $0x108] sm:$0xff]
      %v666 = vld [vmem:[%s396 + $0x110] sm:$0xff]
      %v667 = vld [vmem:[%s396 + $0x118] sm:$0xff]
      %v668 = vld [vmem:[%s396 + $0x120] sm:$0xff]
      %v669 = vld [vmem:[%s396 + $0x128] sm:$0xff]
      %v670 = vld [vmem:[%s396 + $0x130] sm:$0xff]
      %v671 = vld [vmem:[%s396 + $0x138] sm:$0xff]
      %v672 = vld [vmem:[%s396 + $0x140] sm:$0xff]
      %674 = vset.pattern.permute.xlu0 0
      %675 = vperm.xlu0 %674, %v632
      %v676 = vpop.permute.xlu0 %675
      %679 = vset.pattern.permute.xlu0 0
      %680 = vperm.xlu0 %679, %v633
      %v681 = vpop.permute.xlu0 %680
      %684 = vset.pattern.permute.xlu0 0
      %685 = vperm.xlu0 %684, %v634
      %v686 = vpop.permute.xlu0 %685
      %689 = vset.pattern.permute.xlu0 0
      %690 = vperm.xlu0 %689, %v635
      %v691 = vpop.permute.xlu0 %690
      %694 = vset.pattern.permute.xlu0 0
      %695 = vperm.xlu0 %694, %v636
      %v696 = vpop.permute.xlu0 %695
      %699 = vset.pattern.permute.xlu0 0
      %700 = vperm.xlu0 %699, %v637
      %v701 = vpop.permute.xlu0 %700
      %704 = vset.pattern.permute.xlu0 0
      %705 = vperm.xlu0 %704, %v638
      %v706 = vpop.permute.xlu0 %705
      %709 = vset.pattern.permute.xlu0 0
      %710 = vperm.xlu0 %709, %v639
      %v711 = vpop.permute.xlu0 %710
      %714 = vset.pattern.permute.xlu0 0
      %715 = vperm.xlu0 %714, %v640
      %v716 = vpop.permute.xlu0 %715
      %719 = vset.pattern.permute.xlu0 0
      %720 = vperm.xlu0 %719, %v641
      %v721 = vpop.permute.xlu0 %720
      %724 = vset.pattern.permute.xlu0 0
      %725 = vperm.xlu0 %724, %v642
      %v726 = vpop.permute.xlu0 %725
      %729 = vset.pattern.permute.xlu0 0
      %730 = vperm.xlu0 %729, %v643
      %v731 = vpop.permute.xlu0 %730
      %734 = vset.pattern.permute.xlu0 0
      %735 = vperm.xlu0 %734, %v644
      %v736 = vpop.permute.xlu0 %735
      %739 = vset.pattern.permute.xlu0 0
      %740 = vperm.xlu0 %739, %v645
      %v741 = vpop.permute.xlu0 %740
      %744 = vset.pattern.permute.xlu0 0
      %745 = vperm.xlu0 %744, %v646
      %v746 = vpop.permute.xlu0 %745
      %749 = vset.pattern.permute.xlu0 0
      %750 = vperm.xlu0 %749, %v647
      %v751 = vpop.permute.xlu0 %750
      %754 = vset.pattern.permute.xlu0 0
      %755 = vperm.xlu0 %754, %v648
      %v756 = vpop.permute.xlu0 %755
      %759 = vset.pattern.permute.xlu0 0
      %760 = vperm.xlu0 %759, %v649
      %v761 = vpop.permute.xlu0 %760
      %764 = vset.pattern.permute.xlu0 0
      %765 = vperm.xlu0 %764, %v650
      %v766 = vpop.permute.xlu0 %765
      %769 = vset.pattern.permute.xlu0 0
      %770 = vperm.xlu0 %769, %v651
      %v771 = vpop.permute.xlu0 %770
      %774 = vset.pattern.permute.xlu0 0
      %775 = vperm.xlu0 %774, %v652
      %v776 = vpop.permute.xlu0 %775
      %779 = vset.pattern.permute.xlu0 0
      %780 = vperm.xlu0 %779, %v653
      %v781 = vpop.permute.xlu0 %780
      %784 = vset.pattern.permute.xlu0 0
      %785 = vperm.xlu0 %784, %v654
      %v786 = vpop.permute.xlu0 %785
      %789 = vset.pattern.permute.xlu0 0
      %790 = vperm.xlu0 %789, %v655
      %v791 = vpop.permute.xlu0 %790
      %794 = vset.pattern.permute.xlu0 0
      %795 = vperm.xlu0 %794, %v656
      %v796 = vpop.permute.xlu0 %795
      %799 = vset.pattern.permute.xlu0 0
      %800 = vperm.xlu0 %799, %v657
      %v801 = vpop.permute.xlu0 %800
      %804 = vset.pattern.permute.xlu0 0
      %805 = vperm.xlu0 %804, %v658
      %v806 = vpop.permute.xlu0 %805
      %809 = vset.pattern.permute.xlu0 0
      %810 = vperm.xlu0 %809, %v659
      %v811 = vpop.permute.xlu0 %810
      %814 = vset.pattern.permute.xlu0 0
      %815 = vperm.xlu0 %814, %v660
      %v816 = vpop.permute.xlu0 %815
      %819 = vset.pattern.permute.xlu0 0
      %820 = vperm.xlu0 %819, %v661
      %v821 = vpop.permute.xlu0 %820
      %824 = vset.pattern.permute.xlu0 0
      %825 = vperm.xlu0 %824, %v662
      %v826 = vpop.permute.xlu0 %825
      %829 = vset.pattern.permute.xlu0 0
      %830 = vperm.xlu0 %829, %v663
      %v831 = vpop.permute.xlu0 %830
      %834 = vset.pattern.permute.xlu0 0
      %835 = vperm.xlu0 %834, %v664
      %v836 = vpop.permute.xlu0 %835
      %839 = vset.pattern.permute.xlu0 0
      %840 = vperm.xlu0 %839, %v665
      %v841 = vpop.permute.xlu0 %840
      %844 = vset.pattern.permute.xlu0 0
      %845 = vperm.xlu0 %844, %v666
      %v846 = vpop.permute.xlu0 %845
      %849 = vset.pattern.permute.xlu0 0
      %850 = vperm.xlu0 %849, %v667
      %v851 = vpop.permute.xlu0 %850
      %854 = vset.pattern.permute.xlu0 0
      %855 = vperm.xlu0 %854, %v668
      %v856 = vpop.permute.xlu0 %855
      %859 = vset.pattern.permute.xlu0 0
      %860 = vperm.xlu0 %859, %v669
      %v861 = vpop.permute.xlu0 %860
      %864 = vset.pattern.permute.xlu0 0
      %865 = vperm.xlu0 %864, %v670
      %v866 = vpop.permute.xlu0 %865
      %869 = vset.pattern.permute.xlu0 0
      %870 = vperm.xlu0 %869, %v671
      %v871 = vpop.permute.xlu0 %870
      %874 = vset.pattern.permute.xlu0 0
      %875 = vperm.xlu0 %874, %v672
      %v876 = vpop.permute.xlu0 %875
      %v878 = vmul.f32 %v591, %v676
      %v879 = vmul.f32 %v592, %v681
      %v880 = vmul.f32 %v593, %v686
      %v881 = vmul.f32 %v594, %v691
      %v882 = vmul.f32 %v595, %v696
      %v883 = vmul.f32 %v596, %v701
      %v884 = vmul.f32 %v597, %v706
      %v885 = vmul.f32 %v598, %v711
      %v886 = vmul.f32 %v599, %v716
      %v887 = vmul.f32 %v600, %v721
      %v888 = vmul.f32 %v601, %v726
      %v889 = vmul.f32 %v602, %v731
      %v890 = vmul.f32 %v603, %v736
      %v891 = vmul.f32 %v604, %v741
      %v892 = vmul.f32 %v605, %v746
      %v893 = vmul.f32 %v606, %v751
      %v894 = vmul.f32 %v607, %v756
      %v895 = vmul.f32 %v608, %v761
      %v896 = vmul.f32 %v609, %v766
      %v897 = vmul.f32 %v610, %v771
      %v898 = vmul.f32 %v611, %v776
      %v899 = vmul.f32 %v612, %v781
      %v900 = vmul.f32 %v613, %v786
      %v901 = vmul.f32 %v614, %v791
      %v902 = vmul.f32 %v615, %v796
      %v903 = vmul.f32 %v616, %v801
      %v904 = vmul.f32 %v617, %v806
      %v905 = vmul.f32 %v618, %v811
      %v906 = vmul.f32 %v619, %v816
      %v907 = vmul.f32 %v620, %v821
      %v908 = vmul.f32 %v621, %v826
      %v909 = vmul.f32 %v622, %v831
      %v910 = vmul.f32 %v623, %v836
      %v911 = vmul.f32 %v624, %v841
      %v912 = vmul.f32 %v625, %v846
      %v913 = vmul.f32 %v626, %v851
      %v914 = vmul.f32 %v627, %v856
      %v915 = vmul.f32 %v628, %v861
      %v916 = vmul.f32 %v629, %v866
      %v917 = vmul.f32 %v630, %v871
      %v918 = vmul.f32 %v631, %v876
      %960 = vrot.lane.b32.xlu0 %v878, 4
      %v961 = vpop.permute.xlu0 %960
      %962 = vrot.lane.b32.xlu0 %v879, 4
      %v963 = vpop.permute.xlu0 %962
      %964 = vrot.lane.b32.xlu0 %v880, 4
      %v965 = vpop.permute.xlu0 %964
      %966 = vrot.lane.b32.xlu0 %v881, 4
      %v967 = vpop.permute.xlu0 %966
      %968 = vrot.lane.b32.xlu0 %v882, 4
      %v969 = vpop.permute.xlu0 %968
      %970 = vrot.lane.b32.xlu0 %v883, 4
      %v971 = vpop.permute.xlu0 %970
      %972 = vrot.lane.b32.xlu0 %v884, 4
      %v973 = vpop.permute.xlu0 %972
      %974 = vrot.lane.b32.xlu0 %v885, 4
      %v975 = vpop.permute.xlu0 %974
      %976 = vrot.lane.b32.xlu0 %v886, 4
      %v977 = vpop.permute.xlu0 %976
      %978 = vrot.lane.b32.xlu0 %v887, 4
      %v979 = vpop.permute.xlu0 %978
      %980 = vrot.lane.b32.xlu0 %v888, 4
      %v981 = vpop.permute.xlu0 %980
      %982 = vrot.lane.b32.xlu0 %v889, 4
      %v983 = vpop.permute.xlu0 %982
      %984 = vrot.lane.b32.xlu0 %v890, 4
      %v985 = vpop.permute.xlu0 %984
      %986 = vrot.lane.b32.xlu0 %v891, 4
      %v987 = vpop.permute.xlu0 %986
      %988 = vrot.lane.b32.xlu0 %v892, 4
      %v989 = vpop.permute.xlu0 %988
      %990 = vrot.lane.b32.xlu0 %v893, 4
      %v991 = vpop.permute.xlu0 %990
      %992 = vrot.lane.b32.xlu0 %v894, 4
      %v993 = vpop.permute.xlu0 %992
      %994 = vrot.lane.b32.xlu0 %v895, 4
      %v995 = vpop.permute.xlu0 %994
      %996 = vrot.lane.b32.xlu0 %v896, 4
      %v997 = vpop.permute.xlu0 %996
      %998 = vrot.lane.b32.xlu0 %v897, 4
      %v999 = vpop.permute.xlu0 %998
      %1000 = vrot.lane.b32.xlu0 %v898, 4
      %v1001 = vpop.permute.xlu0 %1000
      %1002 = vrot.lane.b32.xlu0 %v899, 4
      %v1003 = vpop.permute.xlu0 %1002
      %1004 = vrot.lane.b32.xlu0 %v900, 4
      %v1005 = vpop.permute.xlu0 %1004
      %1006 = vrot.lane.b32.xlu0 %v901, 4
      %v1007 = vpop.permute.xlu0 %1006
      %1008 = vrot.lane.b32.xlu0 %v902, 4
      %v1009 = vpop.permute.xlu0 %1008
      %1010 = vrot.lane.b32.xlu0 %v903, 4
      %v1011 = vpop.permute.xlu0 %1010
      %1012 = vrot.lane.b32.xlu0 %v904, 4
      %v1013 = vpop.permute.xlu0 %1012
      %1014 = vrot.lane.b32.xlu0 %v905, 4
      %v1015 = vpop.permute.xlu0 %1014
      %1016 = vrot.lane.b32.xlu0 %v906, 4
      %v1017 = vpop.permute.xlu0 %1016
      %1018 = vrot.lane.b32.xlu0 %v907, 4
      %v1019 = vpop.permute.xlu0 %1018
      %1020 = vrot.lane.b32.xlu0 %v908, 4
      %v1021 = vpop.permute.xlu0 %1020
      %1022 = vrot.lane.b32.xlu0 %v909, 4
      %v1023 = vpop.permute.xlu0 %1022
      %1024 = vrot.lane.b32.xlu0 %v910, 4
      %v1025 = vpop.permute.xlu0 %1024
      %1026 = vrot.lane.b32.xlu0 %v911, 4
      %v1027 = vpop.permute.xlu0 %1026
      %1028 = vrot.lane.b32.xlu0 %v912, 4
      %v1029 = vpop.permute.xlu0 %1028
      %1030 = vrot.lane.b32.xlu0 %v913, 4
      %v1031 = vpop.permute.xlu0 %1030
      %1032 = vrot.lane.b32.xlu0 %v914, 4
      %v1033 = vpop.permute.xlu0 %1032
      %1034 = vrot.lane.b32.xlu0 %v915, 4
      %v1035 = vpop.permute.xlu0 %1034
      %1036 = vrot.lane.b32.xlu0 %v916, 4
      %v1037 = vpop.permute.xlu0 %1036
      %1038 = vrot.lane.b32.xlu0 %v917, 4
      %v1039 = vpop.permute.xlu0 %1038
      %1040 = vrot.lane.b32.xlu0 %v918, 4
      %v1041 = vpop.permute.xlu0 %1040
      %vm1083 = vcmask 31744
      %v1084 = vsel %vm1083, %v509, %v961
      %v1085 = vsel %vm1083, %v510, %v963
      %v1086 = vsel %vm1083, %v511, %v965
      %v1087 = vsel %vm1083, %v512, %v967
      %v1088 = vsel %vm1083, %v513, %v969
      %v1089 = vsel %vm1083, %v514, %v971
      %v1090 = vsel %vm1083, %v515, %v973
      %v1091 = vsel %vm1083, %v516, %v975
      %v1092 = vsel %vm1083, %v517, %v977
      %v1093 = vsel %vm1083, %v518, %v979
      %v1094 = vsel %vm1083, %v519, %v981
      %v1095 = vsel %vm1083, %v520, %v983
      %v1096 = vsel %vm1083, %v521, %v985
      %v1097 = vsel %vm1083, %v522, %v987
      %v1098 = vsel %vm1083, %v523, %v989
      %v1099 = vsel %vm1083, %v524, %v991
      %v1100 = vsel %vm1083, %v525, %v993
      %v1101 = vsel %vm1083, %v526, %v995
      %v1102 = vsel %vm1083, %v527, %v997
      %v1103 = vsel %vm1083, %v528, %v999
      %v1104 = vsel %vm1083, %v529, %v1001
      %v1105 = vsel %vm1083, %v530, %v1003
      %v1106 = vsel %vm1083, %v531, %v1005
      %v1107 = vsel %vm1083, %v532, %v1007
      %v1108 = vsel %vm1083, %v533, %v1009
      %v1109 = vsel %vm1083, %v534, %v1011
      %v1110 = vsel %vm1083, %v535, %v1013
      %v1111 = vsel %vm1083, %v536, %v1015
      %v1112 = vsel %vm1083, %v537, %v1017
      %v1113 = vsel %vm1083, %v538, %v1019
      %v1114 = vsel %vm1083, %v539, %v1021
      %v1115 = vsel %vm1083, %v540, %v1023
      %v1116 = vsel %vm1083, %v541, %v1025
      %v1117 = vsel %vm1083, %v542, %v1027
      %v1118 = vsel %vm1083, %v543, %v1029
      %v1119 = vsel %vm1083, %v544, %v1031
      %v1120 = vsel %vm1083, %v545, %v1033
      %v1121 = vsel %vm1083, %v546, %v1035
      %v1122 = vsel %vm1083, %v547, %v1037
      %v1123 = vsel %vm1083, %v548, %v1039
      %v1124 = vsel %vm1083, %v549, %v1041
      %v1125 = vrot.slane %v1084, 1
      %v1126 = vrot.slane %v1085, 1
      %v1127 = vrot.slane %v1086, 1
      %v1128 = vrot.slane %v1087, 1
      %v1129 = vrot.slane %v1088, 1
      %v1130 = vrot.slane %v1089, 1
      %v1131 = vrot.slane %v1090, 1
      %v1132 = vrot.slane %v1091, 1
      %v1133 = vrot.slane %v1092, 1
      %v1134 = vrot.slane %v1093, 1
      %v1135 = vrot.slane %v1094, 1
      %v1136 = vrot.slane %v1095, 1
      %v1137 = vrot.slane %v1096, 1
      %v1138 = vrot.slane %v1097, 1
      %v1139 = vrot.slane %v1098, 1
      %v1140 = vrot.slane %v1099, 1
      %v1141 = vrot.slane %v1100, 1
      %v1142 = vrot.slane %v1101, 1
      %v1143 = vrot.slane %v1102, 1
      %v1144 = vrot.slane %v1103, 1
      %v1145 = vrot.slane %v1104, 1
      %v1146 = vrot.slane %v1105, 1
      %v1147 = vrot.slane %v1106, 1
      %v1148 = vrot.slane %v1107, 1
      %v1149 = vrot.slane %v1108, 1
      %v1150 = vrot.slane %v1109, 1
      %v1151 = vrot.slane %v1110, 1
      %v1152 = vrot.slane %v1111, 1
      %v1153 = vrot.slane %v1112, 1
      %v1154 = vrot.slane %v1113, 1
      %v1155 = vrot.slane %v1114, 1
      %v1156 = vrot.slane %v1115, 1
      %v1157 = vrot.slane %v1116, 1
      %v1158 = vrot.slane %v1117, 1
      %v1159 = vrot.slane %v1118, 1
      %v1160 = vrot.slane %v1119, 1
      %v1161 = vrot.slane %v1120, 1
      %v1162 = vrot.slane %v1121, 1
      %v1163 = vrot.slane %v1122, 1
      %v1164 = vrot.slane %v1123, 1
      %v1165 = vrot.slane %v1124, 1
      %v1166 = vlaneseq
      %v1167 = vshrl.u32 %v1166, 7
      %vm1168 = vcmp.lt.s32.totalorder %v1167, 7
      %v1169 = vsel %vm1168, %v1164, %v1165
      %v1170 = vsel %vm1168, %v1163, %v1164
      %v1171 = vsel %vm1168, %v1162, %v1163
      %v1172 = vsel %vm1168, %v1161, %v1162
      %v1173 = vsel %vm1168, %v1160, %v1161
      %v1174 = vsel %vm1168, %v1159, %v1160
      %v1175 = vsel %vm1168, %v1158, %v1159
      %v1176 = vsel %vm1168, %v1157, %v1158
      %v1177 = vsel %vm1168, %v1156, %v1157
      %v1178 = vsel %vm1168, %v1155, %v1156
      %v1179 = vsel %vm1168, %v1154, %v1155
      %v1180 = vsel %vm1168, %v1153, %v1154
      %v1181 = vsel %vm1168, %v1152, %v1153
      %v1182 = vsel %vm1168, %v1151, %v1152
      %v1183 = vsel %vm1168, %v1150, %v1151
      %v1184 = vsel %vm1168, %v1149, %v1150
      %v1185 = vsel %vm1168, %v1148, %v1149
      %v1186 = vsel %vm1168, %v1147, %v1148
      %v1187 = vsel %vm1168, %v1146, %v1147
      %v1188 = vsel %vm1168, %v1145, %v1146
      %v1189 = vsel %vm1168, %v1144, %v1145
      %v1190 = vsel %vm1168, %v1143, %v1144
      %v1191 = vsel %vm1168, %v1142, %v1143
      %v1192 = vsel %vm1168, %v1141, %v1142
      %v1193 = vsel %vm1168, %v1140, %v1141
      %v1194 = vsel %vm1168, %v1139, %v1140
      %v1195 = vsel %vm1168, %v1138, %v1139
      %v1196 = vsel %vm1168, %v1137, %v1138
      %v1197 = vsel %vm1168, %v1136, %v1137
      %v1198 = vsel %vm1168, %v1135, %v1136
      %v1199 = vsel %vm1168, %v1134, %v1135
      %v1200 = vsel %vm1168, %v1133, %v1134
      %v1201 = vsel %vm1168, %v1132, %v1133
      %v1202 = vsel %vm1168, %v1131, %v1132
      %v1203 = vsel %vm1168, %v1130, %v1131
      %v1204 = vsel %vm1168, %v1129, %v1130
      %v1205 = vsel %vm1168, %v1128, %v1129
      %v1206 = vsel %vm1168, %v1127, %v1128
      %v1207 = vsel %vm1168, %v1126, %v1127
      %v1208 = vsel %vm1168, %v1125, %v1126
      %v1209 = vsel %vm1168, %v1165, %v1125
      %v1210 = vrot.slane %v1084, 2
      %v1211 = vrot.slane %v1085, 2
      %v1212 = vrot.slane %v1086, 2
      %v1213 = vrot.slane %v1087, 2
      %v1214 = vrot.slane %v1088, 2
      %v1215 = vrot.slane %v1089, 2
      %v1216 = vrot.slane %v1090, 2
      %v1217 = vrot.slane %v1091, 2
      %v1218 = vrot.slane %v1092, 2
      %v1219 = vrot.slane %v1093, 2
      %v1220 = vrot.slane %v1094, 2
      %v1221 = vrot.slane %v1095, 2
      %v1222 = vrot.slane %v1096, 2
      %v1223 = vrot.slane %v1097, 2
      %v1224 = vrot.slane %v1098, 2
      %v1225 = vrot.slane %v1099, 2
      %v1226 = vrot.slane %v1100, 2
      %v1227 = vrot.slane %v1101, 2
      %v1228 = vrot.slane %v1102, 2
      %v1229 = vrot.slane %v1103, 2
      %v1230 = vrot.slane %v1104, 2
      %v1231 = vrot.slane %v1105, 2
      %v1232 = vrot.slane %v1106, 2
      %v1233 = vrot.slane %v1107, 2
      %v1234 = vrot.slane %v1108, 2
      %v1235 = vrot.slane %v1109, 2
      %v1236 = vrot.slane %v1110, 2
      %v1237 = vrot.slane %v1111, 2
      %v1238 = vrot.slane %v1112, 2
      %v1239 = vrot.slane %v1113, 2
      %v1240 = vrot.slane %v1114, 2
      %v1241 = vrot.slane %v1115, 2
      %v1242 = vrot.slane %v1116, 2
      %v1243 = vrot.slane %v1117, 2
      %v1244 = vrot.slane %v1118, 2
      %v1245 = vrot.slane %v1119, 2
      %v1246 = vrot.slane %v1120, 2
      %v1247 = vrot.slane %v1121, 2
      %v1248 = vrot.slane %v1122, 2
      %v1249 = vrot.slane %v1123, 2
      %v1250 = vrot.slane %v1124, 2
      %vm1251 = vcmp.lt.s32.totalorder %v1167, 6
      %v1252 = vsel %vm1251, %v1249, %v1250
      %v1253 = vsel %vm1251, %v1248, %v1249
      %v1254 = vsel %vm1251, %v1247, %v1248
      %v1255 = vsel %vm1251, %v1246, %v1247
      %v1256 = vsel %vm1251, %v1245, %v1246
      %v1257 = vsel %vm1251, %v1244, %v1245
      %v1258 = vsel %vm1251, %v1243, %v1244
      %v1259 = vsel %vm1251, %v1242, %v1243
      %v1260 = vsel %vm1251, %v1241, %v1242
      %v1261 = vsel %vm1251, %v1240, %v1241
      %v1262 = vsel %vm1251, %v1239, %v1240
      %v1263 = vsel %vm1251, %v1238, %v1239
      %v1264 = vsel %vm1251, %v1237, %v1238
      %v1265 = vsel %vm1251, %v1236, %v1237
      %v1266 = vsel %vm1251, %v1235, %v1236
      %v1267 = vsel %vm1251, %v1234, %v1235
      %v1268 = vsel %vm1251, %v1233, %v1234
      %v1269 = vsel %vm1251, %v1232, %v1233
      %v1270 = vsel %vm1251, %v1231, %v1232
      %v1271 = vsel %vm1251, %v1230, %v1231
      %v1272 = vsel %vm1251, %v1229, %v1230
      %v1273 = vsel %vm1251, %v1228, %v1229
      %v1274 = vsel %vm1251, %v1227, %v1228
      %v1275 = vsel %vm1251, %v1226, %v1227
      %v1276 = vsel %vm1251, %v1225, %v1226
      %v1277 = vsel %vm1251, %v1224, %v1225
      %v1278 = vsel %vm1251, %v1223, %v1224
      %v1279 = vsel %vm1251, %v1222, %v1223
      %v1280 = vsel %vm1251, %v1221, %v1222
      %v1281 = vsel %vm1251, %v1220, %v1221
      %v1282 = vsel %vm1251, %v1219, %v1220
      %v1283 = vsel %vm1251, %v1218, %v1219
      %v1284 = vsel %vm1251, %v1217, %v1218
      %v1285 = vsel %vm1251, %v1216, %v1217
      %v1286 = vsel %vm1251, %v1215, %v1216
      %v1287 = vsel %vm1251, %v1214, %v1215
      %v1288 = vsel %vm1251, %v1213, %v1214
      %v1289 = vsel %vm1251, %v1212, %v1213
      %v1290 = vsel %vm1251, %v1211, %v1212
      %v1291 = vsel %vm1251, %v1210, %v1211
      %v1292 = vsel %vm1251, %v1250, %v1210
      %1334 = vrot.lane.b32.xlu0 %v1208, 8
      %v1335 = vpop.permute.xlu0 %1334
      %1336 = vrot.lane.b32.xlu0 %v1207, 8
      %v1337 = vpop.permute.xlu0 %1336
      %1338 = vrot.lane.b32.xlu0 %v1206, 8
      %v1339 = vpop.permute.xlu0 %1338
      %1340 = vrot.lane.b32.xlu0 %v1205, 8
      %v1341 = vpop.permute.xlu0 %1340
      %1342 = vrot.lane.b32.xlu0 %v1204, 8
      %v1343 = vpop.permute.xlu0 %1342
      %1344 = vrot.lane.b32.xlu0 %v1203, 8
      %v1345 = vpop.permute.xlu0 %1344
      %1346 = vrot.lane.b32.xlu0 %v1202, 8
      %v1347 = vpop.permute.xlu0 %1346
      %1348 = vrot.lane.b32.xlu0 %v1201, 8
      %v1349 = vpop.permute.xlu0 %1348
      %1350 = vrot.lane.b32.xlu0 %v1200, 8
      %v1351 = vpop.permute.xlu0 %1350
      %1352 = vrot.lane.b32.xlu0 %v1199, 8
      %v1353 = vpop.permute.xlu0 %1352
      %1354 = vrot.lane.b32.xlu0 %v1198, 8
      %v1355 = vpop.permute.xlu0 %1354
      %1356 = vrot.lane.b32.xlu0 %v1197, 8
      %v1357 = vpop.permute.xlu0 %1356
      %1358 = vrot.lane.b32.xlu0 %v1196, 8
      %v1359 = vpop.permute.xlu0 %1358
      %1360 = vrot.lane.b32.xlu0 %v1195, 8
      %v1361 = vpop.permute.xlu0 %1360
      %1362 = vrot.lane.b32.xlu0 %v1194, 8
      %v1363 = vpop.permute.xlu0 %1362
      %1364 = vrot.lane.b32.xlu0 %v1193, 8
      %v1365 = vpop.permute.xlu0 %1364
      %1366 = vrot.lane.b32.xlu0 %v1192, 8
      %v1367 = vpop.permute.xlu0 %1366
      %1368 = vrot.lane.b32.xlu0 %v1191, 8
      %v1369 = vpop.permute.xlu0 %1368
      %1370 = vrot.lane.b32.xlu0 %v1190, 8
      %v1371 = vpop.permute.xlu0 %1370
      %1372 = vrot.lane.b32.xlu0 %v1189, 8
      %v1373 = vpop.permute.xlu0 %1372
      %1374 = vrot.lane.b32.xlu0 %v1188, 8
      %v1375 = vpop.permute.xlu0 %1374
      %1376 = vrot.lane.b32.xlu0 %v1187, 8
      %v1377 = vpop.permute.xlu0 %1376
      %1378 = vrot.lane.b32.xlu0 %v1186, 8
      %v1379 = vpop.permute.xlu0 %1378
      %1380 = vrot.lane.b32.xlu0 %v1185, 8
      %v1381 = vpop.permute.xlu0 %1380
      %1382 = vrot.lane.b32.xlu0 %v1184, 8
      %v1383 = vpop.permute.xlu0 %1382
      %1384 = vrot.lane.b32.xlu0 %v1183, 8
      %v1385 = vpop.permute.xlu0 %1384
      %1386 = vrot.lane.b32.xlu0 %v1182, 8
      %v1387 = vpop.permute.xlu0 %1386
      %1388 = vrot.lane.b32.xlu0 %v1181, 8
      %v1389 = vpop.permute.xlu0 %1388
      %1390 = vrot.lane.b32.xlu0 %v1180, 8
      %v1391 = vpop.permute.xlu0 %1390
      %1392 = vrot.lane.b32.xlu0 %v1179, 8
      %v1393 = vpop.permute.xlu0 %1392
      %1394 = vrot.lane.b32.xlu0 %v1178, 8
      %v1395 = vpop.permute.xlu0 %1394
      %1396 = vrot.lane.b32.xlu0 %v1177, 8
      %v1397 = vpop.permute.xlu0 %1396
      %1398 = vrot.lane.b32.xlu0 %v1176, 8
      %v1399 = vpop.permute.xlu0 %1398
      %1400 = vrot.lane.b32.xlu0 %v1175, 8
      %v1401 = vpop.permute.xlu0 %1400
      %1402 = vrot.lane.b32.xlu0 %v1174, 8
      %v1403 = vpop.permute.xlu0 %1402
      %1404 = vrot.lane.b32.xlu0 %v1173, 8
      %v1405 = vpop.permute.xlu0 %1404
      %1406 = vrot.lane.b32.xlu0 %v1172, 8
      %v1407 = vpop.permute.xlu0 %1406
      %1408 = vrot.lane.b32.xlu0 %v1171, 8
      %v1409 = vpop.permute.xlu0 %1408
      %1410 = vrot.lane.b32.xlu0 %v1170, 8
      %v1411 = vpop.permute.xlu0 %1410
      %1412 = vrot.lane.b32.xlu0 %v1169, 8
      %v1413 = vpop.permute.xlu0 %1412
      %1414 = vrot.lane.b32.xlu0 %v1209, 8
      %v1415 = vpop.permute.xlu0 %1414
      %1498 = vrot.lane.b32.xlu0 %v1291, 16
      %v1499 = vpop.permute.xlu0 %1498
      %1500 = vrot.lane.b32.xlu0 %v1290, 16
      %v1501 = vpop.permute.xlu0 %1500
      %1502 = vrot.lane.b32.xlu0 %v1289, 16
      %v1503 = vpop.permute.xlu0 %1502
      %1504 = vrot.lane.b32.xlu0 %v1288, 16
      %v1505 = vpop.permute.xlu0 %1504
      %1506 = vrot.lane.b32.xlu0 %v1287, 16
      %v1507 = vpop.permute.xlu0 %1506
      %1508 = vrot.lane.b32.xlu0 %v1286, 16
      %v1509 = vpop.permute.xlu0 %1508
      %1510 = vrot.lane.b32.xlu0 %v1285, 16
      %v1511 = vpop.permute.xlu0 %1510
      %1512 = vrot.lane.b32.xlu0 %v1284, 16
      %v1513 = vpop.permute.xlu0 %1512
      %1514 = vrot.lane.b32.xlu0 %v1283, 16
      %v1515 = vpop.permute.xlu0 %1514
      %1516 = vrot.lane.b32.xlu0 %v1282, 16
      %v1517 = vpop.permute.xlu0 %1516
      %1518 = vrot.lane.b32.xlu0 %v1281, 16
      %v1519 = vpop.permute.xlu0 %1518
      %1520 = vrot.lane.b32.xlu0 %v1280, 16
      %v1521 = vpop.permute.xlu0 %1520
      %1522 = vrot.lane.b32.xlu0 %v1279, 16
      %v1523 = vpop.permute.xlu0 %1522
      %1524 = vrot.lane.b32.xlu0 %v1278, 16
      %v1525 = vpop.permute.xlu0 %1524
      %1526 = vrot.lane.b32.xlu0 %v1277, 16
      %v1527 = vpop.permute.xlu0 %1526
      %1528 = vrot.lane.b32.xlu0 %v1276, 16
      %v1529 = vpop.permute.xlu0 %1528
      %1530 = vrot.lane.b32.xlu0 %v1275, 16
      %v1531 = vpop.permute.xlu0 %1530
      %1532 = vrot.lane.b32.xlu0 %v1274, 16
      %v1533 = vpop.permute.xlu0 %1532
      %1534 = vrot.lane.b32.xlu0 %v1273, 16
      %v1535 = vpop.permute.xlu0 %1534
      %1536 = vrot.lane.b32.xlu0 %v1272, 16
      %v1537 = vpop.permute.xlu0 %1536
      %1538 = vrot.lane.b32.xlu0 %v1271, 16
      %v1539 = vpop.permute.xlu0 %1538
      %1540 = vrot.lane.b32.xlu0 %v1270, 16
      %v1541 = vpop.permute.xlu0 %1540
      %1542 = vrot.lane.b32.xlu0 %v1269, 16
      %v1543 = vpop.permute.xlu0 %1542
      %1544 = vrot.lane.b32.xlu0 %v1268, 16
      %v1545 = vpop.permute.xlu0 %1544
      %1546 = vrot.lane.b32.xlu0 %v1267, 16
      %v1547 = vpop.permute.xlu0 %1546
      %1548 = vrot.lane.b32.xlu0 %v1266, 16
      %v1549 = vpop.permute.xlu0 %1548
      %1550 = vrot.lane.b32.xlu0 %v1265, 16
      %v1551 = vpop.permute.xlu0 %1550
      %1552 = vrot.lane.b32.xlu0 %v1264, 16
      %v1553 = vpop.permute.xlu0 %1552
      %1554 = vrot.lane.b32.xlu0 %v1263, 16
      %v1555 = vpop.permute.xlu0 %1554
      %1556 = vrot.lane.b32.xlu0 %v1262, 16
      %v1557 = vpop.permute.xlu0 %1556
      %1558 = vrot.lane.b32.xlu0 %v1261, 16
      %v1559 = vpop.permute.xlu0 %1558
      %1560 = vrot.lane.b32.xlu0 %v1260, 16
      %v1561 = vpop.permute.xlu0 %1560
      %1562 = vrot.lane.b32.xlu0 %v1259, 16
      %v1563 = vpop.permute.xlu0 %1562
      %1564 = vrot.lane.b32.xlu0 %v1258, 16
      %v1565 = vpop.permute.xlu0 %1564
      %1566 = vrot.lane.b32.xlu0 %v1257, 16
      %v1567 = vpop.permute.xlu0 %1566
      %1568 = vrot.lane.b32.xlu0 %v1256, 16
      %v1569 = vpop.permute.xlu0 %1568
      %1570 = vrot.lane.b32.xlu0 %v1255, 16
      %v1571 = vpop.permute.xlu0 %1570
      %1572 = vrot.lane.b32.xlu0 %v1254, 16
      %v1573 = vpop.permute.xlu0 %1572
      %1574 = vrot.lane.b32.xlu0 %v1253, 16
      %v1575 = vpop.permute.xlu0 %1574
      %1576 = vrot.lane.b32.xlu0 %v1252, 16
      %v1577 = vpop.permute.xlu0 %1576
      %1578 = vrot.lane.b32.xlu0 %v1292, 16
      %v1579 = vpop.permute.xlu0 %1578
      %vm1621 = vcmask 64512
      %v1622 = vsel %vm1621, %v1084, %v1335
      %v1623 = vsel %vm1621, %v1085, %v1337
      %v1624 = vsel %vm1621, %v1086, %v1339
      %v1625 = vsel %vm1621, %v1087, %v1341
      %v1626 = vsel %vm1621, %v1088, %v1343
      %v1627 = vsel %vm1621, %v1089, %v1345
      %v1628 = vsel %vm1621, %v1090, %v1347
      %v1629 = vsel %vm1621, %v1091, %v1349
      %v1630 = vsel %vm1621, %v1092, %v1351
      %v1631 = vsel %vm1621, %v1093, %v1353
      %v1632 = vsel %vm1621, %v1094, %v1355
      %v1633 = vsel %vm1621, %v1095, %v1357
      %v1634 = vsel %vm1621, %v1096, %v1359
      %v1635 = vsel %vm1621, %v1097, %v1361
      %v1636 = vsel %vm1621, %v1098, %v1363
      %v1637 = vsel %vm1621, %v1099, %v1365
      %v1638 = vsel %vm1621, %v1100, %v1367
      %v1639 = vsel %vm1621, %v1101, %v1369
      %v1640 = vsel %vm1621, %v1102, %v1371
      %v1641 = vsel %vm1621, %v1103, %v1373
      %v1642 = vsel %vm1621, %v1104, %v1375
      %v1643 = vsel %vm1621, %v1105, %v1377
      %v1644 = vsel %vm1621, %v1106, %v1379
      %v1645 = vsel %vm1621, %v1107, %v1381
      %v1646 = vsel %vm1621, %v1108, %v1383
      %v1647 = vsel %vm1621, %v1109, %v1385
      %v1648 = vsel %vm1621, %v1110, %v1387
      %v1649 = vsel %vm1621, %v1111, %v1389
      %v1650 = vsel %vm1621, %v1112, %v1391
      %v1651 = vsel %vm1621, %v1113, %v1393
      %v1652 = vsel %vm1621, %v1114, %v1395
      %v1653 = vsel %vm1621, %v1115, %v1397
      %v1654 = vsel %vm1621, %v1116, %v1399
      %v1655 = vsel %vm1621, %v1117, %v1401
      %v1656 = vsel %vm1621, %v1118, %v1403
      %v1657 = vsel %vm1621, %v1119, %v1405
      %v1658 = vsel %vm1621, %v1120, %v1407
      %v1659 = vsel %vm1621, %v1121, %v1409
      %v1660 = vsel %vm1621, %v1122, %v1411
      %v1661 = vsel %vm1621, %v1123, %v1413
      %v1662 = vsel %vm1621, %v1124, %v1415
      %vm1663 = vcmask 130048
      %v1664 = vsel %vm1663, %v1622, %v1499
      %v1665 = vsel %vm1663, %v1623, %v1501
      %v1666 = vsel %vm1663, %v1624, %v1503
      %v1667 = vsel %vm1663, %v1625, %v1505
      %v1668 = vsel %vm1663, %v1626, %v1507
      %v1669 = vsel %vm1663, %v1627, %v1509
      %v1670 = vsel %vm1663, %v1628, %v1511
      %v1671 = vsel %vm1663, %v1629, %v1513
      %v1672 = vsel %vm1663, %v1630, %v1515
      %v1673 = vsel %vm1663, %v1631, %v1517
      %v1674 = vsel %vm1663, %v1632, %v1519
      %v1675 = vsel %vm1663, %v1633, %v1521
      %v1676 = vsel %vm1663, %v1634, %v1523
      %v1677 = vsel %vm1663, %v1635, %v1525
      %v1678 = vsel %vm1663, %v1636, %v1527
      %v1679 = vsel %vm1663, %v1637, %v1529
      %v1680 = vsel %vm1663, %v1638, %v1531
      %v1681 = vsel %vm1663, %v1639, %v1533
      %v1682 = vsel %vm1663, %v1640, %v1535
      %v1683 = vsel %vm1663, %v1641, %v1537
      %v1684 = vsel %vm1663, %v1642, %v1539
      %v1685 = vsel %vm1663, %v1643, %v1541
      %v1686 = vsel %vm1663, %v1644, %v1543
      %v1687 = vsel %vm1663, %v1645, %v1545
      %v1688 = vsel %vm1663, %v1646, %v1547
      %v1689 = vsel %vm1663, %v1647, %v1549
      %v1690 = vsel %vm1663, %v1648, %v1551
      %v1691 = vsel %vm1663, %v1649, %v1553
      %v1692 = vsel %vm1663, %v1650, %v1555
      %v1693 = vsel %vm1663, %v1651, %v1557
      %v1694 = vsel %vm1663, %v1652, %v1559
      %v1695 = vsel %vm1663, %v1653, %v1561
      %v1696 = vsel %vm1663, %v1654, %v1563
      %v1697 = vsel %vm1663, %v1655, %v1565
      %v1698 = vsel %vm1663, %v1656, %v1567
      %v1699 = vsel %vm1663, %v1657, %v1569
      %v1700 = vsel %vm1663, %v1658, %v1571
      %v1701 = vsel %vm1663, %v1659, %v1573
      %v1702 = vsel %vm1663, %v1660, %v1575
      %v1703 = vsel %vm1663, %v1661, %v1577
      %v1704 = vsel %vm1663, %v1662, %v1579
      %v1705 = vpack.c.bf16 %v1665, %v1664
      %v1706 = vpack.c.bf16 %v1667, %v1666
      %v1707 = vpack.c.bf16 %v1669, %v1668
      %v1708 = vpack.c.bf16 %v1671, %v1670
      %v1709 = vpack.c.bf16 %v1673, %v1672
      %v1710 = vpack.c.bf16 %v1675, %v1674
      %v1711 = vpack.c.bf16 %v1677, %v1676
      %v1712 = vpack.c.bf16 %v1679, %v1678
      %v1713 = vpack.c.bf16 %v1681, %v1680
      %v1714 = vpack.c.bf16 %v1683, %v1682
      %v1715 = vpack.c.bf16 %v1685, %v1684
      %v1716 = vpack.c.bf16 %v1687, %v1686
      %v1717 = vpack.c.bf16 %v1689, %v1688
      %v1718 = vpack.c.bf16 %v1691, %v1690
      %v1719 = vpack.c.bf16 %v1693, %v1692
      %v1720 = vpack.c.bf16 %v1695, %v1694
      %v1721 = vpack.c.bf16 %v1697, %v1696
      %v1722 = vpack.c.bf16 %v1699, %v1698
      %v1723 = vpack.c.bf16 %v1701, %v1700
      %v1724 = vpack.c.bf16 %v1703, %v1702
      %v1725 = vpack.c.bf16 %v1704, %v1704
      %s1726 = smul.u32 %s25, 9
      %s1727 = smul.addr %s1726, 4
      %s1728 = scalar_lea.vmem %s3, %s1727
      %v1729 = vld [vmem:[%s1728] sm:$0xf]
      %v1730 = vld [vmem:[%s1728 + $0x4] sm:$0xf]
      %v1731 = vld [vmem:[%s1728 + $0x8] sm:$0xf]
      %v1735 = vunpack.c.l.b16 %v1729
      %v1736 = vunpack.c.l.b16 %v1730
      %v1737 = vunpack.c.l.b16 %v1731
      %v1738 = vpack.c.b16 %v1736, %v1735
      %v1739 = vpack.c.b16 %v1737, %v1737
      %vm1741 = vcmask 195584
      %v1743 = vsel %vm1741, %v1705, 0
      %v1746 = vsel %vm1741, %v1706, 0
      %v1749 = vsel %vm1741, %v1707, 0
      %v1752 = vsel %vm1741, %v1708, 0
      %v1755 = vsel %vm1741, %v1709, 0
      %v1758 = vsel %vm1741, %v1710, 0
      %v1761 = vsel %vm1741, %v1711, 0
      %v1764 = vsel %vm1741, %v1712, 0
      %v1767 = vsel %vm1741, %v1713, 0
      %v1770 = vsel %vm1741, %v1714, 0
      %v1773 = vsel %vm1741, %v1715, 0
      %v1776 = vsel %vm1741, %v1716, 0
      %v1779 = vsel %vm1741, %v1717, 0
      %v1782 = vsel %vm1741, %v1718, 0
      %v1785 = vsel %vm1741, %v1719, 0
      %v1788 = vsel %vm1741, %v1720, 0
      %v1791 = vsel %vm1741, %v1721, 0
      %v1794 = vsel %vm1741, %v1722, 0
      %v1797 = vsel %vm1741, %v1723, 0
      %v1800 = vsel %vm1741, %v1724, 0
      %v1803 = vsel %vm1741, %v1725, 0
      %vm1805 = vcmask 1043456
      %v1807 = vsel %vm1805, %v1739, 0
      %1809 = vmatpush.bf16.msra.mxu0 0
      %1810 = vmatpush.bf16.msra.mxu0 0
      %1811 = vmatpush.bf16.msra.mxu0 0
      %1812 = vmatpush.bf16.msra.mxu0 0
      %1813 = vmatpush.bf16.msra.mxu0 0
      %1814 = vmatpush.bf16.msra.mxu0 0
      %1815 = vmatpush.bf16.msra.mxu0 %v1807
      %1816 = vmatpush.bf16.msra.mxu0 %v1738
      %1817 = vmatmul.bf16.gmra.mxu0 %v1743
      %v1818 = vpop.f32.mrf.mxu0
      %v1819 = vadd.f32 0.0, %v1818
      %v1820 = vpop.f32.mrf.mxu0
      %v1821 = vadd.f32 0.0, %v1820
      %1822 = vmatmul.bf16.gmra.mxu0 %v1746
      %v1823 = vpop.f32.mrf.mxu0
      %v1824 = vadd.f32 0.0, %v1823
      %v1825 = vpop.f32.mrf.mxu0
      %v1826 = vadd.f32 0.0, %v1825
      %1827 = vmatmul.bf16.gmra.mxu0 %v1749
      %v1828 = vpop.f32.mrf.mxu0
      %v1829 = vadd.f32 0.0, %v1828
      %v1830 = vpop.f32.mrf.mxu0
      %v1831 = vadd.f32 0.0, %v1830
      %1832 = vmatmul.bf16.gmra.mxu0 %v1752
      %v1833 = vpop.f32.mrf.mxu0
      %v1834 = vadd.f32 0.0, %v1833
      %v1835 = vpop.f32.mrf.mxu0
      %v1836 = vadd.f32 0.0, %v1835
      %1837 = vmatmul.bf16.gmra.mxu0 %v1755
      %v1838 = vpop.f32.mrf.mxu0
      %v1839 = vadd.f32 0.0, %v1838
      %v1840 = vpop.f32.mrf.mxu0
      %v1841 = vadd.f32 0.0, %v1840
      %1842 = vmatmul.bf16.gmra.mxu0 %v1758
      %v1843 = vpop.f32.mrf.mxu0
      %v1844 = vadd.f32 0.0, %v1843
      %v1845 = vpop.f32.mrf.mxu0
      %v1846 = vadd.f32 0.0, %v1845
      %1847 = vmatmul.bf16.gmra.mxu0 %v1761
      %v1848 = vpop.f32.mrf.mxu0
      %v1849 = vadd.f32 0.0, %v1848
      %v1850 = vpop.f32.mrf.mxu0
      %v1851 = vadd.f32 0.0, %v1850
      %1852 = vmatmul.bf16.gmra.mxu0 %v1764
      %v1853 = vpop.f32.mrf.mxu0
      %v1854 = vadd.f32 0.0, %v1853
      %v1855 = vpop.f32.mrf.mxu0
      %v1856 = vadd.f32 0.0, %v1855
      %1857 = vmatmul.bf16.gmra.mxu0 %v1767
      %v1858 = vpop.f32.mrf.mxu0
      %v1859 = vadd.f32 0.0, %v1858
      %v1860 = vpop.f32.mrf.mxu0
      %v1861 = vadd.f32 0.0, %v1860
      %1862 = vmatmul.bf16.gmra.mxu0 %v1770
      %v1863 = vpop.f32.mrf.mxu0
      %v1864 = vadd.f32 0.0, %v1863
      %v1865 = vpop.f32.mrf.mxu0
      %v1866 = vadd.f32 0.0, %v1865
      %1867 = vmatmul.bf16.gmra.mxu0 %v1773
      %v1868 = vpop.f32.mrf.mxu0
      %v1869 = vadd.f32 0.0, %v1868
      %v1870 = vpop.f32.mrf.mxu0
      %v1871 = vadd.f32 0.0, %v1870
      %1872 = vmatmul.bf16.gmra.mxu0 %v1776
      %v1873 = vpop.f32.mrf.mxu0
      %v1874 = vadd.f32 0.0, %v1873
      %v1875 = vpop.f32.mrf.mxu0
      %v1876 = vadd.f32 0.0, %v1875
      %1877 = vmatmul.bf16.gmra.mxu0 %v1779
      %v1878 = vpop.f32.mrf.mxu0
      %v1879 = vadd.f32 0.0, %v1878
      %v1880 = vpop.f32.mrf.mxu0
      %v1881 = vadd.f32 0.0, %v1880
      %1882 = vmatmul.bf16.gmra.mxu0 %v1782
      %v1883 = vpop.f32.mrf.mxu0
      %v1884 = vadd.f32 0.0, %v1883
      %v1885 = vpop.f32.mrf.mxu0
      %v1886 = vadd.f32 0.0, %v1885
      %1887 = vmatmul.bf16.gmra.mxu0 %v1785
      %v1888 = vpop.f32.mrf.mxu0
      %v1889 = vadd.f32 0.0, %v1888
      %v1890 = vpop.f32.mrf.mxu0
      %v1891 = vadd.f32 0.0, %v1890
      %1892 = vmatmul.bf16.gmra.mxu0 %v1788
      %v1893 = vpop.f32.mrf.mxu0
      %v1894 = vadd.f32 0.0, %v1893
      %v1895 = vpop.f32.mrf.mxu0
      %v1896 = vadd.f32 0.0, %v1895
      %1897 = vmatmul.bf16.gmra.mxu0 %v1791
      %v1898 = vpop.f32.mrf.mxu0
      %v1899 = vadd.f32 0.0, %v1898
      %v1900 = vpop.f32.mrf.mxu0
      %v1901 = vadd.f32 0.0, %v1900
      %1902 = vmatmul.bf16.gmra.mxu0 %v1794
      %v1903 = vpop.f32.mrf.mxu0
      %v1904 = vadd.f32 0.0, %v1903
      %v1905 = vpop.f32.mrf.mxu0
      %v1906 = vadd.f32 0.0, %v1905
      %1907 = vmatmul.bf16.gmra.mxu0 %v1797
      %v1908 = vpop.f32.mrf.mxu0
      %v1909 = vadd.f32 0.0, %v1908
      %v1910 = vpop.f32.mrf.mxu0
      %v1911 = vadd.f32 0.0, %v1910
      %1912 = vmatmul.bf16.gmra.mxu0 %v1800
      %v1913 = vpop.f32.mrf.mxu0
      %v1914 = vadd.f32 0.0, %v1913
      %v1915 = vpop.f32.mrf.mxu0
      %v1916 = vadd.f32 0.0, %v1915
      %1917 = vmatmul.bf16.gmra.mxu0 %v1803
      %v1918 = vpop.f32.mrf.mxu0
      %v1919 = vadd.f32 0.0, %v1918
      %v1920 = vpop.f32.mrf.mxu0
      %1921 = vdwg.mxu0
      %v1922 = vld [vmem:[#allocation2] sm:$0xff]
      %v1923 = vld [vmem:[#allocation2 + $0x8] sm:$0xff]
      %v1924 = vld [vmem:[#allocation2 + $0x10] sm:$0xff]
      %v1925 = vld [vmem:[#allocation2 + $0x18] sm:$0xff]
      %v1926 = vld [vmem:[#allocation2 + $0x20] sm:$0xff]
      %v1927 = vld [vmem:[#allocation2 + $0x28] sm:$0xff]
      %v1928 = vld [vmem:[#allocation2 + $0x30] sm:$0xff]
      %v1929 = vld [vmem:[#allocation2 + $0x38] sm:$0xff]
      %v1930 = vld [vmem:[#allocation2 + $0x40] sm:$0xff]
      %v1931 = vld [vmem:[#allocation2 + $0x48] sm:$0xff]
      %v1932 = vld [vmem:[#allocation2 + $0x50] sm:$0xff]
      %v1933 = vld [vmem:[#allocation2 + $0x58] sm:$0xff]
      %v1934 = vld [vmem:[#allocation2 + $0x60] sm:$0xff]
      %v1935 = vld [vmem:[#allocation2 + $0x68] sm:$0xff]
      %v1936 = vld [vmem:[#allocation2 + $0x70] sm:$0xff]
      %v1937 = vld [vmem:[#allocation2 + $0x78] sm:$0xff]
      %v1938 = vld [vmem:[#allocation2 + $0x80] sm:$0xff]
      %v1939 = vld [vmem:[#allocation2 + $0x88] sm:$0xff]
      %v1940 = vld [vmem:[#allocation2 + $0x90] sm:$0xff]
      %v1941 = vld [vmem:[#allocation2 + $0x98] sm:$0xff]
      %v1942 = vld [vmem:[#allocation2 + $0xa0] sm:$0xff]
      %v1943 = vld [vmem:[#allocation2 + $0xa8] sm:$0xff]
      %v1944 = vld [vmem:[#allocation2 + $0xb0] sm:$0xff]
      %v1945 = vld [vmem:[#allocation2 + $0xb8] sm:$0xff]
      %v1946 = vld [vmem:[#allocation2 + $0xc0] sm:$0xff]
      %v1947 = vld [vmem:[#allocation2 + $0xc8] sm:$0xff]
      %v1948 = vld [vmem:[#allocation2 + $0xd0] sm:$0xff]
      %v1949 = vld [vmem:[#allocation2 + $0xd8] sm:$0xff]
      %v1950 = vld [vmem:[#allocation2 + $0xe0] sm:$0xff]
      %v1951 = vld [vmem:[#allocation2 + $0xe8] sm:$0xff]
      %v1952 = vld [vmem:[#allocation2 + $0xf0] sm:$0xff]
      %v1953 = vld [vmem:[#allocation2 + $0xf8] sm:$0xff]
      %v1954 = vld [vmem:[#allocation2 + $0x100] sm:$0xff]
      %v1955 = vld [vmem:[#allocation2 + $0x108] sm:$0xff]
      %v1956 = vld [vmem:[#allocation2 + $0x110] sm:$0xff]
      %v1957 = vld [vmem:[#allocation2 + $0x118] sm:$0xff]
      %v1958 = vld [vmem:[#allocation2 + $0x120] sm:$0xff]
      %v1959 = vld [vmem:[#allocation2 + $0x128] sm:$0xff]
      %v1960 = vld [vmem:[#allocation2 + $0x130] sm:$0xff]
      %v1961 = vld [vmem:[#allocation2 + $0x138] sm:$0xff]
      %v1962 = vld [vmem:[#allocation2 + $0x140] sm:$0xff]
      %v1963 = vadd.f32 %v1922, %v1819
      %v1964 = vadd.f32 %v1923, %v1821
      %v1965 = vadd.f32 %v1924, %v1824
      %v1966 = vadd.f32 %v1925, %v1826
      %v1967 = vadd.f32 %v1926, %v1829
      %v1968 = vadd.f32 %v1927, %v1831
      %v1969 = vadd.f32 %v1928, %v1834
      %v1970 = vadd.f32 %v1929, %v1836
      %v1971 = vadd.f32 %v1930, %v1839
      %v1972 = vadd.f32 %v1931, %v1841
      %v1973 = vadd.f32 %v1932, %v1844
      %v1974 = vadd.f32 %v1933, %v1846
      %v1975 = vadd.f32 %v1934, %v1849
      %v1976 = vadd.f32 %v1935, %v1851
      %v1977 = vadd.f32 %v1936, %v1854
      %v1978 = vadd.f32 %v1937, %v1856
      %v1979 = vadd.f32 %v1938, %v1859
      %v1980 = vadd.f32 %v1939, %v1861
      %v1981 = vadd.f32 %v1940, %v1864
      %v1982 = vadd.f32 %v1941, %v1866
      %v1983 = vadd.f32 %v1942, %v1869
      %v1984 = vadd.f32 %v1943, %v1871
      %v1985 = vadd.f32 %v1944, %v1874
      %v1986 = vadd.f32 %v1945, %v1876
      %v1987 = vadd.f32 %v1946, %v1879
      %v1988 = vadd.f32 %v1947, %v1881
      %v1989 = vadd.f32 %v1948, %v1884
      %v1990 = vadd.f32 %v1949, %v1886
      %v1991 = vadd.f32 %v1950, %v1889
      %v1992 = vadd.f32 %v1951, %v1891
      %v1993 = vadd.f32 %v1952, %v1894
      %v1994 = vadd.f32 %v1953, %v1896
      %v1995 = vadd.f32 %v1954, %v1899
      %v1996 = vadd.f32 %v1955, %v1901
      %v1997 = vadd.f32 %v1956, %v1904
      %v1998 = vadd.f32 %v1957, %v1906
      %v1999 = vadd.f32 %v1958, %v1909
      %v2000 = vadd.f32 %v1959, %v1911
      %v2001 = vadd.f32 %v1960, %v1914
      %v2002 = vadd.f32 %v1961, %v1916
      %v2003 = vadd.f32 %v1962, %v1919
      %2004 = vst.msk [vmem:[#allocation2] sm:$0xff] %vm1083, %v1963
      %2005 = vst.msk [vmem:[#allocation2 + $0x8] sm:$0xff] %vm1083, %v1964
      %2006 = vst.msk [vmem:[#allocation2 + $0x10] sm:$0xff] %vm1083, %v1965
      %2007 = vst.msk [vmem:[#allocation2 + $0x18] sm:$0xff] %vm1083, %v1966
      %2008 = vst.msk [vmem:[#allocation2 + $0x20] sm:$0xff] %vm1083, %v1967
      %2009 = vst.msk [vmem:[#allocation2 + $0x28] sm:$0xff] %vm1083, %v1968
      %2010 = vst.msk [vmem:[#allocation2 + $0x30] sm:$0xff] %vm1083, %v1969
      %2011 = vst.msk [vmem:[#allocation2 + $0x38] sm:$0xff] %vm1083, %v1970
      %2012 = vst.msk [vmem:[#allocation2 + $0x40] sm:$0xff] %vm1083, %v1971
      %2013 = vst.msk [vmem:[#allocation2 + $0x48] sm:$0xff] %vm1083, %v1972
      %2014 = vst.msk [vmem:[#allocation2 + $0x50] sm:$0xff] %vm1083, %v1973
      %2015 = vst.msk [vmem:[#allocation2 + $0x58] sm:$0xff] %vm1083, %v1974
      %2016 = vst.msk [vmem:[#allocation2 + $0x60] sm:$0xff] %vm1083, %v1975
      %2017 = vst.msk [vmem:[#allocation2 + $0x68] sm:$0xff] %vm1083, %v1976
      %2018 = vst.msk [vmem:[#allocation2 + $0x70] sm:$0xff] %vm1083, %v1977
      %2019 = vst.msk [vmem:[#allocation2 + $0x78] sm:$0xff] %vm1083, %v1978
      %2020 = vst.msk [vmem:[#allocation2 + $0x80] sm:$0xff] %vm1083, %v1979
      %2021 = vst.msk [vmem:[#allocation2 + $0x88] sm:$0xff] %vm1083, %v1980
      %2022 = vst.msk [vmem:[#allocation2 + $0x90] sm:$0xff] %vm1083, %v1981
      %2023 = vst.msk [vmem:[#allocation2 + $0x98] sm:$0xff] %vm1083, %v1982
      %2024 = vst.msk [vmem:[#allocation2 + $0xa0] sm:$0xff] %vm1083, %v1983
      %2025 = vst.msk [vmem:[#allocation2 + $0xa8] sm:$0xff] %vm1083, %v1984
      %2026 = vst.msk [vmem:[#allocation2 + $0xb0] sm:$0xff] %vm1083, %v1985
      %2027 = vst.msk [vmem:[#allocation2 + $0xb8] sm:$0xff] %vm1083, %v1986
      %2028 = vst.msk [vmem:[#allocation2 + $0xc0] sm:$0xff] %vm1083, %v1987
      %2029 = vst.msk [vmem:[#allocation2 + $0xc8] sm:$0xff] %vm1083, %v1988
      %2030 = vst.msk [vmem:[#allocation2 + $0xd0] sm:$0xff] %vm1083, %v1989
      %2031 = vst.msk [vmem:[#allocation2 + $0xd8] sm:$0xff] %vm1083, %v1990
      %2032 = vst.msk [vmem:[#allocation2 + $0xe0] sm:$0xff] %vm1083, %v1991
      %2033 = vst.msk [vmem:[#allocation2 + $0xe8] sm:$0xff] %vm1083, %v1992
      %2034 = vst.msk [vmem:[#allocation2 + $0xf0] sm:$0xff] %vm1083, %v1993
      %2035 = vst.msk [vmem:[#allocation2 + $0xf8] sm:$0xff] %vm1083, %v1994
      %2036 = vst.msk [vmem:[#allocation2 + $0x100] sm:$0xff] %vm1083, %v1995
      %2037 = vst.msk [vmem:[#allocation2 + $0x108] sm:$0xff] %vm1083, %v1996
      %2038 = vst.msk [vmem:[#allocation2 + $0x110] sm:$0xff] %vm1083, %v1997
      %2039 = vst.msk [vmem:[#allocation2 + $0x118] sm:$0xff] %vm1083, %v1998
      %2040 = vst.msk [vmem:[#allocation2 + $0x120] sm:$0xff] %vm1083, %v1999
      %2041 = vst.msk [vmem:[#allocation2 + $0x128] sm:$0xff] %vm1083, %v2000
      %2042 = vst.msk [vmem:[#allocation2 + $0x130] sm:$0xff] %vm1083, %v2001
      %2043 = vst.msk [vmem:[#allocation2 + $0x138] sm:$0xff] %vm1083, %v2002
      %2044 = vst.msk [vmem:[#allocation2 + $0x140] sm:$0xff] %vm1083, %v2003
      %s2045 = sadd.s32 3, %s1726
      %s2046 = smul.addr %s2045, 4
      %s2047 = scalar_lea.vmem %s3, %s2046
      %v2048 = vld [vmem:[%s2047] sm:$0xf]
      %v2049 = vld [vmem:[%s2047 + $0x4] sm:$0xf]
      %v2050 = vld [vmem:[%s2047 + $0x8] sm:$0xf]
      %v2054 = vunpack.c.l.b16 %v2048
      %v2055 = vunpack.c.l.b16 %v2049
      %v2056 = vunpack.c.l.b16 %v2050
      %v2057 = vpack.c.b16 %v2055, %v2054
      %v2058 = vpack.c.b16 %v2056, %v2056
      %v2061 = vsel %vm1805, %v2058, 0
      %2063 = vmatpush.bf16.msra.mxu0 0
      %2064 = vmatpush.bf16.msra.mxu0 0
      %2065 = vmatpush.bf16.msra.mxu0 0
      %2066 = vmatpush.bf16.msra.mxu0 0
      %2067 = vmatpush.bf16.msra.mxu0 0
      %2068 = vmatpush.bf16.msra.mxu0 0
      %2069 = vmatpush.bf16.msra.mxu0 %v2061
      %2070 = vmatpush.bf16.msra.mxu0 %v2057
      %2071 = vmatmul.bf16.gmra.mxu0 %v1743
      %v2072 = vpop.f32.mrf.mxu0
      %v2073 = vadd.f32 0.0, %v2072
      %v2074 = vpop.f32.mrf.mxu0
      %v2075 = vadd.f32 0.0, %v2074
      %2076 = vmatmul.bf16.gmra.mxu0 %v1746
      %v2077 = vpop.f32.mrf.mxu0
      %v2078 = vadd.f32 0.0, %v2077
      %v2079 = vpop.f32.mrf.mxu0
      %v2080 = vadd.f32 0.0, %v2079
      %2081 = vmatmul.bf16.gmra.mxu0 %v1749
      %v2082 = vpop.f32.mrf.mxu0
      %v2083 = vadd.f32 0.0, %v2082
      %v2084 = vpop.f32.mrf.mxu0
      %v2085 = vadd.f32 0.0, %v2084
      %2086 = vmatmul.bf16.gmra.mxu0 %v1752
      %v2087 = vpop.f32.mrf.mxu0
      %v2088 = vadd.f32 0.0, %v2087
      %v2089 = vpop.f32.mrf.mxu0
      %v2090 = vadd.f32 0.0, %v2089
      %2091 = vmatmul.bf16.gmra.mxu0 %v1755
      %v2092 = vpop.f32.mrf.mxu0
      %v2093 = vadd.f32 0.0, %v2092
      %v2094 = vpop.f32.mrf.mxu0
      %v2095 = vadd.f32 0.0, %v2094
      %2096 = vmatmul.bf16.gmra.mxu0 %v1758
      %v2097 = vpop.f32.mrf.mxu0
      %v2098 = vadd.f32 0.0, %v2097
      %v2099 = vpop.f32.mrf.mxu0
      %v2100 = vadd.f32 0.0, %v2099
      %2101 = vmatmul.bf16.gmra.mxu0 %v1761
      %v2102 = vpop.f32.mrf.mxu0
      %v2103 = vadd.f32 0.0, %v2102
      %v2104 = vpop.f32.mrf.mxu0
      %v2105 = vadd.f32 0.0, %v2104
      %2106 = vmatmul.bf16.gmra.mxu0 %v1764
      %v2107 = vpop.f32.mrf.mxu0
      %v2108 = vadd.f32 0.0, %v2107
      %v2109 = vpop.f32.mrf.mxu0
      %v2110 = vadd.f32 0.0, %v2109
      %2111 = vmatmul.bf16.gmra.mxu0 %v1767
      %v2112 = vpop.f32.mrf.mxu0
      %v2113 = vadd.f32 0.0, %v2112
      %v2114 = vpop.f32.mrf.mxu0
      %v2115 = vadd.f32 0.0, %v2114
      %2116 = vmatmul.bf16.gmra.mxu0 %v1770
      %v2117 = vpop.f32.mrf.mxu0
      %v2118 = vadd.f32 0.0, %v2117
      %v2119 = vpop.f32.mrf.mxu0
      %v2120 = vadd.f32 0.0, %v2119
      %2121 = vmatmul.bf16.gmra.mxu0 %v1773
      %v2122 = vpop.f32.mrf.mxu0
      %v2123 = vadd.f32 0.0, %v2122
      %v2124 = vpop.f32.mrf.mxu0
      %v2125 = vadd.f32 0.0, %v2124
      %2126 = vmatmul.bf16.gmra.mxu0 %v1776
      %v2127 = vpop.f32.mrf.mxu0
      %v2128 = vadd.f32 0.0, %v2127
      %v2129 = vpop.f32.mrf.mxu0
      %v2130 = vadd.f32 0.0, %v2129
      %2131 = vmatmul.bf16.gmra.mxu0 %v1779
      %v2132 = vpop.f32.mrf.mxu0
      %v2133 = vadd.f32 0.0, %v2132
      %v2134 = vpop.f32.mrf.mxu0
      %v2135 = vadd.f32 0.0, %v2134
      %2136 = vmatmul.bf16.gmra.mxu0 %v1782
      %v2137 = vpop.f32.mrf.mxu0
      %v2138 = vadd.f32 0.0, %v2137
      %v2139 = vpop.f32.mrf.mxu0
      %v2140 = vadd.f32 0.0, %v2139
      %2141 = vmatmul.bf16.gmra.mxu0 %v1785
      %v2142 = vpop.f32.mrf.mxu0
      %v2143 = vadd.f32 0.0, %v2142
      %v2144 = vpop.f32.mrf.mxu0
      %v2145 = vadd.f32 0.0, %v2144
      %2146 = vmatmul.bf16.gmra.mxu0 %v1788
      %v2147 = vpop.f32.mrf.mxu0
      %v2148 = vadd.f32 0.0, %v2147
      %v2149 = vpop.f32.mrf.mxu0
      %v2150 = vadd.f32 0.0, %v2149
      %2151 = vmatmul.bf16.gmra.mxu0 %v1791
      %v2152 = vpop.f32.mrf.mxu0
      %v2153 = vadd.f32 0.0, %v2152
      %v2154 = vpop.f32.mrf.mxu0
      %v2155 = vadd.f32 0.0, %v2154
      %2156 = vmatmul.bf16.gmra.mxu0 %v1794
      %v2157 = vpop.f32.mrf.mxu0
      %v2158 = vadd.f32 0.0, %v2157
      %v2159 = vpop.f32.mrf.mxu0
      %v2160 = vadd.f32 0.0, %v2159
      %2161 = vmatmul.bf16.gmra.mxu0 %v1797
      %v2162 = vpop.f32.mrf.mxu0
      %v2163 = vadd.f32 0.0, %v2162
      %v2164 = vpop.f32.mrf.mxu0
      %v2165 = vadd.f32 0.0, %v2164
      %2166 = vmatmul.bf16.gmra.mxu0 %v1800
      %v2167 = vpop.f32.mrf.mxu0
      %v2168 = vadd.f32 0.0, %v2167
      %v2169 = vpop.f32.mrf.mxu0
      %v2170 = vadd.f32 0.0, %v2169
      %2171 = vmatmul.bf16.gmra.mxu0 %v1803
      %v2172 = vpop.f32.mrf.mxu0
      %v2173 = vadd.f32 0.0, %v2172
      %v2174 = vpop.f32.mrf.mxu0
      %2175 = vdwg.mxu0
      %v2176 = vld [vmem:[#allocation2] sm:$0xff]
      %v2177 = vld [vmem:[#allocation2 + $0x8] sm:$0xff]
      %v2178 = vld [vmem:[#allocation2 + $0x10] sm:$0xff]
      %v2179 = vld [vmem:[#allocation2 + $0x18] sm:$0xff]
      %v2180 = vld [vmem:[#allocation2 + $0x20] sm:$0xff]
      %v2181 = vld [vmem:[#allocation2 + $0x28] sm:$0xff]
      %v2182 = vld [vmem:[#allocation2 + $0x30] sm:$0xff]
      %v2183 = vld [vmem:[#allocation2 + $0x38] sm:$0xff]
      %v2184 = vld [vmem:[#allocation2 + $0x40] sm:$0xff]
      %v2185 = vld [vmem:[#allocation2 + $0x48] sm:$0xff]
      %v2186 = vld [vmem:[#allocation2 + $0x50] sm:$0xff]
      %v2187 = vld [vmem:[#allocation2 + $0x58] sm:$0xff]
      %v2188 = vld [vmem:[#allocation2 + $0x60] sm:$0xff]
      %v2189 = vld [vmem:[#allocation2 + $0x68] sm:$0xff]
      %v2190 = vld [vmem:[#allocation2 + $0x70] sm:$0xff]
      %v2191 = vld [vmem:[#allocation2 + $0x78] sm:$0xff]
      %v2192 = vld [vmem:[#allocation2 + $0x80] sm:$0xff]
      %v2193 = vld [vmem:[#allocation2 + $0x88] sm:$0xff]
      %v2194 = vld [vmem:[#allocation2 + $0x90] sm:$0xff]
      %v2195 = vld [vmem:[#allocation2 + $0x98] sm:$0xff]
      %v2196 = vld [vmem:[#allocation2 + $0xa0] sm:$0xff]
      %v2197 = vld [vmem:[#allocation2 + $0xa8] sm:$0xff]
      %v2198 = vld [vmem:[#allocation2 + $0xb0] sm:$0xff]
      %v2199 = vld [vmem:[#allocation2 + $0xb8] sm:$0xff]
      %v2200 = vld [vmem:[#allocation2 + $0xc0] sm:$0xff]
      %v2201 = vld [vmem:[#allocation2 + $0xc8] sm:$0xff]
      %v2202 = vld [vmem:[#allocation2 + $0xd0] sm:$0xff]
      %v2203 = vld [vmem:[#allocation2 + $0xd8] sm:$0xff]
      %v2204 = vld [vmem:[#allocation2 + $0xe0] sm:$0xff]
      %v2205 = vld [vmem:[#allocation2 + $0xe8] sm:$0xff]
      %v2206 = vld [vmem:[#allocation2 + $0xf0] sm:$0xff]
      %v2207 = vld [vmem:[#allocation2 + $0xf8] sm:$0xff]
      %v2208 = vld [vmem:[#allocation2 + $0x100] sm:$0xff]
      %v2209 = vld [vmem:[#allocation2 + $0x108] sm:$0xff]
      %v2210 = vld [vmem:[#allocation2 + $0x110] sm:$0xff]
      %v2211 = vld [vmem:[#allocation2 + $0x118] sm:$0xff]
      %v2212 = vld [vmem:[#allocation2 + $0x120] sm:$0xff]
      %v2213 = vld [vmem:[#allocation2 + $0x128] sm:$0xff]
      %v2214 = vld [vmem:[#allocation2 + $0x130] sm:$0xff]
      %v2215 = vld [vmem:[#allocation2 + $0x138] sm:$0xff]
      %v2216 = vld [vmem:[#allocation2 + $0x140] sm:$0xff]
      %v2217 = vrot.slane %v2073, 2
      %v2218 = vrot.slane %v2075, 2
      %v2219 = vrot.slane %v2078, 2
      %v2220 = vrot.slane %v2080, 2
      %v2221 = vrot.slane %v2083, 2
      %v2222 = vrot.slane %v2085, 2
      %v2223 = vrot.slane %v2088, 2
      %v2224 = vrot.slane %v2090, 2
      %v2225 = vrot.slane %v2093, 2
      %v2226 = vrot.slane %v2095, 2
      %v2227 = vrot.slane %v2098, 2
      %v2228 = vrot.slane %v2100, 2
      %v2229 = vrot.slane %v2103, 2
      %v2230 = vrot.slane %v2105, 2
      %v2231 = vrot.slane %v2108, 2
      %v2232 = vrot.slane %v2110, 2
      %v2233 = vrot.slane %v2113, 2
      %v2234 = vrot.slane %v2115, 2
      %v2235 = vrot.slane %v2118, 2
      %v2236 = vrot.slane %v2120, 2
      %v2237 = vrot.slane %v2123, 2
      %v2238 = vrot.slane %v2125, 2
      %v2239 = vrot.slane %v2128, 2
      %v2240 = vrot.slane %v2130, 2
      %v2241 = vrot.slane %v2133, 2
      %v2242 = vrot.slane %v2135, 2
      %v2243 = vrot.slane %v2138, 2
      %v2244 = vrot.slane %v2140, 2
      %v2245 = vrot.slane %v2143, 2
      %v2246 = vrot.slane %v2145, 2
      %v2247 = vrot.slane %v2148, 2
      %v2248 = vrot.slane %v2150, 2
      %v2249 = vrot.slane %v2153, 2
      %v2250 = vrot.slane %v2155, 2
      %v2251 = vrot.slane %v2158, 2
      %v2252 = vrot.slane %v2160, 2
      %v2253 = vrot.slane %v2163, 2
      %v2254 = vrot.slane %v2165, 2
      %v2255 = vrot.slane %v2168, 2
      %v2256 = vrot.slane %v2170, 2
      %v2257 = vrot.slane %v2173, 2
      %v2258 = vsel %vm1251, %v2256, %v2257
      %v2259 = vsel %vm1251, %v2255, %v2256
      %v2260 = vsel %vm1251, %v2254, %v2255
      %v2261 = vsel %vm1251, %v2253, %v2254
      %v2262 = vsel %vm1251, %v2252, %v2253
      %v2263 = vsel %vm1251, %v2251, %v2252
      %v2264 = vsel %vm1251, %v2250, %v2251
      %v2265 = vsel %vm1251, %v2249, %v2250
      %v2266 = vsel %vm1251, %v2248, %v2249
      %v2267 = vsel %vm1251, %v2247, %v2248
      %v2268 = vsel %vm1251, %v2246, %v2247
      %v2269 = vsel %vm1251, %v2245, %v2246
      %v2270 = vsel %vm1251, %v2244, %v2245
      %v2271 = vsel %vm1251, %v2243, %v2244
      %v2272 = vsel %vm1251, %v2242, %v2243
      %v2273 = vsel %vm1251, %v2241, %v2242
      %v2274 = vsel %vm1251, %v2240, %v2241
      %v2275 = vsel %vm1251, %v2239, %v2240
      %v2276 = vsel %vm1251, %v2238, %v2239
      %v2277 = vsel %vm1251, %v2237, %v2238
      %v2278 = vsel %vm1251, %v2236, %v2237
      %v2279 = vsel %vm1251, %v2235, %v2236
      %v2280 = vsel %vm1251, %v2234, %v2235
      %v2281 = vsel %vm1251, %v2233, %v2234
      %v2282 = vsel %vm1251, %v2232, %v2233
      %v2283 = vsel %vm1251, %v2231, %v2232
      %v2284 = vsel %vm1251, %v2230, %v2231
      %v2285 = vsel %vm1251, %v2229, %v2230
      %v2286 = vsel %vm1251, %v2228, %v2229
      %v2287 = vsel %vm1251, %v2227, %v2228
      %v2288 = vsel %vm1251, %v2226, %v2227
      %v2289 = vsel %vm1251, %v2225, %v2226
      %v2290 = vsel %vm1251, %v2224, %v2225
      %v2291 = vsel %vm1251, %v2223, %v2224
      %v2292 = vsel %vm1251, %v2222, %v2223
      %v2293 = vsel %vm1251, %v2221, %v2222
      %v2294 = vsel %vm1251, %v2220, %v2221
      %v2295 = vsel %vm1251, %v2219, %v2220
      %v2296 = vsel %vm1251, %v2218, %v2219
      %v2297 = vsel %vm1251, %v2217, %v2218
      %v2298 = vsel %vm1251, %v2257, %v2217
      %v2299 = vadd.f32 %v2176, %v2295
      %v2300 = vadd.f32 %v2177, %v2294
      %v2301 = vadd.f32 %v2178, %v2293
      %v2302 = vadd.f32 %v2179, %v2292
      %v2303 = vadd.f32 %v2180, %v2291
      %v2304 = vadd.f32 %v2181, %v2290
      %v2305 = vadd.f32 %v2182, %v2289
      %v2306 = vadd.f32 %v2183, %v2288
      %v2307 = vadd.f32 %v2184, %v2287
      %v2308 = vadd.f32 %v2185, %v2286
      %v2309 = vadd.f32 %v2186, %v2285
      %v2310 = vadd.f32 %v2187, %v2284
      %v2311 = vadd.f32 %v2188, %v2283
      %v2312 = vadd.f32 %v2189, %v2282
      %v2313 = vadd.f32 %v2190, %v2281
      %v2314 = vadd.f32 %v2191, %v2280
      %v2315 = vadd.f32 %v2192, %v2279
      %v2316 = vadd.f32 %v2193, %v2278
      %v2317 = vadd.f32 %v2194, %v2277
      %v2318 = vadd.f32 %v2195, %v2276
      %v2319 = vadd.f32 %v2196, %v2275
      %v2320 = vadd.f32 %v2197, %v2274
      %v2321 = vadd.f32 %v2198, %v2273
      %v2322 = vadd.f32 %v2199, %v2272
      %v2323 = vadd.f32 %v2200, %v2271
      %v2324 = vadd.f32 %v2201, %v2270
      %v2325 = vadd.f32 %v2202, %v2269
      %v2326 = vadd.f32 %v2203, %v2268
      %v2327 = vadd.f32 %v2204, %v2267
      %v2328 = vadd.f32 %v2205, %v2266
      %v2329 = vadd.f32 %v2206, %v2265
      %v2330 = vadd.f32 %v2207, %v2264
      %v2331 = vadd.f32 %v2208, %v2263
      %v2332 = vadd.f32 %v2209, %v2262
      %v2333 = vadd.f32 %v2210, %v2261
      %v2334 = vadd.f32 %v2211, %v2260
      %v2335 = vadd.f32 %v2212, %v2259
      %v2336 = vadd.f32 %v2213, %v2258
      %v2337 = vadd.f32 %v2214, %v2298
      %v2338 = vadd.f32 %v2215, %v2297
      %v2339 = vadd.f32 %v2216, %v2296
      %2340 = vst.msk [vmem:[#allocation2] sm:$0xff] %vm1083, %v2299
      %2341 = vst.msk [vmem:[#allocation2 + $0x8] sm:$0xff] %vm1083, %v2300
      %2342 = vst.msk [vmem:[#allocation2 + $0x10] sm:$0xff] %vm1083, %v2301
      %2343 = vst.msk [vmem:[#allocation2 + $0x18] sm:$0xff] %vm1083, %v2302
      %2344 = vst.msk [vmem:[#allocation2 + $0x20] sm:$0xff] %vm1083, %v2303
      %2345 = vst.msk [vmem:[#allocation2 + $0x28] sm:$0xff] %vm1083, %v2304
      %2346 = vst.msk [vmem:[#allocation2 + $0x30] sm:$0xff] %vm1083, %v2305
      %2347 = vst.msk [vmem:[#allocation2 + $0x38] sm:$0xff] %vm1083, %v2306
      %2348 = vst.msk [vmem:[#allocation2 + $0x40] sm:$0xff] %vm1083, %v2307
      %2349 = vst.msk [vmem:[#allocation2 + $0x48] sm:$0xff] %vm1083, %v2308
      %2350 = vst.msk [vmem:[#allocation2 + $0x50] sm:$0xff] %vm1083, %v2309
      %2351 = vst.msk [vmem:[#allocation2 + $0x58] sm:$0xff] %vm1083, %v2310
      %2352 = vst.msk [vmem:[#allocation2 + $0x60] sm:$0xff] %vm1083, %v2311
      %2353 = vst.msk [vmem:[#allocation2 + $0x68] sm:$0xff] %vm1083, %v2312
      %2354 = vst.msk [vmem:[#allocation2 + $0x70] sm:$0xff] %vm1083, %v2313
      %2355 = vst.msk [vmem:[#allocation2 + $0x78] sm:$0xff] %vm1083, %v2314
      %2356 = vst.msk [vmem:[#allocation2 + $0x80] sm:$0xff] %vm1083, %v2315
      %2357 = vst.msk [vmem:[#allocation2 + $0x88] sm:$0xff] %vm1083, %v2316
      %2358 = vst.msk [vmem:[#allocation2 + $0x90] sm:$0xff] %vm1083, %v2317
      %2359 = vst.msk [vmem:[#allocation2 + $0x98] sm:$0xff] %vm1083, %v2318
      %2360 = vst.msk [vmem:[#allocation2 + $0xa0] sm:$0xff] %vm1083, %v2319
      %2361 = vst.msk [vmem:[#allocation2 + $0xa8] sm:$0xff] %vm1083, %v2320
      %2362 = vst.msk [vmem:[#allocation2 + $0xb0] sm:$0xff] %vm1083, %v2321
      %2363 = vst.msk [vmem:[#allocation2 + $0xb8] sm:$0xff] %vm1083, %v2322
      %2364 = vst.msk [vmem:[#allocation2 + $0xc0] sm:$0xff] %vm1083, %v2323
      %2365 = vst.msk [vmem:[#allocation2 + $0xc8] sm:$0xff] %vm1083, %v2324
      %2366 = vst.msk [vmem:[#allocation2 + $0xd0] sm:$0xff] %vm1083, %v2325
      %2367 = vst.msk [vmem:[#allocation2 + $0xd8] sm:$0xff] %vm1083, %v2326
      %2368 = vst.msk [vmem:[#allocation2 + $0xe0] sm:$0xff] %vm1083, %v2327
      %2369 = vst.msk [vmem:[#allocation2 + $0xe8] sm:$0xff] %vm1083, %v2328
      %2370 = vst.msk [vmem:[#allocation2 + $0xf0] sm:$0xff] %vm1083, %v2329
      %2371 = vst.msk [vmem:[#allocation2 + $0xf8] sm:$0xff] %vm1083, %v2330
      %2372 = vst.msk [vmem:[#allocation2 + $0x100] sm:$0xff] %vm1083, %v2331
      %2373 = vst.msk [vmem:[#allocation2 + $0x108] sm:$0xff] %vm1083, %v2332
      %2374 = vst.msk [vmem:[#allocation2 + $0x110] sm:$0xff] %vm1083, %v2333
      %2375 = vst.msk [vmem:[#allocation2 + $0x118] sm:$0xff] %vm1083, %v2334
      %2376 = vst.msk [vmem:[#allocation2 + $0x120] sm:$0xff] %vm1083, %v2335
      %2377 = vst.msk [vmem:[#allocation2 + $0x128] sm:$0xff] %vm1083, %v2336
      %2378 = vst.msk [vmem:[#allocation2 + $0x130] sm:$0xff] %vm1083, %v2337
      %2379 = vst.msk [vmem:[#allocation2 + $0x138] sm:$0xff] %vm1083, %v2338
      %2380 = vst.msk [vmem:[#allocation2 + $0x140] sm:$0xff] %vm1083, %v2339
      %s2381 = sadd.s32 6, %s1726
      %s2382 = smul.addr %s2381, 4
      %s2383 = scalar_lea.vmem %s3, %s2382
      %v2384 = vld [vmem:[%s2383] sm:$0xf]
      %v2385 = vld [vmem:[%s2383 + $0x4] sm:$0xf]
      %v2386 = vld [vmem:[%s2383 + $0x8] sm:$0xf]
      %v2390 = vunpack.c.l.b16 %v2384
      %v2391 = vunpack.c.l.b16 %v2385
      %v2392 = vunpack.c.l.b16 %v2386
      %v2393 = vpack.c.b16 %v2391, %v2390
      %v2394 = vpack.c.b16 %v2392, %v2392
      %v2397 = vsel %vm1805, %v2394, 0
      %2399 = vmatpush.bf16.msra.mxu0 0
      %2400 = vmatpush.bf16.msra.mxu0 0
      %2401 = vmatpush.bf16.msra.mxu0 0
      %2402 = vmatpush.bf16.msra.mxu0 0
      %2403 = vmatpush.bf16.msra.mxu0 0
      %2404 = vmatpush.bf16.msra.mxu0 0
      %2405 = vmatpush.bf16.msra.mxu0 %v2397
      %2406 = vmatpush.bf16.msra.mxu0 %v2393
      %2407 = vmatmul.bf16.gmra.mxu0 %v1743
      %v2408 = vpop.f32.mrf.mxu0
      %v2409 = vadd.f32 0.0, %v2408
      %v2410 = vpop.f32.mrf.mxu0
      %v2411 = vadd.f32 0.0, %v2410
      %2412 = vmatmul.bf16.gmra.mxu0 %v1746
      %v2413 = vpop.f32.mrf.mxu0
      %v2414 = vadd.f32 0.0, %v2413
      %v2415 = vpop.f32.mrf.mxu0
      %v2416 = vadd.f32 0.0, %v2415
      %2417 = vmatmul.bf16.gmra.mxu0 %v1749
      %v2418 = vpop.f32.mrf.mxu0
      %v2419 = vadd.f32 0.0, %v2418
      %v2420 = vpop.f32.mrf.mxu0
      %v2421 = vadd.f32 0.0, %v2420
      %2422 = vmatmul.bf16.gmra.mxu0 %v1752
      %v2423 = vpop.f32.mrf.mxu0
      %v2424 = vadd.f32 0.0, %v2423
      %v2425 = vpop.f32.mrf.mxu0
      %v2426 = vadd.f32 0.0, %v2425
      %2427 = vmatmul.bf16.gmra.mxu0 %v1755
      %v2428 = vpop.f32.mrf.mxu0
      %v2429 = vadd.f32 0.0, %v2428
      %v2430 = vpop.f32.mrf.mxu0
      %v2431 = vadd.f32 0.0, %v2430
      %2432 = vmatmul.bf16.gmra.mxu0 %v1758
      %v2433 = vpop.f32.mrf.mxu0
      %v2434 = vadd.f32 0.0, %v2433
      %v2435 = vpop.f32.mrf.mxu0
      %v2436 = vadd.f32 0.0, %v2435
      %2437 = vmatmul.bf16.gmra.mxu0 %v1761
      %v2438 = vpop.f32.mrf.mxu0
      %v2439 = vadd.f32 0.0, %v2438
      %v2440 = vpop.f32.mrf.mxu0
      %v2441 = vadd.f32 0.0, %v2440
      %2442 = vmatmul.bf16.gmra.mxu0 %v1764
      %v2443 = vpop.f32.mrf.mxu0
      %v2444 = vadd.f32 0.0, %v2443
      %v2445 = vpop.f32.mrf.mxu0
      %v2446 = vadd.f32 0.0, %v2445
      %2447 = vmatmul.bf16.gmra.mxu0 %v1767
      %v2448 = vpop.f32.mrf.mxu0
      %v2449 = vadd.f32 0.0, %v2448
      %v2450 = vpop.f32.mrf.mxu0
      %v2451 = vadd.f32 0.0, %v2450
      %2452 = vmatmul.bf16.gmra.mxu0 %v1770
      %v2453 = vpop.f32.mrf.mxu0
      %v2454 = vadd.f32 0.0, %v2453
      %v2455 = vpop.f32.mrf.mxu0
      %v2456 = vadd.f32 0.0, %v2455
      %2457 = vmatmul.bf16.gmra.mxu0 %v1773
      %v2458 = vpop.f32.mrf.mxu0
      %v2459 = vadd.f32 0.0, %v2458
      %v2460 = vpop.f32.mrf.mxu0
      %v2461 = vadd.f32 0.0, %v2460
      %2462 = vmatmul.bf16.gmra.mxu0 %v1776
      %v2463 = vpop.f32.mrf.mxu0
      %v2464 = vadd.f32 0.0, %v2463
      %v2465 = vpop.f32.mrf.mxu0
      %v2466 = vadd.f32 0.0, %v2465
      %2467 = vmatmul.bf16.gmra.mxu0 %v1779
      %v2468 = vpop.f32.mrf.mxu0
      %v2469 = vadd.f32 0.0, %v2468
      %v2470 = vpop.f32.mrf.mxu0
      %v2471 = vadd.f32 0.0, %v2470
      %2472 = vmatmul.bf16.gmra.mxu0 %v1782
      %v2473 = vpop.f32.mrf.mxu0
      %v2474 = vadd.f32 0.0, %v2473
      %v2475 = vpop.f32.mrf.mxu0
      %v2476 = vadd.f32 0.0, %v2475
      %2477 = vmatmul.bf16.gmra.mxu0 %v1785
      %v2478 = vpop.f32.mrf.mxu0
      %v2479 = vadd.f32 0.0, %v2478
      %v2480 = vpop.f32.mrf.mxu0
      %v2481 = vadd.f32 0.0, %v2480
      %2482 = vmatmul.bf16.gmra.mxu0 %v1788
      %v2483 = vpop.f32.mrf.mxu0
      %v2484 = vadd.f32 0.0, %v2483
      %v2485 = vpop.f32.mrf.mxu0
      %v2486 = vadd.f32 0.0, %v2485
      %2487 = vmatmul.bf16.gmra.mxu0 %v1791
      %v2488 = vpop.f32.mrf.mxu0
      %v2489 = vadd.f32 0.0, %v2488
      %v2490 = vpop.f32.mrf.mxu0
      %v2491 = vadd.f32 0.0, %v2490
      %2492 = vmatmul.bf16.gmra.mxu0 %v1794
      %v2493 = vpop.f32.mrf.mxu0
      %v2494 = vadd.f32 0.0, %v2493
      %v2495 = vpop.f32.mrf.mxu0
      %v2496 = vadd.f32 0.0, %v2495
      %2497 = vmatmul.bf16.gmra.mxu0 %v1797
      %v2498 = vpop.f32.mrf.mxu0
      %v2499 = vadd.f32 0.0, %v2498
      %v2500 = vpop.f32.mrf.mxu0
      %v2501 = vadd.f32 0.0, %v2500
      %2502 = vmatmul.bf16.gmra.mxu0 %v1800
      %v2503 = vpop.f32.mrf.mxu0
      %v2504 = vadd.f32 0.0, %v2503
      %v2505 = vpop.f32.mrf.mxu0
      %v2506 = vadd.f32 0.0, %v2505
      %2507 = vmatmul.bf16.gmra.mxu0 %v1803
      %v2508 = vpop.f32.mrf.mxu0
      %v2509 = vadd.f32 0.0, %v2508
      %v2510 = vpop.f32.mrf.mxu0
      %2511 = vdwg.mxu0
      %v2512 = vld [vmem:[#allocation2] sm:$0xff]
      %v2513 = vld [vmem:[#allocation2 + $0x8] sm:$0xff]
      %v2514 = vld [vmem:[#allocation2 + $0x10] sm:$0xff]
      %v2515 = vld [vmem:[#allocation2 + $0x18] sm:$0xff]
      %v2516 = vld [vmem:[#allocation2 + $0x20] sm:$0xff]
      %v2517 = vld [vmem:[#allocation2 + $0x28] sm:$0xff]
      %v2518 = vld [vmem:[#allocation2 + $0x30] sm:$0xff]
      %v2519 = vld [vmem:[#allocation2 + $0x38] sm:$0xff]
      %v2520 = vld [vmem:[#allocation2 + $0x40] sm:$0xff]
      %v2521 = vld [vmem:[#allocation2 + $0x48] sm:$0xff]
      %v2522 = vld [vmem:[#allocation2 + $0x50] sm:$0xff]
      %v2523 = vld [vmem:[#allocation2 + $0x58] sm:$0xff]
      %v2524 = vld [vmem:[#allocation2 + $0x60] sm:$0xff]
      %v2525 = vld [vmem:[#allocation2 + $0x68] sm:$0xff]
      %v2526 = vld [vmem:[#allocation2 + $0x70] sm:$0xff]
      %v2527 = vld [vmem:[#allocation2 + $0x78] sm:$0xff]
      %v2528 = vld [vmem:[#allocation2 + $0x80] sm:$0xff]
      %v2529 = vld [vmem:[#allocation2 + $0x88] sm:$0xff]
      %v2530 = vld [vmem:[#allocation2 + $0x90] sm:$0xff]
      %v2531 = vld [vmem:[#allocation2 + $0x98] sm:$0xff]
      %v2532 = vld [vmem:[#allocation2 + $0xa0] sm:$0xff]
      %v2533 = vld [vmem:[#allocation2 + $0xa8] sm:$0xff]
      %v2534 = vld [vmem:[#allocation2 + $0xb0] sm:$0xff]
      %v2535 = vld [vmem:[#allocation2 + $0xb8] sm:$0xff]
      %v2536 = vld [vmem:[#allocation2 + $0xc0] sm:$0xff]
      %v2537 = vld [vmem:[#allocation2 + $0xc8] sm:$0xff]
      %v2538 = vld [vmem:[#allocation2 + $0xd0] sm:$0xff]
      %v2539 = vld [vmem:[#allocation2 + $0xd8] sm:$0xff]
      %v2540 = vld [vmem:[#allocation2 + $0xe0] sm:$0xff]
      %v2541 = vld [vmem:[#allocation2 + $0xe8] sm:$0xff]
      %v2542 = vld [vmem:[#allocation2 + $0xf0] sm:$0xff]
      %v2543 = vld [vmem:[#allocation2 + $0xf8] sm:$0xff]
      %v2544 = vld [vmem:[#allocation2 + $0x100] sm:$0xff]
      %v2545 = vld [vmem:[#allocation2 + $0x108] sm:$0xff]
      %v2546 = vld [vmem:[#allocation2 + $0x110] sm:$0xff]
      %v2547 = vld [vmem:[#allocation2 + $0x118] sm:$0xff]
      %v2548 = vld [vmem:[#allocation2 + $0x120] sm:$0xff]
      %v2549 = vld [vmem:[#allocation2 + $0x128] sm:$0xff]
      %v2550 = vld [vmem:[#allocation2 + $0x130] sm:$0xff]
      %v2551 = vld [vmem:[#allocation2 + $0x138] sm:$0xff]
      %v2552 = vld [vmem:[#allocation2 + $0x140] sm:$0xff]
      %v2553 = vrot.slane %v2409, 4
      %v2554 = vrot.slane %v2411, 4
      %v2555 = vrot.slane %v2414, 4
      %v2556 = vrot.slane %v2416, 4
      %v2557 = vrot.slane %v2419, 4
      %v2558 = vrot.slane %v2421, 4
      %v2559 = vrot.slane %v2424, 4
      %v2560 = vrot.slane %v2426, 4
      %v2561 = vrot.slane %v2429, 4
      %v2562 = vrot.slane %v2431, 4
      %v2563 = vrot.slane %v2434, 4
      %v2564 = vrot.slane %v2436, 4
      %v2565 = vrot.slane %v2439, 4
      %v2566 = vrot.slane %v2441, 4
      %v2567 = vrot.slane %v2444, 4
      %v2568 = vrot.slane %v2446, 4
      %v2569 = vrot.slane %v2449, 4
      %v2570 = vrot.slane %v2451, 4
      %v2571 = vrot.slane %v2454, 4
      %v2572 = vrot.slane %v2456, 4
      %v2573 = vrot.slane %v2459, 4
      %v2574 = vrot.slane %v2461, 4
      %v2575 = vrot.slane %v2464, 4
      %v2576 = vrot.slane %v2466, 4
      %v2577 = vrot.slane %v2469, 4
      %v2578 = vrot.slane %v2471, 4
      %v2579 = vrot.slane %v2474, 4
      %v2580 = vrot.slane %v2476, 4
      %v2581 = vrot.slane %v2479, 4
      %v2582 = vrot.slane %v2481, 4
      %v2583 = vrot.slane %v2484, 4
      %v2584 = vrot.slane %v2486, 4
      %v2585 = vrot.slane %v2489, 4
      %v2586 = vrot.slane %v2491, 4
      %v2587 = vrot.slane %v2494, 4
      %v2588 = vrot.slane %v2496, 4
      %v2589 = vrot.slane %v2499, 4
      %v2590 = vrot.slane %v2501, 4
      %v2591 = vrot.slane %v2504, 4
      %v2592 = vrot.slane %v2506, 4
      %v2593 = vrot.slane %v2509, 4
      %vm2594 = vcmp.lt.s32.totalorder %v1167, 4
      %v2595 = vsel %vm2594, %v2592, %v2593
      %v2596 = vsel %vm2594, %v2591, %v2592
      %v2597 = vsel %vm2594, %v2590, %v2591
      %v2598 = vsel %vm2594, %v2589, %v2590
      %v2599 = vsel %vm2594, %v2588, %v2589
      %v2600 = vsel %vm2594, %v2587, %v2588
      %v2601 = vsel %vm2594, %v2586, %v2587
      %v2602 = vsel %vm2594, %v2585, %v2586
      %v2603 = vsel %vm2594, %v2584, %v2585
      %v2604 = vsel %vm2594, %v2583, %v2584
      %v2605 = vsel %vm2594, %v2582, %v2583
      %v2606 = vsel %vm2594, %v2581, %v2582
      %v2607 = vsel %vm2594, %v2580, %v2581
      %v2608 = vsel %vm2594, %v2579, %v2580
      %v2609 = vsel %vm2594, %v2578, %v2579
      %v2610 = vsel %vm2594, %v2577, %v2578
      %v2611 = vsel %vm2594, %v2576, %v2577
      %v2612 = vsel %vm2594, %v2575, %v2576
      %v2613 = vsel %vm2594, %v2574, %v2575
      %v2614 = vsel %vm2594, %v2573, %v2574
      %v2615 = vsel %vm2594, %v2572, %v2573
      %v2616 = vsel %vm2594, %v2571, %v2572
      %v2617 = vsel %vm2594, %v2570, %v2571
      %v2618 = vsel %vm2594, %v2569, %v2570
      %v2619 = vsel %vm2594, %v2568, %v2569
      %v2620 = vsel %vm2594, %v2567, %v2568
      %v2621 = vsel %vm2594, %v2566, %v2567
      %v2622 = vsel %vm2594, %v2565, %v2566
      %v2623 = vsel %vm2594, %v2564, %v2565
      %v2624 = vsel %vm2594, %v2563, %v2564
      %v2625 = vsel %vm2594, %v2562, %v2563
      %v2626 = vsel %vm2594, %v2561, %v2562
      %v2627 = vsel %vm2594, %v2560, %v2561
      %v2628 = vsel %vm2594, %v2559, %v2560
      %v2629 = vsel %vm2594, %v2558, %v2559
      %v2630 = vsel %vm2594, %v2557, %v2558
      %v2631 = vsel %vm2594, %v2556, %v2557
      %v2632 = vsel %vm2594, %v2555, %v2556
      %v2633 = vsel %vm2594, %v2554, %v2555
      %v2634 = vsel %vm2594, %v2553, %v2554
      %v2635 = vsel %vm2594, %v2593, %v2553
      %v2636 = vadd.f32 %v2512, %v2630
      %v2637 = vadd.f32 %v2513, %v2629
      %v2638 = vadd.f32 %v2514, %v2628
      %v2639 = vadd.f32 %v2515, %v2627
      %v2640 = vadd.f32 %v2516, %v2626
      %v2641 = vadd.f32 %v2517, %v2625
      %v2642 = vadd.f32 %v2518, %v2624
      %v2643 = vadd.f32 %v2519, %v2623
      %v2644 = vadd.f32 %v2520, %v2622
      %v2645 = vadd.f32 %v2521, %v2621
      %v2646 = vadd.f32 %v2522, %v2620
      %v2647 = vadd.f32 %v2523, %v2619
      %v2648 = vadd.f32 %v2524, %v2618
      %v2649 = vadd.f32 %v2525, %v2617
      %v2650 = vadd.f32 %v2526, %v2616
      %v2651 = vadd.f32 %v2527, %v2615
      %v2652 = vadd.f32 %v2528, %v2614
      %v2653 = vadd.f32 %v2529, %v2613
      %v2654 = vadd.f32 %v2530, %v2612
      %v2655 = vadd.f32 %v2531, %v2611
      %v2656 = vadd.f32 %v2532, %v2610
      %v2657 = vadd.f32 %v2533, %v2609
      %v2658 = vadd.f32 %v2534, %v2608
      %v2659 = vadd.f32 %v2535, %v2607
      %v2660 = vadd.f32 %v2536, %v2606
      %v2661 = vadd.f32 %v2537, %v2605
      %v2662 = vadd.f32 %v2538, %v2604
      %v2663 = vadd.f32 %v2539, %v2603
      %v2664 = vadd.f32 %v2540, %v2602
      %v2665 = vadd.f32 %v2541, %v2601
      %v2666 = vadd.f32 %v2542, %v2600
      %v2667 = vadd.f32 %v2543, %v2599
      %v2668 = vadd.f32 %v2544, %v2598
      %v2669 = vadd.f32 %v2545, %v2597
      %v2670 = vadd.f32 %v2546, %v2596
      %v2671 = vadd.f32 %v2547, %v2595
      %v2672 = vadd.f32 %v2548, %v2635
      %v2673 = vadd.f32 %v2549, %v2634
      %v2674 = vadd.f32 %v2550, %v2633
      %v2675 = vadd.f32 %v2551, %v2632
      %v2676 = vadd.f32 %v2552, %v2631
      %2677 = vst.msk [vmem:[#allocation2] sm:$0xff] %vm1083, %v2636
      %2678 = vst.msk [vmem:[#allocation2 + $0x8] sm:$0xff] %vm1083, %v2637
      %2679 = vst.msk [vmem:[#allocation2 + $0x10] sm:$0xff] %vm1083, %v2638
      %2680 = vst.msk [vmem:[#allocation2 + $0x18] sm:$0xff] %vm1083, %v2639
      %2681 = vst.msk [vmem:[#allocation2 + $0x20] sm:$0xff] %vm1083, %v2640
      %2682 = vst.msk [vmem:[#allocation2 + $0x28] sm:$0xff] %vm1083, %v2641
      %2683 = vst.msk [vmem:[#allocation2 + $0x30] sm:$0xff] %vm1083, %v2642
      %2684 = vst.msk [vmem:[#allocation2 + $0x38] sm:$0xff] %vm1083, %v2643
      %2685 = vst.msk [vmem:[#allocation2 + $0x40] sm:$0xff] %vm1083, %v2644
      %2686 = vst.msk [vmem:[#allocation2 + $0x48] sm:$0xff] %vm1083, %v2645
      %2687 = vst.msk [vmem:[#allocation2 + $0x50] sm:$0xff] %vm1083, %v2646
      %2688 = vst.msk [vmem:[#allocation2 + $0x58] sm:$0xff] %vm1083, %v2647
      %2689 = vst.msk [vmem:[#allocation2 + $0x60] sm:$0xff] %vm1083, %v2648
      %2690 = vst.msk [vmem:[#allocation2 + $0x68] sm:$0xff] %vm1083, %v2649
      %2691 = vst.msk [vmem:[#allocation2 + $0x70] sm:$0xff] %vm1083, %v2650
      %2692 = vst.msk [vmem:[#allocation2 + $0x78] sm:$0xff] %vm1083, %v2651
      %2693 = vst.msk [vmem:[#allocation2 + $0x80] sm:$0xff] %vm1083, %v2652
      %2694 = vst.msk [vmem:[#allocation2 + $0x88] sm:$0xff] %vm1083, %v2653
      %2695 = vst.msk [vmem:[#allocation2 + $0x90] sm:$0xff] %vm1083, %v2654
      %2696 = vst.msk [vmem:[#allocation2 + $0x98] sm:$0xff] %vm1083, %v2655
      %2697 = vst.msk [vmem:[#allocation2 + $0xa0] sm:$0xff] %vm1083, %v2656
      %2698 = vst.msk [vmem:[#allocation2 + $0xa8] sm:$0xff] %vm1083, %v2657
      %2699 = vst.msk [vmem:[#allocation2 + $0xb0] sm:$0xff] %vm1083, %v2658
      %2700 = vst.msk [vmem:[#allocation2 + $0xb8] sm:$0xff] %vm1083, %v2659
      %2701 = vst.msk [vmem:[#allocation2 + $0xc0] sm:$0xff] %vm1083, %v2660
      %2702 = vst.msk [vmem:[#allocation2 + $0xc8] sm:$0xff] %vm1083, %v2661
      %2703 = vst.msk [vmem:[#allocation2 + $0xd0] sm:$0xff] %vm1083, %v2662
      %2704 = vst.msk [vmem:[#allocation2 + $0xd8] sm:$0xff] %vm1083, %v2663
      %2705 = vst.msk [vmem:[#allocation2 + $0xe0] sm:$0xff] %vm1083, %v2664
      %2706 = vst.msk [vmem:[#allocation2 + $0xe8] sm:$0xff] %vm1083, %v2665
      %2707 = vst.msk [vmem:[#allocation2 + $0xf0] sm:$0xff] %vm1083, %v2666
      %2708 = vst.msk [vmem:[#allocation2 + $0xf8] sm:$0xff] %vm1083, %v2667
      %2709 = vst.msk [vmem:[#allocation2 + $0x100] sm:$0xff] %vm1083, %v2668
      %2710 = vst.msk [vmem:[#allocation2 + $0x108] sm:$0xff] %vm1083, %v2669
      %2711 = vst.msk [vmem:[#allocation2 + $0x110] sm:$0xff] %vm1083, %v2670
      %2712 = vst.msk [vmem:[#allocation2 + $0x118] sm:$0xff] %vm1083, %v2671
      %2713 = vst.msk [vmem:[#allocation2 + $0x120] sm:$0xff] %vm1083, %v2672
      %2714 = vst.msk [vmem:[#allocation2 + $0x128] sm:$0xff] %vm1083, %v2673
      %2715 = vst.msk [vmem:[#allocation2 + $0x130] sm:$0xff] %vm1083, %v2674
      %2716 = vst.msk [vmem:[#allocation2 + $0x138] sm:$0xff] %vm1083, %v2675
      %2717 = vst.msk [vmem:[#allocation2 + $0x140] sm:$0xff] %vm1083, %v2676
      %p2718 = scmp.eq.s32.totalorder %s25, 2
      // Predicated region
      $region41: #{_lambda_.14} parent=35 // pred_check
        %p2719 = pneg %p2718
      $region42: #{_lambda_.14} parent=35 // pred_check_branch
        %2721 = sbr.rel (%p2719) target = $region44
      $region43: #{_lambda_.14} parent=35 // pred_region
        %v2722 = vld [vmem:[#allocation2] sm:$0xff]
        %v2723 = vld [vmem:[#allocation2 + $0x8] sm:$0xff]
        %2724 = vst.msk [vmem:[%s406] sm:$0xff] %vm1083, %v2722
        %2725 = vst.msk [vmem:[%s406 + $0x8] sm:$0xff] %vm1083, %v2723
        %v2726 = vld [vmem:[#allocation2 + $0x12] sm:$0xff]
        %v2727 = vld [vmem:[#allocation2 + $0x1a] sm:$0xff]
        %2728 = vst.msk [vmem:[%s406 + $0x10] sm:$0xff] %vm1083, %v2726
        %2729 = vst.msk [vmem:[%s406 + $0x18] sm:$0xff] %vm1083, %v2727
        %v2730 = vld [vmem:[#allocation2 + $0x24] sm:$0xff]
        %v2731 = vld [vmem:[#allocation2 + $0x2c] sm:$0xff]
        %2732 = vst.msk [vmem:[%s406 + $0x20] sm:$0xff] %vm1083, %v2730
        %2733 = vst.msk [vmem:[%s406 + $0x28] sm:$0xff] %vm1083, %v2731
        %v2734 = vld [vmem:[#allocation2 + $0x36] sm:$0xff]
        %v2735 = vld [vmem:[#allocation2 + $0x3e] sm:$0xff]
        %2736 = vst.msk [vmem:[%s406 + $0x30] sm:$0xff] %vm1083, %v2734
        %2737 = vst.msk [vmem:[%s406 + $0x38] sm:$0xff] %vm1083, %v2735
        %v2738 = vld [vmem:[#allocation2 + $0x48] sm:$0xff]
        %v2739 = vld [vmem:[#allocation2 + $0x50] sm:$0xff]
        %2740 = vst.msk [vmem:[%s406 + $0x40] sm:$0xff] %vm1083, %v2738
        %2741 = vst.msk [vmem:[%s406 + $0x48] sm:$0xff] %vm1083, %v2739
        %v2742 = vld [vmem:[#allocation2 + $0x5a] sm:$0xff]
        %v2743 = vld [vmem:[#allocation2 + $0x62] sm:$0xff]
        %2744 = vst.msk [vmem:[%s406 + $0x50] sm:$0xff] %vm1083, %v2742
        %2745 = vst.msk [vmem:[%s406 + $0x58] sm:$0xff] %vm1083, %v2743
        %v2746 = vld [vmem:[#allocation2 + $0x6c] sm:$0xff]
        %v2747 = vld [vmem:[#allocation2 + $0x74] sm:$0xff]
        %2748 = vst.msk [vmem:[%s406 + $0x60] sm:$0xff] %vm1083, %v2746
        %2749 = vst.msk [vmem:[%s406 + $0x68] sm:$0xff] %vm1083, %v2747
        %v2750 = vld [vmem:[#allocation2 + $0x7e] sm:$0xff]
        %v2751 = vld [vmem:[#allocation2 + $0x86] sm:$0xff]
        %2752 = vst.msk [vmem:[%s406 + $0x70] sm:$0xff] %vm1083, %v2750
        %2753 = vst.msk [vmem:[%s406 + $0x78] sm:$0xff] %vm1083, %v2751
        %v2754 = vld [vmem:[#allocation2 + $0x90] sm:$0xff]
        %v2755 = vld [vmem:[#allocation2 + $0x98] sm:$0xff]
        %2756 = vst.msk [vmem:[%s406 + $0x80] sm:$0xff] %vm1083, %v2754
        %2757 = vst.msk [vmem:[%s406 + $0x88] sm:$0xff] %vm1083, %v2755
        %v2758 = vld [vmem:[#allocation2 + $0xa2] sm:$0xff]
        %v2759 = vld [vmem:[#allocation2 + $0xaa] sm:$0xff]
        %2760 = vst.msk [vmem:[%s406 + $0x90] sm:$0xff] %vm1083, %v2758
        %2761 = vst.msk [vmem:[%s406 + $0x98] sm:$0xff] %vm1083, %v2759
        %v2762 = vld [vmem:[#allocation2 + $0xb4] sm:$0xff]
        %v2763 = vld [vmem:[#allocation2 + $0xbc] sm:$0xff]
        %2764 = vst.msk [vmem:[%s406 + $0xa0] sm:$0xff] %vm1083, %v2762
        %2765 = vst.msk [vmem:[%s406 + $0xa8] sm:$0xff] %vm1083, %v2763
        %v2766 = vld [vmem:[#allocation2 + $0xc6] sm:$0xff]
        %v2767 = vld [vmem:[#allocation2 + $0xce] sm:$0xff]
        %2768 = vst.msk [vmem:[%s406 + $0xb0] sm:$0xff] %vm1083, %v2766
        %2769 = vst.msk [vmem:[%s406 + $0xb8] sm:$0xff] %vm1083, %v2767
        %v2770 = vld [vmem:[#allocation2 + $0xd8] sm:$0xff]
        %v2771 = vld [vmem:[#allocation2 + $0xe0] sm:$0xff]
        %2772 = vst.msk [vmem:[%s406 + $0xc0] sm:$0xff] %vm1083, %v2770
        %2773 = vst.msk [vmem:[%s406 + $0xc8] sm:$0xff] %vm1083, %v2771
        %v2774 = vld [vmem:[#allocation2 + $0xea] sm:$0xff]
        %v2775 = vld [vmem:[#allocation2 + $0xf2] sm:$0xff]
        %2776 = vst.msk [vmem:[%s406 + $0xd0] sm:$0xff] %vm1083, %v2774
        %2777 = vst.msk [vmem:[%s406 + $0xd8] sm:$0xff] %vm1083, %v2775
        %v2778 = vld [vmem:[#allocation2 + $0xfc] sm:$0xff]
        %v2779 = vld [vmem:[#allocation2 + $0x104] sm:$0xff]
        %2780 = vst.msk [vmem:[%s406 + $0xe0] sm:$0xff] %vm1083, %v2778
        %2781 = vst.msk [vmem:[%s406 + $0xe8] sm:$0xff] %vm1083, %v2779
        %v2782 = vld [vmem:[#allocation2 + $0x10e] sm:$0xff]
        %v2783 = vld [vmem:[#allocation2 + $0x116] sm:$0xff]
        %2784 = vst.msk [vmem:[%s406 + $0xf0] sm:$0xff] %vm1083, %v2782
        %2785 = vst.msk [vmem:[%s406 + $0xf8] sm:$0xff] %vm1083, %v2783
        %v2786 = vld [vmem:[%s406] sm:$0xff]
        %v2787 = vld [vmem:[%s406 + $0x8] sm:$0xff]
        %v2788 = vld [vmem:[%s406 + $0x10] sm:$0xff]
        %v2789 = vld [vmem:[%s406 + $0x18] sm:$0xff]
        %v2790 = vld [vmem:[%s406 + $0x20] sm:$0xff]
        %v2791 = vld [vmem:[%s406 + $0x28] sm:$0xff]
        %v2792 = vld [vmem:[%s406 + $0x30] sm:$0xff]
        %v2793 = vld [vmem:[%s406 + $0x38] sm:$0xff]
        %v2794 = vld [vmem:[%s406 + $0x40] sm:$0xff]
        %v2795 = vld [vmem:[%s406 + $0x48] sm:$0xff]
        %v2796 = vld [vmem:[%s406 + $0x50] sm:$0xff]
        %v2797 = vld [vmem:[%s406 + $0x58] sm:$0xff]
        %v2798 = vld [vmem:[%s406 + $0x60] sm:$0xff]
        %v2799 = vld [vmem:[%s406 + $0x68] sm:$0xff]
        %v2800 = vld [vmem:[%s406 + $0x70] sm:$0xff]
        %v2801 = vld [vmem:[%s406 + $0x78] sm:$0xff]
        %v2802 = vld [vmem:[%s406 + $0x80] sm:$0xff]
        %v2803 = vld [vmem:[%s406 + $0x88] sm:$0xff]
        %v2804 = vld [vmem:[%s406 + $0x90] sm:$0xff]
        %v2805 = vld [vmem:[%s406 + $0x98] sm:$0xff]
        %v2806 = vld [vmem:[%s406 + $0xa0] sm:$0xff]
        %v2807 = vld [vmem:[%s406 + $0xa8] sm:$0xff]
        %v2808 = vld [vmem:[%s406 + $0xb0] sm:$0xff]
        %v2809 = vld [vmem:[%s406 + $0xb8] sm:$0xff]
        %v2810 = vld [vmem:[%s406 + $0xc0] sm:$0xff]
        %v2811 = vld [vmem:[%s406 + $0xc8] sm:$0xff]
        %v2812 = vld [vmem:[%s406 + $0xd0] sm:$0xff]
        %v2813 = vld [vmem:[%s406 + $0xd8] sm:$0xff]
        %v2814 = vld [vmem:[%s406 + $0xe0] sm:$0xff]
        %v2815 = vld [vmem:[%s406 + $0xe8] sm:$0xff]
        %v2816 = vld [vmem:[%s406 + $0xf0] sm:$0xff]
        %v2817 = vld [vmem:[%s406 + $0xf8] sm:$0xff]
        %v2818 = vsel %vm1083, %v2786, 0.0
        %v2819 = vsel %vm1083, %v2787, 0.0
        %v2820 = vadd.f32 %v2818, %v2819
        %v2821 = vsel %vm1083, %v2788, 0.0
        %v2822 = vadd.f32 %v2820, %v2821
        %v2823 = vsel %vm1083, %v2789, 0.0
        %v2824 = vadd.f32 %v2822, %v2823
        %v2825 = vsel %vm1083, %v2790, 0.0
        %v2826 = vadd.f32 %v2824, %v2825
        %v2827 = vsel %vm1083, %v2791, 0.0
        %v2828 = vadd.f32 %v2826, %v2827
        %v2829 = vsel %vm1083, %v2792, 0.0
        %v2830 = vadd.f32 %v2828, %v2829
        %v2831 = vsel %vm1083, %v2793, 0.0
        %v2832 = vadd.f32 %v2830, %v2831
        %v2833 = vsel %vm1083, %v2794, 0.0
        %v2834 = vadd.f32 %v2832, %v2833
        %v2835 = vsel %vm1083, %v2795, 0.0
        %v2836 = vadd.f32 %v2834, %v2835
        %v2837 = vsel %vm1083, %v2796, 0.0
        %v2838 = vadd.f32 %v2836, %v2837
        %v2839 = vsel %vm1083, %v2797, 0.0
        %v2840 = vadd.f32 %v2838, %v2839
        %v2841 = vsel %vm1083, %v2798, 0.0
        %v2842 = vadd.f32 %v2840, %v2841
        %v2843 = vsel %vm1083, %v2799, 0.0
        %v2844 = vadd.f32 %v2842, %v2843
        %v2845 = vsel %vm1083, %v2800, 0.0
        %v2846 = vadd.f32 %v2844, %v2845
        %v2847 = vsel %vm1083, %v2801, 0.0
        %v2848 = vadd.f32 %v2846, %v2847
        %v2849 = vsel %vm1083, %v2802, 0.0
        %v2850 = vadd.f32 %v2848, %v2849
        %v2851 = vsel %vm1083, %v2803, 0.0
        %v2852 = vadd.f32 %v2850, %v2851
        %v2853 = vsel %vm1083, %v2804, 0.0
        %v2854 = vadd.f32 %v2852, %v2853
        %v2855 = vsel %vm1083, %v2805, 0.0
        %v2856 = vadd.f32 %v2854, %v2855
        %v2857 = vsel %vm1083, %v2806, 0.0
        %v2858 = vadd.f32 %v2856, %v2857
        %v2859 = vsel %vm1083, %v2807, 0.0
        %v2860 = vadd.f32 %v2858, %v2859
        %v2861 = vsel %vm1083, %v2808, 0.0
        %v2862 = vadd.f32 %v2860, %v2861
        %v2863 = vsel %vm1083, %v2809, 0.0
        %v2864 = vadd.f32 %v2862, %v2863
        %v2865 = vsel %vm1083, %v2810, 0.0
        %v2866 = vadd.f32 %v2864, %v2865
        %v2867 = vsel %vm1083, %v2811, 0.0
        %v2868 = vadd.f32 %v2866, %v2867
        %v2869 = vsel %vm1083, %v2812, 0.0
        %v2870 = vadd.f32 %v2868, %v2869
        %v2871 = vsel %vm1083, %v2813, 0.0
        %v2872 = vadd.f32 %v2870, %v2871
        %v2873 = vsel %vm1083, %v2814, 0.0
        %v2874 = vadd.f32 %v2872, %v2873
        %v2875 = vsel %vm1083, %v2815, 0.0
        %v2876 = vadd.f32 %v2874, %v2875
        %v2877 = vsel %vm1083, %v2816, 0.0
        %v2878 = vadd.f32 %v2876, %v2877
        %v2879 = vsel %vm1083, %v2817, 0.0
        %v2880 = vadd.f32 %v2878, %v2879
        %v2881 = vrot.slane %v2880, 4
        %v2882 = vadd.f32 %v2880, %v2881
        %v2883 = vrot.slane %v2882, 2
        %v2884 = vadd.f32 %v2882, %v2883
        %v2885 = vrot.slane %v2884, 1
        %v2886 = vadd.f32 %v2884, %v2885
        %vm2887 = vcmask 24576
        %2888 = vst.msk [vmem:[%s413] sm:$0x1] %vm2887, %v2886
        %v2889 = vmul.f32 %v2786, %v2786
        %v2890 = vmul.f32 %v2787, %v2787
        %v2891 = vmul.f32 %v2788, %v2788
        %v2892 = vmul.f32 %v2789, %v2789
        %v2893 = vmul.f32 %v2790, %v2790
        %v2894 = vmul.f32 %v2791, %v2791
        %v2895 = vmul.f32 %v2792, %v2792
        %v2896 = vmul.f32 %v2793, %v2793
        %v2897 = vmul.f32 %v2794, %v2794
        %v2898 = vmul.f32 %v2795, %v2795
        %v2899 = vmul.f32 %v2796, %v2796
        %v2900 = vmul.f32 %v2797, %v2797
        %v2901 = vmul.f32 %v2798, %v2798
        %v2902 = vmul.f32 %v2799, %v2799
        %v2903 = vmul.f32 %v2800, %v2800
        %v2904 = vmul.f32 %v2801, %v2801
        %v2905 = vmul.f32 %v2802, %v2802
        %v2906 = vmul.f32 %v2803, %v2803
        %v2907 = vmul.f32 %v2804, %v2804
        %v2908 = vmul.f32 %v2805, %v2805
        %v2909 = vmul.f32 %v2806, %v2806
        %v2910 = vmul.f32 %v2807, %v2807
        %v2911 = vmul.f32 %v2808, %v2808
        %v2912 = vmul.f32 %v2809, %v2809
        %v2913 = vmul.f32 %v2810, %v2810
        %v2914 = vmul.f32 %v2811, %v2811
        %v2915 = vmul.f32 %v2812, %v2812
        %v2916 = vmul.f32 %v2813, %v2813
        %v2917 = vmul.f32 %v2814, %v2814
        %v2918 = vmul.f32 %v2815, %v2815
        %v2919 = vmul.f32 %v2816, %v2816
        %v2920 = vmul.f32 %v2817, %v2817
        %v2921 = vsel %vm1083, %v2889, 0.0
        %v2922 = vsel %vm1083, %v2890, 0.0
        %v2923 = vadd.f32 %v2921, %v2922
        %v2924 = vsel %vm1083, %v2891, 0.0
        %v2925 = vadd.f32 %v2923, %v2924
        %v2926 = vsel %vm1083, %v2892, 0.0
        %v2927 = vadd.f32 %v2925, %v2926
        %v2928 = vsel %vm1083, %v2893, 0.0
        %v2929 = vadd.f32 %v2927, %v2928
        %v2930 = vsel %vm1083, %v2894, 0.0
        %v2931 = vadd.f32 %v2929, %v2930
        %v2932 = vsel %vm1083, %v2895, 0.0
        %v2933 = vadd.f32 %v2931, %v2932
        %v2934 = vsel %vm1083, %v2896, 0.0
        %v2935 = vadd.f32 %v2933, %v2934
        %v2936 = vsel %vm1083, %v2897, 0.0
        %v2937 = vadd.f32 %v2935, %v2936
        %v2938 = vsel %vm1083, %v2898, 0.0
        %v2939 = vadd.f32 %v2937, %v2938
        %v2940 = vsel %vm1083, %v2899, 0.0
        %v2941 = vadd.f32 %v2939, %v2940
        %v2942 = vsel %vm1083, %v2900, 0.0
        %v2943 = vadd.f32 %v2941, %v2942
        %v2944 = vsel %vm1083, %v2901, 0.0
        %v2945 = vadd.f32 %v2943, %v2944
        %v2946 = vsel %vm1083, %v2902, 0.0
        %v2947 = vadd.f32 %v2945, %v2946
        %v2948 = vsel %vm1083, %v2903, 0.0
        %v2949 = vadd.f32 %v2947, %v2948
        %v2950 = vsel %vm1083, %v2904, 0.0
        %v2951 = vadd.f32 %v2949, %v2950
        %v2952 = vsel %vm1083, %v2905, 0.0
        %v2953 = vadd.f32 %v2951, %v2952
        %v2954 = vsel %vm1083, %v2906, 0.0
        %v2955 = vadd.f32 %v2953, %v2954
        %v2956 = vsel %vm1083, %v2907, 0.0
        %v2957 = vadd.f32 %v2955, %v2956
        %v2958 = vsel %vm1083, %v2908, 0.0
        %v2959 = vadd.f32 %v2957, %v2958
        %v2960 = vsel %vm1083, %v2909, 0.0
        %v2961 = vadd.f32 %v2959, %v2960
        %v2962 = vsel %vm1083, %v2910, 0.0
        %v2963 = vadd.f32 %v2961, %v2962
        %v2964 = vsel %vm1083, %v2911, 0.0
        %v2965 = vadd.f32 %v2963, %v2964
        %v2966 = vsel %vm1083, %v2912, 0.0
        %v2967 = vadd.f32 %v2965, %v2966
        %v2968 = vsel %vm1083, %v2913, 0.0
        %v2969 = vadd.f32 %v2967, %v2968
        %v2970 = vsel %vm1083, %v2914, 0.0
        %v2971 = vadd.f32 %v2969, %v2970
        %v2972 = vsel %vm1083, %v2915, 0.0
        %v2973 = vadd.f32 %v2971, %v2972
        %v2974 = vsel %vm1083, %v2916, 0.0
        %v2975 = vadd.f32 %v2973, %v2974
        %v2976 = vsel %vm1083, %v2917, 0.0
        %v2977 = vadd.f32 %v2975, %v2976
        %v2978 = vsel %vm1083, %v2918, 0.0
        %v2979 = vadd.f32 %v2977, %v2978
        %v2980 = vsel %vm1083, %v2919, 0.0
        %v2981 = vadd.f32 %v2979, %v2980
        %v2982 = vsel %vm1083, %v2920, 0.0
        %v2983 = vadd.f32 %v2981, %v2982
        %v2984 = vrot.slane %v2983, 4
        %v2985 = vadd.f32 %v2983, %v2984
        %v2986 = vrot.slane %v2985, 2
        %v2987 = vadd.f32 %v2985, %v2986
        %v2988 = vrot.slane %v2987, 1
        %v2989 = vadd.f32 %v2987, %v2988
        %2990 = vst.msk [vmem:[%s420] sm:$0x1] %vm2887, %v2989
      $region44: #{_lambda_.14} parent=35 // pred_fallthru
        _
      %p2991 = scmp.lt.s32.totalorder %s23, 0
      %s2992 = scalar_select %p2991, %s23, 0
      %p2993 = scmp.lt.s32.totalorder %s24, 7
      %s2994 = scalar_select %p2993, %s24, 7
      %s2995 = smul.addr %s2994, 32
      %s2996 = smul.addr %s2992, 256
      %s2997 = sadd.s32 %s2995, %s2996
      %s2998 = smul.addr %s2997, 8
      %s2999 = scalar_lea.vmem %s4, %s2998
      %p3000 = scmp.lt.s32.totalorder %s23, 0
      %s3001 = scalar_select %p3000, %s23, 0
      %p3002 = scmp.lt.s32.totalorder %s24, 7
      %s3003 = scalar_select %p3002, %s24, 7
      %s3004 = smul.addr %s3001, 8
      %s3005 = sadd.s32 %s3003, %s3004
      %s3006 = scalar_lea.vmem %s5, %s3005
      %p3007 = scmp.lt.s32.totalorder %s23, 0
      %s3008 = scalar_select %p3007, %s23, 0
      %p3009 = scmp.lt.s32.totalorder %s24, 7
      %s3010 = scalar_select %p3009, %s24, 7
      %s3011 = smul.addr %s3008, 8
      %s3012 = sadd.s32 %s3010, %s3011
      %s3013 = scalar_lea.vmem %s6, %s3012
      // Predicated region
      $region45: #{_lambda_.14} parent=35 // pred_check
        %p3014 = pneg %p168
      $region46: #{_lambda_.14} parent=35 // pred_check_branch
        %3016 = sbr.rel (%p3014) target = $region48
      $region47: #{_lambda_.14} parent=35 // pred_region
        _
      $region48: #{_lambda_.14} parent=35 // pred_fallthru
        _
      // Predicated region
      $region49: #{_lambda_.14} parent=35 // pred_check
        %p3017 = pneg %p196
      $region50: #{_lambda_.14} parent=35 // pred_check_branch
        %3019 = sbr.rel (%p3017) target = $region52
      $region51: #{_lambda_.14} parent=35 // pred_region
        _
      $region52: #{_lambda_.14} parent=35 // pred_fallthru
        _
      // Predicated region
      $region53: #{_lambda_.14} parent=35 // pred_check
        %p3020 = pneg %p224
      $region54: #{_lambda_.14} parent=35 // pred_check_branch
        %3022 = sbr.rel (%p3020) target = $region56
      $region55: #{_lambda_.14} parent=35 // pred_region
        _
      $region56: #{_lambda_.14} parent=35 // pred_fallthru
        _
    $region36: #{_lambda_.14} parent=5 // pred_fallthru
      _
    %p3023 = scmp.le.s32.totalorder 2, %s13
    // Predicated region
    $region57: #{_lambda_.14} parent=5 // pred_check
      %p3024 = pneg %p3023
    $region58: #{_lambda_.14} parent=5 // pred_check_branch
      %3026 = sbr.rel (%p3024) target = $region60
    $region59: #{_lambda_.14} parent=5 // pred_region
      %s3027 = ssub.s32 %s13, 2
      // Predicated region
      $region61: #{_lambda_.14} parent=59 // pred_check
        %p3028 = pneg %p174
      $region62: #{_lambda_.14} parent=59 // pred_check_branch
        %3030 = sbr.rel (%p3028) target = $region64
      $region63: #{_lambda_.14} parent=59 // pred_region
        %p3031 = scmp.lt.s32.totalorder %s26, 0
        %s3032 = scalar_select %p3031, %s26, 0
        %p3033 = scmp.lt.s32.totalorder %s27, 7
        %s3034 = scalar_select %p3033, %s27, 7
        %s3035 = smul.addr %s3034, 32
        %s3036 = smul.addr %s3032, 256
        %s3037 = sadd.s32 %s3035, %s3036
        %s3038 = smul.addr %s3037, 8
        %s3039 = scalar_lea.vmem %s4, %s3038
      $region64: #{_lambda_.14} parent=59 // pred_fallthru
        _
      // Predicated region
      $region65: #{_lambda_.14} parent=59 // pred_check
        %p3040 = pneg %p202
      $region66: #{_lambda_.14} parent=59 // pred_check_branch
        %3042 = sbr.rel (%p3040) target = $region68
      $region67: #{_lambda_.14} parent=59 // pred_region
        %p3043 = scmp.lt.s32.totalorder %s26, 0
        %s3044 = scalar_select %p3043, %s26, 0
        %p3045 = scmp.lt.s32.totalorder %s27, 7
        %s3046 = scalar_select %p3045, %s27, 7
        %s3047 = smul.addr %s3044, 8
        %s3048 = sadd.s32 %s3046, %s3047
        %s3049 = scalar_lea.vmem %s5, %s3048
      $region68: #{_lambda_.14} parent=59 // pred_fallthru
        _
      // Predicated region
      $region69: #{_lambda_.14} parent=59 // pred_check
        %p3050 = pneg %p230
      $region70: #{_lambda_.14} parent=59 // pred_check_branch
        %3052 = sbr.rel (%p3050) target = $region72
      $region71: #{_lambda_.14} parent=59 // pred_region
        %p3053 = scmp.lt.s32.totalorder %s26, 0
        %s3054 = scalar_select %p3053, %s26, 0
        %p3055 = scmp.lt.s32.totalorder %s27, 7
        %s3056 = scalar_select %p3055, %s27, 7
        %s3057 = smul.addr %s3054, 8
        %s3058 = sadd.s32 %s3056, %s3057
        %s3059 = scalar_lea.vmem %s6, %s3058
      $region72: #{_lambda_.14} parent=59 // pred_fallthru
        _
    $region60: #{_lambda_.14} parent=5 // pred_fallthru
      _
  $region6: #{_lambda_.14} parent=0 // loop_footer
    %s17 = sadd.s32 1, %s13
  $region7: #{_lambda_.14} parent=0 // loop_footer_branch
    %12 = sbr.rel target = $region3
  $region8: #{_lambda_.14} parent=0 // loop_exit
    _

// kernel: _lambda_.15
$region0: #{_lambda_.15}
  #allocation0 [shape = 'u32[]', space=smem, size = 0x4, offset = 0x4, fixed_abs, tag = 'smem constant byte address 0x4 - core index']
  #allocation1 [shape = 'u32[72,128]{1,0:T(1,128)}', space=vmem, size = 0x9000, scoped, tag = 'internal scratch']
  %s0 = inlined_call_operand.vmem [shape: f32[1,2048,4], index: 0, kind: input, shape index: {}]
  %s1 = inlined_call_operand.vmem [shape: f32[1,1,4], index: 1, kind: input, shape index: {}]
  %s2 = inlined_call_operand.vmem [shape: f32[1,1,4], index: 2, kind: input, shape index: {}]
  %s3 = inlined_call_operand.vmem [shape: f32[1,4], index: 3, kind: input, shape index: {}]
  %s4 = inlined_call_operand.vmem [shape: f32[1,4], index: 4, kind: input, shape index: {}]
  %s5 = inlined_call_operand.vmem [shape: bf16[2,4], index: 5, kind: input, shape index: {}]
  %s6 = inlined_call_operand.hbm [shape: bf16[1,2048,4], index: 6, kind: output, shape index: {0}]
  %s7 = inlined_call_operand.vmem [shape: f32[1,2,2048], index: 7, kind: output, shape index: {1}]
  %8 = xla_tuple %s6, %s7
  %s9 = sld [smem:[#allocation0]]
  $region65: #{_lambda_.15} parent=0
    _
  %s11 = ssub.s32 1, %s9
  %s12 = scalar_select 0, %s11, %s9
  $region1: #{_lambda_.15} parent=0
    #allocation2 [shape = 'u8[524288]{0}', space=vmem, size = 0x80000, scoped, tag = 'output window, operand 0']
    #allocation3 [shape = 's32[2]{0}', space=sflag, size = 0x8, scoped, tag = 'scoped memory for _lambda_.15']
    %13 = vsyncpa [#allocation3], 0
    %s14 = scalar_lea.sflag [#allocation3], 1
    %15 = vsyncpa %s14, 0
    loop: start=0, step=1, limit=4
    $region2: #{_lambda_.15} parent=1 // loop_pre_header
      _
    $region3: #{_lambda_.15} parent=1 // loop_header
      %s17 = sphi 0, %s21
      %p18 = scmp.ge.s32.totalorder %s17, 4
      %s24 = sphi 0, %s36
      %s25 = sphi 0, %s32
      %s26 = sphi 0, %s24
      %s27 = sphi 0, %s25
      %s28 = sphi 0, %s26
      %s29 = sphi 0, %s27
      %s41 = sphi 0, %s43
      %s44 = sphi 0, %s41
      %s45 = sphi 0, %s44
      %s61 = sphi 0, %s45
      %s67 = sphi 0, %s69
      %s70 = sphi 0, %s67
      %s71 = sphi 0, %s70
      %s87 = sphi 0, %s71
      %s93 = sphi 0, %s95
      %s96 = sphi 0, %s93
      %s97 = sphi 0, %s96
      %s113 = sphi 0, %s97
      %s117 = sphi 0, %s117
      %s119 = sphi 0, %s117
      %s120 = sphi 0, %s119
      %s134 = sphi 0, %s120
      %s138 = sphi 0, %s138
      %s140 = sphi 0, %s138
      %s141 = sphi 0, %s140
      %s155 = sphi 0, %s141
      %s159 = sphi 0, %s159
      %s161 = sphi 0, %s159
      %s162 = sphi 0, %s161
      %s176 = sphi 0, %s162
      %s184 = sphi 0, %s186
      %s187 = sphi 0, %s184
      %s188 = sphi 0, %s187
      %s204 = sphi 0, %s188
      %s212 = sphi 0, %s214
      %s215 = sphi 0, %s212
      %s216 = sphi 0, %s215
      %s232 = sphi 0, %s216
    $region4: #{_lambda_.15} parent=1 // loop_header_branch
      %20 = sbr.rel (%p18) target = $region8
    $region5: #{_lambda_.15} parent=1 // loop_body
      %s22 = ssub.s32 %s17, 1
      %s23 = ssub.s32 %s17, 2
      %s30 = sadd.s32 1, %s25
      %p31 = scmp.ge.s32.totalorder %s30, 2
      %s32 = scalar_select %p31, 0, %s30
      %s33 = sadd.s32 1, %s24
      %s34 = scalar_select %p31, %s33, %s24
      %p35 = scmp.ge.s32.totalorder %s34, 1
      %s36 = scalar_select %p35, 0, %s34
      %s37 = ssub.s32 %s24, %s36
      %s38 = ssub.s32 %s25, %s32
      %s39 = sor.u32 %s37, %s38
      %p40 = scmp.eq.s32.totalorder %s39, 0
      %s42 = sadd.s32 %s41, 1
      %s43 = scalar_select %p40, %s41, %s42
      %p46 = pneg %p40
      %p47 = scmp.eq.s32.totalorder %s17, 1
      %p48 = por %p46, %p47
      %p49 = scmp.ne.s32.totalorder %s41, %s44
      %p50 = scmp.eq.s32.totalorder %s17, 0
      %p51 = por %p49, %p50
      %p52 = scmp.ne.s32.totalorder %s41, %s44
      %p53 = scmp.eq.s32.totalorder %s22, 1
      %p54 = por %p52, %p53
      %p55 = scmp.ne.s32.totalorder %s44, %s45
      %p56 = scmp.eq.s32.totalorder %s22, 0
      %p57 = por %p55, %p56
      %p58 = scmp.ne.s32.totalorder %s44, %s45
      %p59 = scmp.eq.s32.totalorder %s23, 1
      %p60 = por %p58, %p59
      %p62 = scmp.ne.s32.totalorder %s45, %s61
      %p63 = scmp.eq.s32.totalorder %s23, 0
      %p64 = por %p62, %p63
      %s65 = ssub.s32 %s24, %s36
      %p66 = scmp.eq.s32.totalorder %s65, 0
      %s68 = sadd.s32 %s67, 1
      %s69 = scalar_select %p66, %s67, %s68
      %p72 = pneg %p66
      %p73 = scmp.eq.s32.totalorder %s17, 1
      %p74 = por %p72, %p73
      %p75 = scmp.ne.s32.totalorder %s67, %s70
      %p76 = scmp.eq.s32.totalorder %s17, 0
      %p77 = por %p75, %p76
      %p78 = scmp.ne.s32.totalorder %s67, %s70
      %p79 = scmp.eq.s32.totalorder %s22, 1
      %p80 = por %p78, %p79
      %p81 = scmp.ne.s32.totalorder %s70, %s71
      %p82 = scmp.eq.s32.totalorder %s22, 0
      %p83 = por %p81, %p82
      %p84 = scmp.ne.s32.totalorder %s70, %s71
      %p85 = scmp.eq.s32.totalorder %s23, 1
      %p86 = por %p84, %p85
      %p88 = scmp.ne.s32.totalorder %s71, %s87
      %p89 = scmp.eq.s32.totalorder %s23, 0
      %p90 = por %p88, %p89
      %s91 = ssub.s32 %s24, %s36
      %p92 = scmp.eq.s32.totalorder %s91, 0
      %s94 = sadd.s32 %s93, 1
      %s95 = scalar_select %p92, %s93, %s94
      %p98 = pneg %p92
      %p99 = scmp.eq.s32.totalorder %s17, 1
      %p100 = por %p98, %p99
      %p101 = scmp.ne.s32.totalorder %s93, %s96
      %p102 = scmp.eq.s32.totalorder %s17, 0
      %p103 = por %p101, %p102
      %p104 = scmp.ne.s32.totalorder %s93, %s96
      %p105 = scmp.eq.s32.totalorder %s22, 1
      %p106 = por %p104, %p105
      %p107 = scmp.ne.s32.totalorder %s96, %s97
      %p108 = scmp.eq.s32.totalorder %s22, 0
      %p109 = por %p107, %p108
      %p110 = scmp.ne.s32.totalorder %s96, %s97
      %p111 = scmp.eq.s32.totalorder %s23, 1
      %p112 = por %p110, %p111
      %p114 = scmp.ne.s32.totalorder %s97, %s113
      %p115 = scmp.eq.s32.totalorder %s23, 0
      %p116 = por %p114, %p115
      %s118 = sadd.s32 %s117, 1
      %p121 = scmp.eq.s32.totalorder %s17, 1
      %p122 = scmp.ne.s32.totalorder %s117, %s119
      %p123 = scmp.eq.s32.totalorder %s17, 0
      %p124 = por %p122, %p123
      %p125 = scmp.ne.s32.totalorder %s117, %s119
      %p126 = scmp.eq.s32.totalorder %s22, 1
      %p127 = por %p125, %p126
      %p128 = scmp.ne.s32.totalorder %s119, %s120
      %p129 = scmp.eq.s32.totalorder %s22, 0
      %p130 = por %p128, %p129
      %p131 = scmp.ne.s32.totalorder %s119, %s120
      %p132 = scmp.eq.s32.totalorder %s23, 1
      %p133 = por %p131, %p132
      %p135 = scmp.ne.s32.totalorder %s120, %s134
      %p136 = scmp.eq.s32.totalorder %s23, 0
      %p137 = por %p135, %p136
      %s139 = sadd.s32 %s138, 1
      %p142 = scmp.eq.s32.totalorder %s17, 1
      %p143 = scmp.ne.s32.totalorder %s138, %s140
      %p144 = scmp.eq.s32.totalorder %s17, 0
      %p145 = por %p143, %p144
      %p146 = scmp.ne.s32.totalorder %s138, %s140
      %p147 = scmp.eq.s32.totalorder %s22, 1
      %p148 = por %p146, %p147
      %p149 = scmp.ne.s32.totalorder %s140, %s141
      %p150 = scmp.eq.s32.totalorder %s22, 0
      %p151 = por %p149, %p150
      %p152 = scmp.ne.s32.totalorder %s140, %s141
      %p153 = scmp.eq.s32.totalorder %s23, 1
      %p154 = por %p152, %p153
      %p156 = scmp.ne.s32.totalorder %s141, %s155
      %p157 = scmp.eq.s32.totalorder %s23, 0
      %p158 = por %p156, %p157
      %s160 = sadd.s32 %s159, 1
      %p163 = scmp.eq.s32.totalorder %s17, 1
      %p164 = scmp.ne.s32.totalorder %s159, %s161
      %p165 = scmp.eq.s32.totalorder %s17, 0
      %p166 = por %p164, %p165
      %p167 = scmp.ne.s32.totalorder %s159, %s161
      %p168 = scmp.eq.s32.totalorder %s22, 1
      %p169 = por %p167, %p168
      %p170 = scmp.ne.s32.totalorder %s161, %s162
      %p171 = scmp.eq.s32.totalorder %s22, 0
      %p172 = por %p170, %p171
      %p173 = scmp.ne.s32.totalorder %s161, %s162
      %p174 = scmp.eq.s32.totalorder %s23, 1
      %p175 = por %p173, %p174
      %p177 = scmp.ne.s32.totalorder %s162, %s176
      %p178 = scmp.eq.s32.totalorder %s23, 0
      %p179 = por %p177, %p178
      %s180 = ssub.s32 %s24, %s36
      %s181 = ssub.s32 %s25, %s32
      %s182 = sor.u32 %s180, %s181
      %p183 = scmp.eq.s32.totalorder %s182, 0
      %s185 = sadd.s32 %s184, 1
      %s186 = scalar_select %p183, %s184, %s185
      %p189 = pneg %p183
      %p190 = scmp.eq.s32.totalorder %s17, 1
      %p191 = por %p189, %p190
      %p192 = scmp.ne.s32.totalorder %s184, %s187
      %p193 = scmp.eq.s32.totalorder %s17, 0
      %p194 = por %p192, %p193
      %p195 = scmp.ne.s32.totalorder %s184, %s187
      %p196 = scmp.eq.s32.totalorder %s22, 1
      %p197 = por %p195, %p196
      %p198 = scmp.ne.s32.totalorder %s187, %s188
      %p199 = scmp.eq.s32.totalorder %s22, 0
      %p200 = por %p198, %p199
      %p201 = scmp.ne.s32.totalorder %s187, %s188
      %p202 = scmp.eq.s32.totalorder %s23, 1
      %p203 = por %p201, %p202
      %p205 = scmp.ne.s32.totalorder %s188, %s204
      %p206 = scmp.eq.s32.totalorder %s23, 0
      %p207 = por %p205, %p206
      %s208 = ssub.s32 %s24, %s36
      %s209 = ssub.s32 %s25, %s32
      %s210 = sor.u32 %s208, %s209
      %p211 = scmp.eq.s32.totalorder %s210, 0
      %s213 = sadd.s32 %s212, 1
      %s214 = scalar_select %p211, %s212, %s213
      %p217 = pneg %p211
      %p218 = scmp.eq.s32.totalorder %s17, 1
      %p219 = por %p217, %p218
      %p220 = scmp.ne.s32.totalorder %s212, %s215
      %p221 = scmp.eq.s32.totalorder %s17, 0
      %p222 = por %p220, %p221
      %p223 = scmp.ne.s32.totalorder %s212, %s215
      %p224 = scmp.eq.s32.totalorder %s22, 1
      %p225 = por %p223, %p224
      %p226 = scmp.ne.s32.totalorder %s215, %s216
      %p227 = scmp.eq.s32.totalorder %s22, 0
      %p228 = por %p226, %p227
      %p229 = scmp.ne.s32.totalorder %s215, %s216
      %p230 = scmp.eq.s32.totalorder %s23, 1
      %p231 = por %p229, %p230
      %p233 = scmp.ne.s32.totalorder %s216, %s232
      %p234 = scmp.eq.s32.totalorder %s23, 0
      %p235 = por %p233, %p234
      %p236 = scmp.le.s32.totalorder 1, %s17
      %p237 = scmp.lt.s32.totalorder %s17, 3
      %p238 = pnand %p236, %p237
      %p239 = pneg %p238
      // Predicated region
      $region9: #{_lambda_.15} parent=5 // pred_check
        _
      $region10: #{_lambda_.15} parent=5 // pred_check_branch
        %241 = sbr.rel (%p238) target = $region12
      $region11: #{_lambda_.15} parent=5 // pred_region
        %s242 = ssub.s32 %s17, 1
        // Predicated region
        $region13: #{_lambda_.15} parent=11 // pred_check
          %p243 = pneg %p83
        $region14: #{_lambda_.15} parent=11 // pred_check_branch
          %245 = sbr.rel (%p243) target = $region16
        $region15: #{_lambda_.15} parent=11 // pred_region
          %p246 = scmp.lt.s32.totalorder %s26, 0
          %s247 = scalar_select %p246, %s26, 0
          %s248 = scalar_lea.vmem %s1, %s247
        $region16: #{_lambda_.15} parent=11 // pred_fallthru
          _
        // Predicated region
        $region17: #{_lambda_.15} parent=11 // pred_check
          %p249 = pneg %p109
        $region18: #{_lambda_.15} parent=11 // pred_check_branch
          %251 = sbr.rel (%p249) target = $region20
        $region19: #{_lambda_.15} parent=11 // pred_region
          %p252 = scmp.lt.s32.totalorder %s26, 0
          %s253 = scalar_select %p252, %s26, 0
          %s254 = scalar_lea.vmem %s2, %s253
        $region20: #{_lambda_.15} parent=11 // pred_fallthru
          _
        // Predicated region
        $region21: #{_lambda_.15} parent=11 // pred_check
          %p255 = pneg %p130
        $region22: #{_lambda_.15} parent=11 // pred_check_branch
          %257 = sbr.rel (%p255) target = $region24
        $region23: #{_lambda_.15} parent=11 // pred_region
          _
        $region24: #{_lambda_.15} parent=11 // pred_fallthru
          _
        // Predicated region
        $region25: #{_lambda_.15} parent=11 // pred_check
          %p258 = pneg %p151
        $region26: #{_lambda_.15} parent=11 // pred_check_branch
          %260 = sbr.rel (%p258) target = $region28
        $region27: #{_lambda_.15} parent=11 // pred_region
          _
        $region28: #{_lambda_.15} parent=11 // pred_fallthru
          _
        // Predicated region
        $region29: #{_lambda_.15} parent=11 // pred_check
          %p261 = pneg %p172
        $region30: #{_lambda_.15} parent=11 // pred_check_branch
          %263 = sbr.rel (%p261) target = $region32
        $region31: #{_lambda_.15} parent=11 // pred_region
          _
        $region32: #{_lambda_.15} parent=11 // pred_fallthru
          _
      $region12: #{_lambda_.15} parent=5 // pred_fallthru
        _
      %p264 = scmp.lt.s32.totalorder %s17, 2
      // Predicated region
      $region33: #{_lambda_.15} parent=5 // pred_check
        %p265 = pneg %p264
      $region34: #{_lambda_.15} parent=5 // pred_check_branch
        %267 = sbr.rel (%p265) target = $region36
      $region35: #{_lambda_.15} parent=5 // pred_region
        // Predicated region
        $region37: #{_lambda_.15} parent=35 // pred_check
          %p268 = pneg %p51
        $region38: #{_lambda_.15} parent=35 // pred_check_branch
          %270 = sbr.rel (%p268) target = $region40
        $region39: #{_lambda_.15} parent=35 // pred_region
          %s271 = smul.u32 128, %s25
          %p272 = scmp.lt.s32.totalorder %s24, 0
          %s273 = scalar_select %p272, %s24, 0
          %p274 = scmp.lt.s32.totalorder %s271, 255
          %s275 = scalar_select %p274, %s271, 255
          %s276 = smul.addr %s273, 256
          %s277 = sadd.s32 %s275, %s276
          %s278 = smul.addr %s277, 8
          %s279 = scalar_lea.vmem %s0, %s278
          %s280 = smul.u32 128, %s25
        $region40: #{_lambda_.15} parent=35 // pred_fallthru
          _
      $region36: #{_lambda_.15} parent=5 // pred_fallthru
        _
      %p281 = scmp.le.s32.totalorder 1, %s17
      %p282 = scmp.lt.s32.totalorder %s17, 3
      %p283 = pnand %p281, %p282
      %p284 = pneg %p283
      // Predicated region
      $region41: #{_lambda_.15} parent=5 // pred_check
        _
      $region42: #{_lambda_.15} parent=5 // pred_check_branch
        %286 = sbr.rel (%p283) target = $region44
      $region43: #{_lambda_.15} parent=5 // pred_region
        %s287 = ssub.s32 %s17, 1
        %s288 = smul.u32 128, %s27
        %p289 = scmp.lt.s32.totalorder %s26, 0
        %s290 = scalar_select %p289, %s26, 0
        %p291 = scmp.lt.s32.totalorder %s288, 255
        %s292 = scalar_select %p291, %s288, 255
        %s293 = smul.addr %s290, 256
        %s294 = sadd.s32 %s292, %s293
        %s295 = smul.addr %s294, 8
        %s296 = scalar_lea.vmem %s0, %s295
        %p297 = pneg %p57
        %p298 = pneg %p54
        %p299 = scmp.lt.s32.totalorder %s26, 0
        %s300 = scalar_select %p299, %s26, 0
        %s301 = scalar_lea.vmem %s1, %s300
        %p302 = pneg %p83
        %p303 = pneg %p80
        %p304 = scmp.lt.s32.totalorder %s26, 0
        %s305 = scalar_select %p304, %s26, 0
        %s306 = scalar_lea.vmem %s2, %s305
        %p307 = pneg %p109
        %p308 = pneg %p106
        %p309 = pneg %p130
        %p310 = pneg %p127
        %p311 = pneg %p151
        %p312 = pneg %p148
        %p313 = pneg %p172
        %p314 = pneg %p169
        %p315 = pneg %p200
        %p316 = pneg %p197
        %s317 = sand.u32 %s187, 1
        %s318 = scalar_lea.sflag [#allocation3], %s317
        %s319 = sand.u32 %s187, 1
        %s320 = smul.addr %s319, 512
        %s321 = scalar_lea.vmem [#allocation2], %s320
        %p322 = pneg %p228
        %p323 = pneg %p225
        %s324 = smul.u32 8, %s27
        %p325 = scmp.lt.s32.totalorder %s26, 0
        %s326 = scalar_select %p325, %s26, 0
        %p327 = scmp.lt.s32.totalorder %s324, 15
        %s328 = scalar_select %p327, %s324, 15
        %s329 = smul.addr %s326, 16
        %s330 = sadd.s32 %s328, %s329
        %s331 = smul.addr %s330, 2
        %s332 = scalar_lea.vmem %s7, %s331
        %s333 = smul.u32 128, %s27
        %p334 = scmp.lt.s32.totalorder %s26, 0
        %s335 = scalar_select %p334, %s26, 0
        %p336 = scmp.lt.s32.totalorder %s333, 255
        %s337 = scalar_select %p336, %s333, 255
        %s338 = smul.addr %s335, 256
        %s339 = sadd.s32 %s337, %s338
        %s340 = smul.addr %s339, 8
        %s341 = scalar_lea.vmem %s0, %s340
        %s342 = smul.u32 128, %s27
        %p343 = scmp.lt.s32.totalorder %s26, 0
        %s344 = scalar_select %p343, %s26, 0
        %s345 = scalar_lea.vmem %s1, %s344
        %p346 = scmp.lt.s32.totalorder %s26, 0
        %s347 = scalar_select %p346, %s26, 0
        %s348 = scalar_lea.vmem %s2, %s347
        %s349 = smul.u32 128, %s27
        %s350 = smul.u32 8, %s27
        %p351 = scmp.lt.s32.totalorder %s26, 0
        %s352 = scalar_select %p351, %s26, 0
        %p353 = scmp.lt.s32.totalorder %s350, 15
        %s354 = scalar_select %p353, %s350, 15
        %s355 = smul.addr %s352, 16
        %s356 = sadd.s32 %s354, %s355
        %s357 = smul.addr %s356, 2
        %s358 = scalar_lea.vmem %s7, %s357
        %s359 = smul.u32 8, %s27
        %v360 = vld [vmem:[%s341] sm:$0xff]
        %v361 = vld [vmem:[%s341 + $0x8] sm:$0xff]
        %v362 = vld [vmem:[%s341 + $0x10] sm:$0xff]
        %v363 = vld [vmem:[%s341 + $0x18] sm:$0xff]
        %v364 = vld [vmem:[%s341 + $0x20] sm:$0xff]
        %v365 = vld [vmem:[%s341 + $0x28] sm:$0xff]
        %v366 = vld [vmem:[%s341 + $0x30] sm:$0xff]
        %v367 = vld [vmem:[%s341 + $0x38] sm:$0xff]
        %v368 = vld [vmem:[%s341 + $0x40] sm:$0xff]
        %v369 = vld [vmem:[%s341 + $0x48] sm:$0xff]
        %v370 = vld [vmem:[%s341 + $0x50] sm:$0xff]
        %v371 = vld [vmem:[%s341 + $0x58] sm:$0xff]
        %v372 = vld [vmem:[%s341 + $0x60] sm:$0xff]
        %v373 = vld [vmem:[%s341 + $0x68] sm:$0xff]
        %v374 = vld [vmem:[%s341 + $0x70] sm:$0xff]
        %v375 = vld [vmem:[%s341 + $0x78] sm:$0xff]
        %v376 = vld [vmem:[%s341 + $0x80] sm:$0xff]
        %v377 = vld [vmem:[%s341 + $0x88] sm:$0xff]
        %v378 = vld [vmem:[%s341 + $0x90] sm:$0xff]
        %v379 = vld [vmem:[%s341 + $0x98] sm:$0xff]
        %v380 = vld [vmem:[%s341 + $0xa0] sm:$0xff]
        %v381 = vld [vmem:[%s341 + $0xa8] sm:$0xff]
        %v382 = vld [vmem:[%s341 + $0xb0] sm:$0xff]
        %v383 = vld [vmem:[%s341 + $0xb8] sm:$0xff]
        %v384 = vld [vmem:[%s341 + $0xc0] sm:$0xff]
        %v385 = vld [vmem:[%s341 + $0xc8] sm:$0xff]
        %v386 = vld [vmem:[%s341 + $0xd0] sm:$0xff]
        %v387 = vld [vmem:[%s341 + $0xd8] sm:$0xff]
        %v388 = vld [vmem:[%s341 + $0xe0] sm:$0xff]
        %v389 = vld [vmem:[%s341 + $0xe8] sm:$0xff]
        %v390 = vld [vmem:[%s341 + $0xf0] sm:$0xff]
        %v391 = vld [vmem:[%s341 + $0xf8] sm:$0xff]
        %v392 = vld [vmem:[%s341 + $0x100] sm:$0xff]
        %v393 = vld [vmem:[%s341 + $0x108] sm:$0xff]
        %v394 = vld [vmem:[%s341 + $0x110] sm:$0xff]
        %v395 = vld [vmem:[%s341 + $0x118] sm:$0xff]
        %v396 = vld [vmem:[%s341 + $0x120] sm:$0xff]
        %v397 = vld [vmem:[%s341 + $0x128] sm:$0xff]
        %v398 = vld [vmem:[%s341 + $0x130] sm:$0xff]
        %v399 = vld [vmem:[%s341 + $0x138] sm:$0xff]
        %v400 = vld [vmem:[%s341 + $0x140] sm:$0xff]
        %v401 = vld [vmem:[%s341 + $0x148] sm:$0xff]
        %v402 = vld [vmem:[%s341 + $0x150] sm:$0xff]
        %v403 = vld [vmem:[%s341 + $0x158] sm:$0xff]
        %v404 = vld [vmem:[%s341 + $0x160] sm:$0xff]
        %v405 = vld [vmem:[%s341 + $0x168] sm:$0xff]
        %v406 = vld [vmem:[%s341 + $0x170] sm:$0xff]
        %v407 = vld [vmem:[%s341 + $0x178] sm:$0xff]
        %v408 = vld [vmem:[%s341 + $0x180] sm:$0xff]
        %v409 = vld [vmem:[%s341 + $0x188] sm:$0xff]
        %v410 = vld [vmem:[%s341 + $0x190] sm:$0xff]
        %v411 = vld [vmem:[%s341 + $0x198] sm:$0xff]
        %v412 = vld [vmem:[%s341 + $0x1a0] sm:$0xff]
        %v413 = vld [vmem:[%s341 + $0x1a8] sm:$0xff]
        %v414 = vld [vmem:[%s341 + $0x1b0] sm:$0xff]
        %v415 = vld [vmem:[%s341 + $0x1b8] sm:$0xff]
        %v416 = vld [vmem:[%s341 + $0x1c0] sm:$0xff]
        %v417 = vld [vmem:[%s341 + $0x1c8] sm:$0xff]
        %v418 = vld [vmem:[%s341 + $0x1d0] sm:$0xff]
        %v419 = vld [vmem:[%s341 + $0x1d8] sm:$0xff]
        %v420 = vld [vmem:[%s341 + $0x1e0] sm:$0xff]
        %v421 = vld [vmem:[%s341 + $0x1e8] sm:$0xff]
        %v422 = vld [vmem:[%s341 + $0x1f0] sm:$0xff]
        %v423 = vld [vmem:[%s341 + $0x1f8] sm:$0xff]
        %v424 = vld [vmem:[%s341 + $0x200] sm:$0xff]
        %v425 = vld [vmem:[%s341 + $0x208] sm:$0xff]
        %v426 = vld [vmem:[%s341 + $0x210] sm:$0xff]
        %v427 = vld [vmem:[%s341 + $0x218] sm:$0xff]
        %v428 = vld [vmem:[%s341 + $0x220] sm:$0xff]
        %v429 = vld [vmem:[%s341 + $0x228] sm:$0xff]
        %v430 = vld [vmem:[%s341 + $0x230] sm:$0xff]
        %v431 = vld [vmem:[%s341 + $0x238] sm:$0xff]
        %v432 = vld [vmem:[%s341 + $0x240] sm:$0xff]
        %v433 = vld [vmem:[%s341 + $0x248] sm:$0xff]
        %v434 = vld [vmem:[%s341 + $0x250] sm:$0xff]
        %v435 = vld [vmem:[%s341 + $0x258] sm:$0xff]
        %v436 = vld [vmem:[%s341 + $0x260] sm:$0xff]
        %v437 = vld [vmem:[%s341 + $0x268] sm:$0xff]
        %v438 = vld [vmem:[%s341 + $0x270] sm:$0xff]
        %v439 = vld [vmem:[%s341 + $0x278] sm:$0xff]
        %v440 = vld [vmem:[%s341 + $0x280] sm:$0xff]
        %v441 = vld [vmem:[%s341 + $0x288] sm:$0xff]
        %v442 = vld [vmem:[%s341 + $0x290] sm:$0xff]
        %v443 = vld [vmem:[%s341 + $0x298] sm:$0xff]
        %v444 = vld [vmem:[%s341 + $0x2a0] sm:$0xff]
        %v445 = vld [vmem:[%s341 + $0x2a8] sm:$0xff]
        %v446 = vld [vmem:[%s341 + $0x2b0] sm:$0xff]
        %v447 = vld [vmem:[%s341 + $0x2b8] sm:$0xff]
        %v448 = vld [vmem:[%s341 + $0x2c0] sm:$0xff]
        %v449 = vld [vmem:[%s341 + $0x2c8] sm:$0xff]
        %v450 = vld [vmem:[%s341 + $0x2d0] sm:$0xff]
        %v451 = vld [vmem:[%s341 + $0x2d8] sm:$0xff]
        %v452 = vld [vmem:[%s341 + $0x2e0] sm:$0xff]
        %v453 = vld [vmem:[%s341 + $0x2e8] sm:$0xff]
        %v454 = vld [vmem:[%s341 + $0x2f0] sm:$0xff]
        %v455 = vld [vmem:[%s341 + $0x2f8] sm:$0xff]
        %v456 = vld [vmem:[%s341 + $0x300] sm:$0xff]
        %v457 = vld [vmem:[%s341 + $0x308] sm:$0xff]
        %v458 = vld [vmem:[%s341 + $0x310] sm:$0xff]
        %v459 = vld [vmem:[%s341 + $0x318] sm:$0xff]
        %v460 = vld [vmem:[%s341 + $0x320] sm:$0xff]
        %v461 = vld [vmem:[%s341 + $0x328] sm:$0xff]
        %v462 = vld [vmem:[%s341 + $0x330] sm:$0xff]
        %v463 = vld [vmem:[%s341 + $0x338] sm:$0xff]
        %v464 = vld [vmem:[%s341 + $0x340] sm:$0xff]
        %v465 = vld [vmem:[%s341 + $0x348] sm:$0xff]
        %v466 = vld [vmem:[%s341 + $0x350] sm:$0xff]
        %v467 = vld [vmem:[%s341 + $0x358] sm:$0xff]
        %v468 = vld [vmem:[%s341 + $0x360] sm:$0xff]
        %v469 = vld [vmem:[%s341 + $0x368] sm:$0xff]
        %v470 = vld [vmem:[%s341 + $0x370] sm:$0xff]
        %v471 = vld [vmem:[%s341 + $0x378] sm:$0xff]
        %v472 = vld [vmem:[%s341 + $0x380] sm:$0xff]
        %v473 = vld [vmem:[%s341 + $0x388] sm:$0xff]
        %v474 = vld [vmem:[%s341 + $0x390] sm:$0xff]
        %v475 = vld [vmem:[%s341 + $0x398] sm:$0xff]
        %v476 = vld [vmem:[%s341 + $0x3a0] sm:$0xff]
        %v477 = vld [vmem:[%s341 + $0x3a8] sm:$0xff]
        %v478 = vld [vmem:[%s341 + $0x3b0] sm:$0xff]
        %v479 = vld [vmem:[%s341 + $0x3b8] sm:$0xff]
        %v480 = vld [vmem:[%s341 + $0x3c0] sm:$0xff]
        %v481 = vld [vmem:[%s341 + $0x3c8] sm:$0xff]
        %v482 = vld [vmem:[%s341 + $0x3d0] sm:$0xff]
        %v483 = vld [vmem:[%s341 + $0x3d8] sm:$0xff]
        %v484 = vld [vmem:[%s341 + $0x3e0] sm:$0xff]
        %v485 = vld [vmem:[%s341 + $0x3e8] sm:$0xff]
        %v486 = vld [vmem:[%s341 + $0x3f0] sm:$0xff]
        %v487 = vld [vmem:[%s341 + $0x3f8] sm:$0xff]
        %v488 = vld [vmem:[%s345] sm:$0x1]
        %v490 = vperm.slane %v488, 0
        %v492 = vsub.f32 %v360, %v490
        %v493 = vsub.f32 %v361, %v490
        %v494 = vsub.f32 %v362, %v490
        %v495 = vsub.f32 %v363, %v490
        %v496 = vsub.f32 %v364, %v490
        %v497 = vsub.f32 %v365, %v490
        %v498 = vsub.f32 %v366, %v490
        %v499 = vsub.f32 %v367, %v490
        %v500 = vsub.f32 %v368, %v490
        %v501 = vsub.f32 %v369, %v490
        %v502 = vsub.f32 %v370, %v490
        %v503 = vsub.f32 %v371, %v490
        %v504 = vsub.f32 %v372, %v490
        %v505 = vsub.f32 %v373, %v490
        %v506 = vsub.f32 %v374, %v490
        %v507 = vsub.f32 %v375, %v490
        %v508 = vsub.f32 %v376, %v490
        %v509 = vsub.f32 %v377, %v490
        %v510 = vsub.f32 %v378, %v490
        %v511 = vsub.f32 %v379, %v490
        %v512 = vsub.f32 %v380, %v490
        %v513 = vsub.f32 %v381, %v490
        %v514 = vsub.f32 %v382, %v490
        %v515 = vsub.f32 %v383, %v490
        %v516 = vsub.f32 %v384, %v490
        %v517 = vsub.f32 %v385, %v490
        %v518 = vsub.f32 %v386, %v490
        %v519 = vsub.f32 %v387, %v490
        %v520 = vsub.f32 %v388, %v490
        %v521 = vsub.f32 %v389, %v490
        %v522 = vsub.f32 %v390, %v490
        %v523 = vsub.f32 %v391, %v490
        %v524 = vsub.f32 %v392, %v490
        %v525 = vsub.f32 %v393, %v490
        %v526 = vsub.f32 %v394, %v490
        %v527 = vsub.f32 %v395, %v490
        %v528 = vsub.f32 %v396, %v490
        %v529 = vsub.f32 %v397, %v490
        %v530 = vsub.f32 %v398, %v490
        %v531 = vsub.f32 %v399, %v490
        %v532 = vsub.f32 %v400, %v490
        %v533 = vsub.f32 %v401, %v490
        %v534 = vsub.f32 %v402, %v490
        %v535 = vsub.f32 %v403, %v490
        %v536 = vsub.f32 %v404, %v490
        %v537 = vsub.f32 %v405, %v490
        %v538 = vsub.f32 %v406, %v490
        %v539 = vsub.f32 %v407, %v490
        %v540 = vsub.f32 %v408, %v490
        %v541 = vsub.f32 %v409, %v490
        %v542 = vsub.f32 %v410, %v490
        %v543 = vsub.f32 %v411, %v490
        %v544 = vsub.f32 %v412, %v490
        %v545 = vsub.f32 %v413, %v490
        %v546 = vsub.f32 %v414, %v490
        %v547 = vsub.f32 %v415, %v490
        %v548 = vsub.f32 %v416, %v490
        %v549 = vsub.f32 %v417, %v490
        %v550 = vsub.f32 %v418, %v490
        %v551 = vsub.f32 %v419, %v490
        %v552 = vsub.f32 %v420, %v490
        %v553 = vsub.f32 %v421, %v490
        %v554 = vsub.f32 %v422, %v490
        %v555 = vsub.f32 %v423, %v490
        %v556 = vsub.f32 %v424, %v490
        %v557 = vsub.f32 %v425, %v490
        %v558 = vsub.f32 %v426, %v490
        %v559 = vsub.f32 %v427, %v490
        %v560 = vsub.f32 %v428, %v490
        %v561 = vsub.f32 %v429, %v490
        %v562 = vsub.f32 %v430, %v490
        %v563 = vsub.f32 %v431, %v490
        %v564 = vsub.f32 %v432, %v490
        %v565 = vsub.f32 %v433, %v490
        %v566 = vsub.f32 %v434, %v490
        %v567 = vsub.f32 %v435, %v490
        %v568 = vsub.f32 %v436, %v490
        %v569 = vsub.f32 %v437, %v490
        %v570 = vsub.f32 %v438, %v490
        %v571 = vsub.f32 %v439, %v490
        %v572 = vsub.f32 %v440, %v490
        %v573 = vsub.f32 %v441, %v490
        %v574 = vsub.f32 %v442, %v490
        %v575 = vsub.f32 %v443, %v490
        %v576 = vsub.f32 %v444, %v490
        %v577 = vsub.f32 %v445, %v490
        %v578 = vsub.f32 %v446, %v490
        %v579 = vsub.f32 %v447, %v490
        %v580 = vsub.f32 %v448, %v490
        %v581 = vsub.f32 %v449, %v490
        %v582 = vsub.f32 %v450, %v490
        %v583 = vsub.f32 %v451, %v490
        %v584 = vsub.f32 %v452, %v490
        %v585 = vsub.f32 %v453, %v490
        %v586 = vsub.f32 %v454, %v490
        %v587 = vsub.f32 %v455, %v490
        %v588 = vsub.f32 %v456, %v490
        %v589 = vsub.f32 %v457, %v490
        %v590 = vsub.f32 %v458, %v490
        %v591 = vsub.f32 %v459, %v490
        %v592 = vsub.f32 %v460, %v490
        %v593 = vsub.f32 %v461, %v490
        %v594 = vsub.f32 %v462, %v490
        %v595 = vsub.f32 %v463, %v490
        %v596 = vsub.f32 %v464, %v490
        %v597 = vsub.f32 %v465, %v490
        %v598 = vsub.f32 %v466, %v490
        %v599 = vsub.f32 %v467, %v490
        %v600 = vsub.f32 %v468, %v490
        %v601 = vsub.f32 %v469, %v490
        %v602 = vsub.f32 %v470, %v490
        %v603 = vsub.f32 %v471, %v490
        %v604 = vsub.f32 %v472, %v490
        %v605 = vsub.f32 %v473, %v490
        %v606 = vsub.f32 %v474, %v490
        %v607 = vsub.f32 %v475, %v490
        %v608 = vsub.f32 %v476, %v490
        %v609 = vsub.f32 %v477, %v490
        %v610 = vsub.f32 %v478, %v490
        %v611 = vsub.f32 %v479, %v490
        %v612 = vsub.f32 %v480, %v490
        %v613 = vsub.f32 %v481, %v490
        %v614 = vsub.f32 %v482, %v490
        %v615 = vsub.f32 %v483, %v490
        %v616 = vsub.f32 %v484, %v490
        %v617 = vsub.f32 %v485, %v490
        %v618 = vsub.f32 %v486, %v490
        %v619 = vsub.f32 %v487, %v490
        %v620 = vld [vmem:[%s348] sm:$0x1]
        %v621 = vld [vmem:[%s3] sm:$0x1]
        %v622 = vmul.f32 %v620, %v621
        %v624 = vperm.slane %v622, 0
        %v626 = vmul.f32 %v492, %v624
        %v627 = vmul.f32 %v493, %v624
        %v628 = vmul.f32 %v494, %v624
        %v629 = vmul.f32 %v495, %v624
        %v630 = vmul.f32 %v496, %v624
        %v631 = vmul.f32 %v497, %v624
        %v632 = vmul.f32 %v498, %v624
        %v633 = vmul.f32 %v499, %v624
        %v634 = vmul.f32 %v500, %v624
        %v635 = vmul.f32 %v501, %v624
        %v636 = vmul.f32 %v502, %v624
        %v637 = vmul.f32 %v503, %v624
        %v638 = vmul.f32 %v504, %v624
        %v639 = vmul.f32 %v505, %v624
        %v640 = vmul.f32 %v506, %v624
        %v641 = vmul.f32 %v507, %v624
        %v642 = vmul.f32 %v508, %v624
        %v643 = vmul.f32 %v509, %v624
        %v644 = vmul.f32 %v510, %v624
        %v645 = vmul.f32 %v511, %v624
        %v646 = vmul.f32 %v512, %v624
        %v647 = vmul.f32 %v513, %v624
        %v648 = vmul.f32 %v514, %v624
        %v649 = vmul.f32 %v515, %v624
        %v650 = vmul.f32 %v516, %v624
        %v651 = vmul.f32 %v517, %v624
        %v652 = vmul.f32 %v518, %v624
        %v653 = vmul.f32 %v519, %v624
        %v654 = vmul.f32 %v520, %v624
        %v655 = vmul.f32 %v521, %v624
        %v656 = vmul.f32 %v522, %v624
        %v657 = vmul.f32 %v523, %v624
        %v658 = vmul.f32 %v524, %v624
        %v659 = vmul.f32 %v525, %v624
        %v660 = vmul.f32 %v526, %v624
        %v661 = vmul.f32 %v527, %v624
        %v662 = vmul.f32 %v528, %v624
        %v663 = vmul.f32 %v529, %v624
        %v664 = vmul.f32 %v530, %v624
        %v665 = vmul.f32 %v531, %v624
        %v666 = vmul.f32 %v532, %v624
        %v667 = vmul.f32 %v533, %v624
        %v668 = vmul.f32 %v534, %v624
        %v669 = vmul.f32 %v535, %v624
        %v670 = vmul.f32 %v536, %v624
        %v671 = vmul.f32 %v537, %v624
        %v672 = vmul.f32 %v538, %v624
        %v673 = vmul.f32 %v539, %v624
        %v674 = vmul.f32 %v540, %v624
        %v675 = vmul.f32 %v541, %v624
        %v676 = vmul.f32 %v542, %v624
        %v677 = vmul.f32 %v543, %v624
        %v678 = vmul.f32 %v544, %v624
        %v679 = vmul.f32 %v545, %v624
        %v680 = vmul.f32 %v546, %v624
        %v681 = vmul.f32 %v547, %v624
        %v682 = vmul.f32 %v548, %v624
        %v683 = vmul.f32 %v549, %v624
        %v684 = vmul.f32 %v550, %v624
        %v685 = vmul.f32 %v551, %v624
        %v686 = vmul.f32 %v552, %v624
        %v687 = vmul.f32 %v553, %v624
        %v688 = vmul.f32 %v554, %v624
        %v689 = vmul.f32 %v555, %v624
        %v690 = vmul.f32 %v556, %v624
        %v691 = vmul.f32 %v557, %v624
        %v692 = vmul.f32 %v558, %v624
        %v693 = vmul.f32 %v559, %v624
        %v694 = vmul.f32 %v560, %v624
        %v695 = vmul.f32 %v561, %v624
        %v696 = vmul.f32 %v562, %v624
        %v697 = vmul.f32 %v563, %v624
        %v698 = vmul.f32 %v564, %v624
        %v699 = vmul.f32 %v565, %v624
        %v700 = vmul.f32 %v566, %v624
        %v701 = vmul.f32 %v567, %v624
        %v702 = vmul.f32 %v568, %v624
        %v703 = vmul.f32 %v569, %v624
        %v704 = vmul.f32 %v570, %v624
        %v705 = vmul.f32 %v571, %v624
        %v706 = vmul.f32 %v572, %v624
        %v707 = vmul.f32 %v573, %v624
        %v708 = vmul.f32 %v574, %v624
        %v709 = vmul.f32 %v575, %v624
        %v710 = vmul.f32 %v576, %v624
        %v711 = vmul.f32 %v577, %v624
        %v712 = vmul.f32 %v578, %v624
        %v713 = vmul.f32 %v579, %v624
        %v714 = vmul.f32 %v580, %v624
        %v715 = vmul.f32 %v581, %v624
        %v716 = vmul.f32 %v582, %v624
        %v717 = vmul.f32 %v583, %v624
        %v718 = vmul.f32 %v584, %v624
        %v719 = vmul.f32 %v585, %v624
        %v720 = vmul.f32 %v586, %v624
        %v721 = vmul.f32 %v587, %v624
        %v722 = vmul.f32 %v588, %v624
        %v723 = vmul.f32 %v589, %v624
        %v724 = vmul.f32 %v590, %v624
        %v725 = vmul.f32 %v591, %v624
        %v726 = vmul.f32 %v592, %v624
        %v727 = vmul.f32 %v593, %v624
        %v728 = vmul.f32 %v594, %v624
        %v729 = vmul.f32 %v595, %v624
        %v730 = vmul.f32 %v596, %v624
        %v731 = vmul.f32 %v597, %v624
        %v732 = vmul.f32 %v598, %v624
        %v733 = vmul.f32 %v599, %v624
        %v734 = vmul.f32 %v600, %v624
        %v735 = vmul.f32 %v601, %v624
        %v736 = vmul.f32 %v602, %v624
        %v737 = vmul.f32 %v603, %v624
        %v738 = vmul.f32 %v604, %v624
        %v739 = vmul.f32 %v605, %v624
        %v740 = vmul.f32 %v606, %v624
        %v741 = vmul.f32 %v607, %v624
        %v742 = vmul.f32 %v608, %v624
        %v743 = vmul.f32 %v609, %v624
        %v744 = vmul.f32 %v610, %v624
        %v745 = vmul.f32 %v611, %v624
        %v746 = vmul.f32 %v612, %v624
        %v747 = vmul.f32 %v613, %v624
        %v748 = vmul.f32 %v614, %v624
        %v749 = vmul.f32 %v615, %v624
        %v750 = vmul.f32 %v616, %v624
        %v751 = vmul.f32 %v617, %v624
        %v752 = vmul.f32 %v618, %v624
        %v753 = vmul.f32 %v619, %v624
        %v754 = vld [vmem:[%s4] sm:$0x1]
        %v756 = vperm.slane %v754, 0
        %v758 = vadd.f32 %v626, %v756
        %v759 = vadd.f32 %v627, %v756
        %v760 = vadd.f32 %v628, %v756
        %v761 = vadd.f32 %v629, %v756
        %v762 = vadd.f32 %v630, %v756
        %v763 = vadd.f32 %v631, %v756
        %v764 = vadd.f32 %v632, %v756
        %v765 = vadd.f32 %v633, %v756
        %v766 = vadd.f32 %v634, %v756
        %v767 = vadd.f32 %v635, %v756
        %v768 = vadd.f32 %v636, %v756
        %v769 = vadd.f32 %v637, %v756
        %v770 = vadd.f32 %v638, %v756
        %v771 = vadd.f32 %v639, %v756
        %v772 = vadd.f32 %v640, %v756
        %v773 = vadd.f32 %v641, %v756
        %v774 = vadd.f32 %v642, %v756
        %v775 = vadd.f32 %v643, %v756
        %v776 = vadd.f32 %v644, %v756
        %v777 = vadd.f32 %v645, %v756
        %v778 = vadd.f32 %v646, %v756
        %v779 = vadd.f32 %v647, %v756
        %v780 = vadd.f32 %v648, %v756
        %v781 = vadd.f32 %v649, %v756
        %v782 = vadd.f32 %v650, %v756
        %v783 = vadd.f32 %v651, %v756
        %v784 = vadd.f32 %v652, %v756
        %v785 = vadd.f32 %v653, %v756
        %v786 = vadd.f32 %v654, %v756
        %v787 = vadd.f32 %v655, %v756
        %v788 = vadd.f32 %v656, %v756
        %v789 = vadd.f32 %v657, %v756
        %v790 = vadd.f32 %v658, %v756
        %v791 = vadd.f32 %v659, %v756
        %v792 = vadd.f32 %v660, %v756
        %v793 = vadd.f32 %v661, %v756
        %v794 = vadd.f32 %v662, %v756
        %v795 = vadd.f32 %v663, %v756
        %v796 = vadd.f32 %v664, %v756
        %v797 = vadd.f32 %v665, %v756
        %v798 = vadd.f32 %v666, %v756
        %v799 = vadd.f32 %v667, %v756
        %v800 = vadd.f32 %v668, %v756
        %v801 = vadd.f32 %v669, %v756
        %v802 = vadd.f32 %v670, %v756
        %v803 = vadd.f32 %v671, %v756
        %v804 = vadd.f32 %v672, %v756
        %v805 = vadd.f32 %v673, %v756
        %v806 = vadd.f32 %v674, %v756
        %v807 = vadd.f32 %v675, %v756
        %v808 = vadd.f32 %v676, %v756
        %v809 = vadd.f32 %v677, %v756
        %v810 = vadd.f32 %v678, %v756
        %v811 = vadd.f32 %v679, %v756
        %v812 = vadd.f32 %v680, %v756
        %v813 = vadd.f32 %v681, %v756
        %v814 = vadd.f32 %v682, %v756
        %v815 = vadd.f32 %v683, %v756
        %v816 = vadd.f32 %v684, %v756
        %v817 = vadd.f32 %v685, %v756
        %v818 = vadd.f32 %v686, %v756
        %v819 = vadd.f32 %v687, %v756
        %v820 = vadd.f32 %v688, %v756
        %v821 = vadd.f32 %v689, %v756
        %v822 = vadd.f32 %v690, %v756
        %v823 = vadd.f32 %v691, %v756
        %v824 = vadd.f32 %v692, %v756
        %v825 = vadd.f32 %v693, %v756
        %v826 = vadd.f32 %v694, %v756
        %v827 = vadd.f32 %v695, %v756
        %v828 = vadd.f32 %v696, %v756
        %v829 = vadd.f32 %v697, %v756
        %v830 = vadd.f32 %v698, %v756
        %v831 = vadd.f32 %v699, %v756
        %v832 = vadd.f32 %v700, %v756
        %v833 = vadd.f32 %v701, %v756
        %v834 = vadd.f32 %v702, %v756
        %v835 = vadd.f32 %v703, %v756
        %v836 = vadd.f32 %v704, %v756
        %v837 = vadd.f32 %v705, %v756
        %v838 = vadd.f32 %v706, %v756
        %v839 = vadd.f32 %v707, %v756
        %v840 = vadd.f32 %v708, %v756
        %v841 = vadd.f32 %v709, %v756
        %v842 = vadd.f32 %v710, %v756
        %v843 = vadd.f32 %v711, %v756
        %v844 = vadd.f32 %v712, %v756
        %v845 = vadd.f32 %v713, %v756
        %v846 = vadd.f32 %v714, %v756
        %v847 = vadd.f32 %v715, %v756
        %v848 = vadd.f32 %v716, %v756
        %v849 = vadd.f32 %v717, %v756
        %v850 = vadd.f32 %v718, %v756
        %v851 = vadd.f32 %v719, %v756
        %v852 = vadd.f32 %v720, %v756
        %v853 = vadd.f32 %v721, %v756
        %v854 = vadd.f32 %v722, %v756
        %v855 = vadd.f32 %v723, %v756
        %v856 = vadd.f32 %v724, %v756
        %v857 = vadd.f32 %v725, %v756
        %v858 = vadd.f32 %v726, %v756
        %v859 = vadd.f32 %v727, %v756
        %v860 = vadd.f32 %v728, %v756
        %v861 = vadd.f32 %v729, %v756
        %v862 = vadd.f32 %v730, %v756
        %v863 = vadd.f32 %v731, %v756
        %v864 = vadd.f32 %v732, %v756
        %v865 = vadd.f32 %v733, %v756
        %v866 = vadd.f32 %v734, %v756
        %v867 = vadd.f32 %v735, %v756
        %v868 = vadd.f32 %v736, %v756
        %v869 = vadd.f32 %v737, %v756
        %v870 = vadd.f32 %v738, %v756
        %v871 = vadd.f32 %v739, %v756
        %v872 = vadd.f32 %v740, %v756
        %v873 = vadd.f32 %v741, %v756
        %v874 = vadd.f32 %v742, %v756
        %v875 = vadd.f32 %v743, %v756
        %v876 = vadd.f32 %v744, %v756
        %v877 = vadd.f32 %v745, %v756
        %v878 = vadd.f32 %v746, %v756
        %v879 = vadd.f32 %v747, %v756
        %v880 = vadd.f32 %v748, %v756
        %v881 = vadd.f32 %v749, %v756
        %v882 = vadd.f32 %v750, %v756
        %v883 = vadd.f32 %v751, %v756
        %v884 = vadd.f32 %v752, %v756
        %v885 = vadd.f32 %v753, %v756
        %vm886 = vcmp.ge.f32.partialorder %v758, 0.0
        %vm887 = vcmp.ge.f32.partialorder %v759, 0.0
        %vm888 = vcmp.ge.f32.partialorder %v760, 0.0
        %vm889 = vcmp.ge.f32.partialorder %v761, 0.0
        %vm890 = vcmp.ge.f32.partialorder %v762, 0.0
        %vm891 = vcmp.ge.f32.partialorder %v763, 0.0
        %vm892 = vcmp.ge.f32.partialorder %v764, 0.0
        %vm893 = vcmp.ge.f32.partialorder %v765, 0.0
        %vm894 = vcmp.ge.f32.partialorder %v766, 0.0
        %vm895 = vcmp.ge.f32.partialorder %v767, 0.0
        %vm896 = vcmp.ge.f32.partialorder %v768, 0.0
        %vm897 = vcmp.ge.f32.partialorder %v769, 0.0
        %vm898 = vcmp.ge.f32.partialorder %v770, 0.0
        %vm899 = vcmp.ge.f32.partialorder %v771, 0.0
        %vm900 = vcmp.ge.f32.partialorder %v772, 0.0
        %vm901 = vcmp.ge.f32.partialorder %v773, 0.0
        %vm902 = vcmp.ge.f32.partialorder %v774, 0.0
        %vm903 = vcmp.ge.f32.partialorder %v775, 0.0
        %vm904 = vcmp.ge.f32.partialorder %v776, 0.0
        %vm905 = vcmp.ge.f32.partialorder %v777, 0.0
        %vm906 = vcmp.ge.f32.partialorder %v778, 0.0
        %vm907 = vcmp.ge.f32.partialorder %v779, 0.0
        %vm908 = vcmp.ge.f32.partialorder %v780, 0.0
        %vm909 = vcmp.ge.f32.partialorder %v781, 0.0
        %vm910 = vcmp.ge.f32.partialorder %v782, 0.0
        %vm911 = vcmp.ge.f32.partialorder %v783, 0.0
        %vm912 = vcmp.ge.f32.partialorder %v784, 0.0
        %vm913 = vcmp.ge.f32.partialorder %v785, 0.0
        %vm914 = vcmp.ge.f32.partialorder %v786, 0.0
        %vm915 = vcmp.ge.f32.partialorder %v787, 0.0
        %vm916 = vcmp.ge.f32.partialorder %v788, 0.0
        %vm917 = vcmp.ge.f32.partialorder %v789, 0.0
        %vm918 = vcmp.ge.f32.partialorder %v790, 0.0
        %vm919 = vcmp.ge.f32.partialorder %v791, 0.0
        %vm920 = vcmp.ge.f32.partialorder %v792, 0.0
        %vm921 = vcmp.ge.f32.partialorder %v793, 0.0
        %vm922 = vcmp.ge.f32.partialorder %v794, 0.0
        %vm923 = vcmp.ge.f32.partialorder %v795, 0.0
        %vm924 = vcmp.ge.f32.partialorder %v796, 0.0
        %vm925 = vcmp.ge.f32.partialorder %v797, 0.0
        %vm926 = vcmp.ge.f32.partialorder %v798, 0.0
        %vm927 = vcmp.ge.f32.partialorder %v799, 0.0
        %vm928 = vcmp.ge.f32.partialorder %v800, 0.0
        %vm929 = vcmp.ge.f32.partialorder %v801, 0.0
        %vm930 = vcmp.ge.f32.partialorder %v802, 0.0
        %vm931 = vcmp.ge.f32.partialorder %v803, 0.0
        %vm932 = vcmp.ge.f32.partialorder %v804, 0.0
        %vm933 = vcmp.ge.f32.partialorder %v805, 0.0
        %vm934 = vcmp.ge.f32.partialorder %v806, 0.0
        %vm935 = vcmp.ge.f32.partialorder %v807, 0.0
        %vm936 = vcmp.ge.f32.partialorder %v808, 0.0
        %vm937 = vcmp.ge.f32.partialorder %v809, 0.0
        %vm938 = vcmp.ge.f32.partialorder %v810, 0.0
        %vm939 = vcmp.ge.f32.partialorder %v811, 0.0
        %vm940 = vcmp.ge.f32.partialorder %v812, 0.0
        %vm941 = vcmp.ge.f32.partialorder %v813, 0.0
        %vm942 = vcmp.ge.f32.partialorder %v814, 0.0
        %vm943 = vcmp.ge.f32.partialorder %v815, 0.0
        %vm944 = vcmp.ge.f32.partialorder %v816, 0.0
        %vm945 = vcmp.ge.f32.partialorder %v817, 0.0
        %vm946 = vcmp.ge.f32.partialorder %v818, 0.0
        %vm947 = vcmp.ge.f32.partialorder %v819, 0.0
        %vm948 = vcmp.ge.f32.partialorder %v820, 0.0
        %vm949 = vcmp.ge.f32.partialorder %v821, 0.0
        %vm950 = vcmp.ge.f32.partialorder %v822, 0.0
        %vm951 = vcmp.ge.f32.partialorder %v823, 0.0
        %vm952 = vcmp.ge.f32.partialorder %v824, 0.0
        %vm953 = vcmp.ge.f32.partialorder %v825, 0.0
        %vm954 = vcmp.ge.f32.partialorder %v826, 0.0
        %vm955 = vcmp.ge.f32.partialorder %v827, 0.0
        %vm956 = vcmp.ge.f32.partialorder %v828, 0.0
        %vm957 = vcmp.ge.f32.partialorder %v829, 0.0
        %vm958 = vcmp.ge.f32.partialorder %v830, 0.0
        %vm959 = vcmp.ge.f32.partialorder %v831, 0.0
        %vm960 = vcmp.ge.f32.partialorder %v832, 0.0
        %vm961 = vcmp.ge.f32.partialorder %v833, 0.0
        %vm962 = vcmp.ge.f32.partialorder %v834, 0.0
        %vm963 = vcmp.ge.f32.partialorder %v835, 0.0
        %vm964 = vcmp.ge.f32.partialorder %v836, 0.0
        %vm965 = vcmp.ge.f32.partialorder %v837, 0.0
        %vm966 = vcmp.ge.f32.partialorder %v838, 0.0
        %vm967 = vcmp.ge.f32.partialorder %v839, 0.0
        %vm968 = vcmp.ge.f32.partialorder %v840, 0.0
        %vm969 = vcmp.ge.f32.partialorder %v841, 0.0
        %vm970 = vcmp.ge.f32.partialorder %v842, 0.0
        %vm971 = vcmp.ge.f32.partialorder %v843, 0.0
        %vm972 = vcmp.ge.f32.partialorder %v844, 0.0
        %vm973 = vcmp.ge.f32.partialorder %v845, 0.0
        %vm974 = vcmp.ge.f32.partialorder %v846, 0.0
        %vm975 = vcmp.ge.f32.partialorder %v847, 0.0
        %vm976 = vcmp.ge.f32.partialorder %v848, 0.0
        %vm977 = vcmp.ge.f32.partialorder %v849, 0.0
        %vm978 = vcmp.ge.f32.partialorder %v850, 0.0
        %vm979 = vcmp.ge.f32.partialorder %v851, 0.0
        %vm980 = vcmp.ge.f32.partialorder %v852, 0.0
        %vm981 = vcmp.ge.f32.partialorder %v853, 0.0
        %vm982 = vcmp.ge.f32.partialorder %v854, 0.0
        %vm983 = vcmp.ge.f32.partialorder %v855, 0.0
        %vm984 = vcmp.ge.f32.partialorder %v856, 0.0
        %vm985 = vcmp.ge.f32.partialorder %v857, 0.0
        %vm986 = vcmp.ge.f32.partialorder %v858, 0.0
        %vm987 = vcmp.ge.f32.partialorder %v859, 0.0
        %vm988 = vcmp.ge.f32.partialorder %v860, 0.0
        %vm989 = vcmp.ge.f32.partialorder %v861, 0.0
        %vm990 = vcmp.ge.f32.partialorder %v862, 0.0
        %vm991 = vcmp.ge.f32.partialorder %v863, 0.0
        %vm992 = vcmp.ge.f32.partialorder %v864, 0.0
        %vm993 = vcmp.ge.f32.partialorder %v865, 0.0
        %vm994 = vcmp.ge.f32.partialorder %v866, 0.0
        %vm995 = vcmp.ge.f32.partialorder %v867, 0.0
        %vm996 = vcmp.ge.f32.partialorder %v868, 0.0
        %vm997 = vcmp.ge.f32.partialorder %v869, 0.0
        %vm998 = vcmp.ge.f32.partialorder %v870, 0.0
        %vm999 = vcmp.ge.f32.partialorder %v871, 0.0
        %vm1000 = vcmp.ge.f32.partialorder %v872, 0.0
        %vm1001 = vcmp.ge.f32.partialorder %v873, 0.0
        %vm1002 = vcmp.ge.f32.partialorder %v874, 0.0
        %vm1003 = vcmp.ge.f32.partialorder %v875, 0.0
        %vm1004 = vcmp.ge.f32.partialorder %v876, 0.0
        %vm1005 = vcmp.ge.f32.partialorder %v877, 0.0
        %vm1006 = vcmp.ge.f32.partialorder %v878, 0.0
        %vm1007 = vcmp.ge.f32.partialorder %v879, 0.0
        %vm1008 = vcmp.ge.f32.partialorder %v880, 0.0
        %vm1009 = vcmp.ge.f32.partialorder %v881, 0.0
        %vm1010 = vcmp.ge.f32.partialorder %v882, 0.0
        %vm1011 = vcmp.ge.f32.partialorder %v883, 0.0
        %vm1012 = vcmp.ge.f32.partialorder %v884, 0.0
        %vm1013 = vcmp.ge.f32.partialorder %v885, 0.0
        %v1014 = vmul.f32 %v758, 0.01
        %v1015 = vmul.f32 %v759, 0.01
        %v1016 = vmul.f32 %v760, 0.01
        %v1017 = vmul.f32 %v761, 0.01
        %v1018 = vmul.f32 %v762, 0.01
        %v1019 = vmul.f32 %v763, 0.01
        %v1020 = vmul.f32 %v764, 0.01
        %v1021 = vmul.f32 %v765, 0.01
        %v1022 = vmul.f32 %v766, 0.01
        %v1023 = vmul.f32 %v767, 0.01
        %v1024 = vmul.f32 %v768, 0.01
        %v1025 = vmul.f32 %v769, 0.01
        %v1026 = vmul.f32 %v770, 0.01
        %v1027 = vmul.f32 %v771, 0.01
        %v1028 = vmul.f32 %v772, 0.01
        %v1029 = vmul.f32 %v773, 0.01
        %v1030 = vmul.f32 %v774, 0.01
        %v1031 = vmul.f32 %v775, 0.01
        %v1032 = vmul.f32 %v776, 0.01
        %v1033 = vmul.f32 %v777, 0.01
        %v1034 = vmul.f32 %v778, 0.01
        %v1035 = vmul.f32 %v779, 0.01
        %v1036 = vmul.f32 %v780, 0.01
        %v1037 = vmul.f32 %v781, 0.01
        %v1038 = vmul.f32 %v782, 0.01
        %v1039 = vmul.f32 %v783, 0.01
        %v1040 = vmul.f32 %v784, 0.01
        %v1041 = vmul.f32 %v785, 0.01
        %v1042 = vmul.f32 %v786, 0.01
        %v1043 = vmul.f32 %v787, 0.01
        %v1044 = vmul.f32 %v788, 0.01
        %v1045 = vmul.f32 %v789, 0.01
        %v1046 = vmul.f32 %v790, 0.01
        %v1047 = vmul.f32 %v791, 0.01
        %v1048 = vmul.f32 %v792, 0.01
        %v1049 = vmul.f32 %v793, 0.01
        %v1050 = vmul.f32 %v794, 0.01
        %v1051 = vmul.f32 %v795, 0.01
        %v1052 = vmul.f32 %v796, 0.01
        %v1053 = vmul.f32 %v797, 0.01
        %v1054 = vmul.f32 %v798, 0.01
        %v1055 = vmul.f32 %v799, 0.01
        %v1056 = vmul.f32 %v800, 0.01
        %v1057 = vmul.f32 %v801, 0.01
        %v1058 = vmul.f32 %v802, 0.01
        %v1059 = vmul.f32 %v803, 0.01
        %v1060 = vmul.f32 %v804, 0.01
        %v1061 = vmul.f32 %v805, 0.01
        %v1062 = vmul.f32 %v806, 0.01
        %v1063 = vmul.f32 %v807, 0.01
        %v1064 = vmul.f32 %v808, 0.01
        %v1065 = vmul.f32 %v809, 0.01
        %v1066 = vmul.f32 %v810, 0.01
        %v1067 = vmul.f32 %v811, 0.01
        %v1068 = vmul.f32 %v812, 0.01
        %v1069 = vmul.f32 %v813, 0.01
        %v1070 = vmul.f32 %v814, 0.01
        %v1071 = vmul.f32 %v815, 0.01
        %v1072 = vmul.f32 %v816, 0.01
        %v1073 = vmul.f32 %v817, 0.01
        %v1074 = vmul.f32 %v818, 0.01
        %v1075 = vmul.f32 %v819, 0.01
        %v1076 = vmul.f32 %v820, 0.01
        %v1077 = vmul.f32 %v821, 0.01
        %v1078 = vmul.f32 %v822, 0.01
        %v1079 = vmul.f32 %v823, 0.01
        %v1080 = vmul.f32 %v824, 0.01
        %v1081 = vmul.f32 %v825, 0.01
        %v1082 = vmul.f32 %v826, 0.01
        %v1083 = vmul.f32 %v827, 0.01
        %v1084 = vmul.f32 %v828, 0.01
        %v1085 = vmul.f32 %v829, 0.01
        %v1086 = vmul.f32 %v830, 0.01
        %v1087 = vmul.f32 %v831, 0.01
        %v1088 = vmul.f32 %v832, 0.01
        %v1089 = vmul.f32 %v833, 0.01
        %v1090 = vmul.f32 %v834, 0.01
        %v1091 = vmul.f32 %v835, 0.01
        %v1092 = vmul.f32 %v836, 0.01
        %v1093 = vmul.f32 %v837, 0.01
        %v1094 = vmul.f32 %v838, 0.01
        %v1095 = vmul.f32 %v839, 0.01
        %v1096 = vmul.f32 %v840, 0.01
        %v1097 = vmul.f32 %v841, 0.01
        %v1098 = vmul.f32 %v842, 0.01
        %v1099 = vmul.f32 %v843, 0.01
        %v1100 = vmul.f32 %v844, 0.01
        %v1101 = vmul.f32 %v845, 0.01
        %v1102 = vmul.f32 %v846, 0.01
        %v1103 = vmul.f32 %v847, 0.01
        %v1104 = vmul.f32 %v848, 0.01
        %v1105 = vmul.f32 %v849, 0.01
        %v1106 = vmul.f32 %v850, 0.01
        %v1107 = vmul.f32 %v851, 0.01
        %v1108 = vmul.f32 %v852, 0.01
        %v1109 = vmul.f32 %v853, 0.01
        %v1110 = vmul.f32 %v854, 0.01
        %v1111 = vmul.f32 %v855, 0.01
        %v1112 = vmul.f32 %v856, 0.01
        %v1113 = vmul.f32 %v857, 0.01
        %v1114 = vmul.f32 %v858, 0.01
        %v1115 = vmul.f32 %v859, 0.01
        %v1116 = vmul.f32 %v860, 0.01
        %v1117 = vmul.f32 %v861, 0.01
        %v1118 = vmul.f32 %v862, 0.01
        %v1119 = vmul.f32 %v863, 0.01
        %v1120 = vmul.f32 %v864, 0.01
        %v1121 = vmul.f32 %v865, 0.01
        %v1122 = vmul.f32 %v866, 0.01
        %v1123 = vmul.f32 %v867, 0.01
        %v1124 = vmul.f32 %v868, 0.01
        %v1125 = vmul.f32 %v869, 0.01
        %v1126 = vmul.f32 %v870, 0.01
        %v1127 = vmul.f32 %v871, 0.01
        %v1128 = vmul.f32 %v872, 0.01
        %v1129 = vmul.f32 %v873, 0.01
        %v1130 = vmul.f32 %v874, 0.01
        %v1131 = vmul.f32 %v875, 0.01
        %v1132 = vmul.f32 %v876, 0.01
        %v1133 = vmul.f32 %v877, 0.01
        %v1134 = vmul.f32 %v878, 0.01
        %v1135 = vmul.f32 %v879, 0.01
        %v1136 = vmul.f32 %v880, 0.01
        %v1137 = vmul.f32 %v881, 0.01
        %v1138 = vmul.f32 %v882, 0.01
        %v1139 = vmul.f32 %v883, 0.01
        %v1140 = vmul.f32 %v884, 0.01
        %v1141 = vmul.f32 %v885, 0.01
        %v1142 = vsel %vm886, %v758, %v1014
        %v1143 = vsel %vm887, %v759, %v1015
        %v1144 = vsel %vm888, %v760, %v1016
        %v1145 = vsel %vm889, %v761, %v1017
        %v1146 = vsel %vm890, %v762, %v1018
        %v1147 = vsel %vm891, %v763, %v1019
        %v1148 = vsel %vm892, %v764, %v1020
        %v1149 = vsel %vm893, %v765, %v1021
        %v1150 = vsel %vm894, %v766, %v1022
        %v1151 = vsel %vm895, %v767, %v1023
        %v1152 = vsel %vm896, %v768, %v1024
        %v1153 = vsel %vm897, %v769, %v1025
        %v1154 = vsel %vm898, %v770, %v1026
        %v1155 = vsel %vm899, %v771, %v1027
        %v1156 = vsel %vm900, %v772, %v1028
        %v1157 = vsel %vm901, %v773, %v1029
        %v1158 = vsel %vm902, %v774, %v1030
        %v1159 = vsel %vm903, %v775, %v1031
        %v1160 = vsel %vm904, %v776, %v1032
        %v1161 = vsel %vm905, %v777, %v1033
        %v1162 = vsel %vm906, %v778, %v1034
        %v1163 = vsel %vm907, %v779, %v1035
        %v1164 = vsel %vm908, %v780, %v1036
        %v1165 = vsel %vm909, %v781, %v1037
        %v1166 = vsel %vm910, %v782, %v1038
        %v1167 = vsel %vm911, %v783, %v1039
        %v1168 = vsel %vm912, %v784, %v1040
        %v1169 = vsel %vm913, %v785, %v1041
        %v1170 = vsel %vm914, %v786, %v1042
        %v1171 = vsel %vm915, %v787, %v1043
        %v1172 = vsel %vm916, %v788, %v1044
        %v1173 = vsel %vm917, %v789, %v1045
        %v1174 = vsel %vm918, %v790, %v1046
        %v1175 = vsel %vm919, %v791, %v1047
        %v1176 = vsel %vm920, %v792, %v1048
        %v1177 = vsel %vm921, %v793, %v1049
        %v1178 = vsel %vm922, %v794, %v1050
        %v1179 = vsel %vm923, %v795, %v1051
        %v1180 = vsel %vm924, %v796, %v1052
        %v1181 = vsel %vm925, %v797, %v1053
        %v1182 = vsel %vm926, %v798, %v1054
        %v1183 = vsel %vm927, %v799, %v1055
        %v1184 = vsel %vm928, %v800, %v1056
        %v1185 = vsel %vm929, %v801, %v1057
        %v1186 = vsel %vm930, %v802, %v1058
        %v1187 = vsel %vm931, %v803, %v1059
        %v1188 = vsel %vm932, %v804, %v1060
        %v1189 = vsel %vm933, %v805, %v1061
        %v1190 = vsel %vm934, %v806, %v1062
        %v1191 = vsel %vm935, %v807, %v1063
        %v1192 = vsel %vm936, %v808, %v1064
        %v1193 = vsel %vm937, %v809, %v1065
        %v1194 = vsel %vm938, %v810, %v1066
        %v1195 = vsel %vm939, %v811, %v1067
        %v1196 = vsel %vm940, %v812, %v1068
        %v1197 = vsel %vm941, %v813, %v1069
        %v1198 = vsel %vm942, %v814, %v1070
        %v1199 = vsel %vm943, %v815, %v1071
        %v1200 = vsel %vm944, %v816, %v1072
        %v1201 = vsel %vm945, %v817, %v1073
        %v1202 = vsel %vm946, %v818, %v1074
        %v1203 = vsel %vm947, %v819, %v1075
        %v1204 = vsel %vm948, %v820, %v1076
        %v1205 = vsel %vm949, %v821, %v1077
        %v1206 = vsel %vm950, %v822, %v1078
        %v1207 = vsel %vm951, %v823, %v1079
        %v1208 = vsel %vm952, %v824, %v1080
        %v1209 = vsel %vm953, %v825, %v1081
        %v1210 = vsel %vm954, %v826, %v1082
        %v1211 = vsel %vm955, %v827, %v1083
        %v1212 = vsel %vm956, %v828, %v1084
        %v1213 = vsel %vm957, %v829, %v1085
        %v1214 = vsel %vm958, %v830, %v1086
        %v1215 = vsel %vm959, %v831, %v1087
        %v1216 = vsel %vm960, %v832, %v1088
        %v1217 = vsel %vm961, %v833, %v1089
        %v1218 = vsel %vm962, %v834, %v1090
        %v1219 = vsel %vm963, %v835, %v1091
        %v1220 = vsel %vm964, %v836, %v1092
        %v1221 = vsel %vm965, %v837, %v1093
        %v1222 = vsel %vm966, %v838, %v1094
        %v1223 = vsel %vm967, %v839, %v1095
        %v1224 = vsel %vm968, %v840, %v1096
        %v1225 = vsel %vm969, %v841, %v1097
        %v1226 = vsel %vm970, %v842, %v1098
        %v1227 = vsel %vm971, %v843, %v1099
        %v1228 = vsel %vm972, %v844, %v1100
        %v1229 = vsel %vm973, %v845, %v1101
        %v1230 = vsel %vm974, %v846, %v1102
        %v1231 = vsel %vm975, %v847, %v1103
        %v1232 = vsel %vm976, %v848, %v1104
        %v1233 = vsel %vm977, %v849, %v1105
        %v1234 = vsel %vm978, %v850, %v1106
        %v1235 = vsel %vm979, %v851, %v1107
        %v1236 = vsel %vm980, %v852, %v1108
        %v1237 = vsel %vm981, %v853, %v1109
        %v1238 = vsel %vm982, %v854, %v1110
        %v1239 = vsel %vm983, %v855, %v1111
        %v1240 = vsel %vm984, %v856, %v1112
        %v1241 = vsel %vm985, %v857, %v1113
        %v1242 = vsel %vm986, %v858, %v1114
        %v1243 = vsel %vm987, %v859, %v1115
        %v1244 = vsel %vm988, %v860, %v1116
        %v1245 = vsel %vm989, %v861, %v1117
        %v1246 = vsel %vm990, %v862, %v1118
        %v1247 = vsel %vm991, %v863, %v1119
        %v1248 = vsel %vm992, %v864, %v1120
        %v1249 = vsel %vm993, %v865, %v1121
        %v1250 = vsel %vm994, %v866, %v1122
        %v1251 = vsel %vm995, %v867, %v1123
        %v1252 = vsel %vm996, %v868, %v1124
        %v1253 = vsel %vm997, %v869, %v1125
        %v1254 = vsel %vm998, %v870, %v1126
        %v1255 = vsel %vm999, %v871, %v1127
        %v1256 = vsel %vm1000, %v872, %v1128
        %v1257 = vsel %vm1001, %v873, %v1129
        %v1258 = vsel %vm1002, %v874, %v1130
        %v1259 = vsel %vm1003, %v875, %v1131
        %v1260 = vsel %vm1004, %v876, %v1132
        %v1261 = vsel %vm1005, %v877, %v1133
        %v1262 = vsel %vm1006, %v878, %v1134
        %v1263 = vsel %vm1007, %v879, %v1135
        %v1264 = vsel %vm1008, %v880, %v1136
        %v1265 = vsel %vm1009, %v881, %v1137
        %v1266 = vsel %vm1010, %v882, %v1138
        %v1267 = vsel %vm1011, %v883, %v1139
        %v1268 = vsel %vm1012, %v884, %v1140
        %v1269 = vsel %vm1013, %v885, %v1141
        %v1270 = vpack.c.bf16 %v1142, %v1142
        %v1271 = vpack.c.bf16 %v1143, %v1143
        %v1272 = vpack.c.bf16 %v1144, %v1144
        %v1273 = vpack.c.bf16 %v1145, %v1145
        %v1274 = vpack.c.bf16 %v1146, %v1146
        %v1275 = vpack.c.bf16 %v1147, %v1147
        %v1276 = vpack.c.bf16 %v1148, %v1148
        %v1277 = vpack.c.bf16 %v1149, %v1149
        %v1278 = vpack.c.bf16 %v1150, %v1150
        %v1279 = vpack.c.bf16 %v1151, %v1151
        %v1280 = vpack.c.bf16 %v1152, %v1152
        %v1281 = vpack.c.bf16 %v1153, %v1153
        %v1282 = vpack.c.bf16 %v1154, %v1154
        %v1283 = vpack.c.bf16 %v1155, %v1155
        %v1284 = vpack.c.bf16 %v1156, %v1156
        %v1285 = vpack.c.bf16 %v1157, %v1157
        %v1286 = vpack.c.bf16 %v1158, %v1158
        %v1287 = vpack.c.bf16 %v1159, %v1159
        %v1288 = vpack.c.bf16 %v1160, %v1160
        %v1289 = vpack.c.bf16 %v1161, %v1161
        %v1290 = vpack.c.bf16 %v1162, %v1162
        %v1291 = vpack.c.bf16 %v1163, %v1163
        %v1292 = vpack.c.bf16 %v1164, %v1164
        %v1293 = vpack.c.bf16 %v1165, %v1165
        %v1294 = vpack.c.bf16 %v1166, %v1166
        %v1295 = vpack.c.bf16 %v1167, %v1167
        %v1296 = vpack.c.bf16 %v1168, %v1168
        %v1297 = vpack.c.bf16 %v1169, %v1169
        %v1298 = vpack.c.bf16 %v1170, %v1170
        %v1299 = vpack.c.bf16 %v1171, %v1171
        %v1300 = vpack.c.bf16 %v1172, %v1172
        %v1301 = vpack.c.bf16 %v1173, %v1173
        %v1302 = vpack.c.bf16 %v1174, %v1174
        %v1303 = vpack.c.bf16 %v1175, %v1175
        %v1304 = vpack.c.bf16 %v1176, %v1176
        %v1305 = vpack.c.bf16 %v1177, %v1177
        %v1306 = vpack.c.bf16 %v1178, %v1178
        %v1307 = vpack.c.bf16 %v1179, %v1179
        %v1308 = vpack.c.bf16 %v1180, %v1180
        %v1309 = vpack.c.bf16 %v1181, %v1181
        %v1310 = vpack.c.bf16 %v1182, %v1182
        %v1311 = vpack.c.bf16 %v1183, %v1183
        %v1312 = vpack.c.bf16 %v1184, %v1184
        %v1313 = vpack.c.bf16 %v1185, %v1185
        %v1314 = vpack.c.bf16 %v1186, %v1186
        %v1315 = vpack.c.bf16 %v1187, %v1187
        %v1316 = vpack.c.bf16 %v1188, %v1188
        %v1317 = vpack.c.bf16 %v1189, %v1189
        %v1318 = vpack.c.bf16 %v1190, %v1190
        %v1319 = vpack.c.bf16 %v1191, %v1191
        %v1320 = vpack.c.bf16 %v1192, %v1192
        %v1321 = vpack.c.bf16 %v1193, %v1193
        %v1322 = vpack.c.bf16 %v1194, %v1194
        %v1323 = vpack.c.bf16 %v1195, %v1195
        %v1324 = vpack.c.bf16 %v1196, %v1196
        %v1325 = vpack.c.bf16 %v1197, %v1197
        %v1326 = vpack.c.bf16 %v1198, %v1198
        %v1327 = vpack.c.bf16 %v1199, %v1199
        %v1328 = vpack.c.bf16 %v1200, %v1200
        %v1329 = vpack.c.bf16 %v1201, %v1201
        %v1330 = vpack.c.bf16 %v1202, %v1202
        %v1331 = vpack.c.bf16 %v1203, %v1203
        %v1332 = vpack.c.bf16 %v1204, %v1204
        %v1333 = vpack.c.bf16 %v1205, %v1205
        %v1334 = vpack.c.bf16 %v1206, %v1206
        %v1335 = vpack.c.bf16 %v1207, %v1207
        %v1336 = vpack.c.bf16 %v1208, %v1208
        %v1337 = vpack.c.bf16 %v1209, %v1209
        %v1338 = vpack.c.bf16 %v1210, %v1210
        %v1339 = vpack.c.bf16 %v1211, %v1211
        %v1340 = vpack.c.bf16 %v1212, %v1212
        %v1341 = vpack.c.bf16 %v1213, %v1213
        %v1342 = vpack.c.bf16 %v1214, %v1214
        %v1343 = vpack.c.bf16 %v1215, %v1215
        %v1344 = vpack.c.bf16 %v1216, %v1216
        %v1345 = vpack.c.bf16 %v1217, %v1217
        %v1346 = vpack.c.bf16 %v1218, %v1218
        %v1347 = vpack.c.bf16 %v1219, %v1219
        %v1348 = vpack.c.bf16 %v1220, %v1220
        %v1349 = vpack.c.bf16 %v1221, %v1221
        %v1350 = vpack.c.bf16 %v1222, %v1222
        %v1351 = vpack.c.bf16 %v1223, %v1223
        %v1352 = vpack.c.bf16 %v1224, %v1224
        %v1353 = vpack.c.bf16 %v1225, %v1225
        %v1354 = vpack.c.bf16 %v1226, %v1226
        %v1355 = vpack.c.bf16 %v1227, %v1227
        %v1356 = vpack.c.bf16 %v1228, %v1228
        %v1357 = vpack.c.bf16 %v1229, %v1229
        %v1358 = vpack.c.bf16 %v1230, %v1230
        %v1359 = vpack.c.bf16 %v1231, %v1231
        %v1360 = vpack.c.bf16 %v1232, %v1232
        %v1361 = vpack.c.bf16 %v1233, %v1233
        %v1362 = vpack.c.bf16 %v1234, %v1234
        %v1363 = vpack.c.bf16 %v1235, %v1235
        %v1364 = vpack.c.bf16 %v1236, %v1236
        %v1365 = vpack.c.bf16 %v1237, %v1237
        %v1366 = vpack.c.bf16 %v1238, %v1238
        %v1367 = vpack.c.bf16 %v1239, %v1239
        %v1368 = vpack.c.bf16 %v1240, %v1240
        %v1369 = vpack.c.bf16 %v1241, %v1241
        %v1370 = vpack.c.bf16 %v1242, %v1242
        %v1371 = vpack.c.bf16 %v1243, %v1243
        %v1372 = vpack.c.bf16 %v1244, %v1244
        %v1373 = vpack.c.bf16 %v1245, %v1245
        %v1374 = vpack.c.bf16 %v1246, %v1246
        %v1375 = vpack.c.bf16 %v1247, %v1247
        %v1376 = vpack.c.bf16 %v1248, %v1248
        %v1377 = vpack.c.bf16 %v1249, %v1249
        %v1378 = vpack.c.bf16 %v1250, %v1250
        %v1379 = vpack.c.bf16 %v1251, %v1251
        %v1380 = vpack.c.bf16 %v1252, %v1252
        %v1381 = vpack.c.bf16 %v1253, %v1253
        %v1382 = vpack.c.bf16 %v1254, %v1254
        %v1383 = vpack.c.bf16 %v1255, %v1255
        %v1384 = vpack.c.bf16 %v1256, %v1256
        %v1385 = vpack.c.bf16 %v1257, %v1257
        %v1386 = vpack.c.bf16 %v1258, %v1258
        %v1387 = vpack.c.bf16 %v1259, %v1259
        %v1388 = vpack.c.bf16 %v1260, %v1260
        %v1389 = vpack.c.bf16 %v1261, %v1261
        %v1390 = vpack.c.bf16 %v1262, %v1262
        %v1391 = vpack.c.bf16 %v1263, %v1263
        %v1392 = vpack.c.bf16 %v1264, %v1264
        %v1393 = vpack.c.bf16 %v1265, %v1265
        %v1394 = vpack.c.bf16 %v1266, %v1266
        %v1395 = vpack.c.bf16 %v1267, %v1267
        %v1396 = vpack.c.bf16 %v1268, %v1268
        %v1397 = vpack.c.bf16 %v1269, %v1269
        %vm1398 = vcmask 27648
        %1399 = vst.msk [vmem:[%s321] sm:$0xf] %vm1398, %v1270
        %1400 = vst.msk [vmem:[%s321 + $0x4] sm:$0xf] %vm1398, %v1271
        %1401 = vst.msk [vmem:[%s321 + $0x8] sm:$0xf] %vm1398, %v1272
        %1402 = vst.msk [vmem:[%s321 + $0xc] sm:$0xf] %vm1398, %v1273
        %1403 = vst.msk [vmem:[%s321 + $0x10] sm:$0xf] %vm1398, %v1274
        %1404 = vst.msk [vmem:[%s321 + $0x14] sm:$0xf] %vm1398, %v1275
        %1405 = vst.msk [vmem:[%s321 + $0x18] sm:$0xf] %vm1398, %v1276
        %1406 = vst.msk [vmem:[%s321 + $0x1c] sm:$0xf] %vm1398, %v1277
        %1407 = vst.msk [vmem:[%s321 + $0x20] sm:$0xf] %vm1398, %v1278
        %1408 = vst.msk [vmem:[%s321 + $0x24] sm:$0xf] %vm1398, %v1279
        %1409 = vst.msk [vmem:[%s321 + $0x28] sm:$0xf] %vm1398, %v1280
        %1410 = vst.msk [vmem:[%s321 + $0x2c] sm:$0xf] %vm1398, %v1281
        %1411 = vst.msk [vmem:[%s321 + $0x30] sm:$0xf] %vm1398, %v1282
        %1412 = vst.msk [vmem:[%s321 + $0x34] sm:$0xf] %vm1398, %v1283
        %1413 = vst.msk [vmem:[%s321 + $0x38] sm:$0xf] %vm1398, %v1284
        %1414 = vst.msk [vmem:[%s321 + $0x3c] sm:$0xf] %vm1398, %v1285
        %1415 = vst.msk [vmem:[%s321 + $0x40] sm:$0xf] %vm1398, %v1286
        %1416 = vst.msk [vmem:[%s321 + $0x44] sm:$0xf] %vm1398, %v1287
        %1417 = vst.msk [vmem:[%s321 + $0x48] sm:$0xf] %vm1398, %v1288
        %1418 = vst.msk [vmem:[%s321 + $0x4c] sm:$0xf] %vm1398, %v1289
        %1419 = vst.msk [vmem:[%s321 + $0x50] sm:$0xf] %vm1398, %v1290
        %1420 = vst.msk [vmem:[%s321 + $0x54] sm:$0xf] %vm1398, %v1291
        %1421 = vst.msk [vmem:[%s321 + $0x58] sm:$0xf] %vm1398, %v1292
        %1422 = vst.msk [vmem:[%s321 + $0x5c] sm:$0xf] %vm1398, %v1293
        %1423 = vst.msk [vmem:[%s321 + $0x60] sm:$0xf] %vm1398, %v1294
        %1424 = vst.msk [vmem:[%s321 + $0x64] sm:$0xf] %vm1398, %v1295
        %1425 = vst.msk [vmem:[%s321 + $0x68] sm:$0xf] %vm1398, %v1296
        %1426 = vst.msk [vmem:[%s321 + $0x6c] sm:$0xf] %vm1398, %v1297
        %1427 = vst.msk [vmem:[%s321 + $0x70] sm:$0xf] %vm1398, %v1298
        %1428 = vst.msk [vmem:[%s321 + $0x74] sm:$0xf] %vm1398, %v1299
        %1429 = vst.msk [vmem:[%s321 + $0x78] sm:$0xf] %vm1398, %v1300
        %1430 = vst.msk [vmem:[%s321 + $0x7c] sm:$0xf] %vm1398, %v1301
        %1431 = vst.msk [vmem:[%s321 + $0x80] sm:$0xf] %vm1398, %v1302
        %1432 = vst.msk [vmem:[%s321 + $0x84] sm:$0xf] %vm1398, %v1303
        %1433 = vst.msk [vmem:[%s321 + $0x88] sm:$0xf] %vm1398, %v1304
        %1434 = vst.msk [vmem:[%s321 + $0x8c] sm:$0xf] %vm1398, %v1305
        %1435 = vst.msk [vmem:[%s321 + $0x90] sm:$0xf] %vm1398, %v1306
        %1436 = vst.msk [vmem:[%s321 + $0x94] sm:$0xf] %vm1398, %v1307
        %1437 = vst.msk [vmem:[%s321 + $0x98] sm:$0xf] %vm1398, %v1308
        %1438 = vst.msk [vmem:[%s321 + $0x9c] sm:$0xf] %vm1398, %v1309
        %1439 = vst.msk [vmem:[%s321 + $0xa0] sm:$0xf] %vm1398, %v1310
        %1440 = vst.msk [vmem:[%s321 + $0xa4] sm:$0xf] %vm1398, %v1311
        %1441 = vst.msk [vmem:[%s321 + $0xa8] sm:$0xf] %vm1398, %v1312
        %1442 = vst.msk [vmem:[%s321 + $0xac] sm:$0xf] %vm1398, %v1313
        %1443 = vst.msk [vmem:[%s321 + $0xb0] sm:$0xf] %vm1398, %v1314
        %1444 = vst.msk [vmem:[%s321 + $0xb4] sm:$0xf] %vm1398, %v1315
        %1445 = vst.msk [vmem:[%s321 + $0xb8] sm:$0xf] %vm1398, %v1316
        %1446 = vst.msk [vmem:[%s321 + $0xbc] sm:$0xf] %vm1398, %v1317
        %1447 = vst.msk [vmem:[%s321 + $0xc0] sm:$0xf] %vm1398, %v1318
        %1448 = vst.msk [vmem:[%s321 + $0xc4] sm:$0xf] %vm1398, %v1319
        %1449 = vst.msk [vmem:[%s321 + $0xc8] sm:$0xf] %vm1398, %v1320
        %1450 = vst.msk [vmem:[%s321 + $0xcc] sm:$0xf] %vm1398, %v1321
        %1451 = vst.msk [vmem:[%s321 + $0xd0] sm:$0xf] %vm1398, %v1322
        %1452 = vst.msk [vmem:[%s321 + $0xd4] sm:$0xf] %vm1398, %v1323
        %1453 = vst.msk [vmem:[%s321 + $0xd8] sm:$0xf] %vm1398, %v1324
        %1454 = vst.msk [vmem:[%s321 + $0xdc] sm:$0xf] %vm1398, %v1325
        %1455 = vst.msk [vmem:[%s321 + $0xe0] sm:$0xf] %vm1398, %v1326
        %1456 = vst.msk [vmem:[%s321 + $0xe4] sm:$0xf] %vm1398, %v1327
        %1457 = vst.msk [vmem:[%s321 + $0xe8] sm:$0xf] %vm1398, %v1328
        %1458 = vst.msk [vmem:[%s321 + $0xec] sm:$0xf] %vm1398, %v1329
        %1459 = vst.msk [vmem:[%s321 + $0xf0] sm:$0xf] %vm1398, %v1330
        %1460 = vst.msk [vmem:[%s321 + $0xf4] sm:$0xf] %vm1398, %v1331
        %1461 = vst.msk [vmem:[%s321 + $0xf8] sm:$0xf] %vm1398, %v1332
        %1462 = vst.msk [vmem:[%s321 + $0xfc] sm:$0xf] %vm1398, %v1333
        %1463 = vst.msk [vmem:[%s321 + $0x100] sm:$0xf] %vm1398, %v1334
        %1464 = vst.msk [vmem:[%s321 + $0x104] sm:$0xf] %vm1398, %v1335
        %1465 = vst.msk [vmem:[%s321 + $0x108] sm:$0xf] %vm1398, %v1336
        %1466 = vst.msk [vmem:[%s321 + $0x10c] sm:$0xf] %vm1398, %v1337
        %1467 = vst.msk [vmem:[%s321 + $0x110] sm:$0xf] %vm1398, %v1338
        %1468 = vst.msk [vmem:[%s321 + $0x114] sm:$0xf] %vm1398, %v1339
        %1469 = vst.msk [vmem:[%s321 + $0x118] sm:$0xf] %vm1398, %v1340
        %1470 = vst.msk [vmem:[%s321 + $0x11c] sm:$0xf] %vm1398, %v1341
        %1471 = vst.msk [vmem:[%s321 + $0x120] sm:$0xf] %vm1398, %v1342
        %1472 = vst.msk [vmem:[%s321 + $0x124] sm:$0xf] %vm1398, %v1343
        %1473 = vst.msk [vmem:[%s321 + $0x128] sm:$0xf] %vm1398, %v1344
        %1474 = vst.msk [vmem:[%s321 + $0x12c] sm:$0xf] %vm1398, %v1345
        %1475 = vst.msk [vmem:[%s321 + $0x130] sm:$0xf] %vm1398, %v1346
        %1476 = vst.msk [vmem:[%s321 + $0x134] sm:$0xf] %vm1398, %v1347
        %1477 = vst.msk [vmem:[%s321 + $0x138] sm:$0xf] %vm1398, %v1348
        %1478 = vst.msk [vmem:[%s321 + $0x13c] sm:$0xf] %vm1398, %v1349
        %1479 = vst.msk [vmem:[%s321 + $0x140] sm:$0xf] %vm1398, %v1350
        %1480 = vst.msk [vmem:[%s321 + $0x144] sm:$0xf] %vm1398, %v1351
        %1481 = vst.msk [vmem:[%s321 + $0x148] sm:$0xf] %vm1398, %v1352
        %1482 = vst.msk [vmem:[%s321 + $0x14c] sm:$0xf] %vm1398, %v1353
        %1483 = vst.msk [vmem:[%s321 + $0x150] sm:$0xf] %vm1398, %v1354
        %1484 = vst.msk [vmem:[%s321 + $0x154] sm:$0xf] %vm1398, %v1355
        %1485 = vst.msk [vmem:[%s321 + $0x158] sm:$0xf] %vm1398, %v1356
        %1486 = vst.msk [vmem:[%s321 + $0x15c] sm:$0xf] %vm1398, %v1357
        %1487 = vst.msk [vmem:[%s321 + $0x160] sm:$0xf] %vm1398, %v1358
        %1488 = vst.msk [vmem:[%s321 + $0x164] sm:$0xf] %vm1398, %v1359
        %1489 = vst.msk [vmem:[%s321 + $0x168] sm:$0xf] %vm1398, %v1360
        %1490 = vst.msk [vmem:[%s321 + $0x16c] sm:$0xf] %vm1398, %v1361
        %1491 = vst.msk [vmem:[%s321 + $0x170] sm:$0xf] %vm1398, %v1362
        %1492 = vst.msk [vmem:[%s321 + $0x174] sm:$0xf] %vm1398, %v1363
        %1493 = vst.msk [vmem:[%s321 + $0x178] sm:$0xf] %vm1398, %v1364
        %1494 = vst.msk [vmem:[%s321 + $0x17c] sm:$0xf] %vm1398, %v1365
        %1495 = vst.msk [vmem:[%s321 + $0x180] sm:$0xf] %vm1398, %v1366
        %1496 = vst.msk [vmem:[%s321 + $0x184] sm:$0xf] %vm1398, %v1367
        %1497 = vst.msk [vmem:[%s321 + $0x188] sm:$0xf] %vm1398, %v1368
        %1498 = vst.msk [vmem:[%s321 + $0x18c] sm:$0xf] %vm1398, %v1369
        %1499 = vst.msk [vmem:[%s321 + $0x190] sm:$0xf] %vm1398, %v1370
        %1500 = vst.msk [vmem:[%s321 + $0x194] sm:$0xf] %vm1398, %v1371
        %1501 = vst.msk [vmem:[%s321 + $0x198] sm:$0xf] %vm1398, %v1372
        %1502 = vst.msk [vmem:[%s321 + $0x19c] sm:$0xf] %vm1398, %v1373
        %1503 = vst.msk [vmem:[%s321 + $0x1a0] sm:$0xf] %vm1398, %v1374
        %1504 = vst.msk [vmem:[%s321 + $0x1a4] sm:$0xf] %vm1398, %v1375
        %1505 = vst.msk [vmem:[%s321 + $0x1a8] sm:$0xf] %vm1398, %v1376
        %1506 = vst.msk [vmem:[%s321 + $0x1ac] sm:$0xf] %vm1398, %v1377
        %1507 = vst.msk [vmem:[%s321 + $0x1b0] sm:$0xf] %vm1398, %v1378
        %1508 = vst.msk [vmem:[%s321 + $0x1b4] sm:$0xf] %vm1398, %v1379
        %1509 = vst.msk [vmem:[%s321 + $0x1b8] sm:$0xf] %vm1398, %v1380
        %1510 = vst.msk [vmem:[%s321 + $0x1bc] sm:$0xf] %vm1398, %v1381
        %1511 = vst.msk [vmem:[%s321 + $0x1c0] sm:$0xf] %vm1398, %v1382
        %1512 = vst.msk [vmem:[%s321 + $0x1c4] sm:$0xf] %vm1398, %v1383
        %1513 = vst.msk [vmem:[%s321 + $0x1c8] sm:$0xf] %vm1398, %v1384
        %1514 = vst.msk [vmem:[%s321 + $0x1cc] sm:$0xf] %vm1398, %v1385
        %1515 = vst.msk [vmem:[%s321 + $0x1d0] sm:$0xf] %vm1398, %v1386
        %1516 = vst.msk [vmem:[%s321 + $0x1d4] sm:$0xf] %vm1398, %v1387
        %1517 = vst.msk [vmem:[%s321 + $0x1d8] sm:$0xf] %vm1398, %v1388
        %1518 = vst.msk [vmem:[%s321 + $0x1dc] sm:$0xf] %vm1398, %v1389
        %1519 = vst.msk [vmem:[%s321 + $0x1e0] sm:$0xf] %vm1398, %v1390
        %1520 = vst.msk [vmem:[%s321 + $0x1e4] sm:$0xf] %vm1398, %v1391
        %1521 = vst.msk [vmem:[%s321 + $0x1e8] sm:$0xf] %vm1398, %v1392
        %1522 = vst.msk [vmem:[%s321 + $0x1ec] sm:$0xf] %vm1398, %v1393
        %1523 = vst.msk [vmem:[%s321 + $0x1f0] sm:$0xf] %vm1398, %v1394
        %1524 = vst.msk [vmem:[%s321 + $0x1f4] sm:$0xf] %vm1398, %v1395
        %1525 = vst.msk [vmem:[%s321 + $0x1f8] sm:$0xf] %vm1398, %v1396
        %1526 = vst.msk [vmem:[%s321 + $0x1fc] sm:$0xf] %vm1398, %v1397
        %v1527 = vld [vmem:[%s5] sm:$0x1]
        %v1656 = vunpack.c.l.b16 %v1270
        %v1657 = vunpack.c.l.b16 %v1271
        %v1658 = vunpack.c.l.b16 %v1272
        %v1659 = vunpack.c.l.b16 %v1273
        %v1660 = vunpack.c.l.b16 %v1274
        %v1661 = vunpack.c.l.b16 %v1275
        %v1662 = vunpack.c.l.b16 %v1276
        %v1663 = vunpack.c.l.b16 %v1277
        %v1664 = vunpack.c.l.b16 %v1278
        %v1665 = vunpack.c.l.b16 %v1279
        %v1666 = vunpack.c.l.b16 %v1280
        %v1667 = vunpack.c.l.b16 %v1281
        %v1668 = vunpack.c.l.b16 %v1282
        %v1669 = vunpack.c.l.b16 %v1283
        %v1670 = vunpack.c.l.b16 %v1284
        %v1671 = vunpack.c.l.b16 %v1285
        %v1672 = vunpack.c.l.b16 %v1286
        %v1673 = vunpack.c.l.b16 %v1287
        %v1674 = vunpack.c.l.b16 %v1288
        %v1675 = vunpack.c.l.b16 %v1289
        %v1676 = vunpack.c.l.b16 %v1290
        %v1677 = vunpack.c.l.b16 %v1291
        %v1678 = vunpack.c.l.b16 %v1292
        %v1679 = vunpack.c.l.b16 %v1293
        %v1680 = vunpack.c.l.b16 %v1294
        %v1681 = vunpack.c.l.b16 %v1295
        %v1682 = vunpack.c.l.b16 %v1296
        %v1683 = vunpack.c.l.b16 %v1297
        %v1684 = vunpack.c.l.b16 %v1298
        %v1685 = vunpack.c.l.b16 %v1299
        %v1686 = vunpack.c.l.b16 %v1300
        %v1687 = vunpack.c.l.b16 %v1301
        %v1688 = vunpack.c.l.b16 %v1302
        %v1689 = vunpack.c.l.b16 %v1303
        %v1690 = vunpack.c.l.b16 %v1304
        %v1691 = vunpack.c.l.b16 %v1305
        %v1692 = vunpack.c.l.b16 %v1306
        %v1693 = vunpack.c.l.b16 %v1307
        %v1694 = vunpack.c.l.b16 %v1308
        %v1695 = vunpack.c.l.b16 %v1309
        %v1696 = vunpack.c.l.b16 %v1310
        %v1697 = vunpack.c.l.b16 %v1311
        %v1698 = vunpack.c.l.b16 %v1312
        %v1699 = vunpack.c.l.b16 %v1313
        %v1700 = vunpack.c.l.b16 %v1314
        %v1701 = vunpack.c.l.b16 %v1315
        %v1702 = vunpack.c.l.b16 %v1316
        %v1703 = vunpack.c.l.b16 %v1317
        %v1704 = vunpack.c.l.b16 %v1318
        %v1705 = vunpack.c.l.b16 %v1319
        %v1706 = vunpack.c.l.b16 %v1320
        %v1707 = vunpack.c.l.b16 %v1321
        %v1708 = vunpack.c.l.b16 %v1322
        %v1709 = vunpack.c.l.b16 %v1323
        %v1710 = vunpack.c.l.b16 %v1324
        %v1711 = vunpack.c.l.b16 %v1325
        %v1712 = vunpack.c.l.b16 %v1326
        %v1713 = vunpack.c.l.b16 %v1327
        %v1714 = vunpack.c.l.b16 %v1328
        %v1715 = vunpack.c.l.b16 %v1329
        %v1716 = vunpack.c.l.b16 %v1330
        %v1717 = vunpack.c.l.b16 %v1331
        %v1718 = vunpack.c.l.b16 %v1332
        %v1719 = vunpack.c.l.b16 %v1333
        %v1720 = vunpack.c.l.b16 %v1334
        %v1721 = vunpack.c.l.b16 %v1335
        %v1722 = vunpack.c.l.b16 %v1336
        %v1723 = vunpack.c.l.b16 %v1337
        %v1724 = vunpack.c.l.b16 %v1338
        %v1725 = vunpack.c.l.b16 %v1339
        %v1726 = vunpack.c.l.b16 %v1340
        %v1727 = vunpack.c.l.b16 %v1341
        %v1728 = vunpack.c.l.b16 %v1342
        %v1729 = vunpack.c.l.b16 %v1343
        %v1730 = vunpack.c.l.b16 %v1344
        %v1731 = vunpack.c.l.b16 %v1345
        %v1732 = vunpack.c.l.b16 %v1346
        %v1733 = vunpack.c.l.b16 %v1347
        %v1734 = vunpack.c.l.b16 %v1348
        %v1735 = vunpack.c.l.b16 %v1349
        %v1736 = vunpack.c.l.b16 %v1350
        %v1737 = vunpack.c.l.b16 %v1351
        %v1738 = vunpack.c.l.b16 %v1352
        %v1739 = vunpack.c.l.b16 %v1353
        %v1740 = vunpack.c.l.b16 %v1354
        %v1741 = vunpack.c.l.b16 %v1355
        %v1742 = vunpack.c.l.b16 %v1356
        %v1743 = vunpack.c.l.b16 %v1357
        %v1744 = vunpack.c.l.b16 %v1358
        %v1745 = vunpack.c.l.b16 %v1359
        %v1746 = vunpack.c.l.b16 %v1360
        %v1747 = vunpack.c.l.b16 %v1361
        %v1748 = vunpack.c.l.b16 %v1362
        %v1749 = vunpack.c.l.b16 %v1363
        %v1750 = vunpack.c.l.b16 %v1364
        %v1751 = vunpack.c.l.b16 %v1365
        %v1752 = vunpack.c.l.b16 %v1366
        %v1753 = vunpack.c.l.b16 %v1367
        %v1754 = vunpack.c.l.b16 %v1368
        %v1755 = vunpack.c.l.b16 %v1369
        %v1756 = vunpack.c.l.b16 %v1370
        %v1757 = vunpack.c.l.b16 %v1371
        %v1758 = vunpack.c.l.b16 %v1372
        %v1759 = vunpack.c.l.b16 %v1373
        %v1760 = vunpack.c.l.b16 %v1374
        %v1761 = vunpack.c.l.b16 %v1375
        %v1762 = vunpack.c.l.b16 %v1376
        %v1763 = vunpack.c.l.b16 %v1377
        %v1764 = vunpack.c.l.b16 %v1378
        %v1765 = vunpack.c.l.b16 %v1379
        %v1766 = vunpack.c.l.b16 %v1380
        %v1767 = vunpack.c.l.b16 %v1381
        %v1768 = vunpack.c.l.b16 %v1382
        %v1769 = vunpack.c.l.b16 %v1383
        %v1770 = vunpack.c.l.b16 %v1384
        %v1771 = vunpack.c.l.b16 %v1385
        %v1772 = vunpack.c.l.b16 %v1386
        %v1773 = vunpack.c.l.b16 %v1387
        %v1774 = vunpack.c.l.b16 %v1388
        %v1775 = vunpack.c.l.b16 %v1389
        %v1776 = vunpack.c.l.b16 %v1390
        %v1777 = vunpack.c.l.b16 %v1391
        %v1778 = vunpack.c.l.b16 %v1392
        %v1779 = vunpack.c.l.b16 %v1393
        %v1780 = vunpack.c.l.b16 %v1394
        %v1781 = vunpack.c.l.b16 %v1395
        %v1782 = vunpack.c.l.b16 %v1396
        %v1783 = vunpack.c.l.b16 %v1397
        %v1784 = vpack.c.b16 %v1657, %v1656
        %v1785 = vpack.c.b16 %v1659, %v1658
        %v1786 = vpack.c.b16 %v1661, %v1660
        %v1787 = vpack.c.b16 %v1663, %v1662
        %v1788 = vpack.c.b16 %v1665, %v1664
        %v1789 = vpack.c.b16 %v1667, %v1666
        %v1790 = vpack.c.b16 %v1669, %v1668
        %v1791 = vpack.c.b16 %v1671, %v1670
        %v1792 = vpack.c.b16 %v1673, %v1672
        %v1793 = vpack.c.b16 %v1675, %v1674
        %v1794 = vpack.c.b16 %v1677, %v1676
        %v1795 = vpack.c.b16 %v1679, %v1678
        %v1796 = vpack.c.b16 %v1681, %v1680
        %v1797 = vpack.c.b16 %v1683, %v1682
        %v1798 = vpack.c.b16 %v1685, %v1684
        %v1799 = vpack.c.b16 %v1687, %v1686
        %v1800 = vpack.c.b16 %v1689, %v1688
        %v1801 = vpack.c.b16 %v1691, %v1690
        %v1802 = vpack.c.b16 %v1693, %v1692
        %v1803 = vpack.c.b16 %v1695, %v1694
        %v1804 = vpack.c.b16 %v1697, %v1696
        %v1805 = vpack.c.b16 %v1699, %v1698
        %v1806 = vpack.c.b16 %v1701, %v1700
        %v1807 = vpack.c.b16 %v1703, %v1702
        %v1808 = vpack.c.b16 %v1705, %v1704
        %v1809 = vpack.c.b16 %v1707, %v1706
        %v1810 = vpack.c.b16 %v1709, %v1708
        %v1811 = vpack.c.b16 %v1711, %v1710
        %v1812 = vpack.c.b16 %v1713, %v1712
        %v1813 = vpack.c.b16 %v1715, %v1714
        %v1814 = vpack.c.b16 %v1717, %v1716
        %v1815 = vpack.c.b16 %v1719, %v1718
        %v1816 = vpack.c.b16 %v1721, %v1720
        %v1817 = vpack.c.b16 %v1723, %v1722
        %v1818 = vpack.c.b16 %v1725, %v1724
        %v1819 = vpack.c.b16 %v1727, %v1726
        %v1820 = vpack.c.b16 %v1729, %v1728
        %v1821 = vpack.c.b16 %v1731, %v1730
        %v1822 = vpack.c.b16 %v1733, %v1732
        %v1823 = vpack.c.b16 %v1735, %v1734
        %v1824 = vpack.c.b16 %v1737, %v1736
        %v1825 = vpack.c.b16 %v1739, %v1738
        %v1826 = vpack.c.b16 %v1741, %v1740
        %v1827 = vpack.c.b16 %v1743, %v1742
        %v1828 = vpack.c.b16 %v1745, %v1744
        %v1829 = vpack.c.b16 %v1747, %v1746
        %v1830 = vpack.c.b16 %v1749, %v1748
        %v1831 = vpack.c.b16 %v1751, %v1750
        %v1832 = vpack.c.b16 %v1753, %v1752
        %v1833 = vpack.c.b16 %v1755, %v1754
        %v1834 = vpack.c.b16 %v1757, %v1756
        %v1835 = vpack.c.b16 %v1759, %v1758
        %v1836 = vpack.c.b16 %v1761, %v1760
        %v1837 = vpack.c.b16 %v1763, %v1762
        %v1838 = vpack.c.b16 %v1765, %v1764
        %v1839 = vpack.c.b16 %v1767, %v1766
        %v1840 = vpack.c.b16 %v1769, %v1768
        %v1841 = vpack.c.b16 %v1771, %v1770
        %v1842 = vpack.c.b16 %v1773, %v1772
        %v1843 = vpack.c.b16 %v1775, %v1774
        %v1844 = vpack.c.b16 %v1777, %v1776
        %v1845 = vpack.c.b16 %v1779, %v1778
        %v1846 = vpack.c.b16 %v1781, %v1780
        %v1847 = vpack.c.b16 %v1783, %v1782
        %vm1848 = vcmask 31744
        %v1850 = vsel %vm1848, %v1527, 0
        %v1853 = vsel %vm1848, %v1784, 0
        %v1856 = vsel %vm1848, %v1785, 0
        %v1859 = vsel %vm1848, %v1786, 0
        %v1862 = vsel %vm1848, %v1787, 0
        %v1865 = vsel %vm1848, %v1788, 0
        %v1868 = vsel %vm1848, %v1789, 0
        %v1871 = vsel %vm1848, %v1790, 0
        %v1874 = vsel %vm1848, %v1791, 0
        %v1877 = vsel %vm1848, %v1792, 0
        %v1880 = vsel %vm1848, %v1793, 0
        %v1883 = vsel %vm1848, %v1794, 0
        %v1886 = vsel %vm1848, %v1795, 0
        %v1889 = vsel %vm1848, %v1796, 0
        %v1892 = vsel %vm1848, %v1797, 0
        %v1895 = vsel %vm1848, %v1798, 0
        %v1898 = vsel %vm1848, %v1799, 0
        %v1901 = vsel %vm1848, %v1800, 0
        %v1904 = vsel %vm1848, %v1801, 0
        %v1907 = vsel %vm1848, %v1802, 0
        %v1910 = vsel %vm1848, %v1803, 0
        %v1913 = vsel %vm1848, %v1804, 0
        %v1916 = vsel %vm1848, %v1805, 0
        %v1919 = vsel %vm1848, %v1806, 0
        %v1922 = vsel %vm1848, %v1807, 0
        %v1925 = vsel %vm1848, %v1808, 0
        %v1928 = vsel %vm1848, %v1809, 0
        %v1931 = vsel %vm1848, %v1810, 0
        %v1934 = vsel %vm1848, %v1811, 0
        %v1937 = vsel %vm1848, %v1812, 0
        %v1940 = vsel %vm1848, %v1813, 0
        %v1943 = vsel %vm1848, %v1814, 0
        %v1946 = vsel %vm1848, %v1815, 0
        %v1949 = vsel %vm1848, %v1816, 0
        %v1952 = vsel %vm1848, %v1817, 0
        %v1955 = vsel %vm1848, %v1818, 0
        %v1958 = vsel %vm1848, %v1819, 0
        %v1961 = vsel %vm1848, %v1820, 0
        %v1964 = vsel %vm1848, %v1821, 0
        %v1967 = vsel %vm1848, %v1822, 0
        %v1970 = vsel %vm1848, %v1823, 0
        %v1973 = vsel %vm1848, %v1824, 0
        %v1976 = vsel %vm1848, %v1825, 0
        %v1979 = vsel %vm1848, %v1826, 0
        %v1982 = vsel %vm1848, %v1827, 0
        %v1985 = vsel %vm1848, %v1828, 0
        %v1988 = vsel %vm1848, %v1829, 0
        %v1991 = vsel %vm1848, %v1830, 0
        %v1994 = vsel %vm1848, %v1831, 0
        %v1997 = vsel %vm1848, %v1832, 0
        %v2000 = vsel %vm1848, %v1833, 0
        %v2003 = vsel %vm1848, %v1834, 0
        %v2006 = vsel %vm1848, %v1835, 0
        %v2009 = vsel %vm1848, %v1836, 0
        %v2012 = vsel %vm1848, %v1837, 0
        %v2015 = vsel %vm1848, %v1838, 0
        %v2018 = vsel %vm1848, %v1839, 0
        %v2021 = vsel %vm1848, %v1840, 0
        %v2024 = vsel %vm1848, %v1841, 0
        %v2027 = vsel %vm1848, %v1842, 0
        %v2030 = vsel %vm1848, %v1843, 0
        %v2033 = vsel %vm1848, %v1844, 0
        %v2036 = vsel %vm1848, %v1845, 0
        %v2039 = vsel %vm1848, %v1846, 0
        %v2042 = vsel %vm1848, %v1847, 0
        %2044 = vmatpush.bf16.xpose.msra.mxu0 %v1874
        %2045 = vmatpush.bf16.xpose.msra.mxu0 %v1871
        %2046 = vmatpush.bf16.xpose.msra.mxu0 %v1868
        %2047 = vmatpush.bf16.xpose.msra.mxu0 %v1865
        %2048 = vmatpush.bf16.xpose.msra.mxu0 %v1862
        %2049 = vmatpush.bf16.xpose.msra.mxu0 %v1859
        %2050 = vmatpush.bf16.xpose.msra.mxu0 %v1856
        %2051 = vmatpush.bf16.xpose.msra.mxu0 %v1853
        %2052 = vmatmul.bf16.gmra.mxu0 %v1850
        %v2053 = vpop.f32.mrf.mxu0
        %v2054 = vadd.f32 0.0, %v2053
        %v2055 = vpop.f32.mrf.mxu0
        %2056 = vdwg.mxu0
        %2057 = vmatpush.bf16.xpose.msra.mxu0 %v1898
        %2058 = vmatpush.bf16.xpose.msra.mxu0 %v1895
        %2059 = vmatpush.bf16.xpose.msra.mxu0 %v1892
        %2060 = vmatpush.bf16.xpose.msra.mxu0 %v1889
        %2061 = vmatpush.bf16.xpose.msra.mxu0 %v1886
        %2062 = vmatpush.bf16.xpose.msra.mxu0 %v1883
        %2063 = vmatpush.bf16.xpose.msra.mxu0 %v1880
        %2064 = vmatpush.bf16.xpose.msra.mxu0 %v1877
        %2065 = vmatmul.bf16.gmra.mxu0 %v1850
        %v2066 = vpop.f32.mrf.mxu0
        %v2067 = vadd.f32 0.0, %v2066
        %v2068 = vpop.f32.mrf.mxu0
        %2069 = vdwg.mxu0
        %2070 = vmatpush.bf16.xpose.msra.mxu0 %v1922
        %2071 = vmatpush.bf16.xpose.msra.mxu0 %v1919
        %2072 = vmatpush.bf16.xpose.msra.mxu0 %v1916
        %2073 = vmatpush.bf16.xpose.msra.mxu0 %v1913
        %2074 = vmatpush.bf16.xpose.msra.mxu0 %v1910
        %2075 = vmatpush.bf16.xpose.msra.mxu0 %v1907
        %2076 = vmatpush.bf16.xpose.msra.mxu0 %v1904
        %2077 = vmatpush.bf16.xpose.msra.mxu0 %v1901
        %2078 = vmatmul.bf16.gmra.mxu0 %v1850
        %v2079 = vpop.f32.mrf.mxu0
        %v2080 = vadd.f32 0.0, %v2079
        %v2081 = vpop.f32.mrf.mxu0
        %2082 = vdwg.mxu0
        %2083 = vmatpush.bf16.xpose.msra.mxu0 %v1946
        %2084 = vmatpush.bf16.xpose.msra.mxu0 %v1943
        %2085 = vmatpush.bf16.xpose.msra.mxu0 %v1940
        %2086 = vmatpush.bf16.xpose.msra.mxu0 %v1937
        %2087 = vmatpush.bf16.xpose.msra.mxu0 %v1934
        %2088 = vmatpush.bf16.xpose.msra.mxu0 %v1931
        %2089 = vmatpush.bf16.xpose.msra.mxu0 %v1928
        %2090 = vmatpush.bf16.xpose.msra.mxu0 %v1925
        %2091 = vmatmul.bf16.gmra.mxu0 %v1850
        %v2092 = vpop.f32.mrf.mxu0
        %v2093 = vadd.f32 0.0, %v2092
        %v2094 = vpop.f32.mrf.mxu0
        %2095 = vdwg.mxu0
        %2096 = vmatpush.bf16.xpose.msra.mxu0 %v1970
        %2097 = vmatpush.bf16.xpose.msra.mxu0 %v1967
        %2098 = vmatpush.bf16.xpose.msra.mxu0 %v1964
        %2099 = vmatpush.bf16.xpose.msra.mxu0 %v1961
        %2100 = vmatpush.bf16.xpose.msra.mxu0 %v1958
        %2101 = vmatpush.bf16.xpose.msra.mxu0 %v1955
        %2102 = vmatpush.bf16.xpose.msra.mxu0 %v1952
        %2103 = vmatpush.bf16.xpose.msra.mxu0 %v1949
        %2104 = vmatmul.bf16.gmra.mxu0 %v1850
        %v2105 = vpop.f32.mrf.mxu0
        %v2106 = vadd.f32 0.0, %v2105
        %v2107 = vpop.f32.mrf.mxu0
        %2108 = vdwg.mxu0
        %2109 = vmatpush.bf16.xpose.msra.mxu0 %v1994
        %2110 = vmatpush.bf16.xpose.msra.mxu0 %v1991
        %2111 = vmatpush.bf16.xpose.msra.mxu0 %v1988
        %2112 = vmatpush.bf16.xpose.msra.mxu0 %v1985
        %2113 = vmatpush.bf16.xpose.msra.mxu0 %v1982
        %2114 = vmatpush.bf16.xpose.msra.mxu0 %v1979
        %2115 = vmatpush.bf16.xpose.msra.mxu0 %v1976
        %2116 = vmatpush.bf16.xpose.msra.mxu0 %v1973
        %2117 = vmatmul.bf16.gmra.mxu0 %v1850
        %v2118 = vpop.f32.mrf.mxu0
        %v2119 = vadd.f32 0.0, %v2118
        %v2120 = vpop.f32.mrf.mxu0
        %2121 = vdwg.mxu0
        %2122 = vmatpush.bf16.xpose.msra.mxu0 %v2018
        %2123 = vmatpush.bf16.xpose.msra.mxu0 %v2015
        %2124 = vmatpush.bf16.xpose.msra.mxu0 %v2012
        %2125 = vmatpush.bf16.xpose.msra.mxu0 %v2009
        %2126 = vmatpush.bf16.xpose.msra.mxu0 %v2006
        %2127 = vmatpush.bf16.xpose.msra.mxu0 %v2003
        %2128 = vmatpush.bf16.xpose.msra.mxu0 %v2000
        %2129 = vmatpush.bf16.xpose.msra.mxu0 %v1997
        %2130 = vmatmul.bf16.gmra.mxu0 %v1850
        %v2131 = vpop.f32.mrf.mxu0
        %v2132 = vadd.f32 0.0, %v2131
        %v2133 = vpop.f32.mrf.mxu0
        %2134 = vdwg.mxu0
        %2135 = vmatpush.bf16.xpose.msra.mxu0 %v2042
        %2136 = vmatpush.bf16.xpose.msra.mxu0 %v2039
        %2137 = vmatpush.bf16.xpose.msra.mxu0 %v2036
        %2138 = vmatpush.bf16.xpose.msra.mxu0 %v2033
        %2139 = vmatpush.bf16.xpose.msra.mxu0 %v2030
        %2140 = vmatpush.bf16.xpose.msra.mxu0 %v2027
        %2141 = vmatpush.bf16.xpose.msra.mxu0 %v2024
        %2142 = vmatpush.bf16.xpose.msra.mxu0 %v2021
        %2143 = vmatmul.bf16.gmra.mxu0 %v1850
        %v2144 = vpop.f32.mrf.mxu0
        %v2145 = vadd.f32 0.0, %v2144
        %v2146 = vpop.f32.mrf.mxu0
        %2147 = vdwg.mxu0
        %v2156 = vrot.slane %v2067, 6
        %v2157 = vrot.slane %v2080, 4
        %v2158 = vrot.slane %v2093, 2
        %v2159 = vrot.slane %v2119, 6
        %v2160 = vrot.slane %v2132, 4
        %v2161 = vrot.slane %v2145, 2
        %vm2162 = vcmask 1041408
        %v2163 = vsel %vm2162, %v2054, %v2156
        %vm2164 = vcmask 1045508
        %v2165 = vsel %vm2164, %v2157, %v2158
        %vm2166 = vcmask 1043456
        %v2167 = vsel %vm2166, %v2163, %v2165
        %v2168 = vsel %vm2162, %v2106, %v2159
        %v2169 = vsel %vm2164, %v2160, %v2161
        %v2170 = vsel %vm2166, %v2168, %v2169
        %2173 = vst [vmem:[%s358] sm:$0xff] %v2167
        %2174 = vst [vmem:[%s358 + $0x8] sm:$0xff] %v2170
        %s2175 = sand.u32 %s187, 1
        %s2176 = scalar_lea.sflag [#allocation3], %s2175
        %s2177 = sand.u32 %s187, 1
        %s2178 = smul.addr %s2177, 512
        %s2179 = scalar_lea.vmem [#allocation2], %s2178
        %s2180 = smul.u32 8, %s27
        %p2181 = scmp.lt.s32.totalorder %s26, 0
        %s2182 = scalar_select %p2181, %s26, 0
        %p2183 = scmp.lt.s32.totalorder %s2180, 15
        %s2184 = scalar_select %p2183, %s2180, 15
        %s2185 = smul.addr %s2182, 16
        %s2186 = sadd.s32 %s2184, %s2185
        %s2187 = smul.addr %s2186, 2
        %s2188 = scalar_lea.vmem %s7, %s2187
        // Predicated region
        $region45: #{_lambda_.15} parent=43 // pred_check
          %p2189 = pneg %p197
        $region46: #{_lambda_.15} parent=43 // pred_check_branch
          %2191 = sbr.rel (%p2189) target = $region48
        $region47: #{_lambda_.15} parent=43 // pred_region
          %s2192 = smul.u32 128, %s27
          %2194 = vsyncadd %s2176, 0
          %s2195 = smul.addr %s26, 256
          %s2196 = sadd.s32 %s2192, %s2195
          %s2197 = smul.addr %s2196, 4
          %s2198 = scalar_lea.hbm %s6, %s2197
          %s2199 = sshll.u32 %s2179, 4
          %s2200 = int_to_ptr.vmem [resolvable:$true] %s2199
          %s2201 = sshll.u32 %s2198, 4
          %s2202 = int_to_ptr.hbm [resolvable:$true] %s2201
          %2207 = dma.vmem_to_hbm [thread:$0]  %s2200, 8192, %s2202, %s2176, 64, 64, 4
        $region48: #{_lambda_.15} parent=43 // pred_fallthru
          _
        // Predicated region
        $region49: #{_lambda_.15} parent=43 // pred_check
          %p2208 = pneg %p225
        $region50: #{_lambda_.15} parent=43 // pred_check_branch
          %2210 = sbr.rel (%p2208) target = $region52
        $region51: #{_lambda_.15} parent=43 // pred_region
          %s2211 = smul.u32 8, %s27
        $region52: #{_lambda_.15} parent=43 // pred_fallthru
          _
      $region44: #{_lambda_.15} parent=5 // pred_fallthru
        _
      %p2212 = scmp.le.s32.totalorder 2, %s17
      // Predicated region
      $region53: #{_lambda_.15} parent=5 // pred_check
        %p2213 = pneg %p2212
      $region54: #{_lambda_.15} parent=5 // pred_check_branch
        %2215 = sbr.rel (%p2213) target = $region56
      $region55: #{_lambda_.15} parent=5 // pred_region
        %s2216 = ssub.s32 %s17, 2
        // Predicated region
        $region57: #{_lambda_.15} parent=55 // pred_check
          %p2217 = pneg %p203
        $region58: #{_lambda_.15} parent=55 // pred_check_branch
          %2219 = sbr.rel (%p2217) target = $region60
        $region59: #{_lambda_.15} parent=55 // pred_region
          %s2220 = sand.u32 %s188, 1
          %s2221 = scalar_lea.sflag [#allocation3], %s2220
          %s2222 = sand.u32 %s188, 1
          %s2223 = smul.addr %s2222, 512
          %s2224 = scalar_lea.vmem [#allocation2], %s2223
          %2226 = dma.done %s2221, 8192
        $region60: #{_lambda_.15} parent=55 // pred_fallthru
          _
        // Predicated region
        $region61: #{_lambda_.15} parent=55 // pred_check
          %p2227 = pneg %p231
        $region62: #{_lambda_.15} parent=55 // pred_check_branch
          %2229 = sbr.rel (%p2227) target = $region64
        $region63: #{_lambda_.15} parent=55 // pred_region
          %s2230 = smul.u32 8, %s29
          %p2231 = scmp.lt.s32.totalorder %s28, 0
          %s2232 = scalar_select %p2231, %s28, 0
          %p2233 = scmp.lt.s32.totalorder %s2230, 15
          %s2234 = scalar_select %p2233, %s2230, 15
          %s2235 = smul.addr %s2232, 16
          %s2236 = sadd.s32 %s2234, %s2235
          %s2237 = smul.addr %s2236, 2
          %s2238 = scalar_lea.vmem %s7, %s2237
        $region64: #{_lambda_.15} parent=55 // pred_fallthru
          _
      $region56: #{_lambda_.15} parent=5 // pred_fallthru
        _
    $region6: #{_lambda_.15} parent=1 // loop_footer
      %s21 = sadd.s32 1, %s17
    $region7: #{_lambda_.15} parent=1 // loop_footer_branch
      %16 = sbr.rel target = $region3
    $region8: #{_lambda_.15} parent=1 // loop_exit
      _
    %2239 = vsyncpa [#allocation3], 1
    %s2240 = scalar_lea.sflag [#allocation3], 1
    %2241 = vsyncpa %s2240, 1

</llo_original>
